<compile_context>
chip_gen: v5e
topology: v5e:2x2
jax: 0.10.0
libtpu: 0.0.40
codegen_flags: <defaults>
</compile_context>

<pallas_src>
import numpy as np
import jax
import jax.numpy as jnp
from jax.experimental import pallas as pl
from jax.experimental.pallas import tpu as pltpu

B_TILE = 8  # images per grid step (sublane-group size for f32 => free reshapes)


# ------------------------------- fused kernel ------------------------------- #

def _net_kernel(xu_ref, w1_ref, b1_ref, w2_ref, b2_ref,
                wf1_ref, bf1_ref, wf2_ref, bf2_ref, out_ref):
    # xu_ref : (26, B, 84)   kh-unfolded input rows: xu[i,b,kh*28+p] = x[b,i+kh,p]
    # w1_ref : (84, 1024)    banded conv1 weights; cols = [even j' | odd j'] * 512
    # b1_ref : (1, 512)      conv1 bias tiled over 13 pooled columns (pad lanes 0)
    # w2_ref : (3, 512, 768) banded conv2 weights per kh; cols = [even | odd] * 384
    # b2_ref : (1, 384)      conv2 bias tiled over 5 pooled columns (pad lanes 0)
    # wf1_ref: (1920, 128)   fc1 weights, rows permuted to (h, w, c) feature order
    # bf1_ref: (1, 128)
    # wf2_ref: (128, 128)    fc2 weights, output cols padded 10 -> 128 with zeros
    # bf2_ref: (1, 128)
    # out_ref: (B, 128)      padded logits
    B = xu_ref.shape[1]

    # ---- conv1 (MXU): rows = (out-row i, image b), lanes = (parity, j', c) ----
    lhs1 = xu_ref[...].reshape(26 * B, 84).astype(jnp.bfloat16)            # (26B, 84)
    c1 = jnp.dot(lhs1, w1_ref[...], preferred_element_type=jnp.float32)    # (26B, 1024)
    # 2x2 pool over width = max of the even/odd 512-lane blocks (128-aligned)
    pw1 = jnp.maximum(c1[:, :512], c1[:, 512:])                            # (26B, 512)
    r1 = jnp.maximum(pw1 + b1_ref[...], 0.0)                               # bias + ReLU
    # 2x2 pool over height: rows are (i, b) with i outer, groups of B=8 sublanes
    r1 = r1.reshape(13, 2, B, 512)
    p1 = jnp.maximum(r1[:, 0], r1[:, 1])                                   # (13, B, 512)

    # ---- conv2 (MXU): 3 deep matmuls, one per kh; kw banded into the weights ----
    acc2 = None
    for kh in range(3):
        lhs2 = p1[kh:kh + 10].reshape(10 * B, 512).astype(jnp.bfloat16)    # (10B, 512)
        term = jnp.dot(lhs2, w2_ref[kh], preferred_element_type=jnp.float32)  # (10B, 768)
        acc2 = term if acc2 is None else acc2 + term
    pw2 = jnp.maximum(acc2[:, :384], acc2[:, 384:])                        # (10B, 384)
    r2 = jnp.maximum(pw2 + b2_ref[...], 0.0)                               # bias + ReLU
    r2 = r2.reshape(5, 2, B, 384)
    p2 = jnp.maximum(r2[:, 0], r2[:, 1])                                   # (5, B, 384)

    # ---- fc1 + ReLU + fc2 (MXU), weights resident in VMEM ----
    feats = jnp.concatenate([p2[h] for h in range(5)], axis=-1)            # (B, 1920)
    hid = jnp.dot(feats.astype(jnp.bfloat16), wf1_ref[...],
                  preferred_element_type=jnp.float32) + bf1_ref[...]
    hid = jnp.maximum(hid, 0.0)
    out_ref[...] = (jnp.dot(hid.astype(jnp.bfloat16), wf2_ref[...],
                            preferred_element_type=jnp.float32) + bf2_ref[...])


# ------------------------------ parameter prep ------------------------------ #

def init_params(key):
    """PyTorch-layout parameters with nn.Module-style uniform init."""
    ks = jax.random.split(key, 8)

    def u(k, shape, fan_in):
        bound = 1.0 / jnp.sqrt(fan_in)
        return jax.random.uniform(k, shape, jnp.float32, -bound, bound)

    return {
        "conv1_w": u(ks[0], (32, 1, 3, 3), 1 * 9),
        "conv1_b": u(ks[1], (32,), 1 * 9),
        "conv2_w": u(ks[2], (64, 32, 3, 3), 32 * 9),
        "conv2_b": u(ks[3], (64,), 32 * 9),
        "fc1_w":   u(ks[4], (128, 64 * 5 * 5), 64 * 5 * 5),
        "fc1_b":   u(ks[5], (128,), 64 * 5 * 5),
        "fc2_w":   u(ks[6], (10, 128), 128),
        "fc2_b":   u(ks[7], (10,), 128),
    }


def prepare_params(p):
    """One-time (host-side) conversion to the banded / permuted kernel layouts."""
    w1 = np.asarray(p["conv1_w"], np.float32)   # (32, 1, 3, 3)
    b1 = np.asarray(p["conv1_b"], np.float32)   # (32,)
    w2 = np.asarray(p["conv2_w"], np.float32)   # (64, 32, 3, 3)
    b2 = np.asarray(p["conv2_b"], np.float32)   # (64,)
    f1w = np.asarray(p["fc1_w"], np.float32)    # (128, 1600)
    f1b = np.asarray(p["fc1_b"], np.float32)    # (128,)
    f2w = np.asarray(p["fc2_w"], np.float32)    # (10, 128)
    f2b = np.asarray(p["fc2_b"], np.float32)    # (10,)

    # conv1 banded matmul weights: rows r = kh*28 + p (input column p), cols
    # col = parity*512 + j'*32 + c  ->  conv1 output column j = 2*j' + parity.
    W1 = np.zeros((84, 1024), np.float32)
    for kh in range(3):
        for kw in range(3):
            for parity in range(2):
                for jp in range(13):
                    pcol = 2 * jp + parity + kw          # input column index (<= 27)
                    base = parity * 512 + jp * 32
                    W1[kh * 28 + pcol, base:base + 32] = w1[:, 0, kh, kw]
    B1 = np.zeros((1, 512), np.float32)
    for jp in range(13):
        B1[0, jp * 32:(jp + 1) * 32] = b1

    # conv2 banded matmul weights (one slab per kh): rows = p*32 + c with p the
    # pooled1 column, cols = parity*384 + j'*64 + d -> conv2 column j = 2*j'+parity.
    W2 = np.zeros((3, 512, 768), np.float32)
    for kh in range(3):
        for kw in range(3):
            for parity in range(2):
                for jp in range(5):
                    pcol = 2 * jp + parity + kw          # pooled1 column (<= 11)
                    base = parity * 384 + jp * 64
                    W2[kh, pcol * 32:(pcol + 1) * 32, base:base + 64] = w2[:, :, kh, kw].T
    B2 = np.zeros((1, 384), np.float32)
    for jp in range(5):
        B2[0, jp * 64:(jp + 1) * 64] = b2

    # fc1: rows r = h*384 + w*64 + c must pick PyTorch feature index c*25+h*5+w.
    WF1 = np.zeros((5, 6, 64, 128), np.float32)
    WF1[:, :5] = np.transpose(f1w.reshape(128, 64, 5, 5), (2, 3, 1, 0))   # (h,w,c,u)
    WF1 = WF1.reshape(1920, 128)
    BF1 = f1b.reshape(1, 128)

    # fc2: pad output columns 10 -> 128 for a lane-dense store.
    WF2 = np.zeros((128, 128), np.float32)
    WF2[:, :10] = f2w.T
    BF2 = np.zeros((1, 128), np.float32)
    BF2[0, :10] = f2b

    return {
        "w1": jnp.asarray(W1, jnp.bfloat16), "b1": jnp.asarray(B1, jnp.float32),
        "w2": jnp.asarray(W2, jnp.bfloat16), "b2": jnp.asarray(B2, jnp.float32),
        "wf1": jnp.asarray(WF1, jnp.bfloat16), "bf1": jnp.asarray(BF1, jnp.float32),
        "wf2": jnp.asarray(WF2, jnp.bfloat16), "bf2": jnp.asarray(BF2, jnp.float32),
    }


# --------------------------------- forward ---------------------------------- #

@jax.jit
def net_forward(prep, x_nchw):
    n = x_nchw.shape[0]
    n_pad = ((n + B_TILE - 1) // B_TILE) * B_TILE
    x = x_nchw[:, 0].astype(jnp.float32)                       # (N, 28, 28)
    if n_pad != n:
        x = jnp.pad(x, ((0, n_pad - n), (0, 0), (0, 0)))
    # kh-unfold in the wrapper (cheap, tiny data): xu[i, n, kh*28+p] = x[n, i+kh, p]
    xu = jnp.concatenate([x[:, kh:kh + 26, :] for kh in range(3)], axis=-1)  # (Np,26,84)
    xu = jnp.transpose(xu, (1, 0, 2))                                        # (26,Np,84)

    num_tiles = n_pad // B_TILE
    out = pl.pallas_call(
        _net_kernel,
        out_shape=jax.ShapeDtypeStruct((n_pad, 128), jnp.float32),
        grid=(num_tiles,),
        in_specs=[
            pl.BlockSpec((26, B_TILE, 84), lambda t: (0, t, 0)),
            pl.BlockSpec((84, 1024), lambda t: (0, 0)),
            pl.BlockSpec((1, 512), lambda t: (0, 0)),
            pl.BlockSpec((3, 512, 768), lambda t: (0, 0, 0)),
            pl.BlockSpec((1, 384), lambda t: (0, 0)),
            pl.BlockSpec((1920, 128), lambda t: (0, 0)),
            pl.BlockSpec((1, 128), lambda t: (0, 0)),
            pl.BlockSpec((128, 128), lambda t: (0, 0)),
            pl.BlockSpec((1, 128), lambda t: (0, 0)),
        ],
        out_specs=pl.BlockSpec((B_TILE, 128), lambda t: (t, 0)),
        compiler_params=pltpu.CompilerParams(
            dimension_semantics=("parallel",)),
    )(xu, prep["w1"], prep["b1"], prep["w2"], prep["b2"],
      prep["wf1"], prep["bf1"], prep["wf2"], prep["bf2"])

    return out[:n, :10]


if __name__ == "__main__":
    key = jax.random.PRNGKey(0)
    k_x, k_p = jax.random.split(key)
    # Architecture fixes the spatial size: fc1 expects 64*5*5 -> input is 28x28.
    x = jax.random.normal(k_x, (2, 1, 28, 28), jnp.float32)
    params = init_params(k_p)
    prep = prepare_params(params)

    out = net_forward(prep, x)
    out = jax.block_until_ready(out)
    assert out.shape == (2, 10) and out.dtype == jnp.float32
    print("KERNEL_OK")
</pallas_src>

<mosaic_0001>
module attributes {stable_mosaic.version = 11 : i64} {
  func.func @_net_kernel(%arg0: i32, %arg1: memref<26x8x84xf32, #tpu.memory_space<vmem>>, %arg2: memref<84x1024xbf16, #tpu.memory_space<vmem>>, %arg3: memref<1x512xf32, #tpu.memory_space<vmem>>, %arg4: memref<3x512x768xbf16, #tpu.memory_space<vmem>>, %arg5: memref<1x384xf32, #tpu.memory_space<vmem>>, %arg6: memref<1920x128xbf16, #tpu.memory_space<vmem>>, %arg7: memref<1x128xf32, #tpu.memory_space<vmem>>, %arg8: memref<128x128xbf16, #tpu.memory_space<vmem>>, %arg9: memref<1x128xf32, #tpu.memory_space<vmem>>, %arg10: memref<8x128xf32, #tpu.memory_space<vmem>>) attributes {dimension_semantics = [#tpu.dimension_semantics<parallel>], iteration_bounds = array<i64: 1>, scalar_prefetch = 0 : i64, scratch_operands = 0 : i64, tpu.core_type = #tpu.core_type<tc>, window_params = [{transform_indices = @transform_0, window_bounds = array<i64: 26, 8, 84>}, {pipeline_mode = #tpu.pipeline_mode<synchronous>, transform_indices = @transform_1, window_bounds = array<i64: 84, 1024>}, {pipeline_mode = #tpu.pipeline_mode<synchronous>, transform_indices = @transform_2, window_bounds = array<i64: 1, 512>}, {pipeline_mode = #tpu.pipeline_mode<synchronous>, transform_indices = @transform_3, window_bounds = array<i64: 3, 512, 768>}, {pipeline_mode = #tpu.pipeline_mode<synchronous>, transform_indices = @transform_4, window_bounds = array<i64: 1, 384>}, {pipeline_mode = #tpu.pipeline_mode<synchronous>, transform_indices = @transform_5, window_bounds = array<i64: 1920, 128>}, {pipeline_mode = #tpu.pipeline_mode<synchronous>, transform_indices = @transform_6, window_bounds = array<i64: 1, 128>}, {pipeline_mode = #tpu.pipeline_mode<synchronous>, transform_indices = @transform_7, window_bounds = array<i64: 128, 128>}, {pipeline_mode = #tpu.pipeline_mode<synchronous>, transform_indices = @transform_8, window_bounds = array<i64: 1, 128>}, {transform_indices = @transform_9, window_bounds = array<i64: 8, 128>}]} {
    %c0 = arith.constant 0 : index
    %c0_0 = arith.constant 0 : index
    %c0_1 = arith.constant 0 : index
    %0 = vector.load %arg1[%c0, %c0_0, %c0_1] : memref<26x8x84xf32, #tpu.memory_space<vmem>>, vector<26x8x84xf32>
    %1 = vector.shape_cast %0 : vector<26x8x84xf32> to vector<208x84xf32>
    %2 = arith.truncf %1 : vector<208x84xf32> to vector<208x84xbf16>
    %c0_2 = arith.constant 0 : index
    %c0_3 = arith.constant 0 : index
    %3 = vector.load %arg2[%c0_2, %c0_3] : memref<84x1024xbf16, #tpu.memory_space<vmem>>, vector<84x1024xbf16>
    %cst = arith.constant dense<0.000000e+00> : vector<208x1024xf32>
    %4 = tpu.matmul %2, %3, %cst {dimension_numbers = #tpu.dot_dimension_numbers<[1], [0], [0], [1], [0, 0, 1, 1], [], []>} : vector<208x84xbf16>, vector<84x1024xbf16>, vector<208x1024xf32> -> vector<208x1024xf32>
    %5 = vector.extract_strided_slice %4 {offsets = [0, 0], sizes = [208, 512], strides = [1, 1]} : vector<208x1024xf32> to vector<208x512xf32>
    %6 = vector.extract_strided_slice %4 {offsets = [0, 512], sizes = [208, 512], strides = [1, 1]} : vector<208x1024xf32> to vector<208x512xf32>
    %7 = arith.maximumf %5, %6 : vector<208x512xf32>
    %c0_4 = arith.constant 0 : index
    %c0_5 = arith.constant 0 : index
    %8 = vector.load %arg3[%c0_4, %c0_5] : memref<1x512xf32, #tpu.memory_space<vmem>>, vector<1x512xf32>
    %9 = vector.broadcast %8 : vector<1x512xf32> to vector<208x512xf32>
    %10 = arith.addf %7, %9 : vector<208x512xf32>
    %cst_6 = arith.constant 0.000000e+00 : f32
    %11 = vector.broadcast %cst_6 : f32 to vector<208x512xf32>
    %12 = arith.maximumf %10, %11 : vector<208x512xf32>
    %13 = vector.shape_cast %12 : vector<208x512xf32> to vector<13x2x8x512xf32>
    %14 = vector.extract_strided_slice %13 {offsets = [0, 0, 0, 0], sizes = [13, 1, 8, 512], strides = [1, 1, 1, 1]} : vector<13x2x8x512xf32> to vector<13x1x8x512xf32>
    %15 = vector.shape_cast %14 : vector<13x1x8x512xf32> to vector<13x8x512xf32>
    %16 = vector.extract_strided_slice %13 {offsets = [0, 1, 0, 0], sizes = [13, 1, 8, 512], strides = [1, 1, 1, 1]} : vector<13x2x8x512xf32> to vector<13x1x8x512xf32>
    %17 = vector.shape_cast %16 : vector<13x1x8x512xf32> to vector<13x8x512xf32>
    %18 = arith.maximumf %15, %17 : vector<13x8x512xf32>
    %19 = vector.extract_strided_slice %18 {offsets = [0, 0, 0], sizes = [10, 8, 512], strides = [1, 1, 1]} : vector<13x8x512xf32> to vector<10x8x512xf32>
    %20 = vector.shape_cast %19 : vector<10x8x512xf32> to vector<80x512xf32>
    %21 = arith.truncf %20 : vector<80x512xf32> to vector<80x512xbf16>
    %c0_7 = arith.constant 0 : index
    %c0_8 = arith.constant 0 : index
    %c0_9 = arith.constant 0 : index
    %22 = vector.load %arg4[%c0_7, %c0_8, %c0_9] : memref<3x512x768xbf16, #tpu.memory_space<vmem>>, vector<1x512x768xbf16>
    %23 = vector.shape_cast %22 : vector<1x512x768xbf16> to vector<512x768xbf16>
    %cst_10 = arith.constant dense<0.000000e+00> : vector<80x768xf32>
    %24 = tpu.matmul %21, %23, %cst_10 {dimension_numbers = #tpu.dot_dimension_numbers<[1], [0], [0], [1], [0, 0, 1, 1], [], []>} : vector<80x512xbf16>, vector<512x768xbf16>, vector<80x768xf32> -> vector<80x768xf32>
    %25 = vector.extract_strided_slice %18 {offsets = [1, 0, 0], sizes = [10, 8, 512], strides = [1, 1, 1]} : vector<13x8x512xf32> to vector<10x8x512xf32>
    %26 = vector.shape_cast %25 : vector<10x8x512xf32> to vector<80x512xf32>
    %27 = arith.truncf %26 : vector<80x512xf32> to vector<80x512xbf16>
    %c1 = arith.constant 1 : index
    %c0_11 = arith.constant 0 : index
    %c0_12 = arith.constant 0 : index
    %28 = vector.load %arg4[%c1, %c0_11, %c0_12] : memref<3x512x768xbf16, #tpu.memory_space<vmem>>, vector<1x512x768xbf16>
    %29 = vector.shape_cast %28 : vector<1x512x768xbf16> to vector<512x768xbf16>
    %cst_13 = arith.constant dense<0.000000e+00> : vector<80x768xf32>
    %30 = tpu.matmul %27, %29, %cst_13 {dimension_numbers = #tpu.dot_dimension_numbers<[1], [0], [0], [1], [0, 0, 1, 1], [], []>} : vector<80x512xbf16>, vector<512x768xbf16>, vector<80x768xf32> -> vector<80x768xf32>
    %31 = arith.addf %24, %30 : vector<80x768xf32>
    %32 = vector.extract_strided_slice %18 {offsets = [2, 0, 0], sizes = [10, 8, 512], strides = [1, 1, 1]} : vector<13x8x512xf32> to vector<10x8x512xf32>
    %33 = vector.shape_cast %32 : vector<10x8x512xf32> to vector<80x512xf32>
    %34 = arith.truncf %33 : vector<80x512xf32> to vector<80x512xbf16>
    %c2 = arith.constant 2 : index
    %c0_14 = arith.constant 0 : index
    %c0_15 = arith.constant 0 : index
    %35 = vector.load %arg4[%c2, %c0_14, %c0_15] : memref<3x512x768xbf16, #tpu.memory_space<vmem>>, vector<1x512x768xbf16>
    %36 = vector.shape_cast %35 : vector<1x512x768xbf16> to vector<512x768xbf16>
    %cst_16 = arith.constant dense<0.000000e+00> : vector<80x768xf32>
    %37 = tpu.matmul %34, %36, %cst_16 {dimension_numbers = #tpu.dot_dimension_numbers<[1], [0], [0], [1], [0, 0, 1, 1], [], []>} : vector<80x512xbf16>, vector<512x768xbf16>, vector<80x768xf32> -> vector<80x768xf32>
    %38 = arith.addf %31, %37 : vector<80x768xf32>
    %39 = vector.extract_strided_slice %38 {offsets = [0, 0], sizes = [80, 384], strides = [1, 1]} : vector<80x768xf32> to vector<80x384xf32>
    %40 = vector.extract_strided_slice %38 {offsets = [0, 384], sizes = [80, 384], strides = [1, 1]} : vector<80x768xf32> to vector<80x384xf32>
    %41 = arith.maximumf %39, %40 : vector<80x384xf32>
    %c0_17 = arith.constant 0 : index
    %c0_18 = arith.constant 0 : index
    %42 = vector.load %arg5[%c0_17, %c0_18] : memref<1x384xf32, #tpu.memory_space<vmem>>, vector<1x384xf32>
    %43 = vector.broadcast %42 : vector<1x384xf32> to vector<80x384xf32>
    %44 = arith.addf %41, %43 : vector<80x384xf32>
    %cst_19 = arith.constant 0.000000e+00 : f32
    %45 = vector.broadcast %cst_19 : f32 to vector<80x384xf32>
    %46 = arith.maximumf %44, %45 : vector<80x384xf32>
    %47 = vector.shape_cast %46 : vector<80x384xf32> to vector<5x2x8x384xf32>
    %48 = vector.extract_strided_slice %47 {offsets = [0, 0, 0, 0], sizes = [5, 1, 8, 384], strides = [1, 1, 1, 1]} : vector<5x2x8x384xf32> to vector<5x1x8x384xf32>
    %49 = vector.shape_cast %48 : vector<5x1x8x384xf32> to vector<5x8x384xf32>
    %50 = vector.extract_strided_slice %47 {offsets = [0, 1, 0, 0], sizes = [5, 1, 8, 384], strides = [1, 1, 1, 1]} : vector<5x2x8x384xf32> to vector<5x1x8x384xf32>
    %51 = vector.shape_cast %50 : vector<5x1x8x384xf32> to vector<5x8x384xf32>
    %52 = arith.maximumf %49, %51 : vector<5x8x384xf32>
    %53 = vector.extract_strided_slice %52 {offsets = [0, 0, 0], sizes = [1, 8, 384], strides = [1, 1, 1]} : vector<5x8x384xf32> to vector<1x8x384xf32>
    %54 = vector.shape_cast %53 : vector<1x8x384xf32> to vector<8x384xf32>
    %55 = vector.extract_strided_slice %52 {offsets = [1, 0, 0], sizes = [1, 8, 384], strides = [1, 1, 1]} : vector<5x8x384xf32> to vector<1x8x384xf32>
    %56 = vector.shape_cast %55 : vector<1x8x384xf32> to vector<8x384xf32>
    %57 = vector.extract_strided_slice %52 {offsets = [2, 0, 0], sizes = [1, 8, 384], strides = [1, 1, 1]} : vector<5x8x384xf32> to vector<1x8x384xf32>
    %58 = vector.shape_cast %57 : vector<1x8x384xf32> to vector<8x384xf32>
    %59 = vector.extract_strided_slice %52 {offsets = [3, 0, 0], sizes = [1, 8, 384], strides = [1, 1, 1]} : vector<5x8x384xf32> to vector<1x8x384xf32>
    %60 = vector.shape_cast %59 : vector<1x8x384xf32> to vector<8x384xf32>
    %61 = vector.extract_strided_slice %52 {offsets = [4, 0, 0], sizes = [1, 8, 384], strides = [1, 1, 1]} : vector<5x8x384xf32> to vector<1x8x384xf32>
    %62 = vector.shape_cast %61 : vector<1x8x384xf32> to vector<8x384xf32>
    %63 = tpu.concatenate %54, %56, %58, %60, %62 in 1 : vector<8x384xf32>, vector<8x384xf32>, vector<8x384xf32>, vector<8x384xf32>, vector<8x384xf32> -> vector<8x1920xf32>
    %64 = arith.truncf %63 : vector<8x1920xf32> to vector<8x1920xbf16>
    %c0_20 = arith.constant 0 : index
    %c0_21 = arith.constant 0 : index
    %65 = vector.load %arg6[%c0_20, %c0_21] : memref<1920x128xbf16, #tpu.memory_space<vmem>>, vector<1920x128xbf16>
    %cst_22 = arith.constant dense<0.000000e+00> : vector<8x128xf32>
    %66 = tpu.matmul %64, %65, %cst_22 {dimension_numbers = #tpu.dot_dimension_numbers<[1], [0], [0], [1], [0, 0, 1, 1], [], []>} : vector<8x1920xbf16>, vector<1920x128xbf16>, vector<8x128xf32> -> vector<8x128xf32>
    %c0_23 = arith.constant 0 : index
    %c0_24 = arith.constant 0 : index
    %67 = vector.load %arg7[%c0_23, %c0_24] : memref<1x128xf32, #tpu.memory_space<vmem>>, vector<1x128xf32>
    %68 = vector.broadcast %67 : vector<1x128xf32> to vector<8x128xf32>
    %69 = arith.addf %66, %68 : vector<8x128xf32>
    %cst_25 = arith.constant 0.000000e+00 : f32
    %70 = vector.broadcast %cst_25 : f32 to vector<8x128xf32>
    %71 = arith.maximumf %69, %70 : vector<8x128xf32>
    %72 = arith.truncf %71 : vector<8x128xf32> to vector<8x128xbf16>
    %c0_26 = arith.constant 0 : index
    %c0_27 = arith.constant 0 : index
    %73 = vector.load %arg8[%c0_26, %c0_27] : memref<128x128xbf16, #tpu.memory_space<vmem>>, vector<128x128xbf16>
    %cst_28 = arith.constant dense<0.000000e+00> : vector<8x128xf32>
    %74 = tpu.matmul %72, %73, %cst_28 {dimension_numbers = #tpu.dot_dimension_numbers<[1], [0], [0], [1], [0, 0, 1, 1], [], []>} : vector<8x128xbf16>, vector<128x128xbf16>, vector<8x128xf32> -> vector<8x128xf32>
    %c0_29 = arith.constant 0 : index
    %c0_30 = arith.constant 0 : index
    %75 = vector.load %arg9[%c0_29, %c0_30] : memref<1x128xf32, #tpu.memory_space<vmem>>, vector<1x128xf32>
    %76 = vector.broadcast %75 : vector<1x128xf32> to vector<8x128xf32>
    %77 = arith.addf %74, %76 : vector<8x128xf32>
    %c0_31 = arith.constant 0 : index
    %c0_32 = arith.constant 0 : index
    %78 = vector.load %arg10[%c0_31, %c0_32] : memref<8x128xf32, #tpu.memory_space<vmem>>, vector<8x128xf32>
    tpu.vector_store %arg10[%c0_31, %c0_32], %77 {strides = array<i32>} : memref<8x128xf32, #tpu.memory_space<vmem>>, vector<8x128xf32>,
    return
  }
  func.func @transform_0(%arg0: i32) -> (i32, i32, i32) {
    %c0_i32 = arith.constant 0 : i32
    %c0_i32_0 = arith.constant 0 : i32
    %c0_i32_1 = arith.constant 0 : i32
    return %c0_i32, %arg0, %c0_i32_0 : i32, i32, i32
  }
  func.func @transform_1(%arg0: i32) -> (i32, i32) {
    %c0_i32 = arith.constant 0 : i32
    %c0_i32_0 = arith.constant 0 : i32
    %c0_i32_1 = arith.constant 0 : i32
    return %c0_i32, %c0_i32_0 : i32, i32
  }
  func.func @transform_2(%arg0: i32) -> (i32, i32) {
    %c0_i32 = arith.constant 0 : i32
    %c0_i32_0 = arith.constant 0 : i32
    %c0_i32_1 = arith.constant 0 : i32
    return %c0_i32, %c0_i32_0 : i32, i32
  }
  func.func @transform_3(%arg0: i32) -> (i32, i32, i32) {
    %c0_i32 = arith.constant 0 : i32
    %c0_i32_0 = arith.constant 0 : i32
    %c0_i32_1 = arith.constant 0 : i32
    %c0_i32_2 = arith.constant 0 : i32
    return %c0_i32, %c0_i32_0, %c0_i32_1 : i32, i32, i32
  }
  func.func @transform_4(%arg0: i32) -> (i32, i32) {
    %c0_i32 = arith.constant 0 : i32
    %c0_i32_0 = arith.constant 0 : i32
    %c0_i32_1 = arith.constant 0 : i32
    return %c0_i32, %c0_i32_0 : i32, i32
  }
  func.func @transform_5(%arg0: i32) -> (i32, i32) {
    %c0_i32 = arith.constant 0 : i32
    %c0_i32_0 = arith.constant 0 : i32
    %c0_i32_1 = arith.constant 0 : i32
    return %c0_i32, %c0_i32_0 : i32, i32
  }
  func.func @transform_6(%arg0: i32) -> (i32, i32) {
    %c0_i32 = arith.constant 0 : i32
    %c0_i32_0 = arith.constant 0 : i32
    %c0_i32_1 = arith.constant 0 : i32
    return %c0_i32, %c0_i32_0 : i32, i32
  }
  func.func @transform_7(%arg0: i32) -> (i32, i32) {
    %c0_i32 = arith.constant 0 : i32
    %c0_i32_0 = arith.constant 0 : i32
    %c0_i32_1 = arith.constant 0 : i32
    return %c0_i32, %c0_i32_0 : i32, i32
  }
  func.func @transform_8(%arg0: i32) -> (i32, i32) {
    %c0_i32 = arith.constant 0 : i32
    %c0_i32_0 = arith.constant 0 : i32
    %c0_i32_1 = arith.constant 0 : i32
    return %c0_i32, %c0_i32_0 : i32, i32
  }
  func.func @transform_9(%arg0: i32) -> (i32, i32) {
    %c0_i32 = arith.constant 0 : i32
    %c0_i32_0 = arith.constant 0 : i32
    return %arg0, %c0_i32 : i32, i32
  }
}

</mosaic_0001>

<llo_original>
// kernel: net_forward.1
$region0: #{net_forward.1}
  #allocation0 [shape = 'u32[]', space=smem, size = 0x4, offset = 0x4, fixed_abs, tag = 'smem constant byte address 0x4 - core index']
  #allocation1 [shape = 'u32[72,128]{1,0:T(1,128)}', space=vmem, size = 0x9000, scoped, tag = 'internal scratch']
  %s0 = inlined_call_operand.vmem [shape: f32[26,8,84], index: 0, kind: input, shape index: {}]
  %s1 = inlined_call_operand.hbm [shape: bf16[84,1024], index: 1, kind: input, shape index: {}]
  %s2 = inlined_call_operand.hbm [shape: f32[1,512], index: 2, kind: input, shape index: {}]
  %s3 = inlined_call_operand.hbm [shape: bf16[3,512,768], index: 3, kind: input, shape index: {}]
  %s4 = inlined_call_operand.hbm [shape: f32[1,384], index: 4, kind: input, shape index: {}]
  %s5 = inlined_call_operand.hbm [shape: bf16[1920,128], index: 5, kind: input, shape index: {}]
  %s6 = inlined_call_operand.hbm [shape: f32[1,128], index: 6, kind: input, shape index: {}]
  %s7 = inlined_call_operand.hbm [shape: bf16[128,128], index: 7, kind: input, shape index: {}]
  %s8 = inlined_call_operand.hbm [shape: f32[1,128], index: 8, kind: input, shape index: {}]
  %s9 = inlined_call_operand.vmem [shape: f32[8,128], index: 9, kind: output, shape index: {}]
  %s10 = sld [smem:[#allocation0]]
  $region78: #{net_forward.1} parent=0
    _
  %s12 = ssub.s32 1, %s10
  %s13 = scalar_select 0, %s12, %s10
  $region1: #{net_forward.1} parent=0
    #allocation2 [shape = 'u8[180224]{0}', space=vmem, size = 0x2c000, scoped, tag = 'input window, operand 1, single buffered']
    #allocation3 [shape = 's32[1]{0}', space=sflag, size = 0x4, scoped, tag = 'scoped memory for net_forward.1']
    #allocation4 [shape = 'u8[2048]{0}', space=vmem, size = 0x800, scoped, tag = 'input window, operand 2, single buffered']
    #allocation5 [shape = 's32[1]{0}', space=sflag, size = 0x4, scoped, tag = 'scoped memory for net_forward.1']
    #allocation6 [shape = 'u8[2359296]{0}', space=vmem, size = 0x240000, scoped, tag = 'input window, operand 3, single buffered']
    #allocation7 [shape = 'u8[1536]{0}', space=vmem, size = 0x800, scoped, tag = 'input window, operand 4, single buffered']
    #allocation8 [shape = 's32[1]{0}', space=sflag, size = 0x4, scoped, tag = 'scoped memory for net_forward.1']
    #allocation9 [shape = 'u8[491520]{0}', space=vmem, size = 0x78000, scoped, tag = 'input window, operand 5, single buffered']
    #allocation10 [shape = 'u8[512]{0}', space=vmem, size = 0x400, scoped, tag = 'input window, operand 6, single buffered']
    #allocation11 [shape = 's32[1]{0}', space=sflag, size = 0x4, scoped, tag = 'scoped memory for net_forward.1']
    #allocation12 [shape = 'u8[32768]{0}', space=vmem, size = 0x8000, scoped, tag = 'input window, operand 7, single buffered']
    #allocation13 [shape = 'u8[512]{0}', space=vmem, size = 0x400, scoped, tag = 'input window, operand 8, single buffered']
    #allocation14 [shape = 's32[1]{0}', space=sflag, size = 0x4, scoped, tag = 'scoped memory for net_forward.1']
    %14 = vsyncpa [#allocation3], 0
    %15 = vsyncpa [#allocation5], 0
    %16 = vsyncpa [#allocation8], 0
    %17 = vsyncpa [#allocation11], 0
    %18 = vsyncpa [#allocation14], 0
    // Predicated region
    $region2: #{net_forward.1} parent=1 // pred_check
      _
    $region3: #{net_forward.1} parent=1 // pred_check_branch
      %20 = sbr.rel (0) target = $region5
    $region4: #{net_forward.1} parent=1 // pred_region
      _
    $region5: #{net_forward.1} parent=1 // pred_fallthru
      _
    // Predicated region
    $region6: #{net_forward.1} parent=1 // pred_check
      _
    $region7: #{net_forward.1} parent=1 // pred_check_branch
      %22 = sbr.rel (0) target = $region9
    $region8: #{net_forward.1} parent=1 // pred_region
      %24 = vsyncadd [#allocation3], 0
      %s25 = sshll.u32 %s1, 4
      %s26 = int_to_ptr.hbm [resolvable:$true] %s25
      %s27 = sshll.u32 [#allocation2], 4
      %s28 = int_to_ptr.vmem [resolvable:$true] %s27
      %33 = dma.hbm_to_vmem [thread:$0]  %s26, 5632, %s28, [#allocation3], 512, 512, 32
    $region9: #{net_forward.1} parent=1 // pred_fallthru
      _
    // Predicated region
    $region10: #{net_forward.1} parent=1 // pred_check
      _
    $region11: #{net_forward.1} parent=1 // pred_check_branch
      %35 = sbr.rel (0) target = $region13
    $region12: #{net_forward.1} parent=1 // pred_region
      %37 = vsyncadd [#allocation5], 0
      %s39 = sshll.u32 %s2, 4
      %s40 = int_to_ptr.hbm [resolvable:$true] %s39
      %s41 = sshll.u32 [#allocation4], 4
      %s42 = int_to_ptr.vmem [resolvable:$true] %s41
      %44 = dma.hbm_to_vmem [thread:$0]  %s40, 64, %s42, [#allocation5]
    $region13: #{net_forward.1} parent=1 // pred_fallthru
      _
    // Predicated region
    $region14: #{net_forward.1} parent=1 // pred_check
      _
    $region15: #{net_forward.1} parent=1 // pred_check_branch
      %46 = sbr.rel (0) target = $region17
    $region16: #{net_forward.1} parent=1 // pred_region
      %48 = vsyncadd [#allocation5], 0
      %s49 = sshll.u32 %s3, 4
      %s50 = int_to_ptr.hbm [resolvable:$true] %s49
      %s51 = sshll.u32 [#allocation6], 4
      %s52 = int_to_ptr.vmem [resolvable:$true] %s51
      %57 = dma.hbm_to_vmem [thread:$0]  %s50, 73728, %s52, [#allocation5], 384, 384, 24
    $region17: #{net_forward.1} parent=1 // pred_fallthru
      _
    // Predicated region
    $region18: #{net_forward.1} parent=1 // pred_check
      _
    $region19: #{net_forward.1} parent=1 // pred_check_branch
      %59 = sbr.rel (0) target = $region21
    $region20: #{net_forward.1} parent=1 // pred_region
      %61 = vsyncadd [#allocation8], 0
      %s63 = sshll.u32 %s4, 4
      %s64 = int_to_ptr.hbm [resolvable:$true] %s63
      %s65 = sshll.u32 [#allocation7], 4
      %s66 = int_to_ptr.vmem [resolvable:$true] %s65
      %68 = dma.hbm_to_vmem [thread:$0]  %s64, 48, %s66, [#allocation8]
    $region21: #{net_forward.1} parent=1 // pred_fallthru
      _
    // Predicated region
    $region22: #{net_forward.1} parent=1 // pred_check
      _
    $region23: #{net_forward.1} parent=1 // pred_check_branch
      %70 = sbr.rel (0) target = $region25
    $region24: #{net_forward.1} parent=1 // pred_region
      %72 = vsyncadd [#allocation8], 0
      %s73 = sshll.u32 %s5, 4
      %s74 = int_to_ptr.hbm [resolvable:$true] %s73
      %s75 = sshll.u32 [#allocation9], 4
      %s76 = int_to_ptr.vmem [resolvable:$true] %s75
      %81 = dma.hbm_to_vmem [thread:$0]  %s74, 15360, %s76, [#allocation8], 64, 64, 4
    $region25: #{net_forward.1} parent=1 // pred_fallthru
      _
    // Predicated region
    $region26: #{net_forward.1} parent=1 // pred_check
      _
    $region27: #{net_forward.1} parent=1 // pred_check_branch
      %83 = sbr.rel (0) target = $region29
    $region28: #{net_forward.1} parent=1 // pred_region
      %85 = vsyncadd [#allocation11], 0
      %s87 = sshll.u32 %s6, 4
      %s88 = int_to_ptr.hbm [resolvable:$true] %s87
      %s89 = sshll.u32 [#allocation10], 4
      %s90 = int_to_ptr.vmem [resolvable:$true] %s89
      %92 = dma.hbm_to_vmem [thread:$0]  %s88, 16, %s90, [#allocation11]
    $region29: #{net_forward.1} parent=1 // pred_fallthru
      _
    // Predicated region
    $region30: #{net_forward.1} parent=1 // pred_check
      _
    $region31: #{net_forward.1} parent=1 // pred_check_branch
      %94 = sbr.rel (0) target = $region33
    $region32: #{net_forward.1} parent=1 // pred_region
      %96 = vsyncadd [#allocation11], 0
      %s97 = sshll.u32 %s7, 4
      %s98 = int_to_ptr.hbm [resolvable:$true] %s97
      %s99 = sshll.u32 [#allocation12], 4
      %s100 = int_to_ptr.vmem [resolvable:$true] %s99
      %105 = dma.hbm_to_vmem [thread:$0]  %s98, 1024, %s100, [#allocation11], 64, 64, 4
    $region33: #{net_forward.1} parent=1 // pred_fallthru
      _
    // Predicated region
    $region34: #{net_forward.1} parent=1 // pred_check
      _
    $region35: #{net_forward.1} parent=1 // pred_check_branch
      %107 = sbr.rel (0) target = $region37
    $region36: #{net_forward.1} parent=1 // pred_region
      %109 = vsyncadd [#allocation14], 0
      %s111 = sshll.u32 %s8, 4
      %s112 = int_to_ptr.hbm [resolvable:$true] %s111
      %s113 = sshll.u32 [#allocation13], 4
      %s114 = int_to_ptr.vmem [resolvable:$true] %s113
      %116 = dma.hbm_to_vmem [thread:$0]  %s112, 16, %s114, [#allocation14]
    $region37: #{net_forward.1} parent=1 // pred_fallthru
      _
    // Predicated region
    $region38: #{net_forward.1} parent=1 // pred_check
      _
    $region39: #{net_forward.1} parent=1 // pred_check_branch
      %118 = sbr.rel (0) target = $region41
    $region40: #{net_forward.1} parent=1 // pred_region
      %120 = dma.done [#allocation3], 5632
    $region41: #{net_forward.1} parent=1 // pred_fallthru
      _
    // Predicated region
    $region42: #{net_forward.1} parent=1 // pred_check
      _
    $region43: #{net_forward.1} parent=1 // pred_check_branch
      %122 = sbr.rel (0) target = $region45
    $region44: #{net_forward.1} parent=1 // pred_region
      %124 = dma.done [#allocation5], 64
    $region45: #{net_forward.1} parent=1 // pred_fallthru
      _
    // Predicated region
    $region46: #{net_forward.1} parent=1 // pred_check
      _
    $region47: #{net_forward.1} parent=1 // pred_check_branch
      %126 = sbr.rel (0) target = $region49
    $region48: #{net_forward.1} parent=1 // pred_region
      %128 = dma.done [#allocation5], 73728
    $region49: #{net_forward.1} parent=1 // pred_fallthru
      _
    // Predicated region
    $region50: #{net_forward.1} parent=1 // pred_check
      _
    $region51: #{net_forward.1} parent=1 // pred_check_branch
      %130 = sbr.rel (0) target = $region53
    $region52: #{net_forward.1} parent=1 // pred_region
      %132 = dma.done [#allocation8], 48
    $region53: #{net_forward.1} parent=1 // pred_fallthru
      _
    // Predicated region
    $region54: #{net_forward.1} parent=1 // pred_check
      _
    $region55: #{net_forward.1} parent=1 // pred_check_branch
      %134 = sbr.rel (0) target = $region57
    $region56: #{net_forward.1} parent=1 // pred_region
      %136 = dma.done [#allocation8], 15360
    $region57: #{net_forward.1} parent=1 // pred_fallthru
      _
    // Predicated region
    $region58: #{net_forward.1} parent=1 // pred_check
      _
    $region59: #{net_forward.1} parent=1 // pred_check_branch
      %138 = sbr.rel (0) target = $region61
    $region60: #{net_forward.1} parent=1 // pred_region
      %140 = dma.done [#allocation11], 16
    $region61: #{net_forward.1} parent=1 // pred_fallthru
      _
    // Predicated region
    $region62: #{net_forward.1} parent=1 // pred_check
      _
    $region63: #{net_forward.1} parent=1 // pred_check_branch
      %142 = sbr.rel (0) target = $region65
    $region64: #{net_forward.1} parent=1 // pred_region
      %144 = dma.done [#allocation11], 1024
    $region65: #{net_forward.1} parent=1 // pred_fallthru
      _
    // Predicated region
    $region66: #{net_forward.1} parent=1 // pred_check
      _
    $region67: #{net_forward.1} parent=1 // pred_check_branch
      %146 = sbr.rel (0) target = $region69
    $region68: #{net_forward.1} parent=1 // pred_region
      %148 = dma.done [#allocation14], 16
    $region69: #{net_forward.1} parent=1 // pred_fallthru
      _
    %v150 = vld [vmem:[%s0] sm:$0xff]
    %v151 = vld [vmem:[%s0 + $0x8] sm:$0xff]
    %v152 = vld [vmem:[%s0 + $0x10] sm:$0xff]
    %v153 = vld [vmem:[%s0 + $0x18] sm:$0xff]
    %v154 = vld [vmem:[%s0 + $0x20] sm:$0xff]
    %v155 = vld [vmem:[%s0 + $0x28] sm:$0xff]
    %v156 = vld [vmem:[%s0 + $0x30] sm:$0xff]
    %v157 = vld [vmem:[%s0 + $0x38] sm:$0xff]
    %v158 = vld [vmem:[%s0 + $0x40] sm:$0xff]
    %v159 = vld [vmem:[%s0 + $0x48] sm:$0xff]
    %v160 = vld [vmem:[%s0 + $0x50] sm:$0xff]
    %v161 = vld [vmem:[%s0 + $0x58] sm:$0xff]
    %v162 = vld [vmem:[%s0 + $0x60] sm:$0xff]
    %v163 = vld [vmem:[%s0 + $0x68] sm:$0xff]
    %v164 = vld [vmem:[%s0 + $0x70] sm:$0xff]
    %v165 = vld [vmem:[%s0 + $0x78] sm:$0xff]
    %v166 = vld [vmem:[%s0 + $0x80] sm:$0xff]
    %v167 = vld [vmem:[%s0 + $0x88] sm:$0xff]
    %v168 = vld [vmem:[%s0 + $0x90] sm:$0xff]
    %v169 = vld [vmem:[%s0 + $0x98] sm:$0xff]
    %v170 = vld [vmem:[%s0 + $0xa0] sm:$0xff]
    %v171 = vld [vmem:[%s0 + $0xa8] sm:$0xff]
    %v172 = vld [vmem:[%s0 + $0xb0] sm:$0xff]
    %v173 = vld [vmem:[%s0 + $0xb8] sm:$0xff]
    %v174 = vld [vmem:[%s0 + $0xc0] sm:$0xff]
    %v175 = vld [vmem:[%s0 + $0xc8] sm:$0xff]
    %v176 = vpack.c.bf16 %v151, %v150
    %v177 = vpack.c.bf16 %v153, %v152
    %v178 = vpack.c.bf16 %v155, %v154
    %v179 = vpack.c.bf16 %v157, %v156
    %v180 = vpack.c.bf16 %v159, %v158
    %v181 = vpack.c.bf16 %v161, %v160
    %v182 = vpack.c.bf16 %v163, %v162
    %v183 = vpack.c.bf16 %v165, %v164
    %v184 = vpack.c.bf16 %v167, %v166
    %v185 = vpack.c.bf16 %v169, %v168
    %v186 = vpack.c.bf16 %v171, %v170
    %v187 = vpack.c.bf16 %v173, %v172
    %v188 = vpack.c.bf16 %v175, %v174
    %v189 = vld [vmem:[#allocation2] sm:$0xff]
    %v190 = vld [vmem:[#allocation2 + $0x8] sm:$0xff]
    %v191 = vld [vmem:[#allocation2 + $0x10] sm:$0xff]
    %v192 = vld [vmem:[#allocation2 + $0x18] sm:$0xff]
    %v193 = vld [vmem:[#allocation2 + $0x20] sm:$0xff]
    %v194 = vld [vmem:[#allocation2 + $0x28] sm:$0xff]
    %v195 = vld [vmem:[#allocation2 + $0x30] sm:$0xff]
    %v196 = vld [vmem:[#allocation2 + $0x38] sm:$0xff]
    %v197 = vld [vmem:[#allocation2 + $0x40] sm:$0xff]
    %v198 = vld [vmem:[#allocation2 + $0x48] sm:$0xff]
    %v199 = vld [vmem:[#allocation2 + $0x50] sm:$0xff]
    %v200 = vld [vmem:[#allocation2 + $0x58] sm:$0xff]
    %v201 = vld [vmem:[#allocation2 + $0x60] sm:$0xff]
    %v202 = vld [vmem:[#allocation2 + $0x68] sm:$0xff]
    %v203 = vld [vmem:[#allocation2 + $0x70] sm:$0xff]
    %v204 = vld [vmem:[#allocation2 + $0x78] sm:$0xff]
    %v205 = vld [vmem:[#allocation2 + $0x80] sm:$0xff]
    %v206 = vld [vmem:[#allocation2 + $0x88] sm:$0xff]
    %v207 = vld [vmem:[#allocation2 + $0x90] sm:$0xff]
    %v208 = vld [vmem:[#allocation2 + $0x98] sm:$0xff]
    %v209 = vld [vmem:[#allocation2 + $0xa0] sm:$0xff]
    %v210 = vld [vmem:[#allocation2 + $0xa8] sm:$0xff]
    %v211 = vld [vmem:[#allocation2 + $0xb0] sm:$0xff]
    %v212 = vld [vmem:[#allocation2 + $0xb8] sm:$0xff]
    %v213 = vld [vmem:[#allocation2 + $0xc0] sm:$0xff]
    %v214 = vld [vmem:[#allocation2 + $0xc8] sm:$0xff]
    %v215 = vld [vmem:[#allocation2 + $0xd0] sm:$0xff]
    %v216 = vld [vmem:[#allocation2 + $0xd8] sm:$0xff]
    %v217 = vld [vmem:[#allocation2 + $0xe0] sm:$0xff]
    %v218 = vld [vmem:[#allocation2 + $0xe8] sm:$0xff]
    %v219 = vld [vmem:[#allocation2 + $0xf0] sm:$0xff]
    %v220 = vld [vmem:[#allocation2 + $0xf8] sm:$0xff]
    %v221 = vld [vmem:[#allocation2 + $0x100] sm:$0xff]
    %v222 = vld [vmem:[#allocation2 + $0x108] sm:$0xff]
    %v223 = vld [vmem:[#allocation2 + $0x110] sm:$0xff]
    %v224 = vld [vmem:[#allocation2 + $0x118] sm:$0xff]
    %v225 = vld [vmem:[#allocation2 + $0x120] sm:$0xff]
    %v226 = vld [vmem:[#allocation2 + $0x128] sm:$0xff]
    %v227 = vld [vmem:[#allocation2 + $0x130] sm:$0xff]
    %v228 = vld [vmem:[#allocation2 + $0x138] sm:$0xff]
    %v229 = vld [vmem:[#allocation2 + $0x140] sm:$0x33]
    %v230 = vld [vmem:[#allocation2 + $0x148] sm:$0x33]
    %v231 = vld [vmem:[#allocation2 + $0x150] sm:$0x33]
    %v232 = vld [vmem:[#allocation2 + $0x158] sm:$0x33]
    %v277 = vunpack.c.l.b16 %v189
    %v278 = vunpack.c.h.b16 %v189
    %v279 = vunpack.c.l.b16 %v190
    %v280 = vunpack.c.h.b16 %v190
    %v281 = vunpack.c.l.b16 %v191
    %v282 = vunpack.c.h.b16 %v191
    %v283 = vunpack.c.l.b16 %v192
    %v284 = vunpack.c.h.b16 %v192
    %v285 = vunpack.c.l.b16 %v193
    %v286 = vunpack.c.h.b16 %v193
    %v287 = vunpack.c.l.b16 %v194
    %v288 = vunpack.c.h.b16 %v194
    %v289 = vunpack.c.l.b16 %v195
    %v290 = vunpack.c.h.b16 %v195
    %v291 = vunpack.c.l.b16 %v196
    %v292 = vunpack.c.h.b16 %v196
    %v293 = vunpack.c.l.b16 %v197
    %v294 = vunpack.c.h.b16 %v197
    %v295 = vunpack.c.l.b16 %v198
    %v296 = vunpack.c.h.b16 %v198
    %v297 = vunpack.c.l.b16 %v199
    %v298 = vunpack.c.h.b16 %v199
    %v299 = vunpack.c.l.b16 %v200
    %v300 = vunpack.c.h.b16 %v200
    %v301 = vunpack.c.l.b16 %v201
    %v302 = vunpack.c.h.b16 %v201
    %v303 = vunpack.c.l.b16 %v202
    %v304 = vunpack.c.h.b16 %v202
    %v305 = vunpack.c.l.b16 %v203
    %v306 = vunpack.c.h.b16 %v203
    %v307 = vunpack.c.l.b16 %v204
    %v308 = vunpack.c.h.b16 %v204
    %v309 = vunpack.c.l.b16 %v205
    %v310 = vunpack.c.h.b16 %v205
    %v311 = vunpack.c.l.b16 %v206
    %v312 = vunpack.c.h.b16 %v206
    %v313 = vunpack.c.l.b16 %v207
    %v314 = vunpack.c.h.b16 %v207
    %v315 = vunpack.c.l.b16 %v208
    %v316 = vunpack.c.h.b16 %v208
    %v317 = vunpack.c.l.b16 %v209
    %v318 = vunpack.c.h.b16 %v209
    %v319 = vunpack.c.l.b16 %v210
    %v320 = vunpack.c.h.b16 %v210
    %v321 = vunpack.c.l.b16 %v211
    %v322 = vunpack.c.h.b16 %v211
    %v323 = vunpack.c.l.b16 %v212
    %v324 = vunpack.c.h.b16 %v212
    %v325 = vunpack.c.l.b16 %v213
    %v326 = vunpack.c.h.b16 %v213
    %v327 = vunpack.c.l.b16 %v214
    %v328 = vunpack.c.h.b16 %v214
    %v329 = vunpack.c.l.b16 %v215
    %v330 = vunpack.c.h.b16 %v215
    %v331 = vunpack.c.l.b16 %v216
    %v332 = vunpack.c.h.b16 %v216
    %v333 = vunpack.c.l.b16 %v217
    %v334 = vunpack.c.h.b16 %v217
    %v335 = vunpack.c.l.b16 %v218
    %v336 = vunpack.c.h.b16 %v218
    %v337 = vunpack.c.l.b16 %v219
    %v338 = vunpack.c.h.b16 %v219
    %v339 = vunpack.c.l.b16 %v220
    %v340 = vunpack.c.h.b16 %v220
    %v341 = vunpack.c.l.b16 %v221
    %v342 = vunpack.c.h.b16 %v221
    %v343 = vunpack.c.l.b16 %v222
    %v344 = vunpack.c.h.b16 %v222
    %v345 = vunpack.c.l.b16 %v223
    %v346 = vunpack.c.h.b16 %v223
    %v347 = vunpack.c.l.b16 %v224
    %v348 = vunpack.c.h.b16 %v224
    %v349 = vunpack.c.l.b16 %v225
    %v350 = vunpack.c.h.b16 %v225
    %v351 = vunpack.c.l.b16 %v226
    %v352 = vunpack.c.h.b16 %v226
    %v353 = vunpack.c.l.b16 %v227
    %v354 = vunpack.c.h.b16 %v227
    %v355 = vunpack.c.l.b16 %v228
    %v356 = vunpack.c.h.b16 %v228
    %v357 = vunpack.c.l.b16 %v229
    %v358 = vunpack.c.h.b16 %v229
    %v359 = vunpack.c.l.b16 %v230
    %v360 = vunpack.c.h.b16 %v230
    %v361 = vunpack.c.l.b16 %v231
    %v362 = vunpack.c.h.b16 %v231
    %v363 = vunpack.c.l.b16 %v232
    %v364 = vunpack.c.h.b16 %v232
    %v365 = vpack.c.b16 %v285, %v277
    %v366 = vpack.c.b16 %v286, %v278
    %v367 = vpack.c.b16 %v287, %v279
    %v368 = vpack.c.b16 %v288, %v280
    %v369 = vpack.c.b16 %v289, %v281
    %v370 = vpack.c.b16 %v290, %v282
    %v371 = vpack.c.b16 %v291, %v283
    %v372 = vpack.c.b16 %v292, %v284
    %v373 = vpack.c.b16 %v301, %v293
    %v374 = vpack.c.b16 %v302, %v294
    %v375 = vpack.c.b16 %v303, %v295
    %v376 = vpack.c.b16 %v304, %v296
    %v377 = vpack.c.b16 %v305, %v297
    %v378 = vpack.c.b16 %v306, %v298
    %v379 = vpack.c.b16 %v307, %v299
    %v380 = vpack.c.b16 %v308, %v300
    %v381 = vpack.c.b16 %v317, %v309
    %v382 = vpack.c.b16 %v318, %v310
    %v383 = vpack.c.b16 %v319, %v311
    %v384 = vpack.c.b16 %v320, %v312
    %v385 = vpack.c.b16 %v321, %v313
    %v386 = vpack.c.b16 %v322, %v314
    %v387 = vpack.c.b16 %v323, %v315
    %v388 = vpack.c.b16 %v324, %v316
    %v389 = vpack.c.b16 %v333, %v325
    %v390 = vpack.c.b16 %v334, %v326
    %v391 = vpack.c.b16 %v335, %v327
    %v392 = vpack.c.b16 %v336, %v328
    %v393 = vpack.c.b16 %v337, %v329
    %v394 = vpack.c.b16 %v338, %v330
    %v395 = vpack.c.b16 %v339, %v331
    %v396 = vpack.c.b16 %v340, %v332
    %v397 = vpack.c.b16 %v349, %v341
    %v398 = vpack.c.b16 %v350, %v342
    %v399 = vpack.c.b16 %v351, %v343
    %v400 = vpack.c.b16 %v352, %v344
    %v401 = vpack.c.b16 %v353, %v345
    %v402 = vpack.c.b16 %v354, %v346
    %v403 = vpack.c.b16 %v355, %v347
    %v404 = vpack.c.b16 %v356, %v348
    %v405 = vpack.c.b16 %v357, %v357
    %v406 = vpack.c.b16 %v358, %v358
    %v407 = vpack.c.b16 %v359, %v359
    %v408 = vpack.c.b16 %v360, %v360
    %v409 = vpack.c.b16 %v361, %v361
    %v410 = vpack.c.b16 %v362, %v362
    %v411 = vpack.c.b16 %v363, %v363
    %v412 = vpack.c.b16 %v364, %v364
    %vm453 = vcmask 687104
    %v455 = vsel %vm453, %v176, 0
    %v458 = vsel %vm453, %v177, 0
    %v461 = vsel %vm453, %v178, 0
    %v464 = vsel %vm453, %v179, 0
    %v467 = vsel %vm453, %v180, 0
    %v470 = vsel %vm453, %v181, 0
    %v473 = vsel %vm453, %v182, 0
    %v476 = vsel %vm453, %v183, 0
    %v479 = vsel %vm453, %v184, 0
    %v482 = vsel %vm453, %v185, 0
    %v485 = vsel %vm453, %v186, 0
    %v488 = vsel %vm453, %v187, 0
    %v491 = vsel %vm453, %v188, 0
    %vm493 = vcmask 1041408
    %v495 = vsel %vm493, %v405, 0
    %v498 = vsel %vm493, %v406, 0
    %v501 = vsel %vm493, %v407, 0
    %v504 = vsel %vm493, %v408, 0
    %v507 = vsel %vm493, %v409, 0
    %v510 = vsel %vm493, %v410, 0
    %v513 = vsel %vm493, %v411, 0
    %v516 = vsel %vm493, %v412, 0
    %518 = vmatpush.bf16.msra.mxu0 0
    %519 = vmatpush.bf16.msra.mxu0 0
    %520 = vmatpush.bf16.msra.mxu0 %v495
    %521 = vmatpush.bf16.msra.mxu0 %v397
    %522 = vmatpush.bf16.msra.mxu0 %v389
    %523 = vmatpush.bf16.msra.mxu0 %v381
    %524 = vmatpush.bf16.msra.mxu0 %v373
    %525 = vmatpush.bf16.msra.mxu0 %v365
    %526 = vmatmul.bf16.gmra.mxu0 %v455
    %v527 = vpop.f32.mrf.mxu0
    %v528 = vadd.f32 0.0, %v527
    %v529 = vpop.f32.mrf.mxu0
    %v530 = vadd.f32 0.0, %v529
    %531 = vmatmul.bf16.gmra.mxu0 %v458
    %v532 = vpop.f32.mrf.mxu0
    %v533 = vadd.f32 0.0, %v532
    %v534 = vpop.f32.mrf.mxu0
    %v535 = vadd.f32 0.0, %v534
    %536 = vmatmul.bf16.gmra.mxu0 %v461
    %v537 = vpop.f32.mrf.mxu0
    %v538 = vadd.f32 0.0, %v537
    %v539 = vpop.f32.mrf.mxu0
    %v540 = vadd.f32 0.0, %v539
    %541 = vmatmul.bf16.gmra.mxu0 %v464
    %v542 = vpop.f32.mrf.mxu0
    %v543 = vadd.f32 0.0, %v542
    %v544 = vpop.f32.mrf.mxu0
    %v545 = vadd.f32 0.0, %v544
    %546 = vmatmul.bf16.gmra.mxu0 %v467
    %v547 = vpop.f32.mrf.mxu0
    %v548 = vadd.f32 0.0, %v547
    %v549 = vpop.f32.mrf.mxu0
    %v550 = vadd.f32 0.0, %v549
    %551 = vmatmul.bf16.gmra.mxu0 %v470
    %v552 = vpop.f32.mrf.mxu0
    %v553 = vadd.f32 0.0, %v552
    %v554 = vpop.f32.mrf.mxu0
    %v555 = vadd.f32 0.0, %v554
    %556 = vmatmul.bf16.gmra.mxu0 %v473
    %v557 = vpop.f32.mrf.mxu0
    %v558 = vadd.f32 0.0, %v557
    %v559 = vpop.f32.mrf.mxu0
    %v560 = vadd.f32 0.0, %v559
    %561 = vmatmul.bf16.gmra.mxu0 %v476
    %v562 = vpop.f32.mrf.mxu0
    %v563 = vadd.f32 0.0, %v562
    %v564 = vpop.f32.mrf.mxu0
    %v565 = vadd.f32 0.0, %v564
    %566 = vmatmul.bf16.gmra.mxu0 %v479
    %v567 = vpop.f32.mrf.mxu0
    %v568 = vadd.f32 0.0, %v567
    %v569 = vpop.f32.mrf.mxu0
    %v570 = vadd.f32 0.0, %v569
    %571 = vmatmul.bf16.gmra.mxu0 %v482
    %v572 = vpop.f32.mrf.mxu0
    %v573 = vadd.f32 0.0, %v572
    %v574 = vpop.f32.mrf.mxu0
    %v575 = vadd.f32 0.0, %v574
    %576 = vmatmul.bf16.gmra.mxu0 %v485
    %v577 = vpop.f32.mrf.mxu0
    %v578 = vadd.f32 0.0, %v577
    %v579 = vpop.f32.mrf.mxu0
    %v580 = vadd.f32 0.0, %v579
    %581 = vmatmul.bf16.gmra.mxu0 %v488
    %v582 = vpop.f32.mrf.mxu0
    %v583 = vadd.f32 0.0, %v582
    %v584 = vpop.f32.mrf.mxu0
    %v585 = vadd.f32 0.0, %v584
    %586 = vmatmul.bf16.gmra.mxu0 %v491
    %v587 = vpop.f32.mrf.mxu0
    %v588 = vpop.f32.mrf.mxu0
    %589 = vdwg.mxu0
    %590 = vmatpush.bf16.msra.mxu0 0
    %591 = vmatpush.bf16.msra.mxu0 0
    %592 = vmatpush.bf16.msra.mxu0 %v498
    %593 = vmatpush.bf16.msra.mxu0 %v398
    %594 = vmatpush.bf16.msra.mxu0 %v390
    %595 = vmatpush.bf16.msra.mxu0 %v382
    %596 = vmatpush.bf16.msra.mxu0 %v374
    %597 = vmatpush.bf16.msra.mxu0 %v366
    %598 = vmatmul.bf16.gmra.mxu0 %v455
    %v599 = vpop.f32.mrf.mxu0
    %v600 = vadd.f32 0.0, %v599
    %v601 = vpop.f32.mrf.mxu0
    %v602 = vadd.f32 0.0, %v601
    %603 = vmatmul.bf16.gmra.mxu0 %v458
    %v604 = vpop.f32.mrf.mxu0
    %v605 = vadd.f32 0.0, %v604
    %v606 = vpop.f32.mrf.mxu0
    %v607 = vadd.f32 0.0, %v606
    %608 = vmatmul.bf16.gmra.mxu0 %v461
    %v609 = vpop.f32.mrf.mxu0
    %v610 = vadd.f32 0.0, %v609
    %v611 = vpop.f32.mrf.mxu0
    %v612 = vadd.f32 0.0, %v611
    %613 = vmatmul.bf16.gmra.mxu0 %v464
    %v614 = vpop.f32.mrf.mxu0
    %v615 = vadd.f32 0.0, %v614
    %v616 = vpop.f32.mrf.mxu0
    %v617 = vadd.f32 0.0, %v616
    %618 = vmatmul.bf16.gmra.mxu0 %v467
    %v619 = vpop.f32.mrf.mxu0
    %v620 = vadd.f32 0.0, %v619
    %v621 = vpop.f32.mrf.mxu0
    %v622 = vadd.f32 0.0, %v621
    %623 = vmatmul.bf16.gmra.mxu0 %v470
    %v624 = vpop.f32.mrf.mxu0
    %v625 = vadd.f32 0.0, %v624
    %v626 = vpop.f32.mrf.mxu0
    %v627 = vadd.f32 0.0, %v626
    %628 = vmatmul.bf16.gmra.mxu0 %v473
    %v629 = vpop.f32.mrf.mxu0
    %v630 = vadd.f32 0.0, %v629
    %v631 = vpop.f32.mrf.mxu0
    %v632 = vadd.f32 0.0, %v631
    %633 = vmatmul.bf16.gmra.mxu0 %v476
    %v634 = vpop.f32.mrf.mxu0
    %v635 = vadd.f32 0.0, %v634
    %v636 = vpop.f32.mrf.mxu0
    %v637 = vadd.f32 0.0, %v636
    %638 = vmatmul.bf16.gmra.mxu0 %v479
    %v639 = vpop.f32.mrf.mxu0
    %v640 = vadd.f32 0.0, %v639
    %v641 = vpop.f32.mrf.mxu0
    %v642 = vadd.f32 0.0, %v641
    %643 = vmatmul.bf16.gmra.mxu0 %v482
    %v644 = vpop.f32.mrf.mxu0
    %v645 = vadd.f32 0.0, %v644
    %v646 = vpop.f32.mrf.mxu0
    %v647 = vadd.f32 0.0, %v646
    %648 = vmatmul.bf16.gmra.mxu0 %v485
    %v649 = vpop.f32.mrf.mxu0
    %v650 = vadd.f32 0.0, %v649
    %v651 = vpop.f32.mrf.mxu0
    %v652 = vadd.f32 0.0, %v651
    %653 = vmatmul.bf16.gmra.mxu0 %v488
    %v654 = vpop.f32.mrf.mxu0
    %v655 = vadd.f32 0.0, %v654
    %v656 = vpop.f32.mrf.mxu0
    %v657 = vadd.f32 0.0, %v656
    %658 = vmatmul.bf16.gmra.mxu0 %v491
    %v659 = vpop.f32.mrf.mxu0
    %v660 = vpop.f32.mrf.mxu0
    %661 = vdwg.mxu0
    %662 = vmatpush.bf16.msra.mxu0 0
    %663 = vmatpush.bf16.msra.mxu0 0
    %664 = vmatpush.bf16.msra.mxu0 %v501
    %665 = vmatpush.bf16.msra.mxu0 %v399
    %666 = vmatpush.bf16.msra.mxu0 %v391
    %667 = vmatpush.bf16.msra.mxu0 %v383
    %668 = vmatpush.bf16.msra.mxu0 %v375
    %669 = vmatpush.bf16.msra.mxu0 %v367
    %670 = vmatmul.bf16.gmra.mxu0 %v455
    %v671 = vpop.f32.mrf.mxu0
    %v672 = vadd.f32 0.0, %v671
    %v673 = vpop.f32.mrf.mxu0
    %v674 = vadd.f32 0.0, %v673
    %675 = vmatmul.bf16.gmra.mxu0 %v458
    %v676 = vpop.f32.mrf.mxu0
    %v677 = vadd.f32 0.0, %v676
    %v678 = vpop.f32.mrf.mxu0
    %v679 = vadd.f32 0.0, %v678
    %680 = vmatmul.bf16.gmra.mxu0 %v461
    %v681 = vpop.f32.mrf.mxu0
    %v682 = vadd.f32 0.0, %v681
    %v683 = vpop.f32.mrf.mxu0
    %v684 = vadd.f32 0.0, %v683
    %685 = vmatmul.bf16.gmra.mxu0 %v464
    %v686 = vpop.f32.mrf.mxu0
    %v687 = vadd.f32 0.0, %v686
    %v688 = vpop.f32.mrf.mxu0
    %v689 = vadd.f32 0.0, %v688
    %690 = vmatmul.bf16.gmra.mxu0 %v467
    %v691 = vpop.f32.mrf.mxu0
    %v692 = vadd.f32 0.0, %v691
    %v693 = vpop.f32.mrf.mxu0
    %v694 = vadd.f32 0.0, %v693
    %695 = vmatmul.bf16.gmra.mxu0 %v470
    %v696 = vpop.f32.mrf.mxu0
    %v697 = vadd.f32 0.0, %v696
    %v698 = vpop.f32.mrf.mxu0
    %v699 = vadd.f32 0.0, %v698
    %700 = vmatmul.bf16.gmra.mxu0 %v473
    %v701 = vpop.f32.mrf.mxu0
    %v702 = vadd.f32 0.0, %v701
    %v703 = vpop.f32.mrf.mxu0
    %v704 = vadd.f32 0.0, %v703
    %705 = vmatmul.bf16.gmra.mxu0 %v476
    %v706 = vpop.f32.mrf.mxu0
    %v707 = vadd.f32 0.0, %v706
    %v708 = vpop.f32.mrf.mxu0
    %v709 = vadd.f32 0.0, %v708
    %710 = vmatmul.bf16.gmra.mxu0 %v479
    %v711 = vpop.f32.mrf.mxu0
    %v712 = vadd.f32 0.0, %v711
    %v713 = vpop.f32.mrf.mxu0
    %v714 = vadd.f32 0.0, %v713
    %715 = vmatmul.bf16.gmra.mxu0 %v482
    %v716 = vpop.f32.mrf.mxu0
    %v717 = vadd.f32 0.0, %v716
    %v718 = vpop.f32.mrf.mxu0
    %v719 = vadd.f32 0.0, %v718
    %720 = vmatmul.bf16.gmra.mxu0 %v485
    %v721 = vpop.f32.mrf.mxu0
    %v722 = vadd.f32 0.0, %v721
    %v723 = vpop.f32.mrf.mxu0
    %v724 = vadd.f32 0.0, %v723
    %725 = vmatmul.bf16.gmra.mxu0 %v488
    %v726 = vpop.f32.mrf.mxu0
    %v727 = vadd.f32 0.0, %v726
    %v728 = vpop.f32.mrf.mxu0
    %v729 = vadd.f32 0.0, %v728
    %730 = vmatmul.bf16.gmra.mxu0 %v491
    %v731 = vpop.f32.mrf.mxu0
    %v732 = vpop.f32.mrf.mxu0
    %733 = vdwg.mxu0
    %734 = vmatpush.bf16.msra.mxu0 0
    %735 = vmatpush.bf16.msra.mxu0 0
    %736 = vmatpush.bf16.msra.mxu0 %v504
    %737 = vmatpush.bf16.msra.mxu0 %v400
    %738 = vmatpush.bf16.msra.mxu0 %v392
    %739 = vmatpush.bf16.msra.mxu0 %v384
    %740 = vmatpush.bf16.msra.mxu0 %v376
    %741 = vmatpush.bf16.msra.mxu0 %v368
    %742 = vmatmul.bf16.gmra.mxu0 %v455
    %v743 = vpop.f32.mrf.mxu0
    %v744 = vadd.f32 0.0, %v743
    %v745 = vpop.f32.mrf.mxu0
    %v746 = vadd.f32 0.0, %v745
    %747 = vmatmul.bf16.gmra.mxu0 %v458
    %v748 = vpop.f32.mrf.mxu0
    %v749 = vadd.f32 0.0, %v748
    %v750 = vpop.f32.mrf.mxu0
    %v751 = vadd.f32 0.0, %v750
    %752 = vmatmul.bf16.gmra.mxu0 %v461
    %v753 = vpop.f32.mrf.mxu0
    %v754 = vadd.f32 0.0, %v753
    %v755 = vpop.f32.mrf.mxu0
    %v756 = vadd.f32 0.0, %v755
    %757 = vmatmul.bf16.gmra.mxu0 %v464
    %v758 = vpop.f32.mrf.mxu0
    %v759 = vadd.f32 0.0, %v758
    %v760 = vpop.f32.mrf.mxu0
    %v761 = vadd.f32 0.0, %v760
    %762 = vmatmul.bf16.gmra.mxu0 %v467
    %v763 = vpop.f32.mrf.mxu0
    %v764 = vadd.f32 0.0, %v763
    %v765 = vpop.f32.mrf.mxu0
    %v766 = vadd.f32 0.0, %v765
    %767 = vmatmul.bf16.gmra.mxu0 %v470
    %v768 = vpop.f32.mrf.mxu0
    %v769 = vadd.f32 0.0, %v768
    %v770 = vpop.f32.mrf.mxu0
    %v771 = vadd.f32 0.0, %v770
    %772 = vmatmul.bf16.gmra.mxu0 %v473
    %v773 = vpop.f32.mrf.mxu0
    %v774 = vadd.f32 0.0, %v773
    %v775 = vpop.f32.mrf.mxu0
    %v776 = vadd.f32 0.0, %v775
    %777 = vmatmul.bf16.gmra.mxu0 %v476
    %v778 = vpop.f32.mrf.mxu0
    %v779 = vadd.f32 0.0, %v778
    %v780 = vpop.f32.mrf.mxu0
    %v781 = vadd.f32 0.0, %v780
    %782 = vmatmul.bf16.gmra.mxu0 %v479
    %v783 = vpop.f32.mrf.mxu0
    %v784 = vadd.f32 0.0, %v783
    %v785 = vpop.f32.mrf.mxu0
    %v786 = vadd.f32 0.0, %v785
    %787 = vmatmul.bf16.gmra.mxu0 %v482
    %v788 = vpop.f32.mrf.mxu0
    %v789 = vadd.f32 0.0, %v788
    %v790 = vpop.f32.mrf.mxu0
    %v791 = vadd.f32 0.0, %v790
    %792 = vmatmul.bf16.gmra.mxu0 %v485
    %v793 = vpop.f32.mrf.mxu0
    %v794 = vadd.f32 0.0, %v793
    %v795 = vpop.f32.mrf.mxu0
    %v796 = vadd.f32 0.0, %v795
    %797 = vmatmul.bf16.gmra.mxu0 %v488
    %v798 = vpop.f32.mrf.mxu0
    %v799 = vadd.f32 0.0, %v798
    %v800 = vpop.f32.mrf.mxu0
    %v801 = vadd.f32 0.0, %v800
    %802 = vmatmul.bf16.gmra.mxu0 %v491
    %v803 = vpop.f32.mrf.mxu0
    %v804 = vpop.f32.mrf.mxu0
    %805 = vdwg.mxu0
    %806 = vmatpush.bf16.msra.mxu0 0
    %807 = vmatpush.bf16.msra.mxu0 0
    %808 = vmatpush.bf16.msra.mxu0 %v507
    %809 = vmatpush.bf16.msra.mxu0 %v401
    %810 = vmatpush.bf16.msra.mxu0 %v393
    %811 = vmatpush.bf16.msra.mxu0 %v385
    %812 = vmatpush.bf16.msra.mxu0 %v377
    %813 = vmatpush.bf16.msra.mxu0 %v369
    %814 = vmatmul.bf16.gmra.mxu0 %v455
    %v815 = vpop.f32.mrf.mxu0
    %v816 = vadd.f32 0.0, %v815
    %v817 = vpop.f32.mrf.mxu0
    %v818 = vadd.f32 0.0, %v817
    %819 = vmatmul.bf16.gmra.mxu0 %v458
    %v820 = vpop.f32.mrf.mxu0
    %v821 = vadd.f32 0.0, %v820
    %v822 = vpop.f32.mrf.mxu0
    %v823 = vadd.f32 0.0, %v822
    %824 = vmatmul.bf16.gmra.mxu0 %v461
    %v825 = vpop.f32.mrf.mxu0
    %v826 = vadd.f32 0.0, %v825
    %v827 = vpop.f32.mrf.mxu0
    %v828 = vadd.f32 0.0, %v827
    %829 = vmatmul.bf16.gmra.mxu0 %v464
    %v830 = vpop.f32.mrf.mxu0
    %v831 = vadd.f32 0.0, %v830
    %v832 = vpop.f32.mrf.mxu0
    %v833 = vadd.f32 0.0, %v832
    %834 = vmatmul.bf16.gmra.mxu0 %v467
    %v835 = vpop.f32.mrf.mxu0
    %v836 = vadd.f32 0.0, %v835
    %v837 = vpop.f32.mrf.mxu0
    %v838 = vadd.f32 0.0, %v837
    %839 = vmatmul.bf16.gmra.mxu0 %v470
    %v840 = vpop.f32.mrf.mxu0
    %v841 = vadd.f32 0.0, %v840
    %v842 = vpop.f32.mrf.mxu0
    %v843 = vadd.f32 0.0, %v842
    %844 = vmatmul.bf16.gmra.mxu0 %v473
    %v845 = vpop.f32.mrf.mxu0
    %v846 = vadd.f32 0.0, %v845
    %v847 = vpop.f32.mrf.mxu0
    %v848 = vadd.f32 0.0, %v847
    %849 = vmatmul.bf16.gmra.mxu0 %v476
    %v850 = vpop.f32.mrf.mxu0
    %v851 = vadd.f32 0.0, %v850
    %v852 = vpop.f32.mrf.mxu0
    %v853 = vadd.f32 0.0, %v852
    %854 = vmatmul.bf16.gmra.mxu0 %v479
    %v855 = vpop.f32.mrf.mxu0
    %v856 = vadd.f32 0.0, %v855
    %v857 = vpop.f32.mrf.mxu0
    %v858 = vadd.f32 0.0, %v857
    %859 = vmatmul.bf16.gmra.mxu0 %v482
    %v860 = vpop.f32.mrf.mxu0
    %v861 = vadd.f32 0.0, %v860
    %v862 = vpop.f32.mrf.mxu0
    %v863 = vadd.f32 0.0, %v862
    %864 = vmatmul.bf16.gmra.mxu0 %v485
    %v865 = vpop.f32.mrf.mxu0
    %v866 = vadd.f32 0.0, %v865
    %v867 = vpop.f32.mrf.mxu0
    %v868 = vadd.f32 0.0, %v867
    %869 = vmatmul.bf16.gmra.mxu0 %v488
    %v870 = vpop.f32.mrf.mxu0
    %v871 = vadd.f32 0.0, %v870
    %v872 = vpop.f32.mrf.mxu0
    %v873 = vadd.f32 0.0, %v872
    %874 = vmatmul.bf16.gmra.mxu0 %v491
    %v875 = vpop.f32.mrf.mxu0
    %v876 = vpop.f32.mrf.mxu0
    %877 = vdwg.mxu0
    %878 = vmatpush.bf16.msra.mxu0 0
    %879 = vmatpush.bf16.msra.mxu0 0
    %880 = vmatpush.bf16.msra.mxu0 %v510
    %881 = vmatpush.bf16.msra.mxu0 %v402
    %882 = vmatpush.bf16.msra.mxu0 %v394
    %883 = vmatpush.bf16.msra.mxu0 %v386
    %884 = vmatpush.bf16.msra.mxu0 %v378
    %885 = vmatpush.bf16.msra.mxu0 %v370
    %886 = vmatmul.bf16.gmra.mxu0 %v455
    %v887 = vpop.f32.mrf.mxu0
    %v888 = vadd.f32 0.0, %v887
    %v889 = vpop.f32.mrf.mxu0
    %v890 = vadd.f32 0.0, %v889
    %891 = vmatmul.bf16.gmra.mxu0 %v458
    %v892 = vpop.f32.mrf.mxu0
    %v893 = vadd.f32 0.0, %v892
    %v894 = vpop.f32.mrf.mxu0
    %v895 = vadd.f32 0.0, %v894
    %896 = vmatmul.bf16.gmra.mxu0 %v461
    %v897 = vpop.f32.mrf.mxu0
    %v898 = vadd.f32 0.0, %v897
    %v899 = vpop.f32.mrf.mxu0
    %v900 = vadd.f32 0.0, %v899
    %901 = vmatmul.bf16.gmra.mxu0 %v464
    %v902 = vpop.f32.mrf.mxu0
    %v903 = vadd.f32 0.0, %v902
    %v904 = vpop.f32.mrf.mxu0
    %v905 = vadd.f32 0.0, %v904
    %906 = vmatmul.bf16.gmra.mxu0 %v467
    %v907 = vpop.f32.mrf.mxu0
    %v908 = vadd.f32 0.0, %v907
    %v909 = vpop.f32.mrf.mxu0
    %v910 = vadd.f32 0.0, %v909
    %911 = vmatmul.bf16.gmra.mxu0 %v470
    %v912 = vpop.f32.mrf.mxu0
    %v913 = vadd.f32 0.0, %v912
    %v914 = vpop.f32.mrf.mxu0
    %v915 = vadd.f32 0.0, %v914
    %916 = vmatmul.bf16.gmra.mxu0 %v473
    %v917 = vpop.f32.mrf.mxu0
    %v918 = vadd.f32 0.0, %v917
    %v919 = vpop.f32.mrf.mxu0
    %v920 = vadd.f32 0.0, %v919
    %921 = vmatmul.bf16.gmra.mxu0 %v476
    %v922 = vpop.f32.mrf.mxu0
    %v923 = vadd.f32 0.0, %v922
    %v924 = vpop.f32.mrf.mxu0
    %v925 = vadd.f32 0.0, %v924
    %926 = vmatmul.bf16.gmra.mxu0 %v479
    %v927 = vpop.f32.mrf.mxu0
    %v928 = vadd.f32 0.0, %v927
    %v929 = vpop.f32.mrf.mxu0
    %v930 = vadd.f32 0.0, %v929
    %931 = vmatmul.bf16.gmra.mxu0 %v482
    %v932 = vpop.f32.mrf.mxu0
    %v933 = vadd.f32 0.0, %v932
    %v934 = vpop.f32.mrf.mxu0
    %v935 = vadd.f32 0.0, %v934
    %936 = vmatmul.bf16.gmra.mxu0 %v485
    %v937 = vpop.f32.mrf.mxu0
    %v938 = vadd.f32 0.0, %v937
    %v939 = vpop.f32.mrf.mxu0
    %v940 = vadd.f32 0.0, %v939
    %941 = vmatmul.bf16.gmra.mxu0 %v488
    %v942 = vpop.f32.mrf.mxu0
    %v943 = vadd.f32 0.0, %v942
    %v944 = vpop.f32.mrf.mxu0
    %v945 = vadd.f32 0.0, %v944
    %946 = vmatmul.bf16.gmra.mxu0 %v491
    %v947 = vpop.f32.mrf.mxu0
    %v948 = vpop.f32.mrf.mxu0
    %949 = vdwg.mxu0
    %950 = vmatpush.bf16.msra.mxu0 0
    %951 = vmatpush.bf16.msra.mxu0 0
    %952 = vmatpush.bf16.msra.mxu0 %v513
    %953 = vmatpush.bf16.msra.mxu0 %v403
    %954 = vmatpush.bf16.msra.mxu0 %v395
    %955 = vmatpush.bf16.msra.mxu0 %v387
    %956 = vmatpush.bf16.msra.mxu0 %v379
    %957 = vmatpush.bf16.msra.mxu0 %v371
    %958 = vmatmul.bf16.gmra.mxu0 %v455
    %v959 = vpop.f32.mrf.mxu0
    %v960 = vadd.f32 0.0, %v959
    %v961 = vpop.f32.mrf.mxu0
    %v962 = vadd.f32 0.0, %v961
    %963 = vmatmul.bf16.gmra.mxu0 %v458
    %v964 = vpop.f32.mrf.mxu0
    %v965 = vadd.f32 0.0, %v964
    %v966 = vpop.f32.mrf.mxu0
    %v967 = vadd.f32 0.0, %v966
    %968 = vmatmul.bf16.gmra.mxu0 %v461
    %v969 = vpop.f32.mrf.mxu0
    %v970 = vadd.f32 0.0, %v969
    %v971 = vpop.f32.mrf.mxu0
    %v972 = vadd.f32 0.0, %v971
    %973 = vmatmul.bf16.gmra.mxu0 %v464
    %v974 = vpop.f32.mrf.mxu0
    %v975 = vadd.f32 0.0, %v974
    %v976 = vpop.f32.mrf.mxu0
    %v977 = vadd.f32 0.0, %v976
    %978 = vmatmul.bf16.gmra.mxu0 %v467
    %v979 = vpop.f32.mrf.mxu0
    %v980 = vadd.f32 0.0, %v979
    %v981 = vpop.f32.mrf.mxu0
    %v982 = vadd.f32 0.0, %v981
    %983 = vmatmul.bf16.gmra.mxu0 %v470
    %v984 = vpop.f32.mrf.mxu0
    %v985 = vadd.f32 0.0, %v984
    %v986 = vpop.f32.mrf.mxu0
    %v987 = vadd.f32 0.0, %v986
    %988 = vmatmul.bf16.gmra.mxu0 %v473
    %v989 = vpop.f32.mrf.mxu0
    %v990 = vadd.f32 0.0, %v989
    %v991 = vpop.f32.mrf.mxu0
    %v992 = vadd.f32 0.0, %v991
    %993 = vmatmul.bf16.gmra.mxu0 %v476
    %v994 = vpop.f32.mrf.mxu0
    %v995 = vadd.f32 0.0, %v994
    %v996 = vpop.f32.mrf.mxu0
    %v997 = vadd.f32 0.0, %v996
    %998 = vmatmul.bf16.gmra.mxu0 %v479
    %v999 = vpop.f32.mrf.mxu0
    %v1000 = vadd.f32 0.0, %v999
    %v1001 = vpop.f32.mrf.mxu0
    %v1002 = vadd.f32 0.0, %v1001
    %1003 = vmatmul.bf16.gmra.mxu0 %v482
    %v1004 = vpop.f32.mrf.mxu0
    %v1005 = vadd.f32 0.0, %v1004
    %v1006 = vpop.f32.mrf.mxu0
    %v1007 = vadd.f32 0.0, %v1006
    %1008 = vmatmul.bf16.gmra.mxu0 %v485
    %v1009 = vpop.f32.mrf.mxu0
    %v1010 = vadd.f32 0.0, %v1009
    %v1011 = vpop.f32.mrf.mxu0
    %v1012 = vadd.f32 0.0, %v1011
    %1013 = vmatmul.bf16.gmra.mxu0 %v488
    %v1014 = vpop.f32.mrf.mxu0
    %v1015 = vadd.f32 0.0, %v1014
    %v1016 = vpop.f32.mrf.mxu0
    %v1017 = vadd.f32 0.0, %v1016
    %1018 = vmatmul.bf16.gmra.mxu0 %v491
    %v1019 = vpop.f32.mrf.mxu0
    %v1020 = vpop.f32.mrf.mxu0
    %1021 = vdwg.mxu0
    %1022 = vmatpush.bf16.msra.mxu0 0
    %1023 = vmatpush.bf16.msra.mxu0 0
    %1024 = vmatpush.bf16.msra.mxu0 %v516
    %1025 = vmatpush.bf16.msra.mxu0 %v404
    %1026 = vmatpush.bf16.msra.mxu0 %v396
    %1027 = vmatpush.bf16.msra.mxu0 %v388
    %1028 = vmatpush.bf16.msra.mxu0 %v380
    %1029 = vmatpush.bf16.msra.mxu0 %v372
    %1030 = vmatmul.bf16.gmra.mxu0 %v455
    %v1031 = vpop.f32.mrf.mxu0
    %v1032 = vadd.f32 0.0, %v1031
    %v1033 = vpop.f32.mrf.mxu0
    %v1034 = vadd.f32 0.0, %v1033
    %1035 = vmatmul.bf16.gmra.mxu0 %v458
    %v1036 = vpop.f32.mrf.mxu0
    %v1037 = vadd.f32 0.0, %v1036
    %v1038 = vpop.f32.mrf.mxu0
    %v1039 = vadd.f32 0.0, %v1038
    %1040 = vmatmul.bf16.gmra.mxu0 %v461
    %v1041 = vpop.f32.mrf.mxu0
    %v1042 = vadd.f32 0.0, %v1041
    %v1043 = vpop.f32.mrf.mxu0
    %v1044 = vadd.f32 0.0, %v1043
    %1045 = vmatmul.bf16.gmra.mxu0 %v464
    %v1046 = vpop.f32.mrf.mxu0
    %v1047 = vadd.f32 0.0, %v1046
    %v1048 = vpop.f32.mrf.mxu0
    %v1049 = vadd.f32 0.0, %v1048
    %1050 = vmatmul.bf16.gmra.mxu0 %v467
    %v1051 = vpop.f32.mrf.mxu0
    %v1052 = vadd.f32 0.0, %v1051
    %v1053 = vpop.f32.mrf.mxu0
    %v1054 = vadd.f32 0.0, %v1053
    %1055 = vmatmul.bf16.gmra.mxu0 %v470
    %v1056 = vpop.f32.mrf.mxu0
    %v1057 = vadd.f32 0.0, %v1056
    %v1058 = vpop.f32.mrf.mxu0
    %v1059 = vadd.f32 0.0, %v1058
    %1060 = vmatmul.bf16.gmra.mxu0 %v473
    %v1061 = vpop.f32.mrf.mxu0
    %v1062 = vadd.f32 0.0, %v1061
    %v1063 = vpop.f32.mrf.mxu0
    %v1064 = vadd.f32 0.0, %v1063
    %1065 = vmatmul.bf16.gmra.mxu0 %v476
    %v1066 = vpop.f32.mrf.mxu0
    %v1067 = vadd.f32 0.0, %v1066
    %v1068 = vpop.f32.mrf.mxu0
    %v1069 = vadd.f32 0.0, %v1068
    %1070 = vmatmul.bf16.gmra.mxu0 %v479
    %v1071 = vpop.f32.mrf.mxu0
    %v1072 = vadd.f32 0.0, %v1071
    %v1073 = vpop.f32.mrf.mxu0
    %v1074 = vadd.f32 0.0, %v1073
    %1075 = vmatmul.bf16.gmra.mxu0 %v482
    %v1076 = vpop.f32.mrf.mxu0
    %v1077 = vadd.f32 0.0, %v1076
    %v1078 = vpop.f32.mrf.mxu0
    %v1079 = vadd.f32 0.0, %v1078
    %1080 = vmatmul.bf16.gmra.mxu0 %v485
    %v1081 = vpop.f32.mrf.mxu0
    %v1082 = vadd.f32 0.0, %v1081
    %v1083 = vpop.f32.mrf.mxu0
    %v1084 = vadd.f32 0.0, %v1083
    %1085 = vmatmul.bf16.gmra.mxu0 %v488
    %v1086 = vpop.f32.mrf.mxu0
    %v1087 = vadd.f32 0.0, %v1086
    %v1088 = vpop.f32.mrf.mxu0
    %v1089 = vadd.f32 0.0, %v1088
    %1090 = vmatmul.bf16.gmra.mxu0 %v491
    %v1091 = vpop.f32.mrf.mxu0
    %v1092 = vpop.f32.mrf.mxu0
    %1093 = vdwg.mxu0
    %v1094 = vmax.f32 %v528, %v816
    %v1095 = vmax.f32 %v600, %v888
    %v1096 = vmax.f32 %v672, %v960
    %v1097 = vmax.f32 %v744, %v1032
    %v1098 = vmax.f32 %v530, %v818
    %v1099 = vmax.f32 %v602, %v890
    %v1100 = vmax.f32 %v674, %v962
    %v1101 = vmax.f32 %v746, %v1034
    %v1102 = vmax.f32 %v533, %v821
    %v1103 = vmax.f32 %v605, %v893
    %v1104 = vmax.f32 %v677, %v965
    %v1105 = vmax.f32 %v749, %v1037
    %v1106 = vmax.f32 %v535, %v823
    %v1107 = vmax.f32 %v607, %v895
    %v1108 = vmax.f32 %v679, %v967
    %v1109 = vmax.f32 %v751, %v1039
    %v1110 = vmax.f32 %v538, %v826
    %v1111 = vmax.f32 %v610, %v898
    %v1112 = vmax.f32 %v682, %v970
    %v1113 = vmax.f32 %v754, %v1042
    %v1114 = vmax.f32 %v540, %v828
    %v1115 = vmax.f32 %v612, %v900
    %v1116 = vmax.f32 %v684, %v972
    %v1117 = vmax.f32 %v756, %v1044
    %v1118 = vmax.f32 %v543, %v831
    %v1119 = vmax.f32 %v615, %v903
    %v1120 = vmax.f32 %v687, %v975
    %v1121 = vmax.f32 %v759, %v1047
    %v1122 = vmax.f32 %v545, %v833
    %v1123 = vmax.f32 %v617, %v905
    %v1124 = vmax.f32 %v689, %v977
    %v1125 = vmax.f32 %v761, %v1049
    %v1126 = vmax.f32 %v548, %v836
    %v1127 = vmax.f32 %v620, %v908
    %v1128 = vmax.f32 %v692, %v980
    %v1129 = vmax.f32 %v764, %v1052
    %v1130 = vmax.f32 %v550, %v838
    %v1131 = vmax.f32 %v622, %v910
    %v1132 = vmax.f32 %v694, %v982
    %v1133 = vmax.f32 %v766, %v1054
    %v1134 = vmax.f32 %v553, %v841
    %v1135 = vmax.f32 %v625, %v913
    %v1136 = vmax.f32 %v697, %v985
    %v1137 = vmax.f32 %v769, %v1057
    %v1138 = vmax.f32 %v555, %v843
    %v1139 = vmax.f32 %v627, %v915
    %v1140 = vmax.f32 %v699, %v987
    %v1141 = vmax.f32 %v771, %v1059
    %v1142 = vmax.f32 %v558, %v846
    %v1143 = vmax.f32 %v630, %v918
    %v1144 = vmax.f32 %v702, %v990
    %v1145 = vmax.f32 %v774, %v1062
    %v1146 = vmax.f32 %v560, %v848
    %v1147 = vmax.f32 %v632, %v920
    %v1148 = vmax.f32 %v704, %v992
    %v1149 = vmax.f32 %v776, %v1064
    %v1150 = vmax.f32 %v563, %v851
    %v1151 = vmax.f32 %v635, %v923
    %v1152 = vmax.f32 %v707, %v995
    %v1153 = vmax.f32 %v779, %v1067
    %v1154 = vmax.f32 %v565, %v853
    %v1155 = vmax.f32 %v637, %v925
    %v1156 = vmax.f32 %v709, %v997
    %v1157 = vmax.f32 %v781, %v1069
    %v1158 = vmax.f32 %v568, %v856
    %v1159 = vmax.f32 %v640, %v928
    %v1160 = vmax.f32 %v712, %v1000
    %v1161 = vmax.f32 %v784, %v1072
    %v1162 = vmax.f32 %v570, %v858
    %v1163 = vmax.f32 %v642, %v930
    %v1164 = vmax.f32 %v714, %v1002
    %v1165 = vmax.f32 %v786, %v1074
    %v1166 = vmax.f32 %v573, %v861
    %v1167 = vmax.f32 %v645, %v933
    %v1168 = vmax.f32 %v717, %v1005
    %v1169 = vmax.f32 %v789, %v1077
    %v1170 = vmax.f32 %v575, %v863
    %v1171 = vmax.f32 %v647, %v935
    %v1172 = vmax.f32 %v719, %v1007
    %v1173 = vmax.f32 %v791, %v1079
    %v1174 = vmax.f32 %v578, %v866
    %v1175 = vmax.f32 %v650, %v938
    %v1176 = vmax.f32 %v722, %v1010
    %v1177 = vmax.f32 %v794, %v1082
    %v1178 = vmax.f32 %v580, %v868
    %v1179 = vmax.f32 %v652, %v940
    %v1180 = vmax.f32 %v724, %v1012
    %v1181 = vmax.f32 %v796, %v1084
    %v1182 = vmax.f32 %v583, %v871
    %v1183 = vmax.f32 %v655, %v943
    %v1184 = vmax.f32 %v727, %v1015
    %v1185 = vmax.f32 %v799, %v1087
    %v1186 = vmax.f32 %v585, %v873
    %v1187 = vmax.f32 %v657, %v945
    %v1188 = vmax.f32 %v729, %v1017
    %v1189 = vmax.f32 %v801, %v1089
    %v1190 = vld [vmem:[#allocation4] sm:$0xf]
    %v1192 = vperm.slane %v1190, 0
    %v1193 = vperm.slane %v1190, 1
    %v1194 = vperm.slane %v1190, 2
    %v1195 = vperm.slane %v1190, 3
    %v1200 = vadd.f32 %v1094, %v1192
    %v1201 = vadd.f32 %v1095, %v1193
    %v1202 = vadd.f32 %v1096, %v1194
    %v1203 = vadd.f32 %v1097, %v1195
    %v1204 = vadd.f32 %v1098, %v1192
    %v1205 = vadd.f32 %v1099, %v1193
    %v1206 = vadd.f32 %v1100, %v1194
    %v1207 = vadd.f32 %v1101, %v1195
    %v1208 = vadd.f32 %v1102, %v1192
    %v1209 = vadd.f32 %v1103, %v1193
    %v1210 = vadd.f32 %v1104, %v1194
    %v1211 = vadd.f32 %v1105, %v1195
    %v1212 = vadd.f32 %v1106, %v1192
    %v1213 = vadd.f32 %v1107, %v1193
    %v1214 = vadd.f32 %v1108, %v1194
    %v1215 = vadd.f32 %v1109, %v1195
    %v1216 = vadd.f32 %v1110, %v1192
    %v1217 = vadd.f32 %v1111, %v1193
    %v1218 = vadd.f32 %v1112, %v1194
    %v1219 = vadd.f32 %v1113, %v1195
    %v1220 = vadd.f32 %v1114, %v1192
    %v1221 = vadd.f32 %v1115, %v1193
    %v1222 = vadd.f32 %v1116, %v1194
    %v1223 = vadd.f32 %v1117, %v1195
    %v1224 = vadd.f32 %v1118, %v1192
    %v1225 = vadd.f32 %v1119, %v1193
    %v1226 = vadd.f32 %v1120, %v1194
    %v1227 = vadd.f32 %v1121, %v1195
    %v1228 = vadd.f32 %v1122, %v1192
    %v1229 = vadd.f32 %v1123, %v1193
    %v1230 = vadd.f32 %v1124, %v1194
    %v1231 = vadd.f32 %v1125, %v1195
    %v1232 = vadd.f32 %v1126, %v1192
    %v1233 = vadd.f32 %v1127, %v1193
    %v1234 = vadd.f32 %v1128, %v1194
    %v1235 = vadd.f32 %v1129, %v1195
    %v1236 = vadd.f32 %v1130, %v1192
    %v1237 = vadd.f32 %v1131, %v1193
    %v1238 = vadd.f32 %v1132, %v1194
    %v1239 = vadd.f32 %v1133, %v1195
    %v1240 = vadd.f32 %v1134, %v1192
    %v1241 = vadd.f32 %v1135, %v1193
    %v1242 = vadd.f32 %v1136, %v1194
    %v1243 = vadd.f32 %v1137, %v1195
    %v1244 = vadd.f32 %v1138, %v1192
    %v1245 = vadd.f32 %v1139, %v1193
    %v1246 = vadd.f32 %v1140, %v1194
    %v1247 = vadd.f32 %v1141, %v1195
    %v1248 = vadd.f32 %v1142, %v1192
    %v1249 = vadd.f32 %v1143, %v1193
    %v1250 = vadd.f32 %v1144, %v1194
    %v1251 = vadd.f32 %v1145, %v1195
    %v1252 = vadd.f32 %v1146, %v1192
    %v1253 = vadd.f32 %v1147, %v1193
    %v1254 = vadd.f32 %v1148, %v1194
    %v1255 = vadd.f32 %v1149, %v1195
    %v1256 = vadd.f32 %v1150, %v1192
    %v1257 = vadd.f32 %v1151, %v1193
    %v1258 = vadd.f32 %v1152, %v1194
    %v1259 = vadd.f32 %v1153, %v1195
    %v1260 = vadd.f32 %v1154, %v1192
    %v1261 = vadd.f32 %v1155, %v1193
    %v1262 = vadd.f32 %v1156, %v1194
    %v1263 = vadd.f32 %v1157, %v1195
    %v1264 = vadd.f32 %v1158, %v1192
    %v1265 = vadd.f32 %v1159, %v1193
    %v1266 = vadd.f32 %v1160, %v1194
    %v1267 = vadd.f32 %v1161, %v1195
    %v1268 = vadd.f32 %v1162, %v1192
    %v1269 = vadd.f32 %v1163, %v1193
    %v1270 = vadd.f32 %v1164, %v1194
    %v1271 = vadd.f32 %v1165, %v1195
    %v1272 = vadd.f32 %v1166, %v1192
    %v1273 = vadd.f32 %v1167, %v1193
    %v1274 = vadd.f32 %v1168, %v1194
    %v1275 = vadd.f32 %v1169, %v1195
    %v1276 = vadd.f32 %v1170, %v1192
    %v1277 = vadd.f32 %v1171, %v1193
    %v1278 = vadd.f32 %v1172, %v1194
    %v1279 = vadd.f32 %v1173, %v1195
    %v1280 = vadd.f32 %v1174, %v1192
    %v1281 = vadd.f32 %v1175, %v1193
    %v1282 = vadd.f32 %v1176, %v1194
    %v1283 = vadd.f32 %v1177, %v1195
    %v1284 = vadd.f32 %v1178, %v1192
    %v1285 = vadd.f32 %v1179, %v1193
    %v1286 = vadd.f32 %v1180, %v1194
    %v1287 = vadd.f32 %v1181, %v1195
    %v1288 = vadd.f32 %v1182, %v1192
    %v1289 = vadd.f32 %v1183, %v1193
    %v1290 = vadd.f32 %v1184, %v1194
    %v1291 = vadd.f32 %v1185, %v1195
    %v1292 = vadd.f32 %v1186, %v1192
    %v1293 = vadd.f32 %v1187, %v1193
    %v1294 = vadd.f32 %v1188, %v1194
    %v1295 = vadd.f32 %v1189, %v1195
    %v1296 = vmax.f32 %v1200, 0.0
    %v1297 = vmax.f32 %v1201, 0.0
    %v1298 = vmax.f32 %v1202, 0.0
    %v1299 = vmax.f32 %v1203, 0.0
    %v1300 = vmax.f32 %v1204, 0.0
    %v1301 = vmax.f32 %v1205, 0.0
    %v1302 = vmax.f32 %v1206, 0.0
    %v1303 = vmax.f32 %v1207, 0.0
    %v1304 = vmax.f32 %v1208, 0.0
    %v1305 = vmax.f32 %v1209, 0.0
    %v1306 = vmax.f32 %v1210, 0.0
    %v1307 = vmax.f32 %v1211, 0.0
    %v1308 = vmax.f32 %v1212, 0.0
    %v1309 = vmax.f32 %v1213, 0.0
    %v1310 = vmax.f32 %v1214, 0.0
    %v1311 = vmax.f32 %v1215, 0.0
    %v1312 = vmax.f32 %v1216, 0.0
    %v1313 = vmax.f32 %v1217, 0.0
    %v1314 = vmax.f32 %v1218, 0.0
    %v1315 = vmax.f32 %v1219, 0.0
    %v1316 = vmax.f32 %v1220, 0.0
    %v1317 = vmax.f32 %v1221, 0.0
    %v1318 = vmax.f32 %v1222, 0.0
    %v1319 = vmax.f32 %v1223, 0.0
    %v1320 = vmax.f32 %v1224, 0.0
    %v1321 = vmax.f32 %v1225, 0.0
    %v1322 = vmax.f32 %v1226, 0.0
    %v1323 = vmax.f32 %v1227, 0.0
    %v1324 = vmax.f32 %v1228, 0.0
    %v1325 = vmax.f32 %v1229, 0.0
    %v1326 = vmax.f32 %v1230, 0.0
    %v1327 = vmax.f32 %v1231, 0.0
    %v1328 = vmax.f32 %v1232, 0.0
    %v1329 = vmax.f32 %v1233, 0.0
    %v1330 = vmax.f32 %v1234, 0.0
    %v1331 = vmax.f32 %v1235, 0.0
    %v1332 = vmax.f32 %v1236, 0.0
    %v1333 = vmax.f32 %v1237, 0.0
    %v1334 = vmax.f32 %v1238, 0.0
    %v1335 = vmax.f32 %v1239, 0.0
    %v1336 = vmax.f32 %v1240, 0.0
    %v1337 = vmax.f32 %v1241, 0.0
    %v1338 = vmax.f32 %v1242, 0.0
    %v1339 = vmax.f32 %v1243, 0.0
    %v1340 = vmax.f32 %v1244, 0.0
    %v1341 = vmax.f32 %v1245, 0.0
    %v1342 = vmax.f32 %v1246, 0.0
    %v1343 = vmax.f32 %v1247, 0.0
    %v1344 = vmax.f32 %v1248, 0.0
    %v1345 = vmax.f32 %v1249, 0.0
    %v1346 = vmax.f32 %v1250, 0.0
    %v1347 = vmax.f32 %v1251, 0.0
    %v1348 = vmax.f32 %v1252, 0.0
    %v1349 = vmax.f32 %v1253, 0.0
    %v1350 = vmax.f32 %v1254, 0.0
    %v1351 = vmax.f32 %v1255, 0.0
    %v1352 = vmax.f32 %v1256, 0.0
    %v1353 = vmax.f32 %v1257, 0.0
    %v1354 = vmax.f32 %v1258, 0.0
    %v1355 = vmax.f32 %v1259, 0.0
    %v1356 = vmax.f32 %v1260, 0.0
    %v1357 = vmax.f32 %v1261, 0.0
    %v1358 = vmax.f32 %v1262, 0.0
    %v1359 = vmax.f32 %v1263, 0.0
    %v1360 = vmax.f32 %v1264, 0.0
    %v1361 = vmax.f32 %v1265, 0.0
    %v1362 = vmax.f32 %v1266, 0.0
    %v1363 = vmax.f32 %v1267, 0.0
    %v1364 = vmax.f32 %v1268, 0.0
    %v1365 = vmax.f32 %v1269, 0.0
    %v1366 = vmax.f32 %v1270, 0.0
    %v1367 = vmax.f32 %v1271, 0.0
    %v1368 = vmax.f32 %v1272, 0.0
    %v1369 = vmax.f32 %v1273, 0.0
    %v1370 = vmax.f32 %v1274, 0.0
    %v1371 = vmax.f32 %v1275, 0.0
    %v1372 = vmax.f32 %v1276, 0.0
    %v1373 = vmax.f32 %v1277, 0.0
    %v1374 = vmax.f32 %v1278, 0.0
    %v1375 = vmax.f32 %v1279, 0.0
    %v1376 = vmax.f32 %v1280, 0.0
    %v1377 = vmax.f32 %v1281, 0.0
    %v1378 = vmax.f32 %v1282, 0.0
    %v1379 = vmax.f32 %v1283, 0.0
    %v1380 = vmax.f32 %v1284, 0.0
    %v1381 = vmax.f32 %v1285, 0.0
    %v1382 = vmax.f32 %v1286, 0.0
    %v1383 = vmax.f32 %v1287, 0.0
    %v1384 = vmax.f32 %v1288, 0.0
    %v1385 = vmax.f32 %v1289, 0.0
    %v1386 = vmax.f32 %v1290, 0.0
    %v1387 = vmax.f32 %v1291, 0.0
    %v1388 = vmax.f32 %v1292, 0.0
    %v1389 = vmax.f32 %v1293, 0.0
    %v1390 = vmax.f32 %v1294, 0.0
    %v1391 = vmax.f32 %v1295, 0.0
    %v1392 = vmax.f32 %v1296, %v1300
    %v1393 = vmax.f32 %v1297, %v1301
    %v1394 = vmax.f32 %v1298, %v1302
    %v1395 = vmax.f32 %v1299, %v1303
    %v1396 = vmax.f32 %v1304, %v1308
    %v1397 = vmax.f32 %v1305, %v1309
    %v1398 = vmax.f32 %v1306, %v1310
    %v1399 = vmax.f32 %v1307, %v1311
    %v1400 = vmax.f32 %v1312, %v1316
    %v1401 = vmax.f32 %v1313, %v1317
    %v1402 = vmax.f32 %v1314, %v1318
    %v1403 = vmax.f32 %v1315, %v1319
    %v1404 = vmax.f32 %v1320, %v1324
    %v1405 = vmax.f32 %v1321, %v1325
    %v1406 = vmax.f32 %v1322, %v1326
    %v1407 = vmax.f32 %v1323, %v1327
    %v1408 = vmax.f32 %v1328, %v1332
    %v1409 = vmax.f32 %v1329, %v1333
    %v1410 = vmax.f32 %v1330, %v1334
    %v1411 = vmax.f32 %v1331, %v1335
    %v1412 = vmax.f32 %v1336, %v1340
    %v1413 = vmax.f32 %v1337, %v1341
    %v1414 = vmax.f32 %v1338, %v1342
    %v1415 = vmax.f32 %v1339, %v1343
    %v1416 = vmax.f32 %v1344, %v1348
    %v1417 = vmax.f32 %v1345, %v1349
    %v1418 = vmax.f32 %v1346, %v1350
    %v1419 = vmax.f32 %v1347, %v1351
    %v1420 = vmax.f32 %v1352, %v1356
    %v1421 = vmax.f32 %v1353, %v1357
    %v1422 = vmax.f32 %v1354, %v1358
    %v1423 = vmax.f32 %v1355, %v1359
    %v1424 = vmax.f32 %v1360, %v1364
    %v1425 = vmax.f32 %v1361, %v1365
    %v1426 = vmax.f32 %v1362, %v1366
    %v1427 = vmax.f32 %v1363, %v1367
    %v1428 = vmax.f32 %v1368, %v1372
    %v1429 = vmax.f32 %v1369, %v1373
    %v1430 = vmax.f32 %v1370, %v1374
    %v1431 = vmax.f32 %v1371, %v1375
    %v1432 = vmax.f32 %v1376, %v1380
    %v1433 = vmax.f32 %v1377, %v1381
    %v1434 = vmax.f32 %v1378, %v1382
    %v1435 = vmax.f32 %v1379, %v1383
    %v1436 = vmax.f32 %v1384, %v1388
    %v1437 = vmax.f32 %v1385, %v1389
    %v1438 = vmax.f32 %v1386, %v1390
    %v1439 = vmax.f32 %v1387, %v1391
    %v1440 = vpack.c.bf16 %v1396, %v1392
    %v1441 = vpack.c.bf16 %v1397, %v1393
    %v1442 = vpack.c.bf16 %v1398, %v1394
    %v1443 = vpack.c.bf16 %v1399, %v1395
    %v1444 = vpack.c.bf16 %v1404, %v1400
    %v1445 = vpack.c.bf16 %v1405, %v1401
    %v1446 = vpack.c.bf16 %v1406, %v1402
    %v1447 = vpack.c.bf16 %v1407, %v1403
    %v1448 = vpack.c.bf16 %v1412, %v1408
    %v1449 = vpack.c.bf16 %v1413, %v1409
    %v1450 = vpack.c.bf16 %v1414, %v1410
    %v1451 = vpack.c.bf16 %v1415, %v1411
    %v1452 = vpack.c.bf16 %v1420, %v1416
    %v1453 = vpack.c.bf16 %v1421, %v1417
    %v1454 = vpack.c.bf16 %v1422, %v1418
    %v1455 = vpack.c.bf16 %v1423, %v1419
    %v1456 = vpack.c.bf16 %v1428, %v1424
    %v1457 = vpack.c.bf16 %v1429, %v1425
    %v1458 = vpack.c.bf16 %v1430, %v1426
    %v1459 = vpack.c.bf16 %v1431, %v1427
    %v1460 = vld [vmem:[#allocation6] sm:$0xff]
    %v1461 = vld [vmem:[#allocation6 + $0x8] sm:$0xff]
    %v1462 = vld [vmem:[#allocation6 + $0x10] sm:$0xff]
    %v1463 = vld [vmem:[#allocation6 + $0x18] sm:$0xff]
    %v1464 = vld [vmem:[#allocation6 + $0x20] sm:$0xff]
    %v1465 = vld [vmem:[#allocation6 + $0x28] sm:$0xff]
    %v1466 = vld [vmem:[#allocation6 + $0x30] sm:$0xff]
    %v1467 = vld [vmem:[#allocation6 + $0x38] sm:$0xff]
    %v1468 = vld [vmem:[#allocation6 + $0x40] sm:$0xff]
    %v1469 = vld [vmem:[#allocation6 + $0x48] sm:$0xff]
    %v1470 = vld [vmem:[#allocation6 + $0x50] sm:$0xff]
    %v1471 = vld [vmem:[#allocation6 + $0x58] sm:$0xff]
    %v1472 = vld [vmem:[#allocation6 + $0x60] sm:$0xff]
    %v1473 = vld [vmem:[#allocation6 + $0x68] sm:$0xff]
    %v1474 = vld [vmem:[#allocation6 + $0x70] sm:$0xff]
    %v1475 = vld [vmem:[#allocation6 + $0x78] sm:$0xff]
    %v1476 = vld [vmem:[#allocation6 + $0x80] sm:$0xff]
    %v1477 = vld [vmem:[#allocation6 + $0x88] sm:$0xff]
    %v1478 = vld [vmem:[#allocation6 + $0x90] sm:$0xff]
    %v1479 = vld [vmem:[#allocation6 + $0x98] sm:$0xff]
    %v1480 = vld [vmem:[#allocation6 + $0xa0] sm:$0xff]
    %v1481 = vld [vmem:[#allocation6 + $0xa8] sm:$0xff]
    %v1482 = vld [vmem:[#allocation6 + $0xb0] sm:$0xff]
    %v1483 = vld [vmem:[#allocation6 + $0xb8] sm:$0xff]
    %v1484 = vld [vmem:[#allocation6 + $0xc0] sm:$0xff]
    %v1485 = vld [vmem:[#allocation6 + $0xc8] sm:$0xff]
    %v1486 = vld [vmem:[#allocation6 + $0xd0] sm:$0xff]
    %v1487 = vld [vmem:[#allocation6 + $0xd8] sm:$0xff]
    %v1488 = vld [vmem:[#allocation6 + $0xe0] sm:$0xff]
    %v1489 = vld [vmem:[#allocation6 + $0xe8] sm:$0xff]
    %v1490 = vld [vmem:[#allocation6 + $0xf0] sm:$0xff]
    %v1491 = vld [vmem:[#allocation6 + $0xf8] sm:$0xff]
    %v1492 = vld [vmem:[#allocation6 + $0x100] sm:$0xff]
    %v1493 = vld [vmem:[#allocation6 + $0x108] sm:$0xff]
    %v1494 = vld [vmem:[#allocation6 + $0x110] sm:$0xff]
    %v1495 = vld [vmem:[#allocation6 + $0x118] sm:$0xff]
    %v1496 = vld [vmem:[#allocation6 + $0x120] sm:$0xff]
    %v1497 = vld [vmem:[#allocation6 + $0x128] sm:$0xff]
    %v1498 = vld [vmem:[#allocation6 + $0x130] sm:$0xff]
    %v1499 = vld [vmem:[#allocation6 + $0x138] sm:$0xff]
    %v1500 = vld [vmem:[#allocation6 + $0x140] sm:$0xff]
    %v1501 = vld [vmem:[#allocation6 + $0x148] sm:$0xff]
    %v1502 = vld [vmem:[#allocation6 + $0x150] sm:$0xff]
    %v1503 = vld [vmem:[#allocation6 + $0x158] sm:$0xff]
    %v1504 = vld [vmem:[#allocation6 + $0x160] sm:$0xff]
    %v1505 = vld [vmem:[#allocation6 + $0x168] sm:$0xff]
    %v1506 = vld [vmem:[#allocation6 + $0x170] sm:$0xff]
    %v1507 = vld [vmem:[#allocation6 + $0x178] sm:$0xff]
    %v1508 = vld [vmem:[#allocation6 + $0x180] sm:$0xff]
    %v1509 = vld [vmem:[#allocation6 + $0x188] sm:$0xff]
    %v1510 = vld [vmem:[#allocation6 + $0x190] sm:$0xff]
    %v1511 = vld [vmem:[#allocation6 + $0x198] sm:$0xff]
    %v1512 = vld [vmem:[#allocation6 + $0x1a0] sm:$0xff]
    %v1513 = vld [vmem:[#allocation6 + $0x1a8] sm:$0xff]
    %v1514 = vld [vmem:[#allocation6 + $0x1b0] sm:$0xff]
    %v1515 = vld [vmem:[#allocation6 + $0x1b8] sm:$0xff]
    %v1516 = vld [vmem:[#allocation6 + $0x1c0] sm:$0xff]
    %v1517 = vld [vmem:[#allocation6 + $0x1c8] sm:$0xff]
    %v1518 = vld [vmem:[#allocation6 + $0x1d0] sm:$0xff]
    %v1519 = vld [vmem:[#allocation6 + $0x1d8] sm:$0xff]
    %v1520 = vld [vmem:[#allocation6 + $0x1e0] sm:$0xff]
    %v1521 = vld [vmem:[#allocation6 + $0x1e8] sm:$0xff]
    %v1522 = vld [vmem:[#allocation6 + $0x1f0] sm:$0xff]
    %v1523 = vld [vmem:[#allocation6 + $0x1f8] sm:$0xff]
    %v1524 = vld [vmem:[#allocation6 + $0x200] sm:$0xff]
    %v1525 = vld [vmem:[#allocation6 + $0x208] sm:$0xff]
    %v1526 = vld [vmem:[#allocation6 + $0x210] sm:$0xff]
    %v1527 = vld [vmem:[#allocation6 + $0x218] sm:$0xff]
    %v1528 = vld [vmem:[#allocation6 + $0x220] sm:$0xff]
    %v1529 = vld [vmem:[#allocation6 + $0x228] sm:$0xff]
    %v1530 = vld [vmem:[#allocation6 + $0x230] sm:$0xff]
    %v1531 = vld [vmem:[#allocation6 + $0x238] sm:$0xff]
    %v1532 = vld [vmem:[#allocation6 + $0x240] sm:$0xff]
    %v1533 = vld [vmem:[#allocation6 + $0x248] sm:$0xff]
    %v1534 = vld [vmem:[#allocation6 + $0x250] sm:$0xff]
    %v1535 = vld [vmem:[#allocation6 + $0x258] sm:$0xff]
    %v1536 = vld [vmem:[#allocation6 + $0x260] sm:$0xff]
    %v1537 = vld [vmem:[#allocation6 + $0x268] sm:$0xff]
    %v1538 = vld [vmem:[#allocation6 + $0x270] sm:$0xff]
    %v1539 = vld [vmem:[#allocation6 + $0x278] sm:$0xff]
    %v1540 = vld [vmem:[#allocation6 + $0x280] sm:$0xff]
    %v1541 = vld [vmem:[#allocation6 + $0x288] sm:$0xff]
    %v1542 = vld [vmem:[#allocation6 + $0x290] sm:$0xff]
    %v1543 = vld [vmem:[#allocation6 + $0x298] sm:$0xff]
    %v1544 = vld [vmem:[#allocation6 + $0x2a0] sm:$0xff]
    %v1545 = vld [vmem:[#allocation6 + $0x2a8] sm:$0xff]
    %v1546 = vld [vmem:[#allocation6 + $0x2b0] sm:$0xff]
    %v1547 = vld [vmem:[#allocation6 + $0x2b8] sm:$0xff]
    %v1548 = vld [vmem:[#allocation6 + $0x2c0] sm:$0xff]
    %v1549 = vld [vmem:[#allocation6 + $0x2c8] sm:$0xff]
    %v1550 = vld [vmem:[#allocation6 + $0x2d0] sm:$0xff]
    %v1551 = vld [vmem:[#allocation6 + $0x2d8] sm:$0xff]
    %v1552 = vld [vmem:[#allocation6 + $0x2e0] sm:$0xff]
    %v1553 = vld [vmem:[#allocation6 + $0x2e8] sm:$0xff]
    %v1554 = vld [vmem:[#allocation6 + $0x2f0] sm:$0xff]
    %v1555 = vld [vmem:[#allocation6 + $0x2f8] sm:$0xff]
    %v1556 = vld [vmem:[#allocation6 + $0x300] sm:$0xff]
    %v1557 = vld [vmem:[#allocation6 + $0x308] sm:$0xff]
    %v1558 = vld [vmem:[#allocation6 + $0x310] sm:$0xff]
    %v1559 = vld [vmem:[#allocation6 + $0x318] sm:$0xff]
    %v1560 = vld [vmem:[#allocation6 + $0x320] sm:$0xff]
    %v1561 = vld [vmem:[#allocation6 + $0x328] sm:$0xff]
    %v1562 = vld [vmem:[#allocation6 + $0x330] sm:$0xff]
    %v1563 = vld [vmem:[#allocation6 + $0x338] sm:$0xff]
    %v1564 = vld [vmem:[#allocation6 + $0x340] sm:$0xff]
    %v1565 = vld [vmem:[#allocation6 + $0x348] sm:$0xff]
    %v1566 = vld [vmem:[#allocation6 + $0x350] sm:$0xff]
    %v1567 = vld [vmem:[#allocation6 + $0x358] sm:$0xff]
    %v1568 = vld [vmem:[#allocation6 + $0x360] sm:$0xff]
    %v1569 = vld [vmem:[#allocation6 + $0x368] sm:$0xff]
    %v1570 = vld [vmem:[#allocation6 + $0x370] sm:$0xff]
    %v1571 = vld [vmem:[#allocation6 + $0x378] sm:$0xff]
    %v1572 = vld [vmem:[#allocation6 + $0x380] sm:$0xff]
    %v1573 = vld [vmem:[#allocation6 + $0x388] sm:$0xff]
    %v1574 = vld [vmem:[#allocation6 + $0x390] sm:$0xff]
    %v1575 = vld [vmem:[#allocation6 + $0x398] sm:$0xff]
    %v1576 = vld [vmem:[#allocation6 + $0x3a0] sm:$0xff]
    %v1577 = vld [vmem:[#allocation6 + $0x3a8] sm:$0xff]
    %v1578 = vld [vmem:[#allocation6 + $0x3b0] sm:$0xff]
    %v1579 = vld [vmem:[#allocation6 + $0x3b8] sm:$0xff]
    %v1580 = vld [vmem:[#allocation6 + $0x3c0] sm:$0xff]
    %v1581 = vld [vmem:[#allocation6 + $0x3c8] sm:$0xff]
    %v1582 = vld [vmem:[#allocation6 + $0x3d0] sm:$0xff]
    %v1583 = vld [vmem:[#allocation6 + $0x3d8] sm:$0xff]
    %v1584 = vld [vmem:[#allocation6 + $0x3e0] sm:$0xff]
    %v1585 = vld [vmem:[#allocation6 + $0x3e8] sm:$0xff]
    %v1586 = vld [vmem:[#allocation6 + $0x3f0] sm:$0xff]
    %v1587 = vld [vmem:[#allocation6 + $0x3f8] sm:$0xff]
    %v1588 = vld [vmem:[#allocation6 + $0x400] sm:$0xff]
    %v1589 = vld [vmem:[#allocation6 + $0x408] sm:$0xff]
    %v1590 = vld [vmem:[#allocation6 + $0x410] sm:$0xff]
    %v1591 = vld [vmem:[#allocation6 + $0x418] sm:$0xff]
    %v1592 = vld [vmem:[#allocation6 + $0x420] sm:$0xff]
    %v1593 = vld [vmem:[#allocation6 + $0x428] sm:$0xff]
    %v1594 = vld [vmem:[#allocation6 + $0x430] sm:$0xff]
    %v1595 = vld [vmem:[#allocation6 + $0x438] sm:$0xff]
    %v1596 = vld [vmem:[#allocation6 + $0x440] sm:$0xff]
    %v1597 = vld [vmem:[#allocation6 + $0x448] sm:$0xff]
    %v1598 = vld [vmem:[#allocation6 + $0x450] sm:$0xff]
    %v1599 = vld [vmem:[#allocation6 + $0x458] sm:$0xff]
    %v1600 = vld [vmem:[#allocation6 + $0x460] sm:$0xff]
    %v1601 = vld [vmem:[#allocation6 + $0x468] sm:$0xff]
    %v1602 = vld [vmem:[#allocation6 + $0x470] sm:$0xff]
    %v1603 = vld [vmem:[#allocation6 + $0x478] sm:$0xff]
    %v1604 = vld [vmem:[#allocation6 + $0x480] sm:$0xff]
    %v1605 = vld [vmem:[#allocation6 + $0x488] sm:$0xff]
    %v1606 = vld [vmem:[#allocation6 + $0x490] sm:$0xff]
    %v1607 = vld [vmem:[#allocation6 + $0x498] sm:$0xff]
    %v1608 = vld [vmem:[#allocation6 + $0x4a0] sm:$0xff]
    %v1609 = vld [vmem:[#allocation6 + $0x4a8] sm:$0xff]
    %v1610 = vld [vmem:[#allocation6 + $0x4b0] sm:$0xff]
    %v1611 = vld [vmem:[#allocation6 + $0x4b8] sm:$0xff]
    %v1612 = vld [vmem:[#allocation6 + $0x4c0] sm:$0xff]
    %v1613 = vld [vmem:[#allocation6 + $0x4c8] sm:$0xff]
    %v1614 = vld [vmem:[#allocation6 + $0x4d0] sm:$0xff]
    %v1615 = vld [vmem:[#allocation6 + $0x4d8] sm:$0xff]
    %v1616 = vld [vmem:[#allocation6 + $0x4e0] sm:$0xff]
    %v1617 = vld [vmem:[#allocation6 + $0x4e8] sm:$0xff]
    %v1618 = vld [vmem:[#allocation6 + $0x4f0] sm:$0xff]
    %v1619 = vld [vmem:[#allocation6 + $0x4f8] sm:$0xff]
    %v1620 = vld [vmem:[#allocation6 + $0x500] sm:$0xff]
    %v1621 = vld [vmem:[#allocation6 + $0x508] sm:$0xff]
    %v1622 = vld [vmem:[#allocation6 + $0x510] sm:$0xff]
    %v1623 = vld [vmem:[#allocation6 + $0x518] sm:$0xff]
    %v1624 = vld [vmem:[#allocation6 + $0x520] sm:$0xff]
    %v1625 = vld [vmem:[#allocation6 + $0x528] sm:$0xff]
    %v1626 = vld [vmem:[#allocation6 + $0x530] sm:$0xff]
    %v1627 = vld [vmem:[#allocation6 + $0x538] sm:$0xff]
    %v1628 = vld [vmem:[#allocation6 + $0x540] sm:$0xff]
    %v1629 = vld [vmem:[#allocation6 + $0x548] sm:$0xff]
    %v1630 = vld [vmem:[#allocation6 + $0x550] sm:$0xff]
    %v1631 = vld [vmem:[#allocation6 + $0x558] sm:$0xff]
    %v1632 = vld [vmem:[#allocation6 + $0x560] sm:$0xff]
    %v1633 = vld [vmem:[#allocation6 + $0x568] sm:$0xff]
    %v1634 = vld [vmem:[#allocation6 + $0x570] sm:$0xff]
    %v1635 = vld [vmem:[#allocation6 + $0x578] sm:$0xff]
    %v1636 = vld [vmem:[#allocation6 + $0x580] sm:$0xff]
    %v1637 = vld [vmem:[#allocation6 + $0x588] sm:$0xff]
    %v1638 = vld [vmem:[#allocation6 + $0x590] sm:$0xff]
    %v1639 = vld [vmem:[#allocation6 + $0x598] sm:$0xff]
    %v1640 = vld [vmem:[#allocation6 + $0x5a0] sm:$0xff]
    %v1641 = vld [vmem:[#allocation6 + $0x5a8] sm:$0xff]
    %v1642 = vld [vmem:[#allocation6 + $0x5b0] sm:$0xff]
    %v1643 = vld [vmem:[#allocation6 + $0x5b8] sm:$0xff]
    %v1644 = vld [vmem:[#allocation6 + $0x5c0] sm:$0xff]
    %v1645 = vld [vmem:[#allocation6 + $0x5c8] sm:$0xff]
    %v1646 = vld [vmem:[#allocation6 + $0x5d0] sm:$0xff]
    %v1647 = vld [vmem:[#allocation6 + $0x5d8] sm:$0xff]
    %v1648 = vld [vmem:[#allocation6 + $0x5e0] sm:$0xff]
    %v1649 = vld [vmem:[#allocation6 + $0x5e8] sm:$0xff]
    %v1650 = vld [vmem:[#allocation6 + $0x5f0] sm:$0xff]
    %v1651 = vld [vmem:[#allocation6 + $0x5f8] sm:$0xff]
    %v1652 = vpack.c.bf16 %v1400, %v1396
    %v1653 = vpack.c.bf16 %v1401, %v1397
    %v1654 = vpack.c.bf16 %v1402, %v1398
    %v1655 = vpack.c.bf16 %v1403, %v1399
    %v1656 = vpack.c.bf16 %v1408, %v1404
    %v1657 = vpack.c.bf16 %v1409, %v1405
    %v1658 = vpack.c.bf16 %v1410, %v1406
    %v1659 = vpack.c.bf16 %v1411, %v1407
    %v1660 = vpack.c.bf16 %v1416, %v1412
    %v1661 = vpack.c.bf16 %v1417, %v1413
    %v1662 = vpack.c.bf16 %v1418, %v1414
    %v1663 = vpack.c.bf16 %v1419, %v1415
    %v1664 = vpack.c.bf16 %v1424, %v1420
    %v1665 = vpack.c.bf16 %v1425, %v1421
    %v1666 = vpack.c.bf16 %v1426, %v1422
    %v1667 = vpack.c.bf16 %v1427, %v1423
    %v1668 = vpack.c.bf16 %v1432, %v1428
    %v1669 = vpack.c.bf16 %v1433, %v1429
    %v1670 = vpack.c.bf16 %v1434, %v1430
    %v1671 = vpack.c.bf16 %v1435, %v1431
    %s1672 = scalar_lea.vmem [#allocation6], 1536
    %v1673 = vld [vmem:[%s1672] sm:$0xff]
    %v1674 = vld [vmem:[%s1672 + $0x8] sm:$0xff]
    %v1675 = vld [vmem:[%s1672 + $0x10] sm:$0xff]
    %v1676 = vld [vmem:[%s1672 + $0x18] sm:$0xff]
    %v1677 = vld [vmem:[%s1672 + $0x20] sm:$0xff]
    %v1678 = vld [vmem:[%s1672 + $0x28] sm:$0xff]
    %v1679 = vld [vmem:[%s1672 + $0x30] sm:$0xff]
    %v1680 = vld [vmem:[%s1672 + $0x38] sm:$0xff]
    %v1681 = vld [vmem:[%s1672 + $0x40] sm:$0xff]
    %v1682 = vld [vmem:[%s1672 + $0x48] sm:$0xff]
    %v1683 = vld [vmem:[%s1672 + $0x50] sm:$0xff]
    %v1684 = vld [vmem:[%s1672 + $0x58] sm:$0xff]
    %v1685 = vld [vmem:[%s1672 + $0x60] sm:$0xff]
    %v1686 = vld [vmem:[%s1672 + $0x68] sm:$0xff]
    %v1687 = vld [vmem:[%s1672 + $0x70] sm:$0xff]
    %v1688 = vld [vmem:[%s1672 + $0x78] sm:$0xff]
    %v1689 = vld [vmem:[%s1672 + $0x80] sm:$0xff]
    %v1690 = vld [vmem:[%s1672 + $0x88] sm:$0xff]
    %v1691 = vld [vmem:[%s1672 + $0x90] sm:$0xff]
    %v1692 = vld [vmem:[%s1672 + $0x98] sm:$0xff]
    %v1693 = vld [vmem:[%s1672 + $0xa0] sm:$0xff]
    %v1694 = vld [vmem:[%s1672 + $0xa8] sm:$0xff]
    %v1695 = vld [vmem:[%s1672 + $0xb0] sm:$0xff]
    %v1696 = vld [vmem:[%s1672 + $0xb8] sm:$0xff]
    %v1697 = vld [vmem:[%s1672 + $0xc0] sm:$0xff]
    %v1698 = vld [vmem:[%s1672 + $0xc8] sm:$0xff]
    %v1699 = vld [vmem:[%s1672 + $0xd0] sm:$0xff]
    %v1700 = vld [vmem:[%s1672 + $0xd8] sm:$0xff]
    %v1701 = vld [vmem:[%s1672 + $0xe0] sm:$0xff]
    %v1702 = vld [vmem:[%s1672 + $0xe8] sm:$0xff]
    %v1703 = vld [vmem:[%s1672 + $0xf0] sm:$0xff]
    %v1704 = vld [vmem:[%s1672 + $0xf8] sm:$0xff]
    %v1705 = vld [vmem:[%s1672 + $0x100] sm:$0xff]
    %v1706 = vld [vmem:[%s1672 + $0x108] sm:$0xff]
    %v1707 = vld [vmem:[%s1672 + $0x110] sm:$0xff]
    %v1708 = vld [vmem:[%s1672 + $0x118] sm:$0xff]
    %v1709 = vld [vmem:[%s1672 + $0x120] sm:$0xff]
    %v1710 = vld [vmem:[%s1672 + $0x128] sm:$0xff]
    %v1711 = vld [vmem:[%s1672 + $0x130] sm:$0xff]
    %v1712 = vld [vmem:[%s1672 + $0x138] sm:$0xff]
    %v1713 = vld [vmem:[%s1672 + $0x140] sm:$0xff]
    %v1714 = vld [vmem:[%s1672 + $0x148] sm:$0xff]
    %v1715 = vld [vmem:[%s1672 + $0x150] sm:$0xff]
    %v1716 = vld [vmem:[%s1672 + $0x158] sm:$0xff]
    %v1717 = vld [vmem:[%s1672 + $0x160] sm:$0xff]
    %v1718 = vld [vmem:[%s1672 + $0x168] sm:$0xff]
    %v1719 = vld [vmem:[%s1672 + $0x170] sm:$0xff]
    %v1720 = vld [vmem:[%s1672 + $0x178] sm:$0xff]
    %v1721 = vld [vmem:[%s1672 + $0x180] sm:$0xff]
    %v1722 = vld [vmem:[%s1672 + $0x188] sm:$0xff]
    %v1723 = vld [vmem:[%s1672 + $0x190] sm:$0xff]
    %v1724 = vld [vmem:[%s1672 + $0x198] sm:$0xff]
    %v1725 = vld [vmem:[%s1672 + $0x1a0] sm:$0xff]
    %v1726 = vld [vmem:[%s1672 + $0x1a8] sm:$0xff]
    %v1727 = vld [vmem:[%s1672 + $0x1b0] sm:$0xff]
    %v1728 = vld [vmem:[%s1672 + $0x1b8] sm:$0xff]
    %v1729 = vld [vmem:[%s1672 + $0x1c0] sm:$0xff]
    %v1730 = vld [vmem:[%s1672 + $0x1c8] sm:$0xff]
    %v1731 = vld [vmem:[%s1672 + $0x1d0] sm:$0xff]
    %v1732 = vld [vmem:[%s1672 + $0x1d8] sm:$0xff]
    %v1733 = vld [vmem:[%s1672 + $0x1e0] sm:$0xff]
    %v1734 = vld [vmem:[%s1672 + $0x1e8] sm:$0xff]
    %v1735 = vld [vmem:[%s1672 + $0x1f0] sm:$0xff]
    %v1736 = vld [vmem:[%s1672 + $0x1f8] sm:$0xff]
    %v1737 = vld [vmem:[%s1672 + $0x200] sm:$0xff]
    %v1738 = vld [vmem:[%s1672 + $0x208] sm:$0xff]
    %v1739 = vld [vmem:[%s1672 + $0x210] sm:$0xff]
    %v1740 = vld [vmem:[%s1672 + $0x218] sm:$0xff]
    %v1741 = vld [vmem:[%s1672 + $0x220] sm:$0xff]
    %v1742 = vld [vmem:[%s1672 + $0x228] sm:$0xff]
    %v1743 = vld [vmem:[%s1672 + $0x230] sm:$0xff]
    %v1744 = vld [vmem:[%s1672 + $0x238] sm:$0xff]
    %v1745 = vld [vmem:[%s1672 + $0x240] sm:$0xff]
    %v1746 = vld [vmem:[%s1672 + $0x248] sm:$0xff]
    %v1747 = vld [vmem:[%s1672 + $0x250] sm:$0xff]
    %v1748 = vld [vmem:[%s1672 + $0x258] sm:$0xff]
    %v1749 = vld [vmem:[%s1672 + $0x260] sm:$0xff]
    %v1750 = vld [vmem:[%s1672 + $0x268] sm:$0xff]
    %v1751 = vld [vmem:[%s1672 + $0x270] sm:$0xff]
    %v1752 = vld [vmem:[%s1672 + $0x278] sm:$0xff]
    %v1753 = vld [vmem:[%s1672 + $0x280] sm:$0xff]
    %v1754 = vld [vmem:[%s1672 + $0x288] sm:$0xff]
    %v1755 = vld [vmem:[%s1672 + $0x290] sm:$0xff]
    %v1756 = vld [vmem:[%s1672 + $0x298] sm:$0xff]
    %v1757 = vld [vmem:[%s1672 + $0x2a0] sm:$0xff]
    %v1758 = vld [vmem:[%s1672 + $0x2a8] sm:$0xff]
    %v1759 = vld [vmem:[%s1672 + $0x2b0] sm:$0xff]
    %v1760 = vld [vmem:[%s1672 + $0x2b8] sm:$0xff]
    %v1761 = vld [vmem:[%s1672 + $0x2c0] sm:$0xff]
    %v1762 = vld [vmem:[%s1672 + $0x2c8] sm:$0xff]
    %v1763 = vld [vmem:[%s1672 + $0x2d0] sm:$0xff]
    %v1764 = vld [vmem:[%s1672 + $0x2d8] sm:$0xff]
    %v1765 = vld [vmem:[%s1672 + $0x2e0] sm:$0xff]
    %v1766 = vld [vmem:[%s1672 + $0x2e8] sm:$0xff]
    %v1767 = vld [vmem:[%s1672 + $0x2f0] sm:$0xff]
    %v1768 = vld [vmem:[%s1672 + $0x2f8] sm:$0xff]
    %v1769 = vld [vmem:[%s1672 + $0x300] sm:$0xff]
    %v1770 = vld [vmem:[%s1672 + $0x308] sm:$0xff]
    %v1771 = vld [vmem:[%s1672 + $0x310] sm:$0xff]
    %v1772 = vld [vmem:[%s1672 + $0x318] sm:$0xff]
    %v1773 = vld [vmem:[%s1672 + $0x320] sm:$0xff]
    %v1774 = vld [vmem:[%s1672 + $0x328] sm:$0xff]
    %v1775 = vld [vmem:[%s1672 + $0x330] sm:$0xff]
    %v1776 = vld [vmem:[%s1672 + $0x338] sm:$0xff]
    %v1777 = vld [vmem:[%s1672 + $0x340] sm:$0xff]
    %v1778 = vld [vmem:[%s1672 + $0x348] sm:$0xff]
    %v1779 = vld [vmem:[%s1672 + $0x350] sm:$0xff]
    %v1780 = vld [vmem:[%s1672 + $0x358] sm:$0xff]
    %v1781 = vld [vmem:[%s1672 + $0x360] sm:$0xff]
    %v1782 = vld [vmem:[%s1672 + $0x368] sm:$0xff]
    %v1783 = vld [vmem:[%s1672 + $0x370] sm:$0xff]
    %v1784 = vld [vmem:[%s1672 + $0x378] sm:$0xff]
    %v1785 = vld [vmem:[%s1672 + $0x380] sm:$0xff]
    %v1786 = vld [vmem:[%s1672 + $0x388] sm:$0xff]
    %v1787 = vld [vmem:[%s1672 + $0x390] sm:$0xff]
    %v1788 = vld [vmem:[%s1672 + $0x398] sm:$0xff]
    %v1789 = vld [vmem:[%s1672 + $0x3a0] sm:$0xff]
    %v1790 = vld [vmem:[%s1672 + $0x3a8] sm:$0xff]
    %v1791 = vld [vmem:[%s1672 + $0x3b0] sm:$0xff]
    %v1792 = vld [vmem:[%s1672 + $0x3b8] sm:$0xff]
    %v1793 = vld [vmem:[%s1672 + $0x3c0] sm:$0xff]
    %v1794 = vld [vmem:[%s1672 + $0x3c8] sm:$0xff]
    %v1795 = vld [vmem:[%s1672 + $0x3d0] sm:$0xff]
    %v1796 = vld [vmem:[%s1672 + $0x3d8] sm:$0xff]
    %v1797 = vld [vmem:[%s1672 + $0x3e0] sm:$0xff]
    %v1798 = vld [vmem:[%s1672 + $0x3e8] sm:$0xff]
    %v1799 = vld [vmem:[%s1672 + $0x3f0] sm:$0xff]
    %v1800 = vld [vmem:[%s1672 + $0x3f8] sm:$0xff]
    %v1801 = vld [vmem:[%s1672 + $0x400] sm:$0xff]
    %v1802 = vld [vmem:[%s1672 + $0x408] sm:$0xff]
    %v1803 = vld [vmem:[%s1672 + $0x410] sm:$0xff]
    %v1804 = vld [vmem:[%s1672 + $0x418] sm:$0xff]
    %v1805 = vld [vmem:[%s1672 + $0x420] sm:$0xff]
    %v1806 = vld [vmem:[%s1672 + $0x428] sm:$0xff]
    %v1807 = vld [vmem:[%s1672 + $0x430] sm:$0xff]
    %v1808 = vld [vmem:[%s1672 + $0x438] sm:$0xff]
    %v1809 = vld [vmem:[%s1672 + $0x440] sm:$0xff]
    %v1810 = vld [vmem:[%s1672 + $0x448] sm:$0xff]
    %v1811 = vld [vmem:[%s1672 + $0x450] sm:$0xff]
    %v1812 = vld [vmem:[%s1672 + $0x458] sm:$0xff]
    %v1813 = vld [vmem:[%s1672 + $0x460] sm:$0xff]
    %v1814 = vld [vmem:[%s1672 + $0x468] sm:$0xff]
    %v1815 = vld [vmem:[%s1672 + $0x470] sm:$0xff]
    %v1816 = vld [vmem:[%s1672 + $0x478] sm:$0xff]
    %v1817 = vld [vmem:[%s1672 + $0x480] sm:$0xff]
    %v1818 = vld [vmem:[%s1672 + $0x488] sm:$0xff]
    %v1819 = vld [vmem:[%s1672 + $0x490] sm:$0xff]
    %v1820 = vld [vmem:[%s1672 + $0x498] sm:$0xff]
    %v1821 = vld [vmem:[%s1672 + $0x4a0] sm:$0xff]
    %v1822 = vld [vmem:[%s1672 + $0x4a8] sm:$0xff]
    %v1823 = vld [vmem:[%s1672 + $0x4b0] sm:$0xff]
    %v1824 = vld [vmem:[%s1672 + $0x4b8] sm:$0xff]
    %v1825 = vld [vmem:[%s1672 + $0x4c0] sm:$0xff]
    %v1826 = vld [vmem:[%s1672 + $0x4c8] sm:$0xff]
    %v1827 = vld [vmem:[%s1672 + $0x4d0] sm:$0xff]
    %v1828 = vld [vmem:[%s1672 + $0x4d8] sm:$0xff]
    %v1829 = vld [vmem:[%s1672 + $0x4e0] sm:$0xff]
    %v1830 = vld [vmem:[%s1672 + $0x4e8] sm:$0xff]
    %v1831 = vld [vmem:[%s1672 + $0x4f0] sm:$0xff]
    %v1832 = vld [vmem:[%s1672 + $0x4f8] sm:$0xff]
    %v1833 = vld [vmem:[%s1672 + $0x500] sm:$0xff]
    %v1834 = vld [vmem:[%s1672 + $0x508] sm:$0xff]
    %v1835 = vld [vmem:[%s1672 + $0x510] sm:$0xff]
    %v1836 = vld [vmem:[%s1672 + $0x518] sm:$0xff]
    %v1837 = vld [vmem:[%s1672 + $0x520] sm:$0xff]
    %v1838 = vld [vmem:[%s1672 + $0x528] sm:$0xff]
    %v1839 = vld [vmem:[%s1672 + $0x530] sm:$0xff]
    %v1840 = vld [vmem:[%s1672 + $0x538] sm:$0xff]
    %v1841 = vld [vmem:[%s1672 + $0x540] sm:$0xff]
    %v1842 = vld [vmem:[%s1672 + $0x548] sm:$0xff]
    %v1843 = vld [vmem:[%s1672 + $0x550] sm:$0xff]
    %v1844 = vld [vmem:[%s1672 + $0x558] sm:$0xff]
    %v1845 = vld [vmem:[%s1672 + $0x560] sm:$0xff]
    %v1846 = vld [vmem:[%s1672 + $0x568] sm:$0xff]
    %v1847 = vld [vmem:[%s1672 + $0x570] sm:$0xff]
    %v1848 = vld [vmem:[%s1672 + $0x578] sm:$0xff]
    %v1849 = vld [vmem:[%s1672 + $0x580] sm:$0xff]
    %v1850 = vld [vmem:[%s1672 + $0x588] sm:$0xff]
    %v1851 = vld [vmem:[%s1672 + $0x590] sm:$0xff]
    %v1852 = vld [vmem:[%s1672 + $0x598] sm:$0xff]
    %v1853 = vld [vmem:[%s1672 + $0x5a0] sm:$0xff]
    %v1854 = vld [vmem:[%s1672 + $0x5a8] sm:$0xff]
    %v1855 = vld [vmem:[%s1672 + $0x5b0] sm:$0xff]
    %v1856 = vld [vmem:[%s1672 + $0x5b8] sm:$0xff]
    %v1857 = vld [vmem:[%s1672 + $0x5c0] sm:$0xff]
    %v1858 = vld [vmem:[%s1672 + $0x5c8] sm:$0xff]
    %v1859 = vld [vmem:[%s1672 + $0x5d0] sm:$0xff]
    %v1860 = vld [vmem:[%s1672 + $0x5d8] sm:$0xff]
    %v1861 = vld [vmem:[%s1672 + $0x5e0] sm:$0xff]
    %v1862 = vld [vmem:[%s1672 + $0x5e8] sm:$0xff]
    %v1863 = vld [vmem:[%s1672 + $0x5f0] sm:$0xff]
    %v1864 = vld [vmem:[%s1672 + $0x5f8] sm:$0xff]
    %v2057 = vunpack.c.l.b16 %v1673
    %v2058 = vunpack.c.h.b16 %v1673
    %v2059 = vunpack.c.l.b16 %v1674
    %v2060 = vunpack.c.h.b16 %v1674
    %v2061 = vunpack.c.l.b16 %v1675
    %v2062 = vunpack.c.h.b16 %v1675
    %v2063 = vunpack.c.l.b16 %v1676
    %v2064 = vunpack.c.h.b16 %v1676
    %v2065 = vunpack.c.l.b16 %v1677
    %v2066 = vunpack.c.h.b16 %v1677
    %v2067 = vunpack.c.l.b16 %v1678
    %v2068 = vunpack.c.h.b16 %v1678
    %v2069 = vunpack.c.l.b16 %v1679
    %v2070 = vunpack.c.h.b16 %v1679
    %v2071 = vunpack.c.l.b16 %v1680
    %v2072 = vunpack.c.h.b16 %v1680
    %v2073 = vunpack.c.l.b16 %v1681
    %v2074 = vunpack.c.h.b16 %v1681
    %v2075 = vunpack.c.l.b16 %v1682
    %v2076 = vunpack.c.h.b16 %v1682
    %v2077 = vunpack.c.l.b16 %v1683
    %v2078 = vunpack.c.h.b16 %v1683
    %v2079 = vunpack.c.l.b16 %v1684
    %v2080 = vunpack.c.h.b16 %v1684
    %v2081 = vunpack.c.l.b16 %v1685
    %v2082 = vunpack.c.h.b16 %v1685
    %v2083 = vunpack.c.l.b16 %v1686
    %v2084 = vunpack.c.h.b16 %v1686
    %v2085 = vunpack.c.l.b16 %v1687
    %v2086 = vunpack.c.h.b16 %v1687
    %v2087 = vunpack.c.l.b16 %v1688
    %v2088 = vunpack.c.h.b16 %v1688
    %v2089 = vunpack.c.l.b16 %v1689
    %v2090 = vunpack.c.h.b16 %v1689
    %v2091 = vunpack.c.l.b16 %v1690
    %v2092 = vunpack.c.h.b16 %v1690
    %v2093 = vunpack.c.l.b16 %v1691
    %v2094 = vunpack.c.h.b16 %v1691
    %v2095 = vunpack.c.l.b16 %v1692
    %v2096 = vunpack.c.h.b16 %v1692
    %v2097 = vunpack.c.l.b16 %v1693
    %v2098 = vunpack.c.h.b16 %v1693
    %v2099 = vunpack.c.l.b16 %v1694
    %v2100 = vunpack.c.h.b16 %v1694
    %v2101 = vunpack.c.l.b16 %v1695
    %v2102 = vunpack.c.h.b16 %v1695
    %v2103 = vunpack.c.l.b16 %v1696
    %v2104 = vunpack.c.h.b16 %v1696
    %v2105 = vunpack.c.l.b16 %v1697
    %v2106 = vunpack.c.h.b16 %v1697
    %v2107 = vunpack.c.l.b16 %v1698
    %v2108 = vunpack.c.h.b16 %v1698
    %v2109 = vunpack.c.l.b16 %v1699
    %v2110 = vunpack.c.h.b16 %v1699
    %v2111 = vunpack.c.l.b16 %v1700
    %v2112 = vunpack.c.h.b16 %v1700
    %v2113 = vunpack.c.l.b16 %v1701
    %v2114 = vunpack.c.h.b16 %v1701
    %v2115 = vunpack.c.l.b16 %v1702
    %v2116 = vunpack.c.h.b16 %v1702
    %v2117 = vunpack.c.l.b16 %v1703
    %v2118 = vunpack.c.h.b16 %v1703
    %v2119 = vunpack.c.l.b16 %v1704
    %v2120 = vunpack.c.h.b16 %v1704
    %v2121 = vunpack.c.l.b16 %v1705
    %v2122 = vunpack.c.h.b16 %v1705
    %v2123 = vunpack.c.l.b16 %v1706
    %v2124 = vunpack.c.h.b16 %v1706
    %v2125 = vunpack.c.l.b16 %v1707
    %v2126 = vunpack.c.h.b16 %v1707
    %v2127 = vunpack.c.l.b16 %v1708
    %v2128 = vunpack.c.h.b16 %v1708
    %v2129 = vunpack.c.l.b16 %v1709
    %v2130 = vunpack.c.h.b16 %v1709
    %v2131 = vunpack.c.l.b16 %v1710
    %v2132 = vunpack.c.h.b16 %v1710
    %v2133 = vunpack.c.l.b16 %v1711
    %v2134 = vunpack.c.h.b16 %v1711
    %v2135 = vunpack.c.l.b16 %v1712
    %v2136 = vunpack.c.h.b16 %v1712
    %v2137 = vunpack.c.l.b16 %v1713
    %v2138 = vunpack.c.h.b16 %v1713
    %v2139 = vunpack.c.l.b16 %v1714
    %v2140 = vunpack.c.h.b16 %v1714
    %v2141 = vunpack.c.l.b16 %v1715
    %v2142 = vunpack.c.h.b16 %v1715
    %v2143 = vunpack.c.l.b16 %v1716
    %v2144 = vunpack.c.h.b16 %v1716
    %v2145 = vunpack.c.l.b16 %v1717
    %v2146 = vunpack.c.h.b16 %v1717
    %v2147 = vunpack.c.l.b16 %v1718
    %v2148 = vunpack.c.h.b16 %v1718
    %v2149 = vunpack.c.l.b16 %v1719
    %v2150 = vunpack.c.h.b16 %v1719
    %v2151 = vunpack.c.l.b16 %v1720
    %v2152 = vunpack.c.h.b16 %v1720
    %v2153 = vunpack.c.l.b16 %v1721
    %v2154 = vunpack.c.h.b16 %v1721
    %v2155 = vunpack.c.l.b16 %v1722
    %v2156 = vunpack.c.h.b16 %v1722
    %v2157 = vunpack.c.l.b16 %v1723
    %v2158 = vunpack.c.h.b16 %v1723
    %v2159 = vunpack.c.l.b16 %v1724
    %v2160 = vunpack.c.h.b16 %v1724
    %v2161 = vunpack.c.l.b16 %v1725
    %v2162 = vunpack.c.h.b16 %v1725
    %v2163 = vunpack.c.l.b16 %v1726
    %v2164 = vunpack.c.h.b16 %v1726
    %v2165 = vunpack.c.l.b16 %v1727
    %v2166 = vunpack.c.h.b16 %v1727
    %v2167 = vunpack.c.l.b16 %v1728
    %v2168 = vunpack.c.h.b16 %v1728
    %v2169 = vunpack.c.l.b16 %v1729
    %v2170 = vunpack.c.h.b16 %v1729
    %v2171 = vunpack.c.l.b16 %v1730
    %v2172 = vunpack.c.h.b16 %v1730
    %v2173 = vunpack.c.l.b16 %v1731
    %v2174 = vunpack.c.h.b16 %v1731
    %v2175 = vunpack.c.l.b16 %v1732
    %v2176 = vunpack.c.h.b16 %v1732
    %v2177 = vunpack.c.l.b16 %v1733
    %v2178 = vunpack.c.h.b16 %v1733
    %v2179 = vunpack.c.l.b16 %v1734
    %v2180 = vunpack.c.h.b16 %v1734
    %v2181 = vunpack.c.l.b16 %v1735
    %v2182 = vunpack.c.h.b16 %v1735
    %v2183 = vunpack.c.l.b16 %v1736
    %v2184 = vunpack.c.h.b16 %v1736
    %v2185 = vunpack.c.l.b16 %v1737
    %v2186 = vunpack.c.h.b16 %v1737
    %v2187 = vunpack.c.l.b16 %v1738
    %v2188 = vunpack.c.h.b16 %v1738
    %v2189 = vunpack.c.l.b16 %v1739
    %v2190 = vunpack.c.h.b16 %v1739
    %v2191 = vunpack.c.l.b16 %v1740
    %v2192 = vunpack.c.h.b16 %v1740
    %v2193 = vunpack.c.l.b16 %v1741
    %v2194 = vunpack.c.h.b16 %v1741
    %v2195 = vunpack.c.l.b16 %v1742
    %v2196 = vunpack.c.h.b16 %v1742
    %v2197 = vunpack.c.l.b16 %v1743
    %v2198 = vunpack.c.h.b16 %v1743
    %v2199 = vunpack.c.l.b16 %v1744
    %v2200 = vunpack.c.h.b16 %v1744
    %v2201 = vunpack.c.l.b16 %v1745
    %v2202 = vunpack.c.h.b16 %v1745
    %v2203 = vunpack.c.l.b16 %v1746
    %v2204 = vunpack.c.h.b16 %v1746
    %v2205 = vunpack.c.l.b16 %v1747
    %v2206 = vunpack.c.h.b16 %v1747
    %v2207 = vunpack.c.l.b16 %v1748
    %v2208 = vunpack.c.h.b16 %v1748
    %v2209 = vunpack.c.l.b16 %v1749
    %v2210 = vunpack.c.h.b16 %v1749
    %v2211 = vunpack.c.l.b16 %v1750
    %v2212 = vunpack.c.h.b16 %v1750
    %v2213 = vunpack.c.l.b16 %v1751
    %v2214 = vunpack.c.h.b16 %v1751
    %v2215 = vunpack.c.l.b16 %v1752
    %v2216 = vunpack.c.h.b16 %v1752
    %v2217 = vunpack.c.l.b16 %v1753
    %v2218 = vunpack.c.h.b16 %v1753
    %v2219 = vunpack.c.l.b16 %v1754
    %v2220 = vunpack.c.h.b16 %v1754
    %v2221 = vunpack.c.l.b16 %v1755
    %v2222 = vunpack.c.h.b16 %v1755
    %v2223 = vunpack.c.l.b16 %v1756
    %v2224 = vunpack.c.h.b16 %v1756
    %v2225 = vunpack.c.l.b16 %v1757
    %v2226 = vunpack.c.h.b16 %v1757
    %v2227 = vunpack.c.l.b16 %v1758
    %v2228 = vunpack.c.h.b16 %v1758
    %v2229 = vunpack.c.l.b16 %v1759
    %v2230 = vunpack.c.h.b16 %v1759
    %v2231 = vunpack.c.l.b16 %v1760
    %v2232 = vunpack.c.h.b16 %v1760
    %v2233 = vunpack.c.l.b16 %v1761
    %v2234 = vunpack.c.h.b16 %v1761
    %v2235 = vunpack.c.l.b16 %v1762
    %v2236 = vunpack.c.h.b16 %v1762
    %v2237 = vunpack.c.l.b16 %v1763
    %v2238 = vunpack.c.h.b16 %v1763
    %v2239 = vunpack.c.l.b16 %v1764
    %v2240 = vunpack.c.h.b16 %v1764
    %v2241 = vunpack.c.l.b16 %v1765
    %v2242 = vunpack.c.h.b16 %v1765
    %v2243 = vunpack.c.l.b16 %v1766
    %v2244 = vunpack.c.h.b16 %v1766
    %v2245 = vunpack.c.l.b16 %v1767
    %v2246 = vunpack.c.h.b16 %v1767
    %v2247 = vunpack.c.l.b16 %v1768
    %v2248 = vunpack.c.h.b16 %v1768
    %v2249 = vunpack.c.l.b16 %v1769
    %v2250 = vunpack.c.h.b16 %v1769
    %v2251 = vunpack.c.l.b16 %v1770
    %v2252 = vunpack.c.h.b16 %v1770
    %v2253 = vunpack.c.l.b16 %v1771
    %v2254 = vunpack.c.h.b16 %v1771
    %v2255 = vunpack.c.l.b16 %v1772
    %v2256 = vunpack.c.h.b16 %v1772
    %v2257 = vunpack.c.l.b16 %v1773
    %v2258 = vunpack.c.h.b16 %v1773
    %v2259 = vunpack.c.l.b16 %v1774
    %v2260 = vunpack.c.h.b16 %v1774
    %v2261 = vunpack.c.l.b16 %v1775
    %v2262 = vunpack.c.h.b16 %v1775
    %v2263 = vunpack.c.l.b16 %v1776
    %v2264 = vunpack.c.h.b16 %v1776
    %v2265 = vunpack.c.l.b16 %v1777
    %v2266 = vunpack.c.h.b16 %v1777
    %v2267 = vunpack.c.l.b16 %v1778
    %v2268 = vunpack.c.h.b16 %v1778
    %v2269 = vunpack.c.l.b16 %v1779
    %v2270 = vunpack.c.h.b16 %v1779
    %v2271 = vunpack.c.l.b16 %v1780
    %v2272 = vunpack.c.h.b16 %v1780
    %v2273 = vunpack.c.l.b16 %v1781
    %v2274 = vunpack.c.h.b16 %v1781
    %v2275 = vunpack.c.l.b16 %v1782
    %v2276 = vunpack.c.h.b16 %v1782
    %v2277 = vunpack.c.l.b16 %v1783
    %v2278 = vunpack.c.h.b16 %v1783
    %v2279 = vunpack.c.l.b16 %v1784
    %v2280 = vunpack.c.h.b16 %v1784
    %v2281 = vunpack.c.l.b16 %v1785
    %v2282 = vunpack.c.h.b16 %v1785
    %v2283 = vunpack.c.l.b16 %v1786
    %v2284 = vunpack.c.h.b16 %v1786
    %v2285 = vunpack.c.l.b16 %v1787
    %v2286 = vunpack.c.h.b16 %v1787
    %v2287 = vunpack.c.l.b16 %v1788
    %v2288 = vunpack.c.h.b16 %v1788
    %v2289 = vunpack.c.l.b16 %v1789
    %v2290 = vunpack.c.h.b16 %v1789
    %v2291 = vunpack.c.l.b16 %v1790
    %v2292 = vunpack.c.h.b16 %v1790
    %v2293 = vunpack.c.l.b16 %v1791
    %v2294 = vunpack.c.h.b16 %v1791
    %v2295 = vunpack.c.l.b16 %v1792
    %v2296 = vunpack.c.h.b16 %v1792
    %v2297 = vunpack.c.l.b16 %v1793
    %v2298 = vunpack.c.h.b16 %v1793
    %v2299 = vunpack.c.l.b16 %v1794
    %v2300 = vunpack.c.h.b16 %v1794
    %v2301 = vunpack.c.l.b16 %v1795
    %v2302 = vunpack.c.h.b16 %v1795
    %v2303 = vunpack.c.l.b16 %v1796
    %v2304 = vunpack.c.h.b16 %v1796
    %v2305 = vunpack.c.l.b16 %v1797
    %v2306 = vunpack.c.h.b16 %v1797
    %v2307 = vunpack.c.l.b16 %v1798
    %v2308 = vunpack.c.h.b16 %v1798
    %v2309 = vunpack.c.l.b16 %v1799
    %v2310 = vunpack.c.h.b16 %v1799
    %v2311 = vunpack.c.l.b16 %v1800
    %v2312 = vunpack.c.h.b16 %v1800
    %v2313 = vunpack.c.l.b16 %v1801
    %v2314 = vunpack.c.h.b16 %v1801
    %v2315 = vunpack.c.l.b16 %v1802
    %v2316 = vunpack.c.h.b16 %v1802
    %v2317 = vunpack.c.l.b16 %v1803
    %v2318 = vunpack.c.h.b16 %v1803
    %v2319 = vunpack.c.l.b16 %v1804
    %v2320 = vunpack.c.h.b16 %v1804
    %v2321 = vunpack.c.l.b16 %v1805
    %v2322 = vunpack.c.h.b16 %v1805
    %v2323 = vunpack.c.l.b16 %v1806
    %v2324 = vunpack.c.h.b16 %v1806
    %v2325 = vunpack.c.l.b16 %v1807
    %v2326 = vunpack.c.h.b16 %v1807
    %v2327 = vunpack.c.l.b16 %v1808
    %v2328 = vunpack.c.h.b16 %v1808
    %v2329 = vunpack.c.l.b16 %v1809
    %v2330 = vunpack.c.h.b16 %v1809
    %v2331 = vunpack.c.l.b16 %v1810
    %v2332 = vunpack.c.h.b16 %v1810
    %v2333 = vunpack.c.l.b16 %v1811
    %v2334 = vunpack.c.h.b16 %v1811
    %v2335 = vunpack.c.l.b16 %v1812
    %v2336 = vunpack.c.h.b16 %v1812
    %v2337 = vunpack.c.l.b16 %v1813
    %v2338 = vunpack.c.h.b16 %v1813
    %v2339 = vunpack.c.l.b16 %v1814
    %v2340 = vunpack.c.h.b16 %v1814
    %v2341 = vunpack.c.l.b16 %v1815
    %v2342 = vunpack.c.h.b16 %v1815
    %v2343 = vunpack.c.l.b16 %v1816
    %v2344 = vunpack.c.h.b16 %v1816
    %v2345 = vunpack.c.l.b16 %v1817
    %v2346 = vunpack.c.h.b16 %v1817
    %v2347 = vunpack.c.l.b16 %v1818
    %v2348 = vunpack.c.h.b16 %v1818
    %v2349 = vunpack.c.l.b16 %v1819
    %v2350 = vunpack.c.h.b16 %v1819
    %v2351 = vunpack.c.l.b16 %v1820
    %v2352 = vunpack.c.h.b16 %v1820
    %v2353 = vunpack.c.l.b16 %v1821
    %v2354 = vunpack.c.h.b16 %v1821
    %v2355 = vunpack.c.l.b16 %v1822
    %v2356 = vunpack.c.h.b16 %v1822
    %v2357 = vunpack.c.l.b16 %v1823
    %v2358 = vunpack.c.h.b16 %v1823
    %v2359 = vunpack.c.l.b16 %v1824
    %v2360 = vunpack.c.h.b16 %v1824
    %v2361 = vunpack.c.l.b16 %v1825
    %v2362 = vunpack.c.h.b16 %v1825
    %v2363 = vunpack.c.l.b16 %v1826
    %v2364 = vunpack.c.h.b16 %v1826
    %v2365 = vunpack.c.l.b16 %v1827
    %v2366 = vunpack.c.h.b16 %v1827
    %v2367 = vunpack.c.l.b16 %v1828
    %v2368 = vunpack.c.h.b16 %v1828
    %v2369 = vunpack.c.l.b16 %v1829
    %v2370 = vunpack.c.h.b16 %v1829
    %v2371 = vunpack.c.l.b16 %v1830
    %v2372 = vunpack.c.h.b16 %v1830
    %v2373 = vunpack.c.l.b16 %v1831
    %v2374 = vunpack.c.h.b16 %v1831
    %v2375 = vunpack.c.l.b16 %v1832
    %v2376 = vunpack.c.h.b16 %v1832
    %v2377 = vunpack.c.l.b16 %v1833
    %v2378 = vunpack.c.h.b16 %v1833
    %v2379 = vunpack.c.l.b16 %v1834
    %v2380 = vunpack.c.h.b16 %v1834
    %v2381 = vunpack.c.l.b16 %v1835
    %v2382 = vunpack.c.h.b16 %v1835
    %v2383 = vunpack.c.l.b16 %v1836
    %v2384 = vunpack.c.h.b16 %v1836
    %v2385 = vunpack.c.l.b16 %v1837
    %v2386 = vunpack.c.h.b16 %v1837
    %v2387 = vunpack.c.l.b16 %v1838
    %v2388 = vunpack.c.h.b16 %v1838
    %v2389 = vunpack.c.l.b16 %v1839
    %v2390 = vunpack.c.h.b16 %v1839
    %v2391 = vunpack.c.l.b16 %v1840
    %v2392 = vunpack.c.h.b16 %v1840
    %v2393 = vunpack.c.l.b16 %v1841
    %v2394 = vunpack.c.h.b16 %v1841
    %v2395 = vunpack.c.l.b16 %v1842
    %v2396 = vunpack.c.h.b16 %v1842
    %v2397 = vunpack.c.l.b16 %v1843
    %v2398 = vunpack.c.h.b16 %v1843
    %v2399 = vunpack.c.l.b16 %v1844
    %v2400 = vunpack.c.h.b16 %v1844
    %v2401 = vunpack.c.l.b16 %v1845
    %v2402 = vunpack.c.h.b16 %v1845
    %v2403 = vunpack.c.l.b16 %v1846
    %v2404 = vunpack.c.h.b16 %v1846
    %v2405 = vunpack.c.l.b16 %v1847
    %v2406 = vunpack.c.h.b16 %v1847
    %v2407 = vunpack.c.l.b16 %v1848
    %v2408 = vunpack.c.h.b16 %v1848
    %v2409 = vunpack.c.l.b16 %v1849
    %v2410 = vunpack.c.h.b16 %v1849
    %v2411 = vunpack.c.l.b16 %v1850
    %v2412 = vunpack.c.h.b16 %v1850
    %v2413 = vunpack.c.l.b16 %v1851
    %v2414 = vunpack.c.h.b16 %v1851
    %v2415 = vunpack.c.l.b16 %v1852
    %v2416 = vunpack.c.h.b16 %v1852
    %v2417 = vunpack.c.l.b16 %v1853
    %v2418 = vunpack.c.h.b16 %v1853
    %v2419 = vunpack.c.l.b16 %v1854
    %v2420 = vunpack.c.h.b16 %v1854
    %v2421 = vunpack.c.l.b16 %v1855
    %v2422 = vunpack.c.h.b16 %v1855
    %v2423 = vunpack.c.l.b16 %v1856
    %v2424 = vunpack.c.h.b16 %v1856
    %v2425 = vunpack.c.l.b16 %v1857
    %v2426 = vunpack.c.h.b16 %v1857
    %v2427 = vunpack.c.l.b16 %v1858
    %v2428 = vunpack.c.h.b16 %v1858
    %v2429 = vunpack.c.l.b16 %v1859
    %v2430 = vunpack.c.h.b16 %v1859
    %v2431 = vunpack.c.l.b16 %v1860
    %v2432 = vunpack.c.h.b16 %v1860
    %v2433 = vunpack.c.l.b16 %v1861
    %v2434 = vunpack.c.h.b16 %v1861
    %v2435 = vunpack.c.l.b16 %v1862
    %v2436 = vunpack.c.h.b16 %v1862
    %v2437 = vunpack.c.l.b16 %v1863
    %v2438 = vunpack.c.h.b16 %v1863
    %v2439 = vunpack.c.l.b16 %v1864
    %v2440 = vunpack.c.h.b16 %v1864
    %v2441 = vpack.c.b16 %v2063, %v2057
    %v2442 = vpack.c.b16 %v2064, %v2058
    %v2443 = vpack.c.b16 %v2065, %v2059
    %v2444 = vpack.c.b16 %v2066, %v2060
    %v2445 = vpack.c.b16 %v2067, %v2061
    %v2446 = vpack.c.b16 %v2068, %v2062
    %v2447 = vpack.c.b16 %v2075, %v2069
    %v2448 = vpack.c.b16 %v2076, %v2070
    %v2449 = vpack.c.b16 %v2077, %v2071
    %v2450 = vpack.c.b16 %v2078, %v2072
    %v2451 = vpack.c.b16 %v2079, %v2073
    %v2452 = vpack.c.b16 %v2080, %v2074
    %v2453 = vpack.c.b16 %v2087, %v2081
    %v2454 = vpack.c.b16 %v2088, %v2082
    %v2455 = vpack.c.b16 %v2089, %v2083
    %v2456 = vpack.c.b16 %v2090, %v2084
    %v2457 = vpack.c.b16 %v2091, %v2085
    %v2458 = vpack.c.b16 %v2092, %v2086
    %v2459 = vpack.c.b16 %v2099, %v2093
    %v2460 = vpack.c.b16 %v2100, %v2094
    %v2461 = vpack.c.b16 %v2101, %v2095
    %v2462 = vpack.c.b16 %v2102, %v2096
    %v2463 = vpack.c.b16 %v2103, %v2097
    %v2464 = vpack.c.b16 %v2104, %v2098
    %v2465 = vpack.c.b16 %v2111, %v2105
    %v2466 = vpack.c.b16 %v2112, %v2106
    %v2467 = vpack.c.b16 %v2113, %v2107
    %v2468 = vpack.c.b16 %v2114, %v2108
    %v2469 = vpack.c.b16 %v2115, %v2109
    %v2470 = vpack.c.b16 %v2116, %v2110
    %v2471 = vpack.c.b16 %v2123, %v2117
    %v2472 = vpack.c.b16 %v2124, %v2118
    %v2473 = vpack.c.b16 %v2125, %v2119
    %v2474 = vpack.c.b16 %v2126, %v2120
    %v2475 = vpack.c.b16 %v2127, %v2121
    %v2476 = vpack.c.b16 %v2128, %v2122
    %v2477 = vpack.c.b16 %v2135, %v2129
    %v2478 = vpack.c.b16 %v2136, %v2130
    %v2479 = vpack.c.b16 %v2137, %v2131
    %v2480 = vpack.c.b16 %v2138, %v2132
    %v2481 = vpack.c.b16 %v2139, %v2133
    %v2482 = vpack.c.b16 %v2140, %v2134
    %v2483 = vpack.c.b16 %v2147, %v2141
    %v2484 = vpack.c.b16 %v2148, %v2142
    %v2485 = vpack.c.b16 %v2149, %v2143
    %v2486 = vpack.c.b16 %v2150, %v2144
    %v2487 = vpack.c.b16 %v2151, %v2145
    %v2488 = vpack.c.b16 %v2152, %v2146
    %v2489 = vpack.c.b16 %v2159, %v2153
    %v2490 = vpack.c.b16 %v2160, %v2154
    %v2491 = vpack.c.b16 %v2161, %v2155
    %v2492 = vpack.c.b16 %v2162, %v2156
    %v2493 = vpack.c.b16 %v2163, %v2157
    %v2494 = vpack.c.b16 %v2164, %v2158
    %v2495 = vpack.c.b16 %v2171, %v2165
    %v2496 = vpack.c.b16 %v2172, %v2166
    %v2497 = vpack.c.b16 %v2173, %v2167
    %v2498 = vpack.c.b16 %v2174, %v2168
    %v2499 = vpack.c.b16 %v2175, %v2169
    %v2500 = vpack.c.b16 %v2176, %v2170
    %v2501 = vpack.c.b16 %v2183, %v2177
    %v2502 = vpack.c.b16 %v2184, %v2178
    %v2503 = vpack.c.b16 %v2185, %v2179
    %v2504 = vpack.c.b16 %v2186, %v2180
    %v2505 = vpack.c.b16 %v2187, %v2181
    %v2506 = vpack.c.b16 %v2188, %v2182
    %v2507 = vpack.c.b16 %v2195, %v2189
    %v2508 = vpack.c.b16 %v2196, %v2190
    %v2509 = vpack.c.b16 %v2197, %v2191
    %v2510 = vpack.c.b16 %v2198, %v2192
    %v2511 = vpack.c.b16 %v2199, %v2193
    %v2512 = vpack.c.b16 %v2200, %v2194
    %v2513 = vpack.c.b16 %v2207, %v2201
    %v2514 = vpack.c.b16 %v2208, %v2202
    %v2515 = vpack.c.b16 %v2209, %v2203
    %v2516 = vpack.c.b16 %v2210, %v2204
    %v2517 = vpack.c.b16 %v2211, %v2205
    %v2518 = vpack.c.b16 %v2212, %v2206
    %v2519 = vpack.c.b16 %v2219, %v2213
    %v2520 = vpack.c.b16 %v2220, %v2214
    %v2521 = vpack.c.b16 %v2221, %v2215
    %v2522 = vpack.c.b16 %v2222, %v2216
    %v2523 = vpack.c.b16 %v2223, %v2217
    %v2524 = vpack.c.b16 %v2224, %v2218
    %v2525 = vpack.c.b16 %v2231, %v2225
    %v2526 = vpack.c.b16 %v2232, %v2226
    %v2527 = vpack.c.b16 %v2233, %v2227
    %v2528 = vpack.c.b16 %v2234, %v2228
    %v2529 = vpack.c.b16 %v2235, %v2229
    %v2530 = vpack.c.b16 %v2236, %v2230
    %v2531 = vpack.c.b16 %v2243, %v2237
    %v2532 = vpack.c.b16 %v2244, %v2238
    %v2533 = vpack.c.b16 %v2245, %v2239
    %v2534 = vpack.c.b16 %v2246, %v2240
    %v2535 = vpack.c.b16 %v2247, %v2241
    %v2536 = vpack.c.b16 %v2248, %v2242
    %v2537 = vpack.c.b16 %v2255, %v2249
    %v2538 = vpack.c.b16 %v2256, %v2250
    %v2539 = vpack.c.b16 %v2257, %v2251
    %v2540 = vpack.c.b16 %v2258, %v2252
    %v2541 = vpack.c.b16 %v2259, %v2253
    %v2542 = vpack.c.b16 %v2260, %v2254
    %v2543 = vpack.c.b16 %v2267, %v2261
    %v2544 = vpack.c.b16 %v2268, %v2262
    %v2545 = vpack.c.b16 %v2269, %v2263
    %v2546 = vpack.c.b16 %v2270, %v2264
    %v2547 = vpack.c.b16 %v2271, %v2265
    %v2548 = vpack.c.b16 %v2272, %v2266
    %v2549 = vpack.c.b16 %v2279, %v2273
    %v2550 = vpack.c.b16 %v2280, %v2274
    %v2551 = vpack.c.b16 %v2281, %v2275
    %v2552 = vpack.c.b16 %v2282, %v2276
    %v2553 = vpack.c.b16 %v2283, %v2277
    %v2554 = vpack.c.b16 %v2284, %v2278
    %v2555 = vpack.c.b16 %v2291, %v2285
    %v2556 = vpack.c.b16 %v2292, %v2286
    %v2557 = vpack.c.b16 %v2293, %v2287
    %v2558 = vpack.c.b16 %v2294, %v2288
    %v2559 = vpack.c.b16 %v2295, %v2289
    %v2560 = vpack.c.b16 %v2296, %v2290
    %v2561 = vpack.c.b16 %v2303, %v2297
    %v2562 = vpack.c.b16 %v2304, %v2298
    %v2563 = vpack.c.b16 %v2305, %v2299
    %v2564 = vpack.c.b16 %v2306, %v2300
    %v2565 = vpack.c.b16 %v2307, %v2301
    %v2566 = vpack.c.b16 %v2308, %v2302
    %v2567 = vpack.c.b16 %v2315, %v2309
    %v2568 = vpack.c.b16 %v2316, %v2310
    %v2569 = vpack.c.b16 %v2317, %v2311
    %v2570 = vpack.c.b16 %v2318, %v2312
    %v2571 = vpack.c.b16 %v2319, %v2313
    %v2572 = vpack.c.b16 %v2320, %v2314
    %v2573 = vpack.c.b16 %v2327, %v2321
    %v2574 = vpack.c.b16 %v2328, %v2322
    %v2575 = vpack.c.b16 %v2329, %v2323
    %v2576 = vpack.c.b16 %v2330, %v2324
    %v2577 = vpack.c.b16 %v2331, %v2325
    %v2578 = vpack.c.b16 %v2332, %v2326
    %v2579 = vpack.c.b16 %v2339, %v2333
    %v2580 = vpack.c.b16 %v2340, %v2334
    %v2581 = vpack.c.b16 %v2341, %v2335
    %v2582 = vpack.c.b16 %v2342, %v2336
    %v2583 = vpack.c.b16 %v2343, %v2337
    %v2584 = vpack.c.b16 %v2344, %v2338
    %v2585 = vpack.c.b16 %v2351, %v2345
    %v2586 = vpack.c.b16 %v2352, %v2346
    %v2587 = vpack.c.b16 %v2353, %v2347
    %v2588 = vpack.c.b16 %v2354, %v2348
    %v2589 = vpack.c.b16 %v2355, %v2349
    %v2590 = vpack.c.b16 %v2356, %v2350
    %v2591 = vpack.c.b16 %v2363, %v2357
    %v2592 = vpack.c.b16 %v2364, %v2358
    %v2593 = vpack.c.b16 %v2365, %v2359
    %v2594 = vpack.c.b16 %v2366, %v2360
    %v2595 = vpack.c.b16 %v2367, %v2361
    %v2596 = vpack.c.b16 %v2368, %v2362
    %v2597 = vpack.c.b16 %v2375, %v2369
    %v2598 = vpack.c.b16 %v2376, %v2370
    %v2599 = vpack.c.b16 %v2377, %v2371
    %v2600 = vpack.c.b16 %v2378, %v2372
    %v2601 = vpack.c.b16 %v2379, %v2373
    %v2602 = vpack.c.b16 %v2380, %v2374
    %v2603 = vpack.c.b16 %v2387, %v2381
    %v2604 = vpack.c.b16 %v2388, %v2382
    %v2605 = vpack.c.b16 %v2389, %v2383
    %v2606 = vpack.c.b16 %v2390, %v2384
    %v2607 = vpack.c.b16 %v2391, %v2385
    %v2608 = vpack.c.b16 %v2392, %v2386
    %v2609 = vpack.c.b16 %v2399, %v2393
    %v2610 = vpack.c.b16 %v2400, %v2394
    %v2611 = vpack.c.b16 %v2401, %v2395
    %v2612 = vpack.c.b16 %v2402, %v2396
    %v2613 = vpack.c.b16 %v2403, %v2397
    %v2614 = vpack.c.b16 %v2404, %v2398
    %v2615 = vpack.c.b16 %v2411, %v2405
    %v2616 = vpack.c.b16 %v2412, %v2406
    %v2617 = vpack.c.b16 %v2413, %v2407
    %v2618 = vpack.c.b16 %v2414, %v2408
    %v2619 = vpack.c.b16 %v2415, %v2409
    %v2620 = vpack.c.b16 %v2416, %v2410
    %v2621 = vpack.c.b16 %v2423, %v2417
    %v2622 = vpack.c.b16 %v2424, %v2418
    %v2623 = vpack.c.b16 %v2425, %v2419
    %v2624 = vpack.c.b16 %v2426, %v2420
    %v2625 = vpack.c.b16 %v2427, %v2421
    %v2626 = vpack.c.b16 %v2428, %v2422
    %v2627 = vpack.c.b16 %v2435, %v2429
    %v2628 = vpack.c.b16 %v2436, %v2430
    %v2629 = vpack.c.b16 %v2437, %v2431
    %v2630 = vpack.c.b16 %v2438, %v2432
    %v2631 = vpack.c.b16 %v2439, %v2433
    %v2632 = vpack.c.b16 %v2440, %v2434
    %2825 = vmatpush.bf16.msra.mxu0 %v2483
    %2826 = vmatpush.bf16.msra.mxu0 %v2477
    %2827 = vmatpush.bf16.msra.mxu0 %v2471
    %2828 = vmatpush.bf16.msra.mxu0 %v2465
    %2829 = vmatpush.bf16.msra.mxu0 %v2459
    %2830 = vmatpush.bf16.msra.mxu0 %v2453
    %2831 = vmatpush.bf16.msra.mxu0 %v2447
    %2832 = vmatpush.bf16.msra.mxu0 %v2441
    %2833 = vmatmul.bf16.gmra.mxu0 %v1652
    %v2834 = vpop.f32.mrf.mxu0
    %v2835 = vadd.f32 0.0, %v2834
    %v2836 = vpop.f32.mrf.mxu0
    %v2837 = vadd.f32 0.0, %v2836
    %2838 = vmatmul.bf16.gmra.mxu0 %v1656
    %v2839 = vpop.f32.mrf.mxu0
    %v2840 = vadd.f32 0.0, %v2839
    %v2841 = vpop.f32.mrf.mxu0
    %v2842 = vadd.f32 0.0, %v2841
    %2843 = vmatmul.bf16.gmra.mxu0 %v1660
    %v2844 = vpop.f32.mrf.mxu0
    %v2845 = vadd.f32 0.0, %v2844
    %v2846 = vpop.f32.mrf.mxu0
    %v2847 = vadd.f32 0.0, %v2846
    %2848 = vmatmul.bf16.gmra.mxu0 %v1664
    %v2849 = vpop.f32.mrf.mxu0
    %v2850 = vadd.f32 0.0, %v2849
    %v2851 = vpop.f32.mrf.mxu0
    %v2852 = vadd.f32 0.0, %v2851
    %2853 = vmatmul.bf16.gmra.mxu0 %v1668
    %v2854 = vpop.f32.mrf.mxu0
    %v2855 = vadd.f32 0.0, %v2854
    %v2856 = vpop.f32.mrf.mxu0
    %v2857 = vadd.f32 0.0, %v2856
    %2858 = vdwg.mxu0
    %2859 = vmatpush.bf16.msra.mxu0 %v2531
    %2860 = vmatpush.bf16.msra.mxu0 %v2525
    %2861 = vmatpush.bf16.msra.mxu0 %v2519
    %2862 = vmatpush.bf16.msra.mxu0 %v2513
    %2863 = vmatpush.bf16.msra.mxu0 %v2507
    %2864 = vmatpush.bf16.msra.mxu0 %v2501
    %2865 = vmatpush.bf16.msra.mxu0 %v2495
    %2866 = vmatpush.bf16.msra.mxu0 %v2489
    %2867 = vmatmul.bf16.gmra.mxu0 %v1653
    %v2868 = vpop.f32.mrf.mxu0
    %v2869 = vadd.f32 %v2835, %v2868
    %v2870 = vpop.f32.mrf.mxu0
    %v2871 = vadd.f32 %v2837, %v2870
    %2872 = vmatmul.bf16.gmra.mxu0 %v1657
    %v2873 = vpop.f32.mrf.mxu0
    %v2874 = vadd.f32 %v2840, %v2873
    %v2875 = vpop.f32.mrf.mxu0
    %v2876 = vadd.f32 %v2842, %v2875
    %2877 = vmatmul.bf16.gmra.mxu0 %v1661
    %v2878 = vpop.f32.mrf.mxu0
    %v2879 = vadd.f32 %v2845, %v2878
    %v2880 = vpop.f32.mrf.mxu0
    %v2881 = vadd.f32 %v2847, %v2880
    %2882 = vmatmul.bf16.gmra.mxu0 %v1665
    %v2883 = vpop.f32.mrf.mxu0
    %v2884 = vadd.f32 %v2850, %v2883
    %v2885 = vpop.f32.mrf.mxu0
    %v2886 = vadd.f32 %v2852, %v2885
    %2887 = vmatmul.bf16.gmra.mxu0 %v1669
    %v2888 = vpop.f32.mrf.mxu0
    %v2889 = vadd.f32 %v2855, %v2888
    %v2890 = vpop.f32.mrf.mxu0
    %v2891 = vadd.f32 %v2857, %v2890
    %2892 = vdwg.mxu0
    %2893 = vmatpush.bf16.msra.mxu0 %v2579
    %2894 = vmatpush.bf16.msra.mxu0 %v2573
    %2895 = vmatpush.bf16.msra.mxu0 %v2567
    %2896 = vmatpush.bf16.msra.mxu0 %v2561
    %2897 = vmatpush.bf16.msra.mxu0 %v2555
    %2898 = vmatpush.bf16.msra.mxu0 %v2549
    %2899 = vmatpush.bf16.msra.mxu0 %v2543
    %2900 = vmatpush.bf16.msra.mxu0 %v2537
    %2901 = vmatmul.bf16.gmra.mxu0 %v1654
    %v2902 = vpop.f32.mrf.mxu0
    %v2903 = vadd.f32 %v2869, %v2902
    %v2904 = vpop.f32.mrf.mxu0
    %v2905 = vadd.f32 %v2871, %v2904
    %2906 = vmatmul.bf16.gmra.mxu0 %v1658
    %v2907 = vpop.f32.mrf.mxu0
    %v2908 = vadd.f32 %v2874, %v2907
    %v2909 = vpop.f32.mrf.mxu0
    %v2910 = vadd.f32 %v2876, %v2909
    %2911 = vmatmul.bf16.gmra.mxu0 %v1662
    %v2912 = vpop.f32.mrf.mxu0
    %v2913 = vadd.f32 %v2879, %v2912
    %v2914 = vpop.f32.mrf.mxu0
    %v2915 = vadd.f32 %v2881, %v2914
    %2916 = vmatmul.bf16.gmra.mxu0 %v1666
    %v2917 = vpop.f32.mrf.mxu0
    %v2918 = vadd.f32 %v2884, %v2917
    %v2919 = vpop.f32.mrf.mxu0
    %v2920 = vadd.f32 %v2886, %v2919
    %2921 = vmatmul.bf16.gmra.mxu0 %v1670
    %v2922 = vpop.f32.mrf.mxu0
    %v2923 = vadd.f32 %v2889, %v2922
    %v2924 = vpop.f32.mrf.mxu0
    %v2925 = vadd.f32 %v2891, %v2924
    %2926 = vdwg.mxu0
    %2927 = vmatpush.bf16.msra.mxu0 %v2627
    %2928 = vmatpush.bf16.msra.mxu0 %v2621
    %2929 = vmatpush.bf16.msra.mxu0 %v2615
    %2930 = vmatpush.bf16.msra.mxu0 %v2609
    %2931 = vmatpush.bf16.msra.mxu0 %v2603
    %2932 = vmatpush.bf16.msra.mxu0 %v2597
    %2933 = vmatpush.bf16.msra.mxu0 %v2591
    %2934 = vmatpush.bf16.msra.mxu0 %v2585
    %2935 = vmatmul.bf16.gmra.mxu0 %v1655
    %v2936 = vpop.f32.mrf.mxu0
    %v2937 = vadd.f32 %v2903, %v2936
    %v2938 = vpop.f32.mrf.mxu0
    %v2939 = vadd.f32 %v2905, %v2938
    %2940 = vmatmul.bf16.gmra.mxu0 %v1659
    %v2941 = vpop.f32.mrf.mxu0
    %v2942 = vadd.f32 %v2908, %v2941
    %v2943 = vpop.f32.mrf.mxu0
    %v2944 = vadd.f32 %v2910, %v2943
    %2945 = vmatmul.bf16.gmra.mxu0 %v1663
    %v2946 = vpop.f32.mrf.mxu0
    %v2947 = vadd.f32 %v2913, %v2946
    %v2948 = vpop.f32.mrf.mxu0
    %v2949 = vadd.f32 %v2915, %v2948
    %2950 = vmatmul.bf16.gmra.mxu0 %v1667
    %v2951 = vpop.f32.mrf.mxu0
    %v2952 = vadd.f32 %v2918, %v2951
    %v2953 = vpop.f32.mrf.mxu0
    %v2954 = vadd.f32 %v2920, %v2953
    %2955 = vmatmul.bf16.gmra.mxu0 %v1671
    %v2956 = vpop.f32.mrf.mxu0
    %v2957 = vadd.f32 %v2923, %v2956
    %v2958 = vpop.f32.mrf.mxu0
    %v2959 = vadd.f32 %v2925, %v2958
    %2960 = vdwg.mxu0
    %2961 = vmatpush.bf16.msra.mxu0 %v2484
    %2962 = vmatpush.bf16.msra.mxu0 %v2478
    %2963 = vmatpush.bf16.msra.mxu0 %v2472
    %2964 = vmatpush.bf16.msra.mxu0 %v2466
    %2965 = vmatpush.bf16.msra.mxu0 %v2460
    %2966 = vmatpush.bf16.msra.mxu0 %v2454
    %2967 = vmatpush.bf16.msra.mxu0 %v2448
    %2968 = vmatpush.bf16.msra.mxu0 %v2442
    %2969 = vmatmul.bf16.gmra.mxu0 %v1652
    %v2970 = vpop.f32.mrf.mxu0
    %v2971 = vadd.f32 0.0, %v2970
    %v2972 = vpop.f32.mrf.mxu0
    %v2973 = vadd.f32 0.0, %v2972
    %2974 = vmatmul.bf16.gmra.mxu0 %v1656
    %v2975 = vpop.f32.mrf.mxu0
    %v2976 = vadd.f32 0.0, %v2975
    %v2977 = vpop.f32.mrf.mxu0
    %v2978 = vadd.f32 0.0, %v2977
    %2979 = vmatmul.bf16.gmra.mxu0 %v1660
    %v2980 = vpop.f32.mrf.mxu0
    %v2981 = vadd.f32 0.0, %v2980
    %v2982 = vpop.f32.mrf.mxu0
    %v2983 = vadd.f32 0.0, %v2982
    %2984 = vmatmul.bf16.gmra.mxu0 %v1664
    %v2985 = vpop.f32.mrf.mxu0
    %v2986 = vadd.f32 0.0, %v2985
    %v2987 = vpop.f32.mrf.mxu0
    %v2988 = vadd.f32 0.0, %v2987
    %2989 = vmatmul.bf16.gmra.mxu0 %v1668
    %v2990 = vpop.f32.mrf.mxu0
    %v2991 = vadd.f32 0.0, %v2990
    %v2992 = vpop.f32.mrf.mxu0
    %v2993 = vadd.f32 0.0, %v2992
    %2994 = vdwg.mxu0
    %2995 = vmatpush.bf16.msra.mxu0 %v2532
    %2996 = vmatpush.bf16.msra.mxu0 %v2526
    %2997 = vmatpush.bf16.msra.mxu0 %v2520
    %2998 = vmatpush.bf16.msra.mxu0 %v2514
    %2999 = vmatpush.bf16.msra.mxu0 %v2508
    %3000 = vmatpush.bf16.msra.mxu0 %v2502
    %3001 = vmatpush.bf16.msra.mxu0 %v2496
    %3002 = vmatpush.bf16.msra.mxu0 %v2490
    %3003 = vmatmul.bf16.gmra.mxu0 %v1653
    %v3004 = vpop.f32.mrf.mxu0
    %v3005 = vadd.f32 %v2971, %v3004
    %v3006 = vpop.f32.mrf.mxu0
    %v3007 = vadd.f32 %v2973, %v3006
    %3008 = vmatmul.bf16.gmra.mxu0 %v1657
    %v3009 = vpop.f32.mrf.mxu0
    %v3010 = vadd.f32 %v2976, %v3009
    %v3011 = vpop.f32.mrf.mxu0
    %v3012 = vadd.f32 %v2978, %v3011
    %3013 = vmatmul.bf16.gmra.mxu0 %v1661
    %v3014 = vpop.f32.mrf.mxu0
    %v3015 = vadd.f32 %v2981, %v3014
    %v3016 = vpop.f32.mrf.mxu0
    %v3017 = vadd.f32 %v2983, %v3016
    %3018 = vmatmul.bf16.gmra.mxu0 %v1665
    %v3019 = vpop.f32.mrf.mxu0
    %v3020 = vadd.f32 %v2986, %v3019
    %v3021 = vpop.f32.mrf.mxu0
    %v3022 = vadd.f32 %v2988, %v3021
    %3023 = vmatmul.bf16.gmra.mxu0 %v1669
    %v3024 = vpop.f32.mrf.mxu0
    %v3025 = vadd.f32 %v2991, %v3024
    %v3026 = vpop.f32.mrf.mxu0
    %v3027 = vadd.f32 %v2993, %v3026
    %3028 = vdwg.mxu0
    %3029 = vmatpush.bf16.msra.mxu0 %v2580
    %3030 = vmatpush.bf16.msra.mxu0 %v2574
    %3031 = vmatpush.bf16.msra.mxu0 %v2568
    %3032 = vmatpush.bf16.msra.mxu0 %v2562
    %3033 = vmatpush.bf16.msra.mxu0 %v2556
    %3034 = vmatpush.bf16.msra.mxu0 %v2550
    %3035 = vmatpush.bf16.msra.mxu0 %v2544
    %3036 = vmatpush.bf16.msra.mxu0 %v2538
    %3037 = vmatmul.bf16.gmra.mxu0 %v1654
    %v3038 = vpop.f32.mrf.mxu0
    %v3039 = vadd.f32 %v3005, %v3038
    %v3040 = vpop.f32.mrf.mxu0
    %v3041 = vadd.f32 %v3007, %v3040
    %3042 = vmatmul.bf16.gmra.mxu0 %v1658
    %v3043 = vpop.f32.mrf.mxu0
    %v3044 = vadd.f32 %v3010, %v3043
    %v3045 = vpop.f32.mrf.mxu0
    %v3046 = vadd.f32 %v3012, %v3045
    %3047 = vmatmul.bf16.gmra.mxu0 %v1662
    %v3048 = vpop.f32.mrf.mxu0
    %v3049 = vadd.f32 %v3015, %v3048
    %v3050 = vpop.f32.mrf.mxu0
    %v3051 = vadd.f32 %v3017, %v3050
    %3052 = vmatmul.bf16.gmra.mxu0 %v1666
    %v3053 = vpop.f32.mrf.mxu0
    %v3054 = vadd.f32 %v3020, %v3053
    %v3055 = vpop.f32.mrf.mxu0
    %v3056 = vadd.f32 %v3022, %v3055
    %3057 = vmatmul.bf16.gmra.mxu0 %v1670
    %v3058 = vpop.f32.mrf.mxu0
    %v3059 = vadd.f32 %v3025, %v3058
    %v3060 = vpop.f32.mrf.mxu0
    %v3061 = vadd.f32 %v3027, %v3060
    %3062 = vdwg.mxu0
    %3063 = vmatpush.bf16.msra.mxu0 %v2628
    %3064 = vmatpush.bf16.msra.mxu0 %v2622
    %3065 = vmatpush.bf16.msra.mxu0 %v2616
    %3066 = vmatpush.bf16.msra.mxu0 %v2610
    %3067 = vmatpush.bf16.msra.mxu0 %v2604
    %3068 = vmatpush.bf16.msra.mxu0 %v2598
    %3069 = vmatpush.bf16.msra.mxu0 %v2592
    %3070 = vmatpush.bf16.msra.mxu0 %v2586
    %3071 = vmatmul.bf16.gmra.mxu0 %v1655
    %v3072 = vpop.f32.mrf.mxu0
    %v3073 = vadd.f32 %v3039, %v3072
    %v3074 = vpop.f32.mrf.mxu0
    %v3075 = vadd.f32 %v3041, %v3074
    %3076 = vmatmul.bf16.gmra.mxu0 %v1659
    %v3077 = vpop.f32.mrf.mxu0
    %v3078 = vadd.f32 %v3044, %v3077
    %v3079 = vpop.f32.mrf.mxu0
    %v3080 = vadd.f32 %v3046, %v3079
    %3081 = vmatmul.bf16.gmra.mxu0 %v1663
    %v3082 = vpop.f32.mrf.mxu0
    %v3083 = vadd.f32 %v3049, %v3082
    %v3084 = vpop.f32.mrf.mxu0
    %v3085 = vadd.f32 %v3051, %v3084
    %3086 = vmatmul.bf16.gmra.mxu0 %v1667
    %v3087 = vpop.f32.mrf.mxu0
    %v3088 = vadd.f32 %v3054, %v3087
    %v3089 = vpop.f32.mrf.mxu0
    %v3090 = vadd.f32 %v3056, %v3089
    %3091 = vmatmul.bf16.gmra.mxu0 %v1671
    %v3092 = vpop.f32.mrf.mxu0
    %v3093 = vadd.f32 %v3059, %v3092
    %v3094 = vpop.f32.mrf.mxu0
    %v3095 = vadd.f32 %v3061, %v3094
    %3096 = vdwg.mxu0
    %3097 = vmatpush.bf16.msra.mxu0 %v2485
    %3098 = vmatpush.bf16.msra.mxu0 %v2479
    %3099 = vmatpush.bf16.msra.mxu0 %v2473
    %3100 = vmatpush.bf16.msra.mxu0 %v2467
    %3101 = vmatpush.bf16.msra.mxu0 %v2461
    %3102 = vmatpush.bf16.msra.mxu0 %v2455
    %3103 = vmatpush.bf16.msra.mxu0 %v2449
    %3104 = vmatpush.bf16.msra.mxu0 %v2443
    %3105 = vmatmul.bf16.gmra.mxu0 %v1652
    %v3106 = vpop.f32.mrf.mxu0
    %v3107 = vadd.f32 0.0, %v3106
    %v3108 = vpop.f32.mrf.mxu0
    %v3109 = vadd.f32 0.0, %v3108
    %3110 = vmatmul.bf16.gmra.mxu0 %v1656
    %v3111 = vpop.f32.mrf.mxu0
    %v3112 = vadd.f32 0.0, %v3111
    %v3113 = vpop.f32.mrf.mxu0
    %v3114 = vadd.f32 0.0, %v3113
    %3115 = vmatmul.bf16.gmra.mxu0 %v1660
    %v3116 = vpop.f32.mrf.mxu0
    %v3117 = vadd.f32 0.0, %v3116
    %v3118 = vpop.f32.mrf.mxu0
    %v3119 = vadd.f32 0.0, %v3118
    %3120 = vmatmul.bf16.gmra.mxu0 %v1664
    %v3121 = vpop.f32.mrf.mxu0
    %v3122 = vadd.f32 0.0, %v3121
    %v3123 = vpop.f32.mrf.mxu0
    %v3124 = vadd.f32 0.0, %v3123
    %3125 = vmatmul.bf16.gmra.mxu0 %v1668
    %v3126 = vpop.f32.mrf.mxu0
    %v3127 = vadd.f32 0.0, %v3126
    %v3128 = vpop.f32.mrf.mxu0
    %v3129 = vadd.f32 0.0, %v3128
    %3130 = vdwg.mxu0
    %3131 = vmatpush.bf16.msra.mxu0 %v2533
    %3132 = vmatpush.bf16.msra.mxu0 %v2527
    %3133 = vmatpush.bf16.msra.mxu0 %v2521
    %3134 = vmatpush.bf16.msra.mxu0 %v2515
    %3135 = vmatpush.bf16.msra.mxu0 %v2509
    %3136 = vmatpush.bf16.msra.mxu0 %v2503
    %3137 = vmatpush.bf16.msra.mxu0 %v2497
    %3138 = vmatpush.bf16.msra.mxu0 %v2491
    %3139 = vmatmul.bf16.gmra.mxu0 %v1653
    %v3140 = vpop.f32.mrf.mxu0
    %v3141 = vadd.f32 %v3107, %v3140
    %v3142 = vpop.f32.mrf.mxu0
    %v3143 = vadd.f32 %v3109, %v3142
    %3144 = vmatmul.bf16.gmra.mxu0 %v1657
    %v3145 = vpop.f32.mrf.mxu0
    %v3146 = vadd.f32 %v3112, %v3145
    %v3147 = vpop.f32.mrf.mxu0
    %v3148 = vadd.f32 %v3114, %v3147
    %3149 = vmatmul.bf16.gmra.mxu0 %v1661
    %v3150 = vpop.f32.mrf.mxu0
    %v3151 = vadd.f32 %v3117, %v3150
    %v3152 = vpop.f32.mrf.mxu0
    %v3153 = vadd.f32 %v3119, %v3152
    %3154 = vmatmul.bf16.gmra.mxu0 %v1665
    %v3155 = vpop.f32.mrf.mxu0
    %v3156 = vadd.f32 %v3122, %v3155
    %v3157 = vpop.f32.mrf.mxu0
    %v3158 = vadd.f32 %v3124, %v3157
    %3159 = vmatmul.bf16.gmra.mxu0 %v1669
    %v3160 = vpop.f32.mrf.mxu0
    %v3161 = vadd.f32 %v3127, %v3160
    %v3162 = vpop.f32.mrf.mxu0
    %v3163 = vadd.f32 %v3129, %v3162
    %3164 = vdwg.mxu0
    %3165 = vmatpush.bf16.msra.mxu0 %v2581
    %3166 = vmatpush.bf16.msra.mxu0 %v2575
    %3167 = vmatpush.bf16.msra.mxu0 %v2569
    %3168 = vmatpush.bf16.msra.mxu0 %v2563
    %3169 = vmatpush.bf16.msra.mxu0 %v2557
    %3170 = vmatpush.bf16.msra.mxu0 %v2551
    %3171 = vmatpush.bf16.msra.mxu0 %v2545
    %3172 = vmatpush.bf16.msra.mxu0 %v2539
    %3173 = vmatmul.bf16.gmra.mxu0 %v1654
    %v3174 = vpop.f32.mrf.mxu0
    %v3175 = vadd.f32 %v3141, %v3174
    %v3176 = vpop.f32.mrf.mxu0
    %v3177 = vadd.f32 %v3143, %v3176
    %3178 = vmatmul.bf16.gmra.mxu0 %v1658
    %v3179 = vpop.f32.mrf.mxu0
    %v3180 = vadd.f32 %v3146, %v3179
    %v3181 = vpop.f32.mrf.mxu0
    %v3182 = vadd.f32 %v3148, %v3181
    %3183 = vmatmul.bf16.gmra.mxu0 %v1662
    %v3184 = vpop.f32.mrf.mxu0
    %v3185 = vadd.f32 %v3151, %v3184
    %v3186 = vpop.f32.mrf.mxu0
    %v3187 = vadd.f32 %v3153, %v3186
    %3188 = vmatmul.bf16.gmra.mxu0 %v1666
    %v3189 = vpop.f32.mrf.mxu0
    %v3190 = vadd.f32 %v3156, %v3189
    %v3191 = vpop.f32.mrf.mxu0
    %v3192 = vadd.f32 %v3158, %v3191
    %3193 = vmatmul.bf16.gmra.mxu0 %v1670
    %v3194 = vpop.f32.mrf.mxu0
    %v3195 = vadd.f32 %v3161, %v3194
    %v3196 = vpop.f32.mrf.mxu0
    %v3197 = vadd.f32 %v3163, %v3196
    %3198 = vdwg.mxu0
    %3199 = vmatpush.bf16.msra.mxu0 %v2629
    %3200 = vmatpush.bf16.msra.mxu0 %v2623
    %3201 = vmatpush.bf16.msra.mxu0 %v2617
    %3202 = vmatpush.bf16.msra.mxu0 %v2611
    %3203 = vmatpush.bf16.msra.mxu0 %v2605
    %3204 = vmatpush.bf16.msra.mxu0 %v2599
    %3205 = vmatpush.bf16.msra.mxu0 %v2593
    %3206 = vmatpush.bf16.msra.mxu0 %v2587
    %3207 = vmatmul.bf16.gmra.mxu0 %v1655
    %v3208 = vpop.f32.mrf.mxu0
    %v3209 = vadd.f32 %v3175, %v3208
    %v3210 = vpop.f32.mrf.mxu0
    %v3211 = vadd.f32 %v3177, %v3210
    %3212 = vmatmul.bf16.gmra.mxu0 %v1659
    %v3213 = vpop.f32.mrf.mxu0
    %v3214 = vadd.f32 %v3180, %v3213
    %v3215 = vpop.f32.mrf.mxu0
    %v3216 = vadd.f32 %v3182, %v3215
    %3217 = vmatmul.bf16.gmra.mxu0 %v1663
    %v3218 = vpop.f32.mrf.mxu0
    %v3219 = vadd.f32 %v3185, %v3218
    %v3220 = vpop.f32.mrf.mxu0
    %v3221 = vadd.f32 %v3187, %v3220
    %3222 = vmatmul.bf16.gmra.mxu0 %v1667
    %v3223 = vpop.f32.mrf.mxu0
    %v3224 = vadd.f32 %v3190, %v3223
    %v3225 = vpop.f32.mrf.mxu0
    %v3226 = vadd.f32 %v3192, %v3225
    %3227 = vmatmul.bf16.gmra.mxu0 %v1671
    %v3228 = vpop.f32.mrf.mxu0
    %v3229 = vadd.f32 %v3195, %v3228
    %v3230 = vpop.f32.mrf.mxu0
    %v3231 = vadd.f32 %v3197, %v3230
    %3232 = vdwg.mxu0
    %3233 = vmatpush.bf16.msra.mxu0 %v2486
    %3234 = vmatpush.bf16.msra.mxu0 %v2480
    %3235 = vmatpush.bf16.msra.mxu0 %v2474
    %3236 = vmatpush.bf16.msra.mxu0 %v2468
    %3237 = vmatpush.bf16.msra.mxu0 %v2462
    %3238 = vmatpush.bf16.msra.mxu0 %v2456
    %3239 = vmatpush.bf16.msra.mxu0 %v2450
    %3240 = vmatpush.bf16.msra.mxu0 %v2444
    %3241 = vmatmul.bf16.gmra.mxu0 %v1652
    %v3242 = vpop.f32.mrf.mxu0
    %v3243 = vadd.f32 0.0, %v3242
    %v3244 = vpop.f32.mrf.mxu0
    %v3245 = vadd.f32 0.0, %v3244
    %3246 = vmatmul.bf16.gmra.mxu0 %v1656
    %v3247 = vpop.f32.mrf.mxu0
    %v3248 = vadd.f32 0.0, %v3247
    %v3249 = vpop.f32.mrf.mxu0
    %v3250 = vadd.f32 0.0, %v3249
    %3251 = vmatmul.bf16.gmra.mxu0 %v1660
    %v3252 = vpop.f32.mrf.mxu0
    %v3253 = vadd.f32 0.0, %v3252
    %v3254 = vpop.f32.mrf.mxu0
    %v3255 = vadd.f32 0.0, %v3254
    %3256 = vmatmul.bf16.gmra.mxu0 %v1664
    %v3257 = vpop.f32.mrf.mxu0
    %v3258 = vadd.f32 0.0, %v3257
    %v3259 = vpop.f32.mrf.mxu0
    %v3260 = vadd.f32 0.0, %v3259
    %3261 = vmatmul.bf16.gmra.mxu0 %v1668
    %v3262 = vpop.f32.mrf.mxu0
    %v3263 = vadd.f32 0.0, %v3262
    %v3264 = vpop.f32.mrf.mxu0
    %v3265 = vadd.f32 0.0, %v3264
    %3266 = vdwg.mxu0
    %3267 = vmatpush.bf16.msra.mxu0 %v2534
    %3268 = vmatpush.bf16.msra.mxu0 %v2528
    %3269 = vmatpush.bf16.msra.mxu0 %v2522
    %3270 = vmatpush.bf16.msra.mxu0 %v2516
    %3271 = vmatpush.bf16.msra.mxu0 %v2510
    %3272 = vmatpush.bf16.msra.mxu0 %v2504
    %3273 = vmatpush.bf16.msra.mxu0 %v2498
    %3274 = vmatpush.bf16.msra.mxu0 %v2492
    %3275 = vmatmul.bf16.gmra.mxu0 %v1653
    %v3276 = vpop.f32.mrf.mxu0
    %v3277 = vadd.f32 %v3243, %v3276
    %v3278 = vpop.f32.mrf.mxu0
    %v3279 = vadd.f32 %v3245, %v3278
    %3280 = vmatmul.bf16.gmra.mxu0 %v1657
    %v3281 = vpop.f32.mrf.mxu0
    %v3282 = vadd.f32 %v3248, %v3281
    %v3283 = vpop.f32.mrf.mxu0
    %v3284 = vadd.f32 %v3250, %v3283
    %3285 = vmatmul.bf16.gmra.mxu0 %v1661
    %v3286 = vpop.f32.mrf.mxu0
    %v3287 = vadd.f32 %v3253, %v3286
    %v3288 = vpop.f32.mrf.mxu0
    %v3289 = vadd.f32 %v3255, %v3288
    %3290 = vmatmul.bf16.gmra.mxu0 %v1665
    %v3291 = vpop.f32.mrf.mxu0
    %v3292 = vadd.f32 %v3258, %v3291
    %v3293 = vpop.f32.mrf.mxu0
    %v3294 = vadd.f32 %v3260, %v3293
    %3295 = vmatmul.bf16.gmra.mxu0 %v1669
    %v3296 = vpop.f32.mrf.mxu0
    %v3297 = vadd.f32 %v3263, %v3296
    %v3298 = vpop.f32.mrf.mxu0
    %v3299 = vadd.f32 %v3265, %v3298
    %3300 = vdwg.mxu0
    %3301 = vmatpush.bf16.msra.mxu0 %v2582
    %3302 = vmatpush.bf16.msra.mxu0 %v2576
    %3303 = vmatpush.bf16.msra.mxu0 %v2570
    %3304 = vmatpush.bf16.msra.mxu0 %v2564
    %3305 = vmatpush.bf16.msra.mxu0 %v2558
    %3306 = vmatpush.bf16.msra.mxu0 %v2552
    %3307 = vmatpush.bf16.msra.mxu0 %v2546
    %3308 = vmatpush.bf16.msra.mxu0 %v2540
    %3309 = vmatmul.bf16.gmra.mxu0 %v1654
    %v3310 = vpop.f32.mrf.mxu0
    %v3311 = vadd.f32 %v3277, %v3310
    %v3312 = vpop.f32.mrf.mxu0
    %v3313 = vadd.f32 %v3279, %v3312
    %3314 = vmatmul.bf16.gmra.mxu0 %v1658
    %v3315 = vpop.f32.mrf.mxu0
    %v3316 = vadd.f32 %v3282, %v3315
    %v3317 = vpop.f32.mrf.mxu0
    %v3318 = vadd.f32 %v3284, %v3317
    %3319 = vmatmul.bf16.gmra.mxu0 %v1662
    %v3320 = vpop.f32.mrf.mxu0
    %v3321 = vadd.f32 %v3287, %v3320
    %v3322 = vpop.f32.mrf.mxu0
    %v3323 = vadd.f32 %v3289, %v3322
    %3324 = vmatmul.bf16.gmra.mxu0 %v1666
    %v3325 = vpop.f32.mrf.mxu0
    %v3326 = vadd.f32 %v3292, %v3325
    %v3327 = vpop.f32.mrf.mxu0
    %v3328 = vadd.f32 %v3294, %v3327
    %3329 = vmatmul.bf16.gmra.mxu0 %v1670
    %v3330 = vpop.f32.mrf.mxu0
    %v3331 = vadd.f32 %v3297, %v3330
    %v3332 = vpop.f32.mrf.mxu0
    %v3333 = vadd.f32 %v3299, %v3332
    %3334 = vdwg.mxu0
    %3335 = vmatpush.bf16.msra.mxu0 %v2630
    %3336 = vmatpush.bf16.msra.mxu0 %v2624
    %3337 = vmatpush.bf16.msra.mxu0 %v2618
    %3338 = vmatpush.bf16.msra.mxu0 %v2612
    %3339 = vmatpush.bf16.msra.mxu0 %v2606
    %3340 = vmatpush.bf16.msra.mxu0 %v2600
    %3341 = vmatpush.bf16.msra.mxu0 %v2594
    %3342 = vmatpush.bf16.msra.mxu0 %v2588
    %3343 = vmatmul.bf16.gmra.mxu0 %v1655
    %v3344 = vpop.f32.mrf.mxu0
    %v3345 = vadd.f32 %v3311, %v3344
    %v3346 = vpop.f32.mrf.mxu0
    %v3347 = vadd.f32 %v3313, %v3346
    %3348 = vmatmul.bf16.gmra.mxu0 %v1659
    %v3349 = vpop.f32.mrf.mxu0
    %v3350 = vadd.f32 %v3316, %v3349
    %v3351 = vpop.f32.mrf.mxu0
    %v3352 = vadd.f32 %v3318, %v3351
    %3353 = vmatmul.bf16.gmra.mxu0 %v1663
    %v3354 = vpop.f32.mrf.mxu0
    %v3355 = vadd.f32 %v3321, %v3354
    %v3356 = vpop.f32.mrf.mxu0
    %v3357 = vadd.f32 %v3323, %v3356
    %3358 = vmatmul.bf16.gmra.mxu0 %v1667
    %v3359 = vpop.f32.mrf.mxu0
    %v3360 = vadd.f32 %v3326, %v3359
    %v3361 = vpop.f32.mrf.mxu0
    %v3362 = vadd.f32 %v3328, %v3361
    %3363 = vmatmul.bf16.gmra.mxu0 %v1671
    %v3364 = vpop.f32.mrf.mxu0
    %v3365 = vadd.f32 %v3331, %v3364
    %v3366 = vpop.f32.mrf.mxu0
    %v3367 = vadd.f32 %v3333, %v3366
    %3368 = vdwg.mxu0
    %3369 = vmatpush.bf16.msra.mxu0 %v2487
    %3370 = vmatpush.bf16.msra.mxu0 %v2481
    %3371 = vmatpush.bf16.msra.mxu0 %v2475
    %3372 = vmatpush.bf16.msra.mxu0 %v2469
    %3373 = vmatpush.bf16.msra.mxu0 %v2463
    %3374 = vmatpush.bf16.msra.mxu0 %v2457
    %3375 = vmatpush.bf16.msra.mxu0 %v2451
    %3376 = vmatpush.bf16.msra.mxu0 %v2445
    %3377 = vmatmul.bf16.gmra.mxu0 %v1652
    %v3378 = vpop.f32.mrf.mxu0
    %v3379 = vadd.f32 0.0, %v3378
    %v3380 = vpop.f32.mrf.mxu0
    %v3381 = vadd.f32 0.0, %v3380
    %3382 = vmatmul.bf16.gmra.mxu0 %v1656
    %v3383 = vpop.f32.mrf.mxu0
    %v3384 = vadd.f32 0.0, %v3383
    %v3385 = vpop.f32.mrf.mxu0
    %v3386 = vadd.f32 0.0, %v3385
    %3387 = vmatmul.bf16.gmra.mxu0 %v1660
    %v3388 = vpop.f32.mrf.mxu0
    %v3389 = vadd.f32 0.0, %v3388
    %v3390 = vpop.f32.mrf.mxu0
    %v3391 = vadd.f32 0.0, %v3390
    %3392 = vmatmul.bf16.gmra.mxu0 %v1664
    %v3393 = vpop.f32.mrf.mxu0
    %v3394 = vadd.f32 0.0, %v3393
    %v3395 = vpop.f32.mrf.mxu0
    %v3396 = vadd.f32 0.0, %v3395
    %3397 = vmatmul.bf16.gmra.mxu0 %v1668
    %v3398 = vpop.f32.mrf.mxu0
    %v3399 = vadd.f32 0.0, %v3398
    %v3400 = vpop.f32.mrf.mxu0
    %v3401 = vadd.f32 0.0, %v3400
    %3402 = vdwg.mxu0
    %3403 = vmatpush.bf16.msra.mxu0 %v2535
    %3404 = vmatpush.bf16.msra.mxu0 %v2529
    %3405 = vmatpush.bf16.msra.mxu0 %v2523
    %3406 = vmatpush.bf16.msra.mxu0 %v2517
    %3407 = vmatpush.bf16.msra.mxu0 %v2511
    %3408 = vmatpush.bf16.msra.mxu0 %v2505
    %3409 = vmatpush.bf16.msra.mxu0 %v2499
    %3410 = vmatpush.bf16.msra.mxu0 %v2493
    %3411 = vmatmul.bf16.gmra.mxu0 %v1653
    %v3412 = vpop.f32.mrf.mxu0
    %v3413 = vadd.f32 %v3379, %v3412
    %v3414 = vpop.f32.mrf.mxu0
    %v3415 = vadd.f32 %v3381, %v3414
    %3416 = vmatmul.bf16.gmra.mxu0 %v1657
    %v3417 = vpop.f32.mrf.mxu0
    %v3418 = vadd.f32 %v3384, %v3417
    %v3419 = vpop.f32.mrf.mxu0
    %v3420 = vadd.f32 %v3386, %v3419
    %3421 = vmatmul.bf16.gmra.mxu0 %v1661
    %v3422 = vpop.f32.mrf.mxu0
    %v3423 = vadd.f32 %v3389, %v3422
    %v3424 = vpop.f32.mrf.mxu0
    %v3425 = vadd.f32 %v3391, %v3424
    %3426 = vmatmul.bf16.gmra.mxu0 %v1665
    %v3427 = vpop.f32.mrf.mxu0
    %v3428 = vadd.f32 %v3394, %v3427
    %v3429 = vpop.f32.mrf.mxu0
    %v3430 = vadd.f32 %v3396, %v3429
    %3431 = vmatmul.bf16.gmra.mxu0 %v1669
    %v3432 = vpop.f32.mrf.mxu0
    %v3433 = vadd.f32 %v3399, %v3432
    %v3434 = vpop.f32.mrf.mxu0
    %v3435 = vadd.f32 %v3401, %v3434
    %3436 = vdwg.mxu0
    %3437 = vmatpush.bf16.msra.mxu0 %v2583
    %3438 = vmatpush.bf16.msra.mxu0 %v2577
    %3439 = vmatpush.bf16.msra.mxu0 %v2571
    %3440 = vmatpush.bf16.msra.mxu0 %v2565
    %3441 = vmatpush.bf16.msra.mxu0 %v2559
    %3442 = vmatpush.bf16.msra.mxu0 %v2553
    %3443 = vmatpush.bf16.msra.mxu0 %v2547
    %3444 = vmatpush.bf16.msra.mxu0 %v2541
    %3445 = vmatmul.bf16.gmra.mxu0 %v1654
    %v3446 = vpop.f32.mrf.mxu0
    %v3447 = vadd.f32 %v3413, %v3446
    %v3448 = vpop.f32.mrf.mxu0
    %v3449 = vadd.f32 %v3415, %v3448
    %3450 = vmatmul.bf16.gmra.mxu0 %v1658
    %v3451 = vpop.f32.mrf.mxu0
    %v3452 = vadd.f32 %v3418, %v3451
    %v3453 = vpop.f32.mrf.mxu0
    %v3454 = vadd.f32 %v3420, %v3453
    %3455 = vmatmul.bf16.gmra.mxu0 %v1662
    %v3456 = vpop.f32.mrf.mxu0
    %v3457 = vadd.f32 %v3423, %v3456
    %v3458 = vpop.f32.mrf.mxu0
    %v3459 = vadd.f32 %v3425, %v3458
    %3460 = vmatmul.bf16.gmra.mxu0 %v1666
    %v3461 = vpop.f32.mrf.mxu0
    %v3462 = vadd.f32 %v3428, %v3461
    %v3463 = vpop.f32.mrf.mxu0
    %v3464 = vadd.f32 %v3430, %v3463
    %3465 = vmatmul.bf16.gmra.mxu0 %v1670
    %v3466 = vpop.f32.mrf.mxu0
    %v3467 = vadd.f32 %v3433, %v3466
    %v3468 = vpop.f32.mrf.mxu0
    %v3469 = vadd.f32 %v3435, %v3468
    %3470 = vdwg.mxu0
    %3471 = vmatpush.bf16.msra.mxu0 %v2631
    %3472 = vmatpush.bf16.msra.mxu0 %v2625
    %3473 = vmatpush.bf16.msra.mxu0 %v2619
    %3474 = vmatpush.bf16.msra.mxu0 %v2613
    %3475 = vmatpush.bf16.msra.mxu0 %v2607
    %3476 = vmatpush.bf16.msra.mxu0 %v2601
    %3477 = vmatpush.bf16.msra.mxu0 %v2595
    %3478 = vmatpush.bf16.msra.mxu0 %v2589
    %3479 = vmatmul.bf16.gmra.mxu0 %v1655
    %v3480 = vpop.f32.mrf.mxu0
    %v3481 = vadd.f32 %v3447, %v3480
    %v3482 = vpop.f32.mrf.mxu0
    %v3483 = vadd.f32 %v3449, %v3482
    %3484 = vmatmul.bf16.gmra.mxu0 %v1659
    %v3485 = vpop.f32.mrf.mxu0
    %v3486 = vadd.f32 %v3452, %v3485
    %v3487 = vpop.f32.mrf.mxu0
    %v3488 = vadd.f32 %v3454, %v3487
    %3489 = vmatmul.bf16.gmra.mxu0 %v1663
    %v3490 = vpop.f32.mrf.mxu0
    %v3491 = vadd.f32 %v3457, %v3490
    %v3492 = vpop.f32.mrf.mxu0
    %v3493 = vadd.f32 %v3459, %v3492
    %3494 = vmatmul.bf16.gmra.mxu0 %v1667
    %v3495 = vpop.f32.mrf.mxu0
    %v3496 = vadd.f32 %v3462, %v3495
    %v3497 = vpop.f32.mrf.mxu0
    %v3498 = vadd.f32 %v3464, %v3497
    %3499 = vmatmul.bf16.gmra.mxu0 %v1671
    %v3500 = vpop.f32.mrf.mxu0
    %v3501 = vadd.f32 %v3467, %v3500
    %v3502 = vpop.f32.mrf.mxu0
    %v3503 = vadd.f32 %v3469, %v3502
    %3504 = vdwg.mxu0
    %3505 = vmatpush.bf16.msra.mxu0 %v2488
    %3506 = vmatpush.bf16.msra.mxu0 %v2482
    %3507 = vmatpush.bf16.msra.mxu0 %v2476
    %3508 = vmatpush.bf16.msra.mxu0 %v2470
    %3509 = vmatpush.bf16.msra.mxu0 %v2464
    %3510 = vmatpush.bf16.msra.mxu0 %v2458
    %3511 = vmatpush.bf16.msra.mxu0 %v2452
    %3512 = vmatpush.bf16.msra.mxu0 %v2446
    %3513 = vmatmul.bf16.gmra.mxu0 %v1652
    %v3514 = vpop.f32.mrf.mxu0
    %v3515 = vadd.f32 0.0, %v3514
    %v3516 = vpop.f32.mrf.mxu0
    %v3517 = vadd.f32 0.0, %v3516
    %3518 = vmatmul.bf16.gmra.mxu0 %v1656
    %v3519 = vpop.f32.mrf.mxu0
    %v3520 = vadd.f32 0.0, %v3519
    %v3521 = vpop.f32.mrf.mxu0
    %v3522 = vadd.f32 0.0, %v3521
    %3523 = vmatmul.bf16.gmra.mxu0 %v1660
    %v3524 = vpop.f32.mrf.mxu0
    %v3525 = vadd.f32 0.0, %v3524
    %v3526 = vpop.f32.mrf.mxu0
    %v3527 = vadd.f32 0.0, %v3526
    %3528 = vmatmul.bf16.gmra.mxu0 %v1664
    %v3529 = vpop.f32.mrf.mxu0
    %v3530 = vadd.f32 0.0, %v3529
    %v3531 = vpop.f32.mrf.mxu0
    %v3532 = vadd.f32 0.0, %v3531
    %3533 = vmatmul.bf16.gmra.mxu0 %v1668
    %v3534 = vpop.f32.mrf.mxu0
    %v3535 = vadd.f32 0.0, %v3534
    %v3536 = vpop.f32.mrf.mxu0
    %v3537 = vadd.f32 0.0, %v3536
    %3538 = vdwg.mxu0
    %3539 = vmatpush.bf16.msra.mxu0 %v2536
    %3540 = vmatpush.bf16.msra.mxu0 %v2530
    %3541 = vmatpush.bf16.msra.mxu0 %v2524
    %3542 = vmatpush.bf16.msra.mxu0 %v2518
    %3543 = vmatpush.bf16.msra.mxu0 %v2512
    %3544 = vmatpush.bf16.msra.mxu0 %v2506
    %3545 = vmatpush.bf16.msra.mxu0 %v2500
    %3546 = vmatpush.bf16.msra.mxu0 %v2494
    %3547 = vmatmul.bf16.gmra.mxu0 %v1653
    %v3548 = vpop.f32.mrf.mxu0
    %v3549 = vadd.f32 %v3515, %v3548
    %v3550 = vpop.f32.mrf.mxu0
    %v3551 = vadd.f32 %v3517, %v3550
    %3552 = vmatmul.bf16.gmra.mxu0 %v1657
    %v3553 = vpop.f32.mrf.mxu0
    %v3554 = vadd.f32 %v3520, %v3553
    %v3555 = vpop.f32.mrf.mxu0
    %v3556 = vadd.f32 %v3522, %v3555
    %3557 = vmatmul.bf16.gmra.mxu0 %v1661
    %v3558 = vpop.f32.mrf.mxu0
    %v3559 = vadd.f32 %v3525, %v3558
    %v3560 = vpop.f32.mrf.mxu0
    %v3561 = vadd.f32 %v3527, %v3560
    %3562 = vmatmul.bf16.gmra.mxu0 %v1665
    %v3563 = vpop.f32.mrf.mxu0
    %v3564 = vadd.f32 %v3530, %v3563
    %v3565 = vpop.f32.mrf.mxu0
    %v3566 = vadd.f32 %v3532, %v3565
    %3567 = vmatmul.bf16.gmra.mxu0 %v1669
    %v3568 = vpop.f32.mrf.mxu0
    %v3569 = vadd.f32 %v3535, %v3568
    %v3570 = vpop.f32.mrf.mxu0
    %v3571 = vadd.f32 %v3537, %v3570
    %3572 = vdwg.mxu0
    %3573 = vmatpush.bf16.msra.mxu0 %v2584
    %3574 = vmatpush.bf16.msra.mxu0 %v2578
    %3575 = vmatpush.bf16.msra.mxu0 %v2572
    %3576 = vmatpush.bf16.msra.mxu0 %v2566
    %3577 = vmatpush.bf16.msra.mxu0 %v2560
    %3578 = vmatpush.bf16.msra.mxu0 %v2554
    %3579 = vmatpush.bf16.msra.mxu0 %v2548
    %3580 = vmatpush.bf16.msra.mxu0 %v2542
    %3581 = vmatmul.bf16.gmra.mxu0 %v1654
    %v3582 = vpop.f32.mrf.mxu0
    %v3583 = vadd.f32 %v3549, %v3582
    %v3584 = vpop.f32.mrf.mxu0
    %v3585 = vadd.f32 %v3551, %v3584
    %3586 = vmatmul.bf16.gmra.mxu0 %v1658
    %v3587 = vpop.f32.mrf.mxu0
    %v3588 = vadd.f32 %v3554, %v3587
    %v3589 = vpop.f32.mrf.mxu0
    %v3590 = vadd.f32 %v3556, %v3589
    %3591 = vmatmul.bf16.gmra.mxu0 %v1662
    %v3592 = vpop.f32.mrf.mxu0
    %v3593 = vadd.f32 %v3559, %v3592
    %v3594 = vpop.f32.mrf.mxu0
    %v3595 = vadd.f32 %v3561, %v3594
    %3596 = vmatmul.bf16.gmra.mxu0 %v1666
    %v3597 = vpop.f32.mrf.mxu0
    %v3598 = vadd.f32 %v3564, %v3597
    %v3599 = vpop.f32.mrf.mxu0
    %v3600 = vadd.f32 %v3566, %v3599
    %3601 = vmatmul.bf16.gmra.mxu0 %v1670
    %v3602 = vpop.f32.mrf.mxu0
    %v3603 = vadd.f32 %v3569, %v3602
    %v3604 = vpop.f32.mrf.mxu0
    %v3605 = vadd.f32 %v3571, %v3604
    %3606 = vdwg.mxu0
    %3607 = vmatpush.bf16.msra.mxu0 %v2632
    %3608 = vmatpush.bf16.msra.mxu0 %v2626
    %3609 = vmatpush.bf16.msra.mxu0 %v2620
    %3610 = vmatpush.bf16.msra.mxu0 %v2614
    %3611 = vmatpush.bf16.msra.mxu0 %v2608
    %3612 = vmatpush.bf16.msra.mxu0 %v2602
    %3613 = vmatpush.bf16.msra.mxu0 %v2596
    %3614 = vmatpush.bf16.msra.mxu0 %v2590
    %3615 = vmatmul.bf16.gmra.mxu0 %v1655
    %v3616 = vpop.f32.mrf.mxu0
    %v3617 = vadd.f32 %v3583, %v3616
    %v3618 = vpop.f32.mrf.mxu0
    %v3619 = vadd.f32 %v3585, %v3618
    %3620 = vmatmul.bf16.gmra.mxu0 %v1659
    %v3621 = vpop.f32.mrf.mxu0
    %v3622 = vadd.f32 %v3588, %v3621
    %v3623 = vpop.f32.mrf.mxu0
    %v3624 = vadd.f32 %v3590, %v3623
    %3625 = vmatmul.bf16.gmra.mxu0 %v1663
    %v3626 = vpop.f32.mrf.mxu0
    %v3627 = vadd.f32 %v3593, %v3626
    %v3628 = vpop.f32.mrf.mxu0
    %v3629 = vadd.f32 %v3595, %v3628
    %3630 = vmatmul.bf16.gmra.mxu0 %v1667
    %v3631 = vpop.f32.mrf.mxu0
    %v3632 = vadd.f32 %v3598, %v3631
    %v3633 = vpop.f32.mrf.mxu0
    %v3634 = vadd.f32 %v3600, %v3633
    %3635 = vmatmul.bf16.gmra.mxu0 %v1671
    %v3636 = vpop.f32.mrf.mxu0
    %v3637 = vadd.f32 %v3603, %v3636
    %v3638 = vpop.f32.mrf.mxu0
    %v3639 = vadd.f32 %v3605, %v3638
    %3640 = vdwg.mxu0
    %v3833 = vunpack.c.l.b16 %v1460
    %v3834 = vunpack.c.h.b16 %v1460
    %v3835 = vunpack.c.l.b16 %v1461
    %v3836 = vunpack.c.h.b16 %v1461
    %v3837 = vunpack.c.l.b16 %v1462
    %v3838 = vunpack.c.h.b16 %v1462
    %v3839 = vunpack.c.l.b16 %v1463
    %v3840 = vunpack.c.h.b16 %v1463
    %v3841 = vunpack.c.l.b16 %v1464
    %v3842 = vunpack.c.h.b16 %v1464
    %v3843 = vunpack.c.l.b16 %v1465
    %v3844 = vunpack.c.h.b16 %v1465
    %v3845 = vunpack.c.l.b16 %v1466
    %v3846 = vunpack.c.h.b16 %v1466
    %v3847 = vunpack.c.l.b16 %v1467
    %v3848 = vunpack.c.h.b16 %v1467
    %v3849 = vunpack.c.l.b16 %v1468
    %v3850 = vunpack.c.h.b16 %v1468
    %v3851 = vunpack.c.l.b16 %v1469
    %v3852 = vunpack.c.h.b16 %v1469
    %v3853 = vunpack.c.l.b16 %v1470
    %v3854 = vunpack.c.h.b16 %v1470
    %v3855 = vunpack.c.l.b16 %v1471
    %v3856 = vunpack.c.h.b16 %v1471
    %v3857 = vunpack.c.l.b16 %v1472
    %v3858 = vunpack.c.h.b16 %v1472
    %v3859 = vunpack.c.l.b16 %v1473
    %v3860 = vunpack.c.h.b16 %v1473
    %v3861 = vunpack.c.l.b16 %v1474
    %v3862 = vunpack.c.h.b16 %v1474
    %v3863 = vunpack.c.l.b16 %v1475
    %v3864 = vunpack.c.h.b16 %v1475
    %v3865 = vunpack.c.l.b16 %v1476
    %v3866 = vunpack.c.h.b16 %v1476
    %v3867 = vunpack.c.l.b16 %v1477
    %v3868 = vunpack.c.h.b16 %v1477
    %v3869 = vunpack.c.l.b16 %v1478
    %v3870 = vunpack.c.h.b16 %v1478
    %v3871 = vunpack.c.l.b16 %v1479
    %v3872 = vunpack.c.h.b16 %v1479
    %v3873 = vunpack.c.l.b16 %v1480
    %v3874 = vunpack.c.h.b16 %v1480
    %v3875 = vunpack.c.l.b16 %v1481
    %v3876 = vunpack.c.h.b16 %v1481
    %v3877 = vunpack.c.l.b16 %v1482
    %v3878 = vunpack.c.h.b16 %v1482
    %v3879 = vunpack.c.l.b16 %v1483
    %v3880 = vunpack.c.h.b16 %v1483
    %v3881 = vunpack.c.l.b16 %v1484
    %v3882 = vunpack.c.h.b16 %v1484
    %v3883 = vunpack.c.l.b16 %v1485
    %v3884 = vunpack.c.h.b16 %v1485
    %v3885 = vunpack.c.l.b16 %v1486
    %v3886 = vunpack.c.h.b16 %v1486
    %v3887 = vunpack.c.l.b16 %v1487
    %v3888 = vunpack.c.h.b16 %v1487
    %v3889 = vunpack.c.l.b16 %v1488
    %v3890 = vunpack.c.h.b16 %v1488
    %v3891 = vunpack.c.l.b16 %v1489
    %v3892 = vunpack.c.h.b16 %v1489
    %v3893 = vunpack.c.l.b16 %v1490
    %v3894 = vunpack.c.h.b16 %v1490
    %v3895 = vunpack.c.l.b16 %v1491
    %v3896 = vunpack.c.h.b16 %v1491
    %v3897 = vunpack.c.l.b16 %v1492
    %v3898 = vunpack.c.h.b16 %v1492
    %v3899 = vunpack.c.l.b16 %v1493
    %v3900 = vunpack.c.h.b16 %v1493
    %v3901 = vunpack.c.l.b16 %v1494
    %v3902 = vunpack.c.h.b16 %v1494
    %v3903 = vunpack.c.l.b16 %v1495
    %v3904 = vunpack.c.h.b16 %v1495
    %v3905 = vunpack.c.l.b16 %v1496
    %v3906 = vunpack.c.h.b16 %v1496
    %v3907 = vunpack.c.l.b16 %v1497
    %v3908 = vunpack.c.h.b16 %v1497
    %v3909 = vunpack.c.l.b16 %v1498
    %v3910 = vunpack.c.h.b16 %v1498
    %v3911 = vunpack.c.l.b16 %v1499
    %v3912 = vunpack.c.h.b16 %v1499
    %v3913 = vunpack.c.l.b16 %v1500
    %v3914 = vunpack.c.h.b16 %v1500
    %v3915 = vunpack.c.l.b16 %v1501
    %v3916 = vunpack.c.h.b16 %v1501
    %v3917 = vunpack.c.l.b16 %v1502
    %v3918 = vunpack.c.h.b16 %v1502
    %v3919 = vunpack.c.l.b16 %v1503
    %v3920 = vunpack.c.h.b16 %v1503
    %v3921 = vunpack.c.l.b16 %v1504
    %v3922 = vunpack.c.h.b16 %v1504
    %v3923 = vunpack.c.l.b16 %v1505
    %v3924 = vunpack.c.h.b16 %v1505
    %v3925 = vunpack.c.l.b16 %v1506
    %v3926 = vunpack.c.h.b16 %v1506
    %v3927 = vunpack.c.l.b16 %v1507
    %v3928 = vunpack.c.h.b16 %v1507
    %v3929 = vunpack.c.l.b16 %v1508
    %v3930 = vunpack.c.h.b16 %v1508
    %v3931 = vunpack.c.l.b16 %v1509
    %v3932 = vunpack.c.h.b16 %v1509
    %v3933 = vunpack.c.l.b16 %v1510
    %v3934 = vunpack.c.h.b16 %v1510
    %v3935 = vunpack.c.l.b16 %v1511
    %v3936 = vunpack.c.h.b16 %v1511
    %v3937 = vunpack.c.l.b16 %v1512
    %v3938 = vunpack.c.h.b16 %v1512
    %v3939 = vunpack.c.l.b16 %v1513
    %v3940 = vunpack.c.h.b16 %v1513
    %v3941 = vunpack.c.l.b16 %v1514
    %v3942 = vunpack.c.h.b16 %v1514
    %v3943 = vunpack.c.l.b16 %v1515
    %v3944 = vunpack.c.h.b16 %v1515
    %v3945 = vunpack.c.l.b16 %v1516
    %v3946 = vunpack.c.h.b16 %v1516
    %v3947 = vunpack.c.l.b16 %v1517
    %v3948 = vunpack.c.h.b16 %v1517
    %v3949 = vunpack.c.l.b16 %v1518
    %v3950 = vunpack.c.h.b16 %v1518
    %v3951 = vunpack.c.l.b16 %v1519
    %v3952 = vunpack.c.h.b16 %v1519
    %v3953 = vunpack.c.l.b16 %v1520
    %v3954 = vunpack.c.h.b16 %v1520
    %v3955 = vunpack.c.l.b16 %v1521
    %v3956 = vunpack.c.h.b16 %v1521
    %v3957 = vunpack.c.l.b16 %v1522
    %v3958 = vunpack.c.h.b16 %v1522
    %v3959 = vunpack.c.l.b16 %v1523
    %v3960 = vunpack.c.h.b16 %v1523
    %v3961 = vunpack.c.l.b16 %v1524
    %v3962 = vunpack.c.h.b16 %v1524
    %v3963 = vunpack.c.l.b16 %v1525
    %v3964 = vunpack.c.h.b16 %v1525
    %v3965 = vunpack.c.l.b16 %v1526
    %v3966 = vunpack.c.h.b16 %v1526
    %v3967 = vunpack.c.l.b16 %v1527
    %v3968 = vunpack.c.h.b16 %v1527
    %v3969 = vunpack.c.l.b16 %v1528
    %v3970 = vunpack.c.h.b16 %v1528
    %v3971 = vunpack.c.l.b16 %v1529
    %v3972 = vunpack.c.h.b16 %v1529
    %v3973 = vunpack.c.l.b16 %v1530
    %v3974 = vunpack.c.h.b16 %v1530
    %v3975 = vunpack.c.l.b16 %v1531
    %v3976 = vunpack.c.h.b16 %v1531
    %v3977 = vunpack.c.l.b16 %v1532
    %v3978 = vunpack.c.h.b16 %v1532
    %v3979 = vunpack.c.l.b16 %v1533
    %v3980 = vunpack.c.h.b16 %v1533
    %v3981 = vunpack.c.l.b16 %v1534
    %v3982 = vunpack.c.h.b16 %v1534
    %v3983 = vunpack.c.l.b16 %v1535
    %v3984 = vunpack.c.h.b16 %v1535
    %v3985 = vunpack.c.l.b16 %v1536
    %v3986 = vunpack.c.h.b16 %v1536
    %v3987 = vunpack.c.l.b16 %v1537
    %v3988 = vunpack.c.h.b16 %v1537
    %v3989 = vunpack.c.l.b16 %v1538
    %v3990 = vunpack.c.h.b16 %v1538
    %v3991 = vunpack.c.l.b16 %v1539
    %v3992 = vunpack.c.h.b16 %v1539
    %v3993 = vunpack.c.l.b16 %v1540
    %v3994 = vunpack.c.h.b16 %v1540
    %v3995 = vunpack.c.l.b16 %v1541
    %v3996 = vunpack.c.h.b16 %v1541
    %v3997 = vunpack.c.l.b16 %v1542
    %v3998 = vunpack.c.h.b16 %v1542
    %v3999 = vunpack.c.l.b16 %v1543
    %v4000 = vunpack.c.h.b16 %v1543
    %v4001 = vunpack.c.l.b16 %v1544
    %v4002 = vunpack.c.h.b16 %v1544
    %v4003 = vunpack.c.l.b16 %v1545
    %v4004 = vunpack.c.h.b16 %v1545
    %v4005 = vunpack.c.l.b16 %v1546
    %v4006 = vunpack.c.h.b16 %v1546
    %v4007 = vunpack.c.l.b16 %v1547
    %v4008 = vunpack.c.h.b16 %v1547
    %v4009 = vunpack.c.l.b16 %v1548
    %v4010 = vunpack.c.h.b16 %v1548
    %v4011 = vunpack.c.l.b16 %v1549
    %v4012 = vunpack.c.h.b16 %v1549
    %v4013 = vunpack.c.l.b16 %v1550
    %v4014 = vunpack.c.h.b16 %v1550
    %v4015 = vunpack.c.l.b16 %v1551
    %v4016 = vunpack.c.h.b16 %v1551
    %v4017 = vunpack.c.l.b16 %v1552
    %v4018 = vunpack.c.h.b16 %v1552
    %v4019 = vunpack.c.l.b16 %v1553
    %v4020 = vunpack.c.h.b16 %v1553
    %v4021 = vunpack.c.l.b16 %v1554
    %v4022 = vunpack.c.h.b16 %v1554
    %v4023 = vunpack.c.l.b16 %v1555
    %v4024 = vunpack.c.h.b16 %v1555
    %v4025 = vunpack.c.l.b16 %v1556
    %v4026 = vunpack.c.h.b16 %v1556
    %v4027 = vunpack.c.l.b16 %v1557
    %v4028 = vunpack.c.h.b16 %v1557
    %v4029 = vunpack.c.l.b16 %v1558
    %v4030 = vunpack.c.h.b16 %v1558
    %v4031 = vunpack.c.l.b16 %v1559
    %v4032 = vunpack.c.h.b16 %v1559
    %v4033 = vunpack.c.l.b16 %v1560
    %v4034 = vunpack.c.h.b16 %v1560
    %v4035 = vunpack.c.l.b16 %v1561
    %v4036 = vunpack.c.h.b16 %v1561
    %v4037 = vunpack.c.l.b16 %v1562
    %v4038 = vunpack.c.h.b16 %v1562
    %v4039 = vunpack.c.l.b16 %v1563
    %v4040 = vunpack.c.h.b16 %v1563
    %v4041 = vunpack.c.l.b16 %v1564
    %v4042 = vunpack.c.h.b16 %v1564
    %v4043 = vunpack.c.l.b16 %v1565
    %v4044 = vunpack.c.h.b16 %v1565
    %v4045 = vunpack.c.l.b16 %v1566
    %v4046 = vunpack.c.h.b16 %v1566
    %v4047 = vunpack.c.l.b16 %v1567
    %v4048 = vunpack.c.h.b16 %v1567
    %v4049 = vunpack.c.l.b16 %v1568
    %v4050 = vunpack.c.h.b16 %v1568
    %v4051 = vunpack.c.l.b16 %v1569
    %v4052 = vunpack.c.h.b16 %v1569
    %v4053 = vunpack.c.l.b16 %v1570
    %v4054 = vunpack.c.h.b16 %v1570
    %v4055 = vunpack.c.l.b16 %v1571
    %v4056 = vunpack.c.h.b16 %v1571
    %v4057 = vunpack.c.l.b16 %v1572
    %v4058 = vunpack.c.h.b16 %v1572
    %v4059 = vunpack.c.l.b16 %v1573
    %v4060 = vunpack.c.h.b16 %v1573
    %v4061 = vunpack.c.l.b16 %v1574
    %v4062 = vunpack.c.h.b16 %v1574
    %v4063 = vunpack.c.l.b16 %v1575
    %v4064 = vunpack.c.h.b16 %v1575
    %v4065 = vunpack.c.l.b16 %v1576
    %v4066 = vunpack.c.h.b16 %v1576
    %v4067 = vunpack.c.l.b16 %v1577
    %v4068 = vunpack.c.h.b16 %v1577
    %v4069 = vunpack.c.l.b16 %v1578
    %v4070 = vunpack.c.h.b16 %v1578
    %v4071 = vunpack.c.l.b16 %v1579
    %v4072 = vunpack.c.h.b16 %v1579
    %v4073 = vunpack.c.l.b16 %v1580
    %v4074 = vunpack.c.h.b16 %v1580
    %v4075 = vunpack.c.l.b16 %v1581
    %v4076 = vunpack.c.h.b16 %v1581
    %v4077 = vunpack.c.l.b16 %v1582
    %v4078 = vunpack.c.h.b16 %v1582
    %v4079 = vunpack.c.l.b16 %v1583
    %v4080 = vunpack.c.h.b16 %v1583
    %v4081 = vunpack.c.l.b16 %v1584
    %v4082 = vunpack.c.h.b16 %v1584
    %v4083 = vunpack.c.l.b16 %v1585
    %v4084 = vunpack.c.h.b16 %v1585
    %v4085 = vunpack.c.l.b16 %v1586
    %v4086 = vunpack.c.h.b16 %v1586
    %v4087 = vunpack.c.l.b16 %v1587
    %v4088 = vunpack.c.h.b16 %v1587
    %v4089 = vunpack.c.l.b16 %v1588
    %v4090 = vunpack.c.h.b16 %v1588
    %v4091 = vunpack.c.l.b16 %v1589
    %v4092 = vunpack.c.h.b16 %v1589
    %v4093 = vunpack.c.l.b16 %v1590
    %v4094 = vunpack.c.h.b16 %v1590
    %v4095 = vunpack.c.l.b16 %v1591
    %v4096 = vunpack.c.h.b16 %v1591
    %v4097 = vunpack.c.l.b16 %v1592
    %v4098 = vunpack.c.h.b16 %v1592
    %v4099 = vunpack.c.l.b16 %v1593
    %v4100 = vunpack.c.h.b16 %v1593
    %v4101 = vunpack.c.l.b16 %v1594
    %v4102 = vunpack.c.h.b16 %v1594
    %v4103 = vunpack.c.l.b16 %v1595
    %v4104 = vunpack.c.h.b16 %v1595
    %v4105 = vunpack.c.l.b16 %v1596
    %v4106 = vunpack.c.h.b16 %v1596
    %v4107 = vunpack.c.l.b16 %v1597
    %v4108 = vunpack.c.h.b16 %v1597
    %v4109 = vunpack.c.l.b16 %v1598
    %v4110 = vunpack.c.h.b16 %v1598
    %v4111 = vunpack.c.l.b16 %v1599
    %v4112 = vunpack.c.h.b16 %v1599
    %v4113 = vunpack.c.l.b16 %v1600
    %v4114 = vunpack.c.h.b16 %v1600
    %v4115 = vunpack.c.l.b16 %v1601
    %v4116 = vunpack.c.h.b16 %v1601
    %v4117 = vunpack.c.l.b16 %v1602
    %v4118 = vunpack.c.h.b16 %v1602
    %v4119 = vunpack.c.l.b16 %v1603
    %v4120 = vunpack.c.h.b16 %v1603
    %v4121 = vunpack.c.l.b16 %v1604
    %v4122 = vunpack.c.h.b16 %v1604
    %v4123 = vunpack.c.l.b16 %v1605
    %v4124 = vunpack.c.h.b16 %v1605
    %v4125 = vunpack.c.l.b16 %v1606
    %v4126 = vunpack.c.h.b16 %v1606
    %v4127 = vunpack.c.l.b16 %v1607
    %v4128 = vunpack.c.h.b16 %v1607
    %v4129 = vunpack.c.l.b16 %v1608
    %v4130 = vunpack.c.h.b16 %v1608
    %v4131 = vunpack.c.l.b16 %v1609
    %v4132 = vunpack.c.h.b16 %v1609
    %v4133 = vunpack.c.l.b16 %v1610
    %v4134 = vunpack.c.h.b16 %v1610
    %v4135 = vunpack.c.l.b16 %v1611
    %v4136 = vunpack.c.h.b16 %v1611
    %v4137 = vunpack.c.l.b16 %v1612
    %v4138 = vunpack.c.h.b16 %v1612
    %v4139 = vunpack.c.l.b16 %v1613
    %v4140 = vunpack.c.h.b16 %v1613
    %v4141 = vunpack.c.l.b16 %v1614
    %v4142 = vunpack.c.h.b16 %v1614
    %v4143 = vunpack.c.l.b16 %v1615
    %v4144 = vunpack.c.h.b16 %v1615
    %v4145 = vunpack.c.l.b16 %v1616
    %v4146 = vunpack.c.h.b16 %v1616
    %v4147 = vunpack.c.l.b16 %v1617
    %v4148 = vunpack.c.h.b16 %v1617
    %v4149 = vunpack.c.l.b16 %v1618
    %v4150 = vunpack.c.h.b16 %v1618
    %v4151 = vunpack.c.l.b16 %v1619
    %v4152 = vunpack.c.h.b16 %v1619
    %v4153 = vunpack.c.l.b16 %v1620
    %v4154 = vunpack.c.h.b16 %v1620
    %v4155 = vunpack.c.l.b16 %v1621
    %v4156 = vunpack.c.h.b16 %v1621
    %v4157 = vunpack.c.l.b16 %v1622
    %v4158 = vunpack.c.h.b16 %v1622
    %v4159 = vunpack.c.l.b16 %v1623
    %v4160 = vunpack.c.h.b16 %v1623
    %v4161 = vunpack.c.l.b16 %v1624
    %v4162 = vunpack.c.h.b16 %v1624
    %v4163 = vunpack.c.l.b16 %v1625
    %v4164 = vunpack.c.h.b16 %v1625
    %v4165 = vunpack.c.l.b16 %v1626
    %v4166 = vunpack.c.h.b16 %v1626
    %v4167 = vunpack.c.l.b16 %v1627
    %v4168 = vunpack.c.h.b16 %v1627
    %v4169 = vunpack.c.l.b16 %v1628
    %v4170 = vunpack.c.h.b16 %v1628
    %v4171 = vunpack.c.l.b16 %v1629
    %v4172 = vunpack.c.h.b16 %v1629
    %v4173 = vunpack.c.l.b16 %v1630
    %v4174 = vunpack.c.h.b16 %v1630
    %v4175 = vunpack.c.l.b16 %v1631
    %v4176 = vunpack.c.h.b16 %v1631
    %v4177 = vunpack.c.l.b16 %v1632
    %v4178 = vunpack.c.h.b16 %v1632
    %v4179 = vunpack.c.l.b16 %v1633
    %v4180 = vunpack.c.h.b16 %v1633
    %v4181 = vunpack.c.l.b16 %v1634
    %v4182 = vunpack.c.h.b16 %v1634
    %v4183 = vunpack.c.l.b16 %v1635
    %v4184 = vunpack.c.h.b16 %v1635
    %v4185 = vunpack.c.l.b16 %v1636
    %v4186 = vunpack.c.h.b16 %v1636
    %v4187 = vunpack.c.l.b16 %v1637
    %v4188 = vunpack.c.h.b16 %v1637
    %v4189 = vunpack.c.l.b16 %v1638
    %v4190 = vunpack.c.h.b16 %v1638
    %v4191 = vunpack.c.l.b16 %v1639
    %v4192 = vunpack.c.h.b16 %v1639
    %v4193 = vunpack.c.l.b16 %v1640
    %v4194 = vunpack.c.h.b16 %v1640
    %v4195 = vunpack.c.l.b16 %v1641
    %v4196 = vunpack.c.h.b16 %v1641
    %v4197 = vunpack.c.l.b16 %v1642
    %v4198 = vunpack.c.h.b16 %v1642
    %v4199 = vunpack.c.l.b16 %v1643
    %v4200 = vunpack.c.h.b16 %v1643
    %v4201 = vunpack.c.l.b16 %v1644
    %v4202 = vunpack.c.h.b16 %v1644
    %v4203 = vunpack.c.l.b16 %v1645
    %v4204 = vunpack.c.h.b16 %v1645
    %v4205 = vunpack.c.l.b16 %v1646
    %v4206 = vunpack.c.h.b16 %v1646
    %v4207 = vunpack.c.l.b16 %v1647
    %v4208 = vunpack.c.h.b16 %v1647
    %v4209 = vunpack.c.l.b16 %v1648
    %v4210 = vunpack.c.h.b16 %v1648
    %v4211 = vunpack.c.l.b16 %v1649
    %v4212 = vunpack.c.h.b16 %v1649
    %v4213 = vunpack.c.l.b16 %v1650
    %v4214 = vunpack.c.h.b16 %v1650
    %v4215 = vunpack.c.l.b16 %v1651
    %v4216 = vunpack.c.h.b16 %v1651
    %v4217 = vpack.c.b16 %v3839, %v3833
    %v4218 = vpack.c.b16 %v3840, %v3834
    %v4219 = vpack.c.b16 %v3841, %v3835
    %v4220 = vpack.c.b16 %v3842, %v3836
    %v4221 = vpack.c.b16 %v3843, %v3837
    %v4222 = vpack.c.b16 %v3844, %v3838
    %v4223 = vpack.c.b16 %v3851, %v3845
    %v4224 = vpack.c.b16 %v3852, %v3846
    %v4225 = vpack.c.b16 %v3853, %v3847
    %v4226 = vpack.c.b16 %v3854, %v3848
    %v4227 = vpack.c.b16 %v3855, %v3849
    %v4228 = vpack.c.b16 %v3856, %v3850
    %v4229 = vpack.c.b16 %v3863, %v3857
    %v4230 = vpack.c.b16 %v3864, %v3858
    %v4231 = vpack.c.b16 %v3865, %v3859
    %v4232 = vpack.c.b16 %v3866, %v3860
    %v4233 = vpack.c.b16 %v3867, %v3861
    %v4234 = vpack.c.b16 %v3868, %v3862
    %v4235 = vpack.c.b16 %v3875, %v3869
    %v4236 = vpack.c.b16 %v3876, %v3870
    %v4237 = vpack.c.b16 %v3877, %v3871
    %v4238 = vpack.c.b16 %v3878, %v3872
    %v4239 = vpack.c.b16 %v3879, %v3873
    %v4240 = vpack.c.b16 %v3880, %v3874
    %v4241 = vpack.c.b16 %v3887, %v3881
    %v4242 = vpack.c.b16 %v3888, %v3882
    %v4243 = vpack.c.b16 %v3889, %v3883
    %v4244 = vpack.c.b16 %v3890, %v3884
    %v4245 = vpack.c.b16 %v3891, %v3885
    %v4246 = vpack.c.b16 %v3892, %v3886
    %v4247 = vpack.c.b16 %v3899, %v3893
    %v4248 = vpack.c.b16 %v3900, %v3894
    %v4249 = vpack.c.b16 %v3901, %v3895
    %v4250 = vpack.c.b16 %v3902, %v3896
    %v4251 = vpack.c.b16 %v3903, %v3897
    %v4252 = vpack.c.b16 %v3904, %v3898
    %v4253 = vpack.c.b16 %v3911, %v3905
    %v4254 = vpack.c.b16 %v3912, %v3906
    %v4255 = vpack.c.b16 %v3913, %v3907
    %v4256 = vpack.c.b16 %v3914, %v3908
    %v4257 = vpack.c.b16 %v3915, %v3909
    %v4258 = vpack.c.b16 %v3916, %v3910
    %v4259 = vpack.c.b16 %v3923, %v3917
    %v4260 = vpack.c.b16 %v3924, %v3918
    %v4261 = vpack.c.b16 %v3925, %v3919
    %v4262 = vpack.c.b16 %v3926, %v3920
    %v4263 = vpack.c.b16 %v3927, %v3921
    %v4264 = vpack.c.b16 %v3928, %v3922
    %v4265 = vpack.c.b16 %v3935, %v3929
    %v4266 = vpack.c.b16 %v3936, %v3930
    %v4267 = vpack.c.b16 %v3937, %v3931
    %v4268 = vpack.c.b16 %v3938, %v3932
    %v4269 = vpack.c.b16 %v3939, %v3933
    %v4270 = vpack.c.b16 %v3940, %v3934
    %v4271 = vpack.c.b16 %v3947, %v3941
    %v4272 = vpack.c.b16 %v3948, %v3942
    %v4273 = vpack.c.b16 %v3949, %v3943
    %v4274 = vpack.c.b16 %v3950, %v3944
    %v4275 = vpack.c.b16 %v3951, %v3945
    %v4276 = vpack.c.b16 %v3952, %v3946
    %v4277 = vpack.c.b16 %v3959, %v3953
    %v4278 = vpack.c.b16 %v3960, %v3954
    %v4279 = vpack.c.b16 %v3961, %v3955
    %v4280 = vpack.c.b16 %v3962, %v3956
    %v4281 = vpack.c.b16 %v3963, %v3957
    %v4282 = vpack.c.b16 %v3964, %v3958
    %v4283 = vpack.c.b16 %v3971, %v3965
    %v4284 = vpack.c.b16 %v3972, %v3966
    %v4285 = vpack.c.b16 %v3973, %v3967
    %v4286 = vpack.c.b16 %v3974, %v3968
    %v4287 = vpack.c.b16 %v3975, %v3969
    %v4288 = vpack.c.b16 %v3976, %v3970
    %v4289 = vpack.c.b16 %v3983, %v3977
    %v4290 = vpack.c.b16 %v3984, %v3978
    %v4291 = vpack.c.b16 %v3985, %v3979
    %v4292 = vpack.c.b16 %v3986, %v3980
    %v4293 = vpack.c.b16 %v3987, %v3981
    %v4294 = vpack.c.b16 %v3988, %v3982
    %v4295 = vpack.c.b16 %v3995, %v3989
    %v4296 = vpack.c.b16 %v3996, %v3990
    %v4297 = vpack.c.b16 %v3997, %v3991
    %v4298 = vpack.c.b16 %v3998, %v3992
    %v4299 = vpack.c.b16 %v3999, %v3993
    %v4300 = vpack.c.b16 %v4000, %v3994
    %v4301 = vpack.c.b16 %v4007, %v4001
    %v4302 = vpack.c.b16 %v4008, %v4002
    %v4303 = vpack.c.b16 %v4009, %v4003
    %v4304 = vpack.c.b16 %v4010, %v4004
    %v4305 = vpack.c.b16 %v4011, %v4005
    %v4306 = vpack.c.b16 %v4012, %v4006
    %v4307 = vpack.c.b16 %v4019, %v4013
    %v4308 = vpack.c.b16 %v4020, %v4014
    %v4309 = vpack.c.b16 %v4021, %v4015
    %v4310 = vpack.c.b16 %v4022, %v4016
    %v4311 = vpack.c.b16 %v4023, %v4017
    %v4312 = vpack.c.b16 %v4024, %v4018
    %v4313 = vpack.c.b16 %v4031, %v4025
    %v4314 = vpack.c.b16 %v4032, %v4026
    %v4315 = vpack.c.b16 %v4033, %v4027
    %v4316 = vpack.c.b16 %v4034, %v4028
    %v4317 = vpack.c.b16 %v4035, %v4029
    %v4318 = vpack.c.b16 %v4036, %v4030
    %v4319 = vpack.c.b16 %v4043, %v4037
    %v4320 = vpack.c.b16 %v4044, %v4038
    %v4321 = vpack.c.b16 %v4045, %v4039
    %v4322 = vpack.c.b16 %v4046, %v4040
    %v4323 = vpack.c.b16 %v4047, %v4041
    %v4324 = vpack.c.b16 %v4048, %v4042
    %v4325 = vpack.c.b16 %v4055, %v4049
    %v4326 = vpack.c.b16 %v4056, %v4050
    %v4327 = vpack.c.b16 %v4057, %v4051
    %v4328 = vpack.c.b16 %v4058, %v4052
    %v4329 = vpack.c.b16 %v4059, %v4053
    %v4330 = vpack.c.b16 %v4060, %v4054
    %v4331 = vpack.c.b16 %v4067, %v4061
    %v4332 = vpack.c.b16 %v4068, %v4062
    %v4333 = vpack.c.b16 %v4069, %v4063
    %v4334 = vpack.c.b16 %v4070, %v4064
    %v4335 = vpack.c.b16 %v4071, %v4065
    %v4336 = vpack.c.b16 %v4072, %v4066
    %v4337 = vpack.c.b16 %v4079, %v4073
    %v4338 = vpack.c.b16 %v4080, %v4074
    %v4339 = vpack.c.b16 %v4081, %v4075
    %v4340 = vpack.c.b16 %v4082, %v4076
    %v4341 = vpack.c.b16 %v4083, %v4077
    %v4342 = vpack.c.b16 %v4084, %v4078
    %v4343 = vpack.c.b16 %v4091, %v4085
    %v4344 = vpack.c.b16 %v4092, %v4086
    %v4345 = vpack.c.b16 %v4093, %v4087
    %v4346 = vpack.c.b16 %v4094, %v4088
    %v4347 = vpack.c.b16 %v4095, %v4089
    %v4348 = vpack.c.b16 %v4096, %v4090
    %v4349 = vpack.c.b16 %v4103, %v4097
    %v4350 = vpack.c.b16 %v4104, %v4098
    %v4351 = vpack.c.b16 %v4105, %v4099
    %v4352 = vpack.c.b16 %v4106, %v4100
    %v4353 = vpack.c.b16 %v4107, %v4101
    %v4354 = vpack.c.b16 %v4108, %v4102
    %v4355 = vpack.c.b16 %v4115, %v4109
    %v4356 = vpack.c.b16 %v4116, %v4110
    %v4357 = vpack.c.b16 %v4117, %v4111
    %v4358 = vpack.c.b16 %v4118, %v4112
    %v4359 = vpack.c.b16 %v4119, %v4113
    %v4360 = vpack.c.b16 %v4120, %v4114
    %v4361 = vpack.c.b16 %v4127, %v4121
    %v4362 = vpack.c.b16 %v4128, %v4122
    %v4363 = vpack.c.b16 %v4129, %v4123
    %v4364 = vpack.c.b16 %v4130, %v4124
    %v4365 = vpack.c.b16 %v4131, %v4125
    %v4366 = vpack.c.b16 %v4132, %v4126
    %v4367 = vpack.c.b16 %v4139, %v4133
    %v4368 = vpack.c.b16 %v4140, %v4134
    %v4369 = vpack.c.b16 %v4141, %v4135
    %v4370 = vpack.c.b16 %v4142, %v4136
    %v4371 = vpack.c.b16 %v4143, %v4137
    %v4372 = vpack.c.b16 %v4144, %v4138
    %v4373 = vpack.c.b16 %v4151, %v4145
    %v4374 = vpack.c.b16 %v4152, %v4146
    %v4375 = vpack.c.b16 %v4153, %v4147
    %v4376 = vpack.c.b16 %v4154, %v4148
    %v4377 = vpack.c.b16 %v4155, %v4149
    %v4378 = vpack.c.b16 %v4156, %v4150
    %v4379 = vpack.c.b16 %v4163, %v4157
    %v4380 = vpack.c.b16 %v4164, %v4158
    %v4381 = vpack.c.b16 %v4165, %v4159
    %v4382 = vpack.c.b16 %v4166, %v4160
    %v4383 = vpack.c.b16 %v4167, %v4161
    %v4384 = vpack.c.b16 %v4168, %v4162
    %v4385 = vpack.c.b16 %v4175, %v4169
    %v4386 = vpack.c.b16 %v4176, %v4170
    %v4387 = vpack.c.b16 %v4177, %v4171
    %v4388 = vpack.c.b16 %v4178, %v4172
    %v4389 = vpack.c.b16 %v4179, %v4173
    %v4390 = vpack.c.b16 %v4180, %v4174
    %v4391 = vpack.c.b16 %v4187, %v4181
    %v4392 = vpack.c.b16 %v4188, %v4182
    %v4393 = vpack.c.b16 %v4189, %v4183
    %v4394 = vpack.c.b16 %v4190, %v4184
    %v4395 = vpack.c.b16 %v4191, %v4185
    %v4396 = vpack.c.b16 %v4192, %v4186
    %v4397 = vpack.c.b16 %v4199, %v4193
    %v4398 = vpack.c.b16 %v4200, %v4194
    %v4399 = vpack.c.b16 %v4201, %v4195
    %v4400 = vpack.c.b16 %v4202, %v4196
    %v4401 = vpack.c.b16 %v4203, %v4197
    %v4402 = vpack.c.b16 %v4204, %v4198
    %v4403 = vpack.c.b16 %v4211, %v4205
    %v4404 = vpack.c.b16 %v4212, %v4206
    %v4405 = vpack.c.b16 %v4213, %v4207
    %v4406 = vpack.c.b16 %v4214, %v4208
    %v4407 = vpack.c.b16 %v4215, %v4209
    %v4408 = vpack.c.b16 %v4216, %v4210
    %4601 = vmatpush.bf16.msra.mxu0 %v4259
    %4602 = vmatpush.bf16.msra.mxu0 %v4253
    %4603 = vmatpush.bf16.msra.mxu0 %v4247
    %4604 = vmatpush.bf16.msra.mxu0 %v4241
    %4605 = vmatpush.bf16.msra.mxu0 %v4235
    %4606 = vmatpush.bf16.msra.mxu0 %v4229
    %4607 = vmatpush.bf16.msra.mxu0 %v4223
    %4608 = vmatpush.bf16.msra.mxu0 %v4217
    %4609 = vmatmul.bf16.gmra.mxu0 %v1440
    %v4610 = vpop.f32.mrf.mxu0
    %v4611 = vadd.f32 %v2937, %v4610
    %v4612 = vpop.f32.mrf.mxu0
    %v4613 = vadd.f32 %v2939, %v4612
    %4614 = vmatmul.bf16.gmra.mxu0 %v1444
    %v4615 = vpop.f32.mrf.mxu0
    %v4616 = vadd.f32 %v2942, %v4615
    %v4617 = vpop.f32.mrf.mxu0
    %v4618 = vadd.f32 %v2944, %v4617
    %4619 = vmatmul.bf16.gmra.mxu0 %v1448
    %v4620 = vpop.f32.mrf.mxu0
    %v4621 = vadd.f32 %v2947, %v4620
    %v4622 = vpop.f32.mrf.mxu0
    %v4623 = vadd.f32 %v2949, %v4622
    %4624 = vmatmul.bf16.gmra.mxu0 %v1452
    %v4625 = vpop.f32.mrf.mxu0
    %v4626 = vadd.f32 %v2952, %v4625
    %v4627 = vpop.f32.mrf.mxu0
    %v4628 = vadd.f32 %v2954, %v4627
    %4629 = vmatmul.bf16.gmra.mxu0 %v1456
    %v4630 = vpop.f32.mrf.mxu0
    %v4631 = vadd.f32 %v2957, %v4630
    %v4632 = vpop.f32.mrf.mxu0
    %v4633 = vadd.f32 %v2959, %v4632
    %4634 = vdwg.mxu0
    %4635 = vmatpush.bf16.msra.mxu0 %v4307
    %4636 = vmatpush.bf16.msra.mxu0 %v4301
    %4637 = vmatpush.bf16.msra.mxu0 %v4295
    %4638 = vmatpush.bf16.msra.mxu0 %v4289
    %4639 = vmatpush.bf16.msra.mxu0 %v4283
    %4640 = vmatpush.bf16.msra.mxu0 %v4277
    %4641 = vmatpush.bf16.msra.mxu0 %v4271
    %4642 = vmatpush.bf16.msra.mxu0 %v4265
    %4643 = vmatmul.bf16.gmra.mxu0 %v1441
    %v4644 = vpop.f32.mrf.mxu0
    %v4645 = vadd.f32 %v4611, %v4644
    %v4646 = vpop.f32.mrf.mxu0
    %v4647 = vadd.f32 %v4613, %v4646
    %4648 = vmatmul.bf16.gmra.mxu0 %v1445
    %v4649 = vpop.f32.mrf.mxu0
    %v4650 = vadd.f32 %v4616, %v4649
    %v4651 = vpop.f32.mrf.mxu0
    %v4652 = vadd.f32 %v4618, %v4651
    %4653 = vmatmul.bf16.gmra.mxu0 %v1449
    %v4654 = vpop.f32.mrf.mxu0
    %v4655 = vadd.f32 %v4621, %v4654
    %v4656 = vpop.f32.mrf.mxu0
    %v4657 = vadd.f32 %v4623, %v4656
    %4658 = vmatmul.bf16.gmra.mxu0 %v1453
    %v4659 = vpop.f32.mrf.mxu0
    %v4660 = vadd.f32 %v4626, %v4659
    %v4661 = vpop.f32.mrf.mxu0
    %v4662 = vadd.f32 %v4628, %v4661
    %4663 = vmatmul.bf16.gmra.mxu0 %v1457
    %v4664 = vpop.f32.mrf.mxu0
    %v4665 = vadd.f32 %v4631, %v4664
    %v4666 = vpop.f32.mrf.mxu0
    %v4667 = vadd.f32 %v4633, %v4666
    %4668 = vdwg.mxu0
    %4669 = vmatpush.bf16.msra.mxu0 %v4355
    %4670 = vmatpush.bf16.msra.mxu0 %v4349
    %4671 = vmatpush.bf16.msra.mxu0 %v4343
    %4672 = vmatpush.bf16.msra.mxu0 %v4337
    %4673 = vmatpush.bf16.msra.mxu0 %v4331
    %4674 = vmatpush.bf16.msra.mxu0 %v4325
    %4675 = vmatpush.bf16.msra.mxu0 %v4319
    %4676 = vmatpush.bf16.msra.mxu0 %v4313
    %4677 = vmatmul.bf16.gmra.mxu0 %v1442
    %v4678 = vpop.f32.mrf.mxu0
    %v4679 = vadd.f32 %v4645, %v4678
    %v4680 = vpop.f32.mrf.mxu0
    %v4681 = vadd.f32 %v4647, %v4680
    %4682 = vmatmul.bf16.gmra.mxu0 %v1446
    %v4683 = vpop.f32.mrf.mxu0
    %v4684 = vadd.f32 %v4650, %v4683
    %v4685 = vpop.f32.mrf.mxu0
    %v4686 = vadd.f32 %v4652, %v4685
    %4687 = vmatmul.bf16.gmra.mxu0 %v1450
    %v4688 = vpop.f32.mrf.mxu0
    %v4689 = vadd.f32 %v4655, %v4688
    %v4690 = vpop.f32.mrf.mxu0
    %v4691 = vadd.f32 %v4657, %v4690
    %4692 = vmatmul.bf16.gmra.mxu0 %v1454
    %v4693 = vpop.f32.mrf.mxu0
    %v4694 = vadd.f32 %v4660, %v4693
    %v4695 = vpop.f32.mrf.mxu0
    %v4696 = vadd.f32 %v4662, %v4695
    %4697 = vmatmul.bf16.gmra.mxu0 %v1458
    %v4698 = vpop.f32.mrf.mxu0
    %v4699 = vadd.f32 %v4665, %v4698
    %v4700 = vpop.f32.mrf.mxu0
    %v4701 = vadd.f32 %v4667, %v4700
    %4702 = vdwg.mxu0
    %4703 = vmatpush.bf16.msra.mxu0 %v4403
    %4704 = vmatpush.bf16.msra.mxu0 %v4397
    %4705 = vmatpush.bf16.msra.mxu0 %v4391
    %4706 = vmatpush.bf16.msra.mxu0 %v4385
    %4707 = vmatpush.bf16.msra.mxu0 %v4379
    %4708 = vmatpush.bf16.msra.mxu0 %v4373
    %4709 = vmatpush.bf16.msra.mxu0 %v4367
    %4710 = vmatpush.bf16.msra.mxu0 %v4361
    %4711 = vmatmul.bf16.gmra.mxu0 %v1443
    %v4712 = vpop.f32.mrf.mxu0
    %v4713 = vadd.f32 %v4679, %v4712
    %v4714 = vpop.f32.mrf.mxu0
    %v4715 = vadd.f32 %v4681, %v4714
    %4716 = vmatmul.bf16.gmra.mxu0 %v1447
    %v4717 = vpop.f32.mrf.mxu0
    %v4718 = vadd.f32 %v4684, %v4717
    %v4719 = vpop.f32.mrf.mxu0
    %v4720 = vadd.f32 %v4686, %v4719
    %4721 = vmatmul.bf16.gmra.mxu0 %v1451
    %v4722 = vpop.f32.mrf.mxu0
    %v4723 = vadd.f32 %v4689, %v4722
    %v4724 = vpop.f32.mrf.mxu0
    %v4725 = vadd.f32 %v4691, %v4724
    %4726 = vmatmul.bf16.gmra.mxu0 %v1455
    %v4727 = vpop.f32.mrf.mxu0
    %v4728 = vadd.f32 %v4694, %v4727
    %v4729 = vpop.f32.mrf.mxu0
    %v4730 = vadd.f32 %v4696, %v4729
    %4731 = vmatmul.bf16.gmra.mxu0 %v1459
    %v4732 = vpop.f32.mrf.mxu0
    %v4733 = vadd.f32 %v4699, %v4732
    %v4734 = vpop.f32.mrf.mxu0
    %v4735 = vadd.f32 %v4701, %v4734
    %4736 = vdwg.mxu0
    %4737 = vmatpush.bf16.msra.mxu0 %v4260
    %4738 = vmatpush.bf16.msra.mxu0 %v4254
    %4739 = vmatpush.bf16.msra.mxu0 %v4248
    %4740 = vmatpush.bf16.msra.mxu0 %v4242
    %4741 = vmatpush.bf16.msra.mxu0 %v4236
    %4742 = vmatpush.bf16.msra.mxu0 %v4230
    %4743 = vmatpush.bf16.msra.mxu0 %v4224
    %4744 = vmatpush.bf16.msra.mxu0 %v4218
    %4745 = vmatmul.bf16.gmra.mxu0 %v1440
    %v4746 = vpop.f32.mrf.mxu0
    %v4747 = vadd.f32 %v3073, %v4746
    %v4748 = vpop.f32.mrf.mxu0
    %v4749 = vadd.f32 %v3075, %v4748
    %4750 = vmatmul.bf16.gmra.mxu0 %v1444
    %v4751 = vpop.f32.mrf.mxu0
    %v4752 = vadd.f32 %v3078, %v4751
    %v4753 = vpop.f32.mrf.mxu0
    %v4754 = vadd.f32 %v3080, %v4753
    %4755 = vmatmul.bf16.gmra.mxu0 %v1448
    %v4756 = vpop.f32.mrf.mxu0
    %v4757 = vadd.f32 %v3083, %v4756
    %v4758 = vpop.f32.mrf.mxu0
    %v4759 = vadd.f32 %v3085, %v4758
    %4760 = vmatmul.bf16.gmra.mxu0 %v1452
    %v4761 = vpop.f32.mrf.mxu0
    %v4762 = vadd.f32 %v3088, %v4761
    %v4763 = vpop.f32.mrf.mxu0
    %v4764 = vadd.f32 %v3090, %v4763
    %4765 = vmatmul.bf16.gmra.mxu0 %v1456
    %v4766 = vpop.f32.mrf.mxu0
    %v4767 = vadd.f32 %v3093, %v4766
    %v4768 = vpop.f32.mrf.mxu0
    %v4769 = vadd.f32 %v3095, %v4768
    %4770 = vdwg.mxu0
    %4771 = vmatpush.bf16.msra.mxu0 %v4308
    %4772 = vmatpush.bf16.msra.mxu0 %v4302
    %4773 = vmatpush.bf16.msra.mxu0 %v4296
    %4774 = vmatpush.bf16.msra.mxu0 %v4290
    %4775 = vmatpush.bf16.msra.mxu0 %v4284
    %4776 = vmatpush.bf16.msra.mxu0 %v4278
    %4777 = vmatpush.bf16.msra.mxu0 %v4272
    %4778 = vmatpush.bf16.msra.mxu0 %v4266
    %4779 = vmatmul.bf16.gmra.mxu0 %v1441
    %v4780 = vpop.f32.mrf.mxu0
    %v4781 = vadd.f32 %v4747, %v4780
    %v4782 = vpop.f32.mrf.mxu0
    %v4783 = vadd.f32 %v4749, %v4782
    %4784 = vmatmul.bf16.gmra.mxu0 %v1445
    %v4785 = vpop.f32.mrf.mxu0
    %v4786 = vadd.f32 %v4752, %v4785
    %v4787 = vpop.f32.mrf.mxu0
    %v4788 = vadd.f32 %v4754, %v4787
    %4789 = vmatmul.bf16.gmra.mxu0 %v1449
    %v4790 = vpop.f32.mrf.mxu0
    %v4791 = vadd.f32 %v4757, %v4790
    %v4792 = vpop.f32.mrf.mxu0
    %v4793 = vadd.f32 %v4759, %v4792
    %4794 = vmatmul.bf16.gmra.mxu0 %v1453
    %v4795 = vpop.f32.mrf.mxu0
    %v4796 = vadd.f32 %v4762, %v4795
    %v4797 = vpop.f32.mrf.mxu0
    %v4798 = vadd.f32 %v4764, %v4797
    %4799 = vmatmul.bf16.gmra.mxu0 %v1457
    %v4800 = vpop.f32.mrf.mxu0
    %v4801 = vadd.f32 %v4767, %v4800
    %v4802 = vpop.f32.mrf.mxu0
    %v4803 = vadd.f32 %v4769, %v4802
    %4804 = vdwg.mxu0
    %4805 = vmatpush.bf16.msra.mxu0 %v4356
    %4806 = vmatpush.bf16.msra.mxu0 %v4350
    %4807 = vmatpush.bf16.msra.mxu0 %v4344
    %4808 = vmatpush.bf16.msra.mxu0 %v4338
    %4809 = vmatpush.bf16.msra.mxu0 %v4332
    %4810 = vmatpush.bf16.msra.mxu0 %v4326
    %4811 = vmatpush.bf16.msra.mxu0 %v4320
    %4812 = vmatpush.bf16.msra.mxu0 %v4314
    %4813 = vmatmul.bf16.gmra.mxu0 %v1442
    %v4814 = vpop.f32.mrf.mxu0
    %v4815 = vadd.f32 %v4781, %v4814
    %v4816 = vpop.f32.mrf.mxu0
    %v4817 = vadd.f32 %v4783, %v4816
    %4818 = vmatmul.bf16.gmra.mxu0 %v1446
    %v4819 = vpop.f32.mrf.mxu0
    %v4820 = vadd.f32 %v4786, %v4819
    %v4821 = vpop.f32.mrf.mxu0
    %v4822 = vadd.f32 %v4788, %v4821
    %4823 = vmatmul.bf16.gmra.mxu0 %v1450
    %v4824 = vpop.f32.mrf.mxu0
    %v4825 = vadd.f32 %v4791, %v4824
    %v4826 = vpop.f32.mrf.mxu0
    %v4827 = vadd.f32 %v4793, %v4826
    %4828 = vmatmul.bf16.gmra.mxu0 %v1454
    %v4829 = vpop.f32.mrf.mxu0
    %v4830 = vadd.f32 %v4796, %v4829
    %v4831 = vpop.f32.mrf.mxu0
    %v4832 = vadd.f32 %v4798, %v4831
    %4833 = vmatmul.bf16.gmra.mxu0 %v1458
    %v4834 = vpop.f32.mrf.mxu0
    %v4835 = vadd.f32 %v4801, %v4834
    %v4836 = vpop.f32.mrf.mxu0
    %v4837 = vadd.f32 %v4803, %v4836
    %4838 = vdwg.mxu0
    %4839 = vmatpush.bf16.msra.mxu0 %v4404
    %4840 = vmatpush.bf16.msra.mxu0 %v4398
    %4841 = vmatpush.bf16.msra.mxu0 %v4392
    %4842 = vmatpush.bf16.msra.mxu0 %v4386
    %4843 = vmatpush.bf16.msra.mxu0 %v4380
    %4844 = vmatpush.bf16.msra.mxu0 %v4374
    %4845 = vmatpush.bf16.msra.mxu0 %v4368
    %4846 = vmatpush.bf16.msra.mxu0 %v4362
    %4847 = vmatmul.bf16.gmra.mxu0 %v1443
    %v4848 = vpop.f32.mrf.mxu0
    %v4849 = vadd.f32 %v4815, %v4848
    %v4850 = vpop.f32.mrf.mxu0
    %v4851 = vadd.f32 %v4817, %v4850
    %4852 = vmatmul.bf16.gmra.mxu0 %v1447
    %v4853 = vpop.f32.mrf.mxu0
    %v4854 = vadd.f32 %v4820, %v4853
    %v4855 = vpop.f32.mrf.mxu0
    %v4856 = vadd.f32 %v4822, %v4855
    %4857 = vmatmul.bf16.gmra.mxu0 %v1451
    %v4858 = vpop.f32.mrf.mxu0
    %v4859 = vadd.f32 %v4825, %v4858
    %v4860 = vpop.f32.mrf.mxu0
    %v4861 = vadd.f32 %v4827, %v4860
    %4862 = vmatmul.bf16.gmra.mxu0 %v1455
    %v4863 = vpop.f32.mrf.mxu0
    %v4864 = vadd.f32 %v4830, %v4863
    %v4865 = vpop.f32.mrf.mxu0
    %v4866 = vadd.f32 %v4832, %v4865
    %4867 = vmatmul.bf16.gmra.mxu0 %v1459
    %v4868 = vpop.f32.mrf.mxu0
    %v4869 = vadd.f32 %v4835, %v4868
    %v4870 = vpop.f32.mrf.mxu0
    %v4871 = vadd.f32 %v4837, %v4870
    %4872 = vdwg.mxu0
    %4873 = vmatpush.bf16.msra.mxu0 %v4261
    %4874 = vmatpush.bf16.msra.mxu0 %v4255
    %4875 = vmatpush.bf16.msra.mxu0 %v4249
    %4876 = vmatpush.bf16.msra.mxu0 %v4243
    %4877 = vmatpush.bf16.msra.mxu0 %v4237
    %4878 = vmatpush.bf16.msra.mxu0 %v4231
    %4879 = vmatpush.bf16.msra.mxu0 %v4225
    %4880 = vmatpush.bf16.msra.mxu0 %v4219
    %4881 = vmatmul.bf16.gmra.mxu0 %v1440
    %v4882 = vpop.f32.mrf.mxu0
    %v4883 = vadd.f32 %v3209, %v4882
    %v4884 = vpop.f32.mrf.mxu0
    %v4885 = vadd.f32 %v3211, %v4884
    %4886 = vmatmul.bf16.gmra.mxu0 %v1444
    %v4887 = vpop.f32.mrf.mxu0
    %v4888 = vadd.f32 %v3214, %v4887
    %v4889 = vpop.f32.mrf.mxu0
    %v4890 = vadd.f32 %v3216, %v4889
    %4891 = vmatmul.bf16.gmra.mxu0 %v1448
    %v4892 = vpop.f32.mrf.mxu0
    %v4893 = vadd.f32 %v3219, %v4892
    %v4894 = vpop.f32.mrf.mxu0
    %v4895 = vadd.f32 %v3221, %v4894
    %4896 = vmatmul.bf16.gmra.mxu0 %v1452
    %v4897 = vpop.f32.mrf.mxu0
    %v4898 = vadd.f32 %v3224, %v4897
    %v4899 = vpop.f32.mrf.mxu0
    %v4900 = vadd.f32 %v3226, %v4899
    %4901 = vmatmul.bf16.gmra.mxu0 %v1456
    %v4902 = vpop.f32.mrf.mxu0
    %v4903 = vadd.f32 %v3229, %v4902
    %v4904 = vpop.f32.mrf.mxu0
    %v4905 = vadd.f32 %v3231, %v4904
    %4906 = vdwg.mxu0
    %4907 = vmatpush.bf16.msra.mxu0 %v4309
    %4908 = vmatpush.bf16.msra.mxu0 %v4303
    %4909 = vmatpush.bf16.msra.mxu0 %v4297
    %4910 = vmatpush.bf16.msra.mxu0 %v4291
    %4911 = vmatpush.bf16.msra.mxu0 %v4285
    %4912 = vmatpush.bf16.msra.mxu0 %v4279
    %4913 = vmatpush.bf16.msra.mxu0 %v4273
    %4914 = vmatpush.bf16.msra.mxu0 %v4267
    %4915 = vmatmul.bf16.gmra.mxu0 %v1441
    %v4916 = vpop.f32.mrf.mxu0
    %v4917 = vadd.f32 %v4883, %v4916
    %v4918 = vpop.f32.mrf.mxu0
    %v4919 = vadd.f32 %v4885, %v4918
    %4920 = vmatmul.bf16.gmra.mxu0 %v1445
    %v4921 = vpop.f32.mrf.mxu0
    %v4922 = vadd.f32 %v4888, %v4921
    %v4923 = vpop.f32.mrf.mxu0
    %v4924 = vadd.f32 %v4890, %v4923
    %4925 = vmatmul.bf16.gmra.mxu0 %v1449
    %v4926 = vpop.f32.mrf.mxu0
    %v4927 = vadd.f32 %v4893, %v4926
    %v4928 = vpop.f32.mrf.mxu0
    %v4929 = vadd.f32 %v4895, %v4928
    %4930 = vmatmul.bf16.gmra.mxu0 %v1453
    %v4931 = vpop.f32.mrf.mxu0
    %v4932 = vadd.f32 %v4898, %v4931
    %v4933 = vpop.f32.mrf.mxu0
    %v4934 = vadd.f32 %v4900, %v4933
    %4935 = vmatmul.bf16.gmra.mxu0 %v1457
    %v4936 = vpop.f32.mrf.mxu0
    %v4937 = vadd.f32 %v4903, %v4936
    %v4938 = vpop.f32.mrf.mxu0
    %v4939 = vadd.f32 %v4905, %v4938
    %4940 = vdwg.mxu0
    %4941 = vmatpush.bf16.msra.mxu0 %v4357
    %4942 = vmatpush.bf16.msra.mxu0 %v4351
    %4943 = vmatpush.bf16.msra.mxu0 %v4345
    %4944 = vmatpush.bf16.msra.mxu0 %v4339
    %4945 = vmatpush.bf16.msra.mxu0 %v4333
    %4946 = vmatpush.bf16.msra.mxu0 %v4327
    %4947 = vmatpush.bf16.msra.mxu0 %v4321
    %4948 = vmatpush.bf16.msra.mxu0 %v4315
    %4949 = vmatmul.bf16.gmra.mxu0 %v1442
    %v4950 = vpop.f32.mrf.mxu0
    %v4951 = vadd.f32 %v4917, %v4950
    %v4952 = vpop.f32.mrf.mxu0
    %v4953 = vadd.f32 %v4919, %v4952
    %4954 = vmatmul.bf16.gmra.mxu0 %v1446
    %v4955 = vpop.f32.mrf.mxu0
    %v4956 = vadd.f32 %v4922, %v4955
    %v4957 = vpop.f32.mrf.mxu0
    %v4958 = vadd.f32 %v4924, %v4957
    %4959 = vmatmul.bf16.gmra.mxu0 %v1450
    %v4960 = vpop.f32.mrf.mxu0
    %v4961 = vadd.f32 %v4927, %v4960
    %v4962 = vpop.f32.mrf.mxu0
    %v4963 = vadd.f32 %v4929, %v4962
    %4964 = vmatmul.bf16.gmra.mxu0 %v1454
    %v4965 = vpop.f32.mrf.mxu0
    %v4966 = vadd.f32 %v4932, %v4965
    %v4967 = vpop.f32.mrf.mxu0
    %v4968 = vadd.f32 %v4934, %v4967
    %4969 = vmatmul.bf16.gmra.mxu0 %v1458
    %v4970 = vpop.f32.mrf.mxu0
    %v4971 = vadd.f32 %v4937, %v4970
    %v4972 = vpop.f32.mrf.mxu0
    %v4973 = vadd.f32 %v4939, %v4972
    %4974 = vdwg.mxu0
    %4975 = vmatpush.bf16.msra.mxu0 %v4405
    %4976 = vmatpush.bf16.msra.mxu0 %v4399
    %4977 = vmatpush.bf16.msra.mxu0 %v4393
    %4978 = vmatpush.bf16.msra.mxu0 %v4387
    %4979 = vmatpush.bf16.msra.mxu0 %v4381
    %4980 = vmatpush.bf16.msra.mxu0 %v4375
    %4981 = vmatpush.bf16.msra.mxu0 %v4369
    %4982 = vmatpush.bf16.msra.mxu0 %v4363
    %4983 = vmatmul.bf16.gmra.mxu0 %v1443
    %v4984 = vpop.f32.mrf.mxu0
    %v4985 = vadd.f32 %v4951, %v4984
    %v4986 = vpop.f32.mrf.mxu0
    %v4987 = vadd.f32 %v4953, %v4986
    %4988 = vmatmul.bf16.gmra.mxu0 %v1447
    %v4989 = vpop.f32.mrf.mxu0
    %v4990 = vadd.f32 %v4956, %v4989
    %v4991 = vpop.f32.mrf.mxu0
    %v4992 = vadd.f32 %v4958, %v4991
    %4993 = vmatmul.bf16.gmra.mxu0 %v1451
    %v4994 = vpop.f32.mrf.mxu0
    %v4995 = vadd.f32 %v4961, %v4994
    %v4996 = vpop.f32.mrf.mxu0
    %v4997 = vadd.f32 %v4963, %v4996
    %4998 = vmatmul.bf16.gmra.mxu0 %v1455
    %v4999 = vpop.f32.mrf.mxu0
    %v5000 = vadd.f32 %v4966, %v4999
    %v5001 = vpop.f32.mrf.mxu0
    %v5002 = vadd.f32 %v4968, %v5001
    %5003 = vmatmul.bf16.gmra.mxu0 %v1459
    %v5004 = vpop.f32.mrf.mxu0
    %v5005 = vadd.f32 %v4971, %v5004
    %v5006 = vpop.f32.mrf.mxu0
    %v5007 = vadd.f32 %v4973, %v5006
    %5008 = vdwg.mxu0
    %5009 = vmatpush.bf16.msra.mxu0 %v4262
    %5010 = vmatpush.bf16.msra.mxu0 %v4256
    %5011 = vmatpush.bf16.msra.mxu0 %v4250
    %5012 = vmatpush.bf16.msra.mxu0 %v4244
    %5013 = vmatpush.bf16.msra.mxu0 %v4238
    %5014 = vmatpush.bf16.msra.mxu0 %v4232
    %5015 = vmatpush.bf16.msra.mxu0 %v4226
    %5016 = vmatpush.bf16.msra.mxu0 %v4220
    %5017 = vmatmul.bf16.gmra.mxu0 %v1440
    %v5018 = vpop.f32.mrf.mxu0
    %v5019 = vadd.f32 %v3345, %v5018
    %v5020 = vpop.f32.mrf.mxu0
    %v5021 = vadd.f32 %v3347, %v5020
    %5022 = vmatmul.bf16.gmra.mxu0 %v1444
    %v5023 = vpop.f32.mrf.mxu0
    %v5024 = vadd.f32 %v3350, %v5023
    %v5025 = vpop.f32.mrf.mxu0
    %v5026 = vadd.f32 %v3352, %v5025
    %5027 = vmatmul.bf16.gmra.mxu0 %v1448
    %v5028 = vpop.f32.mrf.mxu0
    %v5029 = vadd.f32 %v3355, %v5028
    %v5030 = vpop.f32.mrf.mxu0
    %v5031 = vadd.f32 %v3357, %v5030
    %5032 = vmatmul.bf16.gmra.mxu0 %v1452
    %v5033 = vpop.f32.mrf.mxu0
    %v5034 = vadd.f32 %v3360, %v5033
    %v5035 = vpop.f32.mrf.mxu0
    %v5036 = vadd.f32 %v3362, %v5035
    %5037 = vmatmul.bf16.gmra.mxu0 %v1456
    %v5038 = vpop.f32.mrf.mxu0
    %v5039 = vadd.f32 %v3365, %v5038
    %v5040 = vpop.f32.mrf.mxu0
    %v5041 = vadd.f32 %v3367, %v5040
    %5042 = vdwg.mxu0
    %5043 = vmatpush.bf16.msra.mxu0 %v4310
    %5044 = vmatpush.bf16.msra.mxu0 %v4304
    %5045 = vmatpush.bf16.msra.mxu0 %v4298
    %5046 = vmatpush.bf16.msra.mxu0 %v4292
    %5047 = vmatpush.bf16.msra.mxu0 %v4286
    %5048 = vmatpush.bf16.msra.mxu0 %v4280
    %5049 = vmatpush.bf16.msra.mxu0 %v4274
    %5050 = vmatpush.bf16.msra.mxu0 %v4268
    %5051 = vmatmul.bf16.gmra.mxu0 %v1441
    %v5052 = vpop.f32.mrf.mxu0
    %v5053 = vadd.f32 %v5019, %v5052
    %v5054 = vpop.f32.mrf.mxu0
    %v5055 = vadd.f32 %v5021, %v5054
    %5056 = vmatmul.bf16.gmra.mxu0 %v1445
    %v5057 = vpop.f32.mrf.mxu0
    %v5058 = vadd.f32 %v5024, %v5057
    %v5059 = vpop.f32.mrf.mxu0
    %v5060 = vadd.f32 %v5026, %v5059
    %5061 = vmatmul.bf16.gmra.mxu0 %v1449
    %v5062 = vpop.f32.mrf.mxu0
    %v5063 = vadd.f32 %v5029, %v5062
    %v5064 = vpop.f32.mrf.mxu0
    %v5065 = vadd.f32 %v5031, %v5064
    %5066 = vmatmul.bf16.gmra.mxu0 %v1453
    %v5067 = vpop.f32.mrf.mxu0
    %v5068 = vadd.f32 %v5034, %v5067
    %v5069 = vpop.f32.mrf.mxu0
    %v5070 = vadd.f32 %v5036, %v5069
    %5071 = vmatmul.bf16.gmra.mxu0 %v1457
    %v5072 = vpop.f32.mrf.mxu0
    %v5073 = vadd.f32 %v5039, %v5072
    %v5074 = vpop.f32.mrf.mxu0
    %v5075 = vadd.f32 %v5041, %v5074
    %5076 = vdwg.mxu0
    %5077 = vmatpush.bf16.msra.mxu0 %v4358
    %5078 = vmatpush.bf16.msra.mxu0 %v4352
    %5079 = vmatpush.bf16.msra.mxu0 %v4346
    %5080 = vmatpush.bf16.msra.mxu0 %v4340
    %5081 = vmatpush.bf16.msra.mxu0 %v4334
    %5082 = vmatpush.bf16.msra.mxu0 %v4328
    %5083 = vmatpush.bf16.msra.mxu0 %v4322
    %5084 = vmatpush.bf16.msra.mxu0 %v4316
    %5085 = vmatmul.bf16.gmra.mxu0 %v1442
    %v5086 = vpop.f32.mrf.mxu0
    %v5087 = vadd.f32 %v5053, %v5086
    %v5088 = vpop.f32.mrf.mxu0
    %v5089 = vadd.f32 %v5055, %v5088
    %5090 = vmatmul.bf16.gmra.mxu0 %v1446
    %v5091 = vpop.f32.mrf.mxu0
    %v5092 = vadd.f32 %v5058, %v5091
    %v5093 = vpop.f32.mrf.mxu0
    %v5094 = vadd.f32 %v5060, %v5093
    %5095 = vmatmul.bf16.gmra.mxu0 %v1450
    %v5096 = vpop.f32.mrf.mxu0
    %v5097 = vadd.f32 %v5063, %v5096
    %v5098 = vpop.f32.mrf.mxu0
    %v5099 = vadd.f32 %v5065, %v5098
    %5100 = vmatmul.bf16.gmra.mxu0 %v1454
    %v5101 = vpop.f32.mrf.mxu0
    %v5102 = vadd.f32 %v5068, %v5101
    %v5103 = vpop.f32.mrf.mxu0
    %v5104 = vadd.f32 %v5070, %v5103
    %5105 = vmatmul.bf16.gmra.mxu0 %v1458
    %v5106 = vpop.f32.mrf.mxu0
    %v5107 = vadd.f32 %v5073, %v5106
    %v5108 = vpop.f32.mrf.mxu0
    %v5109 = vadd.f32 %v5075, %v5108
    %5110 = vdwg.mxu0
    %5111 = vmatpush.bf16.msra.mxu0 %v4406
    %5112 = vmatpush.bf16.msra.mxu0 %v4400
    %5113 = vmatpush.bf16.msra.mxu0 %v4394
    %5114 = vmatpush.bf16.msra.mxu0 %v4388
    %5115 = vmatpush.bf16.msra.mxu0 %v4382
    %5116 = vmatpush.bf16.msra.mxu0 %v4376
    %5117 = vmatpush.bf16.msra.mxu0 %v4370
    %5118 = vmatpush.bf16.msra.mxu0 %v4364
    %5119 = vmatmul.bf16.gmra.mxu0 %v1443
    %v5120 = vpop.f32.mrf.mxu0
    %v5121 = vadd.f32 %v5087, %v5120
    %v5122 = vpop.f32.mrf.mxu0
    %v5123 = vadd.f32 %v5089, %v5122
    %5124 = vmatmul.bf16.gmra.mxu0 %v1447
    %v5125 = vpop.f32.mrf.mxu0
    %v5126 = vadd.f32 %v5092, %v5125
    %v5127 = vpop.f32.mrf.mxu0
    %v5128 = vadd.f32 %v5094, %v5127
    %5129 = vmatmul.bf16.gmra.mxu0 %v1451
    %v5130 = vpop.f32.mrf.mxu0
    %v5131 = vadd.f32 %v5097, %v5130
    %v5132 = vpop.f32.mrf.mxu0
    %v5133 = vadd.f32 %v5099, %v5132
    %5134 = vmatmul.bf16.gmra.mxu0 %v1455
    %v5135 = vpop.f32.mrf.mxu0
    %v5136 = vadd.f32 %v5102, %v5135
    %v5137 = vpop.f32.mrf.mxu0
    %v5138 = vadd.f32 %v5104, %v5137
    %5139 = vmatmul.bf16.gmra.mxu0 %v1459
    %v5140 = vpop.f32.mrf.mxu0
    %v5141 = vadd.f32 %v5107, %v5140
    %v5142 = vpop.f32.mrf.mxu0
    %v5143 = vadd.f32 %v5109, %v5142
    %5144 = vdwg.mxu0
    %5145 = vmatpush.bf16.msra.mxu0 %v4263
    %5146 = vmatpush.bf16.msra.mxu0 %v4257
    %5147 = vmatpush.bf16.msra.mxu0 %v4251
    %5148 = vmatpush.bf16.msra.mxu0 %v4245
    %5149 = vmatpush.bf16.msra.mxu0 %v4239
    %5150 = vmatpush.bf16.msra.mxu0 %v4233
    %5151 = vmatpush.bf16.msra.mxu0 %v4227
    %5152 = vmatpush.bf16.msra.mxu0 %v4221
    %5153 = vmatmul.bf16.gmra.mxu0 %v1440
    %v5154 = vpop.f32.mrf.mxu0
    %v5155 = vadd.f32 %v3481, %v5154
    %v5156 = vpop.f32.mrf.mxu0
    %v5157 = vadd.f32 %v3483, %v5156
    %5158 = vmatmul.bf16.gmra.mxu0 %v1444
    %v5159 = vpop.f32.mrf.mxu0
    %v5160 = vadd.f32 %v3486, %v5159
    %v5161 = vpop.f32.mrf.mxu0
    %v5162 = vadd.f32 %v3488, %v5161
    %5163 = vmatmul.bf16.gmra.mxu0 %v1448
    %v5164 = vpop.f32.mrf.mxu0
    %v5165 = vadd.f32 %v3491, %v5164
    %v5166 = vpop.f32.mrf.mxu0
    %v5167 = vadd.f32 %v3493, %v5166
    %5168 = vmatmul.bf16.gmra.mxu0 %v1452
    %v5169 = vpop.f32.mrf.mxu0
    %v5170 = vadd.f32 %v3496, %v5169
    %v5171 = vpop.f32.mrf.mxu0
    %v5172 = vadd.f32 %v3498, %v5171
    %5173 = vmatmul.bf16.gmra.mxu0 %v1456
    %v5174 = vpop.f32.mrf.mxu0
    %v5175 = vadd.f32 %v3501, %v5174
    %v5176 = vpop.f32.mrf.mxu0
    %v5177 = vadd.f32 %v3503, %v5176
    %5178 = vdwg.mxu0
    %5179 = vmatpush.bf16.msra.mxu0 %v4311
    %5180 = vmatpush.bf16.msra.mxu0 %v4305
    %5181 = vmatpush.bf16.msra.mxu0 %v4299
    %5182 = vmatpush.bf16.msra.mxu0 %v4293
    %5183 = vmatpush.bf16.msra.mxu0 %v4287
    %5184 = vmatpush.bf16.msra.mxu0 %v4281
    %5185 = vmatpush.bf16.msra.mxu0 %v4275
    %5186 = vmatpush.bf16.msra.mxu0 %v4269
    %5187 = vmatmul.bf16.gmra.mxu0 %v1441
    %v5188 = vpop.f32.mrf.mxu0
    %v5189 = vadd.f32 %v5155, %v5188
    %v5190 = vpop.f32.mrf.mxu0
    %v5191 = vadd.f32 %v5157, %v5190
    %5192 = vmatmul.bf16.gmra.mxu0 %v1445
    %v5193 = vpop.f32.mrf.mxu0
    %v5194 = vadd.f32 %v5160, %v5193
    %v5195 = vpop.f32.mrf.mxu0
    %v5196 = vadd.f32 %v5162, %v5195
    %5197 = vmatmul.bf16.gmra.mxu0 %v1449
    %v5198 = vpop.f32.mrf.mxu0
    %v5199 = vadd.f32 %v5165, %v5198
    %v5200 = vpop.f32.mrf.mxu0
    %v5201 = vadd.f32 %v5167, %v5200
    %5202 = vmatmul.bf16.gmra.mxu0 %v1453
    %v5203 = vpop.f32.mrf.mxu0
    %v5204 = vadd.f32 %v5170, %v5203
    %v5205 = vpop.f32.mrf.mxu0
    %v5206 = vadd.f32 %v5172, %v5205
    %5207 = vmatmul.bf16.gmra.mxu0 %v1457
    %v5208 = vpop.f32.mrf.mxu0
    %v5209 = vadd.f32 %v5175, %v5208
    %v5210 = vpop.f32.mrf.mxu0
    %v5211 = vadd.f32 %v5177, %v5210
    %5212 = vdwg.mxu0
    %5213 = vmatpush.bf16.msra.mxu0 %v4359
    %5214 = vmatpush.bf16.msra.mxu0 %v4353
    %5215 = vmatpush.bf16.msra.mxu0 %v4347
    %5216 = vmatpush.bf16.msra.mxu0 %v4341
    %5217 = vmatpush.bf16.msra.mxu0 %v4335
    %5218 = vmatpush.bf16.msra.mxu0 %v4329
    %5219 = vmatpush.bf16.msra.mxu0 %v4323
    %5220 = vmatpush.bf16.msra.mxu0 %v4317
    %5221 = vmatmul.bf16.gmra.mxu0 %v1442
    %v5222 = vpop.f32.mrf.mxu0
    %v5223 = vadd.f32 %v5189, %v5222
    %v5224 = vpop.f32.mrf.mxu0
    %v5225 = vadd.f32 %v5191, %v5224
    %5226 = vmatmul.bf16.gmra.mxu0 %v1446
    %v5227 = vpop.f32.mrf.mxu0
    %v5228 = vadd.f32 %v5194, %v5227
    %v5229 = vpop.f32.mrf.mxu0
    %v5230 = vadd.f32 %v5196, %v5229
    %5231 = vmatmul.bf16.gmra.mxu0 %v1450
    %v5232 = vpop.f32.mrf.mxu0
    %v5233 = vadd.f32 %v5199, %v5232
    %v5234 = vpop.f32.mrf.mxu0
    %v5235 = vadd.f32 %v5201, %v5234
    %5236 = vmatmul.bf16.gmra.mxu0 %v1454
    %v5237 = vpop.f32.mrf.mxu0
    %v5238 = vadd.f32 %v5204, %v5237
    %v5239 = vpop.f32.mrf.mxu0
    %v5240 = vadd.f32 %v5206, %v5239
    %5241 = vmatmul.bf16.gmra.mxu0 %v1458
    %v5242 = vpop.f32.mrf.mxu0
    %v5243 = vadd.f32 %v5209, %v5242
    %v5244 = vpop.f32.mrf.mxu0
    %v5245 = vadd.f32 %v5211, %v5244
    %5246 = vdwg.mxu0
    %5247 = vmatpush.bf16.msra.mxu0 %v4407
    %5248 = vmatpush.bf16.msra.mxu0 %v4401
    %5249 = vmatpush.bf16.msra.mxu0 %v4395
    %5250 = vmatpush.bf16.msra.mxu0 %v4389
    %5251 = vmatpush.bf16.msra.mxu0 %v4383
    %5252 = vmatpush.bf16.msra.mxu0 %v4377
    %5253 = vmatpush.bf16.msra.mxu0 %v4371
    %5254 = vmatpush.bf16.msra.mxu0 %v4365
    %5255 = vmatmul.bf16.gmra.mxu0 %v1443
    %v5256 = vpop.f32.mrf.mxu0
    %v5257 = vadd.f32 %v5223, %v5256
    %v5258 = vpop.f32.mrf.mxu0
    %v5259 = vadd.f32 %v5225, %v5258
    %5260 = vmatmul.bf16.gmra.mxu0 %v1447
    %v5261 = vpop.f32.mrf.mxu0
    %v5262 = vadd.f32 %v5228, %v5261
    %v5263 = vpop.f32.mrf.mxu0
    %v5264 = vadd.f32 %v5230, %v5263
    %5265 = vmatmul.bf16.gmra.mxu0 %v1451
    %v5266 = vpop.f32.mrf.mxu0
    %v5267 = vadd.f32 %v5233, %v5266
    %v5268 = vpop.f32.mrf.mxu0
    %v5269 = vadd.f32 %v5235, %v5268
    %5270 = vmatmul.bf16.gmra.mxu0 %v1455
    %v5271 = vpop.f32.mrf.mxu0
    %v5272 = vadd.f32 %v5238, %v5271
    %v5273 = vpop.f32.mrf.mxu0
    %v5274 = vadd.f32 %v5240, %v5273
    %5275 = vmatmul.bf16.gmra.mxu0 %v1459
    %v5276 = vpop.f32.mrf.mxu0
    %v5277 = vadd.f32 %v5243, %v5276
    %v5278 = vpop.f32.mrf.mxu0
    %v5279 = vadd.f32 %v5245, %v5278
    %5280 = vdwg.mxu0
    %5281 = vmatpush.bf16.msra.mxu0 %v4264
    %5282 = vmatpush.bf16.msra.mxu0 %v4258
    %5283 = vmatpush.bf16.msra.mxu0 %v4252
    %5284 = vmatpush.bf16.msra.mxu0 %v4246
    %5285 = vmatpush.bf16.msra.mxu0 %v4240
    %5286 = vmatpush.bf16.msra.mxu0 %v4234
    %5287 = vmatpush.bf16.msra.mxu0 %v4228
    %5288 = vmatpush.bf16.msra.mxu0 %v4222
    %5289 = vmatmul.bf16.gmra.mxu0 %v1440
    %v5290 = vpop.f32.mrf.mxu0
    %v5291 = vadd.f32 %v3617, %v5290
    %v5292 = vpop.f32.mrf.mxu0
    %v5293 = vadd.f32 %v3619, %v5292
    %5294 = vmatmul.bf16.gmra.mxu0 %v1444
    %v5295 = vpop.f32.mrf.mxu0
    %v5296 = vadd.f32 %v3622, %v5295
    %v5297 = vpop.f32.mrf.mxu0
    %v5298 = vadd.f32 %v3624, %v5297
    %5299 = vmatmul.bf16.gmra.mxu0 %v1448
    %v5300 = vpop.f32.mrf.mxu0
    %v5301 = vadd.f32 %v3627, %v5300
    %v5302 = vpop.f32.mrf.mxu0
    %v5303 = vadd.f32 %v3629, %v5302
    %5304 = vmatmul.bf16.gmra.mxu0 %v1452
    %v5305 = vpop.f32.mrf.mxu0
    %v5306 = vadd.f32 %v3632, %v5305
    %v5307 = vpop.f32.mrf.mxu0
    %v5308 = vadd.f32 %v3634, %v5307
    %5309 = vmatmul.bf16.gmra.mxu0 %v1456
    %v5310 = vpop.f32.mrf.mxu0
    %v5311 = vadd.f32 %v3637, %v5310
    %v5312 = vpop.f32.mrf.mxu0
    %v5313 = vadd.f32 %v3639, %v5312
    %5314 = vdwg.mxu0
    %5315 = vmatpush.bf16.msra.mxu0 %v4312
    %5316 = vmatpush.bf16.msra.mxu0 %v4306
    %5317 = vmatpush.bf16.msra.mxu0 %v4300
    %5318 = vmatpush.bf16.msra.mxu0 %v4294
    %5319 = vmatpush.bf16.msra.mxu0 %v4288
    %5320 = vmatpush.bf16.msra.mxu0 %v4282
    %5321 = vmatpush.bf16.msra.mxu0 %v4276
    %5322 = vmatpush.bf16.msra.mxu0 %v4270
    %5323 = vmatmul.bf16.gmra.mxu0 %v1441
    %v5324 = vpop.f32.mrf.mxu0
    %v5325 = vadd.f32 %v5291, %v5324
    %v5326 = vpop.f32.mrf.mxu0
    %v5327 = vadd.f32 %v5293, %v5326
    %5328 = vmatmul.bf16.gmra.mxu0 %v1445
    %v5329 = vpop.f32.mrf.mxu0
    %v5330 = vadd.f32 %v5296, %v5329
    %v5331 = vpop.f32.mrf.mxu0
    %v5332 = vadd.f32 %v5298, %v5331
    %5333 = vmatmul.bf16.gmra.mxu0 %v1449
    %v5334 = vpop.f32.mrf.mxu0
    %v5335 = vadd.f32 %v5301, %v5334
    %v5336 = vpop.f32.mrf.mxu0
    %v5337 = vadd.f32 %v5303, %v5336
    %5338 = vmatmul.bf16.gmra.mxu0 %v1453
    %v5339 = vpop.f32.mrf.mxu0
    %v5340 = vadd.f32 %v5306, %v5339
    %v5341 = vpop.f32.mrf.mxu0
    %v5342 = vadd.f32 %v5308, %v5341
    %5343 = vmatmul.bf16.gmra.mxu0 %v1457
    %v5344 = vpop.f32.mrf.mxu0
    %v5345 = vadd.f32 %v5311, %v5344
    %v5346 = vpop.f32.mrf.mxu0
    %v5347 = vadd.f32 %v5313, %v5346
    %5348 = vdwg.mxu0
    %5349 = vmatpush.bf16.msra.mxu0 %v4360
    %5350 = vmatpush.bf16.msra.mxu0 %v4354
    %5351 = vmatpush.bf16.msra.mxu0 %v4348
    %5352 = vmatpush.bf16.msra.mxu0 %v4342
    %5353 = vmatpush.bf16.msra.mxu0 %v4336
    %5354 = vmatpush.bf16.msra.mxu0 %v4330
    %5355 = vmatpush.bf16.msra.mxu0 %v4324
    %5356 = vmatpush.bf16.msra.mxu0 %v4318
    %5357 = vmatmul.bf16.gmra.mxu0 %v1442
    %v5358 = vpop.f32.mrf.mxu0
    %v5359 = vadd.f32 %v5325, %v5358
    %v5360 = vpop.f32.mrf.mxu0
    %v5361 = vadd.f32 %v5327, %v5360
    %5362 = vmatmul.bf16.gmra.mxu0 %v1446
    %v5363 = vpop.f32.mrf.mxu0
    %v5364 = vadd.f32 %v5330, %v5363
    %v5365 = vpop.f32.mrf.mxu0
    %v5366 = vadd.f32 %v5332, %v5365
    %5367 = vmatmul.bf16.gmra.mxu0 %v1450
    %v5368 = vpop.f32.mrf.mxu0
    %v5369 = vadd.f32 %v5335, %v5368
    %v5370 = vpop.f32.mrf.mxu0
    %v5371 = vadd.f32 %v5337, %v5370
    %5372 = vmatmul.bf16.gmra.mxu0 %v1454
    %v5373 = vpop.f32.mrf.mxu0
    %v5374 = vadd.f32 %v5340, %v5373
    %v5375 = vpop.f32.mrf.mxu0
    %v5376 = vadd.f32 %v5342, %v5375
    %5377 = vmatmul.bf16.gmra.mxu0 %v1458
    %v5378 = vpop.f32.mrf.mxu0
    %v5379 = vadd.f32 %v5345, %v5378
    %v5380 = vpop.f32.mrf.mxu0
    %v5381 = vadd.f32 %v5347, %v5380
    %5382 = vdwg.mxu0
    %5383 = vmatpush.bf16.msra.mxu0 %v4408
    %5384 = vmatpush.bf16.msra.mxu0 %v4402
    %5385 = vmatpush.bf16.msra.mxu0 %v4396
    %5386 = vmatpush.bf16.msra.mxu0 %v4390
    %5387 = vmatpush.bf16.msra.mxu0 %v4384
    %5388 = vmatpush.bf16.msra.mxu0 %v4378
    %5389 = vmatpush.bf16.msra.mxu0 %v4372
    %5390 = vmatpush.bf16.msra.mxu0 %v4366
    %5391 = vmatmul.bf16.gmra.mxu0 %v1443
    %v5392 = vpop.f32.mrf.mxu0
    %v5393 = vadd.f32 %v5359, %v5392
    %v5394 = vpop.f32.mrf.mxu0
    %v5395 = vadd.f32 %v5361, %v5394
    %5396 = vmatmul.bf16.gmra.mxu0 %v1447
    %v5397 = vpop.f32.mrf.mxu0
    %v5398 = vadd.f32 %v5364, %v5397
    %v5399 = vpop.f32.mrf.mxu0
    %v5400 = vadd.f32 %v5366, %v5399
    %5401 = vmatmul.bf16.gmra.mxu0 %v1451
    %v5402 = vpop.f32.mrf.mxu0
    %v5403 = vadd.f32 %v5369, %v5402
    %v5404 = vpop.f32.mrf.mxu0
    %v5405 = vadd.f32 %v5371, %v5404
    %5406 = vmatmul.bf16.gmra.mxu0 %v1455
    %v5407 = vpop.f32.mrf.mxu0
    %v5408 = vadd.f32 %v5374, %v5407
    %v5409 = vpop.f32.mrf.mxu0
    %v5410 = vadd.f32 %v5376, %v5409
    %5411 = vmatmul.bf16.gmra.mxu0 %v1459
    %v5412 = vpop.f32.mrf.mxu0
    %v5413 = vadd.f32 %v5379, %v5412
    %v5414 = vpop.f32.mrf.mxu0
    %v5415 = vadd.f32 %v5381, %v5414
    %5416 = vdwg.mxu0
    %v5417 = vpack.c.bf16 %v1436, %v1432
    %v5418 = vpack.c.bf16 %v1437, %v1433
    %v5419 = vpack.c.bf16 %v1438, %v1434
    %v5420 = vpack.c.bf16 %v1439, %v1435
    %s5421 = scalar_lea.vmem [#allocation6], 3072
    %v5422 = vld [vmem:[%s5421] sm:$0xff]
    %v5423 = vld [vmem:[%s5421 + $0x8] sm:$0xff]
    %v5424 = vld [vmem:[%s5421 + $0x10] sm:$0xff]
    %v5425 = vld [vmem:[%s5421 + $0x18] sm:$0xff]
    %v5426 = vld [vmem:[%s5421 + $0x20] sm:$0xff]
    %v5427 = vld [vmem:[%s5421 + $0x28] sm:$0xff]
    %v5428 = vld [vmem:[%s5421 + $0x30] sm:$0xff]
    %v5429 = vld [vmem:[%s5421 + $0x38] sm:$0xff]
    %v5430 = vld [vmem:[%s5421 + $0x40] sm:$0xff]
    %v5431 = vld [vmem:[%s5421 + $0x48] sm:$0xff]
    %v5432 = vld [vmem:[%s5421 + $0x50] sm:$0xff]
    %v5433 = vld [vmem:[%s5421 + $0x58] sm:$0xff]
    %v5434 = vld [vmem:[%s5421 + $0x60] sm:$0xff]
    %v5435 = vld [vmem:[%s5421 + $0x68] sm:$0xff]
    %v5436 = vld [vmem:[%s5421 + $0x70] sm:$0xff]
    %v5437 = vld [vmem:[%s5421 + $0x78] sm:$0xff]
    %v5438 = vld [vmem:[%s5421 + $0x80] sm:$0xff]
    %v5439 = vld [vmem:[%s5421 + $0x88] sm:$0xff]
    %v5440 = vld [vmem:[%s5421 + $0x90] sm:$0xff]
    %v5441 = vld [vmem:[%s5421 + $0x98] sm:$0xff]
    %v5442 = vld [vmem:[%s5421 + $0xa0] sm:$0xff]
    %v5443 = vld [vmem:[%s5421 + $0xa8] sm:$0xff]
    %v5444 = vld [vmem:[%s5421 + $0xb0] sm:$0xff]
    %v5445 = vld [vmem:[%s5421 + $0xb8] sm:$0xff]
    %v5446 = vld [vmem:[%s5421 + $0xc0] sm:$0xff]
    %v5447 = vld [vmem:[%s5421 + $0xc8] sm:$0xff]
    %v5448 = vld [vmem:[%s5421 + $0xd0] sm:$0xff]
    %v5449 = vld [vmem:[%s5421 + $0xd8] sm:$0xff]
    %v5450 = vld [vmem:[%s5421 + $0xe0] sm:$0xff]
    %v5451 = vld [vmem:[%s5421 + $0xe8] sm:$0xff]
    %v5452 = vld [vmem:[%s5421 + $0xf0] sm:$0xff]
    %v5453 = vld [vmem:[%s5421 + $0xf8] sm:$0xff]
    %v5454 = vld [vmem:[%s5421 + $0x100] sm:$0xff]
    %v5455 = vld [vmem:[%s5421 + $0x108] sm:$0xff]
    %v5456 = vld [vmem:[%s5421 + $0x110] sm:$0xff]
    %v5457 = vld [vmem:[%s5421 + $0x118] sm:$0xff]
    %v5458 = vld [vmem:[%s5421 + $0x120] sm:$0xff]
    %v5459 = vld [vmem:[%s5421 + $0x128] sm:$0xff]
    %v5460 = vld [vmem:[%s5421 + $0x130] sm:$0xff]
    %v5461 = vld [vmem:[%s5421 + $0x138] sm:$0xff]
    %v5462 = vld [vmem:[%s5421 + $0x140] sm:$0xff]
    %v5463 = vld [vmem:[%s5421 + $0x148] sm:$0xff]
    %v5464 = vld [vmem:[%s5421 + $0x150] sm:$0xff]
    %v5465 = vld [vmem:[%s5421 + $0x158] sm:$0xff]
    %v5466 = vld [vmem:[%s5421 + $0x160] sm:$0xff]
    %v5467 = vld [vmem:[%s5421 + $0x168] sm:$0xff]
    %v5468 = vld [vmem:[%s5421 + $0x170] sm:$0xff]
    %v5469 = vld [vmem:[%s5421 + $0x178] sm:$0xff]
    %v5470 = vld [vmem:[%s5421 + $0x180] sm:$0xff]
    %v5471 = vld [vmem:[%s5421 + $0x188] sm:$0xff]
    %v5472 = vld [vmem:[%s5421 + $0x190] sm:$0xff]
    %v5473 = vld [vmem:[%s5421 + $0x198] sm:$0xff]
    %v5474 = vld [vmem:[%s5421 + $0x1a0] sm:$0xff]
    %v5475 = vld [vmem:[%s5421 + $0x1a8] sm:$0xff]
    %v5476 = vld [vmem:[%s5421 + $0x1b0] sm:$0xff]
    %v5477 = vld [vmem:[%s5421 + $0x1b8] sm:$0xff]
    %v5478 = vld [vmem:[%s5421 + $0x1c0] sm:$0xff]
    %v5479 = vld [vmem:[%s5421 + $0x1c8] sm:$0xff]
    %v5480 = vld [vmem:[%s5421 + $0x1d0] sm:$0xff]
    %v5481 = vld [vmem:[%s5421 + $0x1d8] sm:$0xff]
    %v5482 = vld [vmem:[%s5421 + $0x1e0] sm:$0xff]
    %v5483 = vld [vmem:[%s5421 + $0x1e8] sm:$0xff]
    %v5484 = vld [vmem:[%s5421 + $0x1f0] sm:$0xff]
    %v5485 = vld [vmem:[%s5421 + $0x1f8] sm:$0xff]
    %v5486 = vld [vmem:[%s5421 + $0x200] sm:$0xff]
    %v5487 = vld [vmem:[%s5421 + $0x208] sm:$0xff]
    %v5488 = vld [vmem:[%s5421 + $0x210] sm:$0xff]
    %v5489 = vld [vmem:[%s5421 + $0x218] sm:$0xff]
    %v5490 = vld [vmem:[%s5421 + $0x220] sm:$0xff]
    %v5491 = vld [vmem:[%s5421 + $0x228] sm:$0xff]
    %v5492 = vld [vmem:[%s5421 + $0x230] sm:$0xff]
    %v5493 = vld [vmem:[%s5421 + $0x238] sm:$0xff]
    %v5494 = vld [vmem:[%s5421 + $0x240] sm:$0xff]
    %v5495 = vld [vmem:[%s5421 + $0x248] sm:$0xff]
    %v5496 = vld [vmem:[%s5421 + $0x250] sm:$0xff]
    %v5497 = vld [vmem:[%s5421 + $0x258] sm:$0xff]
    %v5498 = vld [vmem:[%s5421 + $0x260] sm:$0xff]
    %v5499 = vld [vmem:[%s5421 + $0x268] sm:$0xff]
    %v5500 = vld [vmem:[%s5421 + $0x270] sm:$0xff]
    %v5501 = vld [vmem:[%s5421 + $0x278] sm:$0xff]
    %v5502 = vld [vmem:[%s5421 + $0x280] sm:$0xff]
    %v5503 = vld [vmem:[%s5421 + $0x288] sm:$0xff]
    %v5504 = vld [vmem:[%s5421 + $0x290] sm:$0xff]
    %v5505 = vld [vmem:[%s5421 + $0x298] sm:$0xff]
    %v5506 = vld [vmem:[%s5421 + $0x2a0] sm:$0xff]
    %v5507 = vld [vmem:[%s5421 + $0x2a8] sm:$0xff]
    %v5508 = vld [vmem:[%s5421 + $0x2b0] sm:$0xff]
    %v5509 = vld [vmem:[%s5421 + $0x2b8] sm:$0xff]
    %v5510 = vld [vmem:[%s5421 + $0x2c0] sm:$0xff]
    %v5511 = vld [vmem:[%s5421 + $0x2c8] sm:$0xff]
    %v5512 = vld [vmem:[%s5421 + $0x2d0] sm:$0xff]
    %v5513 = vld [vmem:[%s5421 + $0x2d8] sm:$0xff]
    %v5514 = vld [vmem:[%s5421 + $0x2e0] sm:$0xff]
    %v5515 = vld [vmem:[%s5421 + $0x2e8] sm:$0xff]
    %v5516 = vld [vmem:[%s5421 + $0x2f0] sm:$0xff]
    %v5517 = vld [vmem:[%s5421 + $0x2f8] sm:$0xff]
    %v5518 = vld [vmem:[%s5421 + $0x300] sm:$0xff]
    %v5519 = vld [vmem:[%s5421 + $0x308] sm:$0xff]
    %v5520 = vld [vmem:[%s5421 + $0x310] sm:$0xff]
    %v5521 = vld [vmem:[%s5421 + $0x318] sm:$0xff]
    %v5522 = vld [vmem:[%s5421 + $0x320] sm:$0xff]
    %v5523 = vld [vmem:[%s5421 + $0x328] sm:$0xff]
    %v5524 = vld [vmem:[%s5421 + $0x330] sm:$0xff]
    %v5525 = vld [vmem:[%s5421 + $0x338] sm:$0xff]
    %v5526 = vld [vmem:[%s5421 + $0x340] sm:$0xff]
    %v5527 = vld [vmem:[%s5421 + $0x348] sm:$0xff]
    %v5528 = vld [vmem:[%s5421 + $0x350] sm:$0xff]
    %v5529 = vld [vmem:[%s5421 + $0x358] sm:$0xff]
    %v5530 = vld [vmem:[%s5421 + $0x360] sm:$0xff]
    %v5531 = vld [vmem:[%s5421 + $0x368] sm:$0xff]
    %v5532 = vld [vmem:[%s5421 + $0x370] sm:$0xff]
    %v5533 = vld [vmem:[%s5421 + $0x378] sm:$0xff]
    %v5534 = vld [vmem:[%s5421 + $0x380] sm:$0xff]
    %v5535 = vld [vmem:[%s5421 + $0x388] sm:$0xff]
    %v5536 = vld [vmem:[%s5421 + $0x390] sm:$0xff]
    %v5537 = vld [vmem:[%s5421 + $0x398] sm:$0xff]
    %v5538 = vld [vmem:[%s5421 + $0x3a0] sm:$0xff]
    %v5539 = vld [vmem:[%s5421 + $0x3a8] sm:$0xff]
    %v5540 = vld [vmem:[%s5421 + $0x3b0] sm:$0xff]
    %v5541 = vld [vmem:[%s5421 + $0x3b8] sm:$0xff]
    %v5542 = vld [vmem:[%s5421 + $0x3c0] sm:$0xff]
    %v5543 = vld [vmem:[%s5421 + $0x3c8] sm:$0xff]
    %v5544 = vld [vmem:[%s5421 + $0x3d0] sm:$0xff]
    %v5545 = vld [vmem:[%s5421 + $0x3d8] sm:$0xff]
    %v5546 = vld [vmem:[%s5421 + $0x3e0] sm:$0xff]
    %v5547 = vld [vmem:[%s5421 + $0x3e8] sm:$0xff]
    %v5548 = vld [vmem:[%s5421 + $0x3f0] sm:$0xff]
    %v5549 = vld [vmem:[%s5421 + $0x3f8] sm:$0xff]
    %v5550 = vld [vmem:[%s5421 + $0x400] sm:$0xff]
    %v5551 = vld [vmem:[%s5421 + $0x408] sm:$0xff]
    %v5552 = vld [vmem:[%s5421 + $0x410] sm:$0xff]
    %v5553 = vld [vmem:[%s5421 + $0x418] sm:$0xff]
    %v5554 = vld [vmem:[%s5421 + $0x420] sm:$0xff]
    %v5555 = vld [vmem:[%s5421 + $0x428] sm:$0xff]
    %v5556 = vld [vmem:[%s5421 + $0x430] sm:$0xff]
    %v5557 = vld [vmem:[%s5421 + $0x438] sm:$0xff]
    %v5558 = vld [vmem:[%s5421 + $0x440] sm:$0xff]
    %v5559 = vld [vmem:[%s5421 + $0x448] sm:$0xff]
    %v5560 = vld [vmem:[%s5421 + $0x450] sm:$0xff]
    %v5561 = vld [vmem:[%s5421 + $0x458] sm:$0xff]
    %v5562 = vld [vmem:[%s5421 + $0x460] sm:$0xff]
    %v5563 = vld [vmem:[%s5421 + $0x468] sm:$0xff]
    %v5564 = vld [vmem:[%s5421 + $0x470] sm:$0xff]
    %v5565 = vld [vmem:[%s5421 + $0x478] sm:$0xff]
    %v5566 = vld [vmem:[%s5421 + $0x480] sm:$0xff]
    %v5567 = vld [vmem:[%s5421 + $0x488] sm:$0xff]
    %v5568 = vld [vmem:[%s5421 + $0x490] sm:$0xff]
    %v5569 = vld [vmem:[%s5421 + $0x498] sm:$0xff]
    %v5570 = vld [vmem:[%s5421 + $0x4a0] sm:$0xff]
    %v5571 = vld [vmem:[%s5421 + $0x4a8] sm:$0xff]
    %v5572 = vld [vmem:[%s5421 + $0x4b0] sm:$0xff]
    %v5573 = vld [vmem:[%s5421 + $0x4b8] sm:$0xff]
    %v5574 = vld [vmem:[%s5421 + $0x4c0] sm:$0xff]
    %v5575 = vld [vmem:[%s5421 + $0x4c8] sm:$0xff]
    %v5576 = vld [vmem:[%s5421 + $0x4d0] sm:$0xff]
    %v5577 = vld [vmem:[%s5421 + $0x4d8] sm:$0xff]
    %v5578 = vld [vmem:[%s5421 + $0x4e0] sm:$0xff]
    %v5579 = vld [vmem:[%s5421 + $0x4e8] sm:$0xff]
    %v5580 = vld [vmem:[%s5421 + $0x4f0] sm:$0xff]
    %v5581 = vld [vmem:[%s5421 + $0x4f8] sm:$0xff]
    %v5582 = vld [vmem:[%s5421 + $0x500] sm:$0xff]
    %v5583 = vld [vmem:[%s5421 + $0x508] sm:$0xff]
    %v5584 = vld [vmem:[%s5421 + $0x510] sm:$0xff]
    %v5585 = vld [vmem:[%s5421 + $0x518] sm:$0xff]
    %v5586 = vld [vmem:[%s5421 + $0x520] sm:$0xff]
    %v5587 = vld [vmem:[%s5421 + $0x528] sm:$0xff]
    %v5588 = vld [vmem:[%s5421 + $0x530] sm:$0xff]
    %v5589 = vld [vmem:[%s5421 + $0x538] sm:$0xff]
    %v5590 = vld [vmem:[%s5421 + $0x540] sm:$0xff]
    %v5591 = vld [vmem:[%s5421 + $0x548] sm:$0xff]
    %v5592 = vld [vmem:[%s5421 + $0x550] sm:$0xff]
    %v5593 = vld [vmem:[%s5421 + $0x558] sm:$0xff]
    %v5594 = vld [vmem:[%s5421 + $0x560] sm:$0xff]
    %v5595 = vld [vmem:[%s5421 + $0x568] sm:$0xff]
    %v5596 = vld [vmem:[%s5421 + $0x570] sm:$0xff]
    %v5597 = vld [vmem:[%s5421 + $0x578] sm:$0xff]
    %v5598 = vld [vmem:[%s5421 + $0x580] sm:$0xff]
    %v5599 = vld [vmem:[%s5421 + $0x588] sm:$0xff]
    %v5600 = vld [vmem:[%s5421 + $0x590] sm:$0xff]
    %v5601 = vld [vmem:[%s5421 + $0x598] sm:$0xff]
    %v5602 = vld [vmem:[%s5421 + $0x5a0] sm:$0xff]
    %v5603 = vld [vmem:[%s5421 + $0x5a8] sm:$0xff]
    %v5604 = vld [vmem:[%s5421 + $0x5b0] sm:$0xff]
    %v5605 = vld [vmem:[%s5421 + $0x5b8] sm:$0xff]
    %v5606 = vld [vmem:[%s5421 + $0x5c0] sm:$0xff]
    %v5607 = vld [vmem:[%s5421 + $0x5c8] sm:$0xff]
    %v5608 = vld [vmem:[%s5421 + $0x5d0] sm:$0xff]
    %v5609 = vld [vmem:[%s5421 + $0x5d8] sm:$0xff]
    %v5610 = vld [vmem:[%s5421 + $0x5e0] sm:$0xff]
    %v5611 = vld [vmem:[%s5421 + $0x5e8] sm:$0xff]
    %v5612 = vld [vmem:[%s5421 + $0x5f0] sm:$0xff]
    %v5613 = vld [vmem:[%s5421 + $0x5f8] sm:$0xff]
    %v5806 = vunpack.c.l.b16 %v5422
    %v5807 = vunpack.c.h.b16 %v5422
    %v5808 = vunpack.c.l.b16 %v5423
    %v5809 = vunpack.c.h.b16 %v5423
    %v5810 = vunpack.c.l.b16 %v5424
    %v5811 = vunpack.c.h.b16 %v5424
    %v5812 = vunpack.c.l.b16 %v5425
    %v5813 = vunpack.c.h.b16 %v5425
    %v5814 = vunpack.c.l.b16 %v5426
    %v5815 = vunpack.c.h.b16 %v5426
    %v5816 = vunpack.c.l.b16 %v5427
    %v5817 = vunpack.c.h.b16 %v5427
    %v5818 = vunpack.c.l.b16 %v5428
    %v5819 = vunpack.c.h.b16 %v5428
    %v5820 = vunpack.c.l.b16 %v5429
    %v5821 = vunpack.c.h.b16 %v5429
    %v5822 = vunpack.c.l.b16 %v5430
    %v5823 = vunpack.c.h.b16 %v5430
    %v5824 = vunpack.c.l.b16 %v5431
    %v5825 = vunpack.c.h.b16 %v5431
    %v5826 = vunpack.c.l.b16 %v5432
    %v5827 = vunpack.c.h.b16 %v5432
    %v5828 = vunpack.c.l.b16 %v5433
    %v5829 = vunpack.c.h.b16 %v5433
    %v5830 = vunpack.c.l.b16 %v5434
    %v5831 = vunpack.c.h.b16 %v5434
    %v5832 = vunpack.c.l.b16 %v5435
    %v5833 = vunpack.c.h.b16 %v5435
    %v5834 = vunpack.c.l.b16 %v5436
    %v5835 = vunpack.c.h.b16 %v5436
    %v5836 = vunpack.c.l.b16 %v5437
    %v5837 = vunpack.c.h.b16 %v5437
    %v5838 = vunpack.c.l.b16 %v5438
    %v5839 = vunpack.c.h.b16 %v5438
    %v5840 = vunpack.c.l.b16 %v5439
    %v5841 = vunpack.c.h.b16 %v5439
    %v5842 = vunpack.c.l.b16 %v5440
    %v5843 = vunpack.c.h.b16 %v5440
    %v5844 = vunpack.c.l.b16 %v5441
    %v5845 = vunpack.c.h.b16 %v5441
    %v5846 = vunpack.c.l.b16 %v5442
    %v5847 = vunpack.c.h.b16 %v5442
    %v5848 = vunpack.c.l.b16 %v5443
    %v5849 = vunpack.c.h.b16 %v5443
    %v5850 = vunpack.c.l.b16 %v5444
    %v5851 = vunpack.c.h.b16 %v5444
    %v5852 = vunpack.c.l.b16 %v5445
    %v5853 = vunpack.c.h.b16 %v5445
    %v5854 = vunpack.c.l.b16 %v5446
    %v5855 = vunpack.c.h.b16 %v5446
    %v5856 = vunpack.c.l.b16 %v5447
    %v5857 = vunpack.c.h.b16 %v5447
    %v5858 = vunpack.c.l.b16 %v5448
    %v5859 = vunpack.c.h.b16 %v5448
    %v5860 = vunpack.c.l.b16 %v5449
    %v5861 = vunpack.c.h.b16 %v5449
    %v5862 = vunpack.c.l.b16 %v5450
    %v5863 = vunpack.c.h.b16 %v5450
    %v5864 = vunpack.c.l.b16 %v5451
    %v5865 = vunpack.c.h.b16 %v5451
    %v5866 = vunpack.c.l.b16 %v5452
    %v5867 = vunpack.c.h.b16 %v5452
    %v5868 = vunpack.c.l.b16 %v5453
    %v5869 = vunpack.c.h.b16 %v5453
    %v5870 = vunpack.c.l.b16 %v5454
    %v5871 = vunpack.c.h.b16 %v5454
    %v5872 = vunpack.c.l.b16 %v5455
    %v5873 = vunpack.c.h.b16 %v5455
    %v5874 = vunpack.c.l.b16 %v5456
    %v5875 = vunpack.c.h.b16 %v5456
    %v5876 = vunpack.c.l.b16 %v5457
    %v5877 = vunpack.c.h.b16 %v5457
    %v5878 = vunpack.c.l.b16 %v5458
    %v5879 = vunpack.c.h.b16 %v5458
    %v5880 = vunpack.c.l.b16 %v5459
    %v5881 = vunpack.c.h.b16 %v5459
    %v5882 = vunpack.c.l.b16 %v5460
    %v5883 = vunpack.c.h.b16 %v5460
    %v5884 = vunpack.c.l.b16 %v5461
    %v5885 = vunpack.c.h.b16 %v5461
    %v5886 = vunpack.c.l.b16 %v5462
    %v5887 = vunpack.c.h.b16 %v5462
    %v5888 = vunpack.c.l.b16 %v5463
    %v5889 = vunpack.c.h.b16 %v5463
    %v5890 = vunpack.c.l.b16 %v5464
    %v5891 = vunpack.c.h.b16 %v5464
    %v5892 = vunpack.c.l.b16 %v5465
    %v5893 = vunpack.c.h.b16 %v5465
    %v5894 = vunpack.c.l.b16 %v5466
    %v5895 = vunpack.c.h.b16 %v5466
    %v5896 = vunpack.c.l.b16 %v5467
    %v5897 = vunpack.c.h.b16 %v5467
    %v5898 = vunpack.c.l.b16 %v5468
    %v5899 = vunpack.c.h.b16 %v5468
    %v5900 = vunpack.c.l.b16 %v5469
    %v5901 = vunpack.c.h.b16 %v5469
    %v5902 = vunpack.c.l.b16 %v5470
    %v5903 = vunpack.c.h.b16 %v5470
    %v5904 = vunpack.c.l.b16 %v5471
    %v5905 = vunpack.c.h.b16 %v5471
    %v5906 = vunpack.c.l.b16 %v5472
    %v5907 = vunpack.c.h.b16 %v5472
    %v5908 = vunpack.c.l.b16 %v5473
    %v5909 = vunpack.c.h.b16 %v5473
    %v5910 = vunpack.c.l.b16 %v5474
    %v5911 = vunpack.c.h.b16 %v5474
    %v5912 = vunpack.c.l.b16 %v5475
    %v5913 = vunpack.c.h.b16 %v5475
    %v5914 = vunpack.c.l.b16 %v5476
    %v5915 = vunpack.c.h.b16 %v5476
    %v5916 = vunpack.c.l.b16 %v5477
    %v5917 = vunpack.c.h.b16 %v5477
    %v5918 = vunpack.c.l.b16 %v5478
    %v5919 = vunpack.c.h.b16 %v5478
    %v5920 = vunpack.c.l.b16 %v5479
    %v5921 = vunpack.c.h.b16 %v5479
    %v5922 = vunpack.c.l.b16 %v5480
    %v5923 = vunpack.c.h.b16 %v5480
    %v5924 = vunpack.c.l.b16 %v5481
    %v5925 = vunpack.c.h.b16 %v5481
    %v5926 = vunpack.c.l.b16 %v5482
    %v5927 = vunpack.c.h.b16 %v5482
    %v5928 = vunpack.c.l.b16 %v5483
    %v5929 = vunpack.c.h.b16 %v5483
    %v5930 = vunpack.c.l.b16 %v5484
    %v5931 = vunpack.c.h.b16 %v5484
    %v5932 = vunpack.c.l.b16 %v5485
    %v5933 = vunpack.c.h.b16 %v5485
    %v5934 = vunpack.c.l.b16 %v5486
    %v5935 = vunpack.c.h.b16 %v5486
    %v5936 = vunpack.c.l.b16 %v5487
    %v5937 = vunpack.c.h.b16 %v5487
    %v5938 = vunpack.c.l.b16 %v5488
    %v5939 = vunpack.c.h.b16 %v5488
    %v5940 = vunpack.c.l.b16 %v5489
    %v5941 = vunpack.c.h.b16 %v5489
    %v5942 = vunpack.c.l.b16 %v5490
    %v5943 = vunpack.c.h.b16 %v5490
    %v5944 = vunpack.c.l.b16 %v5491
    %v5945 = vunpack.c.h.b16 %v5491
    %v5946 = vunpack.c.l.b16 %v5492
    %v5947 = vunpack.c.h.b16 %v5492
    %v5948 = vunpack.c.l.b16 %v5493
    %v5949 = vunpack.c.h.b16 %v5493
    %v5950 = vunpack.c.l.b16 %v5494
    %v5951 = vunpack.c.h.b16 %v5494
    %v5952 = vunpack.c.l.b16 %v5495
    %v5953 = vunpack.c.h.b16 %v5495
    %v5954 = vunpack.c.l.b16 %v5496
    %v5955 = vunpack.c.h.b16 %v5496
    %v5956 = vunpack.c.l.b16 %v5497
    %v5957 = vunpack.c.h.b16 %v5497
    %v5958 = vunpack.c.l.b16 %v5498
    %v5959 = vunpack.c.h.b16 %v5498
    %v5960 = vunpack.c.l.b16 %v5499
    %v5961 = vunpack.c.h.b16 %v5499
    %v5962 = vunpack.c.l.b16 %v5500
    %v5963 = vunpack.c.h.b16 %v5500
    %v5964 = vunpack.c.l.b16 %v5501
    %v5965 = vunpack.c.h.b16 %v5501
    %v5966 = vunpack.c.l.b16 %v5502
    %v5967 = vunpack.c.h.b16 %v5502
    %v5968 = vunpack.c.l.b16 %v5503
    %v5969 = vunpack.c.h.b16 %v5503
    %v5970 = vunpack.c.l.b16 %v5504
    %v5971 = vunpack.c.h.b16 %v5504
    %v5972 = vunpack.c.l.b16 %v5505
    %v5973 = vunpack.c.h.b16 %v5505
    %v5974 = vunpack.c.l.b16 %v5506
    %v5975 = vunpack.c.h.b16 %v5506
    %v5976 = vunpack.c.l.b16 %v5507
    %v5977 = vunpack.c.h.b16 %v5507
    %v5978 = vunpack.c.l.b16 %v5508
    %v5979 = vunpack.c.h.b16 %v5508
    %v5980 = vunpack.c.l.b16 %v5509
    %v5981 = vunpack.c.h.b16 %v5509
    %v5982 = vunpack.c.l.b16 %v5510
    %v5983 = vunpack.c.h.b16 %v5510
    %v5984 = vunpack.c.l.b16 %v5511
    %v5985 = vunpack.c.h.b16 %v5511
    %v5986 = vunpack.c.l.b16 %v5512
    %v5987 = vunpack.c.h.b16 %v5512
    %v5988 = vunpack.c.l.b16 %v5513
    %v5989 = vunpack.c.h.b16 %v5513
    %v5990 = vunpack.c.l.b16 %v5514
    %v5991 = vunpack.c.h.b16 %v5514
    %v5992 = vunpack.c.l.b16 %v5515
    %v5993 = vunpack.c.h.b16 %v5515
    %v5994 = vunpack.c.l.b16 %v5516
    %v5995 = vunpack.c.h.b16 %v5516
    %v5996 = vunpack.c.l.b16 %v5517
    %v5997 = vunpack.c.h.b16 %v5517
    %v5998 = vunpack.c.l.b16 %v5518
    %v5999 = vunpack.c.h.b16 %v5518
    %v6000 = vunpack.c.l.b16 %v5519
    %v6001 = vunpack.c.h.b16 %v5519
    %v6002 = vunpack.c.l.b16 %v5520
    %v6003 = vunpack.c.h.b16 %v5520
    %v6004 = vunpack.c.l.b16 %v5521
    %v6005 = vunpack.c.h.b16 %v5521
    %v6006 = vunpack.c.l.b16 %v5522
    %v6007 = vunpack.c.h.b16 %v5522
    %v6008 = vunpack.c.l.b16 %v5523
    %v6009 = vunpack.c.h.b16 %v5523
    %v6010 = vunpack.c.l.b16 %v5524
    %v6011 = vunpack.c.h.b16 %v5524
    %v6012 = vunpack.c.l.b16 %v5525
    %v6013 = vunpack.c.h.b16 %v5525
    %v6014 = vunpack.c.l.b16 %v5526
    %v6015 = vunpack.c.h.b16 %v5526
    %v6016 = vunpack.c.l.b16 %v5527
    %v6017 = vunpack.c.h.b16 %v5527
    %v6018 = vunpack.c.l.b16 %v5528
    %v6019 = vunpack.c.h.b16 %v5528
    %v6020 = vunpack.c.l.b16 %v5529
    %v6021 = vunpack.c.h.b16 %v5529
    %v6022 = vunpack.c.l.b16 %v5530
    %v6023 = vunpack.c.h.b16 %v5530
    %v6024 = vunpack.c.l.b16 %v5531
    %v6025 = vunpack.c.h.b16 %v5531
    %v6026 = vunpack.c.l.b16 %v5532
    %v6027 = vunpack.c.h.b16 %v5532
    %v6028 = vunpack.c.l.b16 %v5533
    %v6029 = vunpack.c.h.b16 %v5533
    %v6030 = vunpack.c.l.b16 %v5534
    %v6031 = vunpack.c.h.b16 %v5534
    %v6032 = vunpack.c.l.b16 %v5535
    %v6033 = vunpack.c.h.b16 %v5535
    %v6034 = vunpack.c.l.b16 %v5536
    %v6035 = vunpack.c.h.b16 %v5536
    %v6036 = vunpack.c.l.b16 %v5537
    %v6037 = vunpack.c.h.b16 %v5537
    %v6038 = vunpack.c.l.b16 %v5538
    %v6039 = vunpack.c.h.b16 %v5538
    %v6040 = vunpack.c.l.b16 %v5539
    %v6041 = vunpack.c.h.b16 %v5539
    %v6042 = vunpack.c.l.b16 %v5540
    %v6043 = vunpack.c.h.b16 %v5540
    %v6044 = vunpack.c.l.b16 %v5541
    %v6045 = vunpack.c.h.b16 %v5541
    %v6046 = vunpack.c.l.b16 %v5542
    %v6047 = vunpack.c.h.b16 %v5542
    %v6048 = vunpack.c.l.b16 %v5543
    %v6049 = vunpack.c.h.b16 %v5543
    %v6050 = vunpack.c.l.b16 %v5544
    %v6051 = vunpack.c.h.b16 %v5544
    %v6052 = vunpack.c.l.b16 %v5545
    %v6053 = vunpack.c.h.b16 %v5545
    %v6054 = vunpack.c.l.b16 %v5546
    %v6055 = vunpack.c.h.b16 %v5546
    %v6056 = vunpack.c.l.b16 %v5547
    %v6057 = vunpack.c.h.b16 %v5547
    %v6058 = vunpack.c.l.b16 %v5548
    %v6059 = vunpack.c.h.b16 %v5548
    %v6060 = vunpack.c.l.b16 %v5549
    %v6061 = vunpack.c.h.b16 %v5549
    %v6062 = vunpack.c.l.b16 %v5550
    %v6063 = vunpack.c.h.b16 %v5550
    %v6064 = vunpack.c.l.b16 %v5551
    %v6065 = vunpack.c.h.b16 %v5551
    %v6066 = vunpack.c.l.b16 %v5552
    %v6067 = vunpack.c.h.b16 %v5552
    %v6068 = vunpack.c.l.b16 %v5553
    %v6069 = vunpack.c.h.b16 %v5553
    %v6070 = vunpack.c.l.b16 %v5554
    %v6071 = vunpack.c.h.b16 %v5554
    %v6072 = vunpack.c.l.b16 %v5555
    %v6073 = vunpack.c.h.b16 %v5555
    %v6074 = vunpack.c.l.b16 %v5556
    %v6075 = vunpack.c.h.b16 %v5556
    %v6076 = vunpack.c.l.b16 %v5557
    %v6077 = vunpack.c.h.b16 %v5557
    %v6078 = vunpack.c.l.b16 %v5558
    %v6079 = vunpack.c.h.b16 %v5558
    %v6080 = vunpack.c.l.b16 %v5559
    %v6081 = vunpack.c.h.b16 %v5559
    %v6082 = vunpack.c.l.b16 %v5560
    %v6083 = vunpack.c.h.b16 %v5560
    %v6084 = vunpack.c.l.b16 %v5561
    %v6085 = vunpack.c.h.b16 %v5561
    %v6086 = vunpack.c.l.b16 %v5562
    %v6087 = vunpack.c.h.b16 %v5562
    %v6088 = vunpack.c.l.b16 %v5563
    %v6089 = vunpack.c.h.b16 %v5563
    %v6090 = vunpack.c.l.b16 %v5564
    %v6091 = vunpack.c.h.b16 %v5564
    %v6092 = vunpack.c.l.b16 %v5565
    %v6093 = vunpack.c.h.b16 %v5565
    %v6094 = vunpack.c.l.b16 %v5566
    %v6095 = vunpack.c.h.b16 %v5566
    %v6096 = vunpack.c.l.b16 %v5567
    %v6097 = vunpack.c.h.b16 %v5567
    %v6098 = vunpack.c.l.b16 %v5568
    %v6099 = vunpack.c.h.b16 %v5568
    %v6100 = vunpack.c.l.b16 %v5569
    %v6101 = vunpack.c.h.b16 %v5569
    %v6102 = vunpack.c.l.b16 %v5570
    %v6103 = vunpack.c.h.b16 %v5570
    %v6104 = vunpack.c.l.b16 %v5571
    %v6105 = vunpack.c.h.b16 %v5571
    %v6106 = vunpack.c.l.b16 %v5572
    %v6107 = vunpack.c.h.b16 %v5572
    %v6108 = vunpack.c.l.b16 %v5573
    %v6109 = vunpack.c.h.b16 %v5573
    %v6110 = vunpack.c.l.b16 %v5574
    %v6111 = vunpack.c.h.b16 %v5574
    %v6112 = vunpack.c.l.b16 %v5575
    %v6113 = vunpack.c.h.b16 %v5575
    %v6114 = vunpack.c.l.b16 %v5576
    %v6115 = vunpack.c.h.b16 %v5576
    %v6116 = vunpack.c.l.b16 %v5577
    %v6117 = vunpack.c.h.b16 %v5577
    %v6118 = vunpack.c.l.b16 %v5578
    %v6119 = vunpack.c.h.b16 %v5578
    %v6120 = vunpack.c.l.b16 %v5579
    %v6121 = vunpack.c.h.b16 %v5579
    %v6122 = vunpack.c.l.b16 %v5580
    %v6123 = vunpack.c.h.b16 %v5580
    %v6124 = vunpack.c.l.b16 %v5581
    %v6125 = vunpack.c.h.b16 %v5581
    %v6126 = vunpack.c.l.b16 %v5582
    %v6127 = vunpack.c.h.b16 %v5582
    %v6128 = vunpack.c.l.b16 %v5583
    %v6129 = vunpack.c.h.b16 %v5583
    %v6130 = vunpack.c.l.b16 %v5584
    %v6131 = vunpack.c.h.b16 %v5584
    %v6132 = vunpack.c.l.b16 %v5585
    %v6133 = vunpack.c.h.b16 %v5585
    %v6134 = vunpack.c.l.b16 %v5586
    %v6135 = vunpack.c.h.b16 %v5586
    %v6136 = vunpack.c.l.b16 %v5587
    %v6137 = vunpack.c.h.b16 %v5587
    %v6138 = vunpack.c.l.b16 %v5588
    %v6139 = vunpack.c.h.b16 %v5588
    %v6140 = vunpack.c.l.b16 %v5589
    %v6141 = vunpack.c.h.b16 %v5589
    %v6142 = vunpack.c.l.b16 %v5590
    %v6143 = vunpack.c.h.b16 %v5590
    %v6144 = vunpack.c.l.b16 %v5591
    %v6145 = vunpack.c.h.b16 %v5591
    %v6146 = vunpack.c.l.b16 %v5592
    %v6147 = vunpack.c.h.b16 %v5592
    %v6148 = vunpack.c.l.b16 %v5593
    %v6149 = vunpack.c.h.b16 %v5593
    %v6150 = vunpack.c.l.b16 %v5594
    %v6151 = vunpack.c.h.b16 %v5594
    %v6152 = vunpack.c.l.b16 %v5595
    %v6153 = vunpack.c.h.b16 %v5595
    %v6154 = vunpack.c.l.b16 %v5596
    %v6155 = vunpack.c.h.b16 %v5596
    %v6156 = vunpack.c.l.b16 %v5597
    %v6157 = vunpack.c.h.b16 %v5597
    %v6158 = vunpack.c.l.b16 %v5598
    %v6159 = vunpack.c.h.b16 %v5598
    %v6160 = vunpack.c.l.b16 %v5599
    %v6161 = vunpack.c.h.b16 %v5599
    %v6162 = vunpack.c.l.b16 %v5600
    %v6163 = vunpack.c.h.b16 %v5600
    %v6164 = vunpack.c.l.b16 %v5601
    %v6165 = vunpack.c.h.b16 %v5601
    %v6166 = vunpack.c.l.b16 %v5602
    %v6167 = vunpack.c.h.b16 %v5602
    %v6168 = vunpack.c.l.b16 %v5603
    %v6169 = vunpack.c.h.b16 %v5603
    %v6170 = vunpack.c.l.b16 %v5604
    %v6171 = vunpack.c.h.b16 %v5604
    %v6172 = vunpack.c.l.b16 %v5605
    %v6173 = vunpack.c.h.b16 %v5605
    %v6174 = vunpack.c.l.b16 %v5606
    %v6175 = vunpack.c.h.b16 %v5606
    %v6176 = vunpack.c.l.b16 %v5607
    %v6177 = vunpack.c.h.b16 %v5607
    %v6178 = vunpack.c.l.b16 %v5608
    %v6179 = vunpack.c.h.b16 %v5608
    %v6180 = vunpack.c.l.b16 %v5609
    %v6181 = vunpack.c.h.b16 %v5609
    %v6182 = vunpack.c.l.b16 %v5610
    %v6183 = vunpack.c.h.b16 %v5610
    %v6184 = vunpack.c.l.b16 %v5611
    %v6185 = vunpack.c.h.b16 %v5611
    %v6186 = vunpack.c.l.b16 %v5612
    %v6187 = vunpack.c.h.b16 %v5612
    %v6188 = vunpack.c.l.b16 %v5613
    %v6189 = vunpack.c.h.b16 %v5613
    %v6190 = vpack.c.b16 %v5812, %v5806
    %v6191 = vpack.c.b16 %v5813, %v5807
    %v6192 = vpack.c.b16 %v5814, %v5808
    %v6193 = vpack.c.b16 %v5815, %v5809
    %v6194 = vpack.c.b16 %v5816, %v5810
    %v6195 = vpack.c.b16 %v5817, %v5811
    %v6196 = vpack.c.b16 %v5824, %v5818
    %v6197 = vpack.c.b16 %v5825, %v5819
    %v6198 = vpack.c.b16 %v5826, %v5820
    %v6199 = vpack.c.b16 %v5827, %v5821
    %v6200 = vpack.c.b16 %v5828, %v5822
    %v6201 = vpack.c.b16 %v5829, %v5823
    %v6202 = vpack.c.b16 %v5836, %v5830
    %v6203 = vpack.c.b16 %v5837, %v5831
    %v6204 = vpack.c.b16 %v5838, %v5832
    %v6205 = vpack.c.b16 %v5839, %v5833
    %v6206 = vpack.c.b16 %v5840, %v5834
    %v6207 = vpack.c.b16 %v5841, %v5835
    %v6208 = vpack.c.b16 %v5848, %v5842
    %v6209 = vpack.c.b16 %v5849, %v5843
    %v6210 = vpack.c.b16 %v5850, %v5844
    %v6211 = vpack.c.b16 %v5851, %v5845
    %v6212 = vpack.c.b16 %v5852, %v5846
    %v6213 = vpack.c.b16 %v5853, %v5847
    %v6214 = vpack.c.b16 %v5860, %v5854
    %v6215 = vpack.c.b16 %v5861, %v5855
    %v6216 = vpack.c.b16 %v5862, %v5856
    %v6217 = vpack.c.b16 %v5863, %v5857
    %v6218 = vpack.c.b16 %v5864, %v5858
    %v6219 = vpack.c.b16 %v5865, %v5859
    %v6220 = vpack.c.b16 %v5872, %v5866
    %v6221 = vpack.c.b16 %v5873, %v5867
    %v6222 = vpack.c.b16 %v5874, %v5868
    %v6223 = vpack.c.b16 %v5875, %v5869
    %v6224 = vpack.c.b16 %v5876, %v5870
    %v6225 = vpack.c.b16 %v5877, %v5871
    %v6226 = vpack.c.b16 %v5884, %v5878
    %v6227 = vpack.c.b16 %v5885, %v5879
    %v6228 = vpack.c.b16 %v5886, %v5880
    %v6229 = vpack.c.b16 %v5887, %v5881
    %v6230 = vpack.c.b16 %v5888, %v5882
    %v6231 = vpack.c.b16 %v5889, %v5883
    %v6232 = vpack.c.b16 %v5896, %v5890
    %v6233 = vpack.c.b16 %v5897, %v5891
    %v6234 = vpack.c.b16 %v5898, %v5892
    %v6235 = vpack.c.b16 %v5899, %v5893
    %v6236 = vpack.c.b16 %v5900, %v5894
    %v6237 = vpack.c.b16 %v5901, %v5895
    %v6238 = vpack.c.b16 %v5908, %v5902
    %v6239 = vpack.c.b16 %v5909, %v5903
    %v6240 = vpack.c.b16 %v5910, %v5904
    %v6241 = vpack.c.b16 %v5911, %v5905
    %v6242 = vpack.c.b16 %v5912, %v5906
    %v6243 = vpack.c.b16 %v5913, %v5907
    %v6244 = vpack.c.b16 %v5920, %v5914
    %v6245 = vpack.c.b16 %v5921, %v5915
    %v6246 = vpack.c.b16 %v5922, %v5916
    %v6247 = vpack.c.b16 %v5923, %v5917
    %v6248 = vpack.c.b16 %v5924, %v5918
    %v6249 = vpack.c.b16 %v5925, %v5919
    %v6250 = vpack.c.b16 %v5932, %v5926
    %v6251 = vpack.c.b16 %v5933, %v5927
    %v6252 = vpack.c.b16 %v5934, %v5928
    %v6253 = vpack.c.b16 %v5935, %v5929
    %v6254 = vpack.c.b16 %v5936, %v5930
    %v6255 = vpack.c.b16 %v5937, %v5931
    %v6256 = vpack.c.b16 %v5944, %v5938
    %v6257 = vpack.c.b16 %v5945, %v5939
    %v6258 = vpack.c.b16 %v5946, %v5940
    %v6259 = vpack.c.b16 %v5947, %v5941
    %v6260 = vpack.c.b16 %v5948, %v5942
    %v6261 = vpack.c.b16 %v5949, %v5943
    %v6262 = vpack.c.b16 %v5956, %v5950
    %v6263 = vpack.c.b16 %v5957, %v5951
    %v6264 = vpack.c.b16 %v5958, %v5952
    %v6265 = vpack.c.b16 %v5959, %v5953
    %v6266 = vpack.c.b16 %v5960, %v5954
    %v6267 = vpack.c.b16 %v5961, %v5955
    %v6268 = vpack.c.b16 %v5968, %v5962
    %v6269 = vpack.c.b16 %v5969, %v5963
    %v6270 = vpack.c.b16 %v5970, %v5964
    %v6271 = vpack.c.b16 %v5971, %v5965
    %v6272 = vpack.c.b16 %v5972, %v5966
    %v6273 = vpack.c.b16 %v5973, %v5967
    %v6274 = vpack.c.b16 %v5980, %v5974
    %v6275 = vpack.c.b16 %v5981, %v5975
    %v6276 = vpack.c.b16 %v5982, %v5976
    %v6277 = vpack.c.b16 %v5983, %v5977
    %v6278 = vpack.c.b16 %v5984, %v5978
    %v6279 = vpack.c.b16 %v5985, %v5979
    %v6280 = vpack.c.b16 %v5992, %v5986
    %v6281 = vpack.c.b16 %v5993, %v5987
    %v6282 = vpack.c.b16 %v5994, %v5988
    %v6283 = vpack.c.b16 %v5995, %v5989
    %v6284 = vpack.c.b16 %v5996, %v5990
    %v6285 = vpack.c.b16 %v5997, %v5991
    %v6286 = vpack.c.b16 %v6004, %v5998
    %v6287 = vpack.c.b16 %v6005, %v5999
    %v6288 = vpack.c.b16 %v6006, %v6000
    %v6289 = vpack.c.b16 %v6007, %v6001
    %v6290 = vpack.c.b16 %v6008, %v6002
    %v6291 = vpack.c.b16 %v6009, %v6003
    %v6292 = vpack.c.b16 %v6016, %v6010
    %v6293 = vpack.c.b16 %v6017, %v6011
    %v6294 = vpack.c.b16 %v6018, %v6012
    %v6295 = vpack.c.b16 %v6019, %v6013
    %v6296 = vpack.c.b16 %v6020, %v6014
    %v6297 = vpack.c.b16 %v6021, %v6015
    %v6298 = vpack.c.b16 %v6028, %v6022
    %v6299 = vpack.c.b16 %v6029, %v6023
    %v6300 = vpack.c.b16 %v6030, %v6024
    %v6301 = vpack.c.b16 %v6031, %v6025
    %v6302 = vpack.c.b16 %v6032, %v6026
    %v6303 = vpack.c.b16 %v6033, %v6027
    %v6304 = vpack.c.b16 %v6040, %v6034
    %v6305 = vpack.c.b16 %v6041, %v6035
    %v6306 = vpack.c.b16 %v6042, %v6036
    %v6307 = vpack.c.b16 %v6043, %v6037
    %v6308 = vpack.c.b16 %v6044, %v6038
    %v6309 = vpack.c.b16 %v6045, %v6039
    %v6310 = vpack.c.b16 %v6052, %v6046
    %v6311 = vpack.c.b16 %v6053, %v6047
    %v6312 = vpack.c.b16 %v6054, %v6048
    %v6313 = vpack.c.b16 %v6055, %v6049
    %v6314 = vpack.c.b16 %v6056, %v6050
    %v6315 = vpack.c.b16 %v6057, %v6051
    %v6316 = vpack.c.b16 %v6064, %v6058
    %v6317 = vpack.c.b16 %v6065, %v6059
    %v6318 = vpack.c.b16 %v6066, %v6060
    %v6319 = vpack.c.b16 %v6067, %v6061
    %v6320 = vpack.c.b16 %v6068, %v6062
    %v6321 = vpack.c.b16 %v6069, %v6063
    %v6322 = vpack.c.b16 %v6076, %v6070
    %v6323 = vpack.c.b16 %v6077, %v6071
    %v6324 = vpack.c.b16 %v6078, %v6072
    %v6325 = vpack.c.b16 %v6079, %v6073
    %v6326 = vpack.c.b16 %v6080, %v6074
    %v6327 = vpack.c.b16 %v6081, %v6075
    %v6328 = vpack.c.b16 %v6088, %v6082
    %v6329 = vpack.c.b16 %v6089, %v6083
    %v6330 = vpack.c.b16 %v6090, %v6084
    %v6331 = vpack.c.b16 %v6091, %v6085
    %v6332 = vpack.c.b16 %v6092, %v6086
    %v6333 = vpack.c.b16 %v6093, %v6087
    %v6334 = vpack.c.b16 %v6100, %v6094
    %v6335 = vpack.c.b16 %v6101, %v6095
    %v6336 = vpack.c.b16 %v6102, %v6096
    %v6337 = vpack.c.b16 %v6103, %v6097
    %v6338 = vpack.c.b16 %v6104, %v6098
    %v6339 = vpack.c.b16 %v6105, %v6099
    %v6340 = vpack.c.b16 %v6112, %v6106
    %v6341 = vpack.c.b16 %v6113, %v6107
    %v6342 = vpack.c.b16 %v6114, %v6108
    %v6343 = vpack.c.b16 %v6115, %v6109
    %v6344 = vpack.c.b16 %v6116, %v6110
    %v6345 = vpack.c.b16 %v6117, %v6111
    %v6346 = vpack.c.b16 %v6124, %v6118
    %v6347 = vpack.c.b16 %v6125, %v6119
    %v6348 = vpack.c.b16 %v6126, %v6120
    %v6349 = vpack.c.b16 %v6127, %v6121
    %v6350 = vpack.c.b16 %v6128, %v6122
    %v6351 = vpack.c.b16 %v6129, %v6123
    %v6352 = vpack.c.b16 %v6136, %v6130
    %v6353 = vpack.c.b16 %v6137, %v6131
    %v6354 = vpack.c.b16 %v6138, %v6132
    %v6355 = vpack.c.b16 %v6139, %v6133
    %v6356 = vpack.c.b16 %v6140, %v6134
    %v6357 = vpack.c.b16 %v6141, %v6135
    %v6358 = vpack.c.b16 %v6148, %v6142
    %v6359 = vpack.c.b16 %v6149, %v6143
    %v6360 = vpack.c.b16 %v6150, %v6144
    %v6361 = vpack.c.b16 %v6151, %v6145
    %v6362 = vpack.c.b16 %v6152, %v6146
    %v6363 = vpack.c.b16 %v6153, %v6147
    %v6364 = vpack.c.b16 %v6160, %v6154
    %v6365 = vpack.c.b16 %v6161, %v6155
    %v6366 = vpack.c.b16 %v6162, %v6156
    %v6367 = vpack.c.b16 %v6163, %v6157
    %v6368 = vpack.c.b16 %v6164, %v6158
    %v6369 = vpack.c.b16 %v6165, %v6159
    %v6370 = vpack.c.b16 %v6172, %v6166
    %v6371 = vpack.c.b16 %v6173, %v6167
    %v6372 = vpack.c.b16 %v6174, %v6168
    %v6373 = vpack.c.b16 %v6175, %v6169
    %v6374 = vpack.c.b16 %v6176, %v6170
    %v6375 = vpack.c.b16 %v6177, %v6171
    %v6376 = vpack.c.b16 %v6184, %v6178
    %v6377 = vpack.c.b16 %v6185, %v6179
    %v6378 = vpack.c.b16 %v6186, %v6180
    %v6379 = vpack.c.b16 %v6187, %v6181
    %v6380 = vpack.c.b16 %v6188, %v6182
    %v6381 = vpack.c.b16 %v6189, %v6183
    %6574 = vmatpush.bf16.msra.mxu0 %v6232
    %6575 = vmatpush.bf16.msra.mxu0 %v6226
    %6576 = vmatpush.bf16.msra.mxu0 %v6220
    %6577 = vmatpush.bf16.msra.mxu0 %v6214
    %6578 = vmatpush.bf16.msra.mxu0 %v6208
    %6579 = vmatpush.bf16.msra.mxu0 %v6202
    %6580 = vmatpush.bf16.msra.mxu0 %v6196
    %6581 = vmatpush.bf16.msra.mxu0 %v6190
    %6582 = vmatmul.bf16.gmra.mxu0 %v1444
    %v6583 = vpop.f32.mrf.mxu0
    %v6584 = vadd.f32 0.0, %v6583
    %v6585 = vpop.f32.mrf.mxu0
    %v6586 = vadd.f32 0.0, %v6585
    %6587 = vmatmul.bf16.gmra.mxu0 %v1448
    %v6588 = vpop.f32.mrf.mxu0
    %v6589 = vadd.f32 0.0, %v6588
    %v6590 = vpop.f32.mrf.mxu0
    %v6591 = vadd.f32 0.0, %v6590
    %6592 = vmatmul.bf16.gmra.mxu0 %v1452
    %v6593 = vpop.f32.mrf.mxu0
    %v6594 = vadd.f32 0.0, %v6593
    %v6595 = vpop.f32.mrf.mxu0
    %v6596 = vadd.f32 0.0, %v6595
    %6597 = vmatmul.bf16.gmra.mxu0 %v1456
    %v6598 = vpop.f32.mrf.mxu0
    %v6599 = vadd.f32 0.0, %v6598
    %v6600 = vpop.f32.mrf.mxu0
    %v6601 = vadd.f32 0.0, %v6600
    %6602 = vmatmul.bf16.gmra.mxu0 %v5417
    %v6603 = vpop.f32.mrf.mxu0
    %v6604 = vadd.f32 0.0, %v6603
    %v6605 = vpop.f32.mrf.mxu0
    %v6606 = vadd.f32 0.0, %v6605
    %6607 = vdwg.mxu0
    %6608 = vmatpush.bf16.msra.mxu0 %v6280
    %6609 = vmatpush.bf16.msra.mxu0 %v6274
    %6610 = vmatpush.bf16.msra.mxu0 %v6268
    %6611 = vmatpush.bf16.msra.mxu0 %v6262
    %6612 = vmatpush.bf16.msra.mxu0 %v6256
    %6613 = vmatpush.bf16.msra.mxu0 %v6250
    %6614 = vmatpush.bf16.msra.mxu0 %v6244
    %6615 = vmatpush.bf16.msra.mxu0 %v6238
    %6616 = vmatmul.bf16.gmra.mxu0 %v1445
    %v6617 = vpop.f32.mrf.mxu0
    %v6618 = vadd.f32 %v6584, %v6617
    %v6619 = vpop.f32.mrf.mxu0
    %v6620 = vadd.f32 %v6586, %v6619
    %6621 = vmatmul.bf16.gmra.mxu0 %v1449
    %v6622 = vpop.f32.mrf.mxu0
    %v6623 = vadd.f32 %v6589, %v6622
    %v6624 = vpop.f32.mrf.mxu0
    %v6625 = vadd.f32 %v6591, %v6624
    %6626 = vmatmul.bf16.gmra.mxu0 %v1453
    %v6627 = vpop.f32.mrf.mxu0
    %v6628 = vadd.f32 %v6594, %v6627
    %v6629 = vpop.f32.mrf.mxu0
    %v6630 = vadd.f32 %v6596, %v6629
    %6631 = vmatmul.bf16.gmra.mxu0 %v1457
    %v6632 = vpop.f32.mrf.mxu0
    %v6633 = vadd.f32 %v6599, %v6632
    %v6634 = vpop.f32.mrf.mxu0
    %v6635 = vadd.f32 %v6601, %v6634
    %6636 = vmatmul.bf16.gmra.mxu0 %v5418
    %v6637 = vpop.f32.mrf.mxu0
    %v6638 = vadd.f32 %v6604, %v6637
    %v6639 = vpop.f32.mrf.mxu0
    %v6640 = vadd.f32 %v6606, %v6639
    %6641 = vdwg.mxu0
    %6642 = vmatpush.bf16.msra.mxu0 %v6328
    %6643 = vmatpush.bf16.msra.mxu0 %v6322
    %6644 = vmatpush.bf16.msra.mxu0 %v6316
    %6645 = vmatpush.bf16.msra.mxu0 %v6310
    %6646 = vmatpush.bf16.msra.mxu0 %v6304
    %6647 = vmatpush.bf16.msra.mxu0 %v6298
    %6648 = vmatpush.bf16.msra.mxu0 %v6292
    %6649 = vmatpush.bf16.msra.mxu0 %v6286
    %6650 = vmatmul.bf16.gmra.mxu0 %v1446
    %v6651 = vpop.f32.mrf.mxu0
    %v6652 = vadd.f32 %v6618, %v6651
    %v6653 = vpop.f32.mrf.mxu0
    %v6654 = vadd.f32 %v6620, %v6653
    %6655 = vmatmul.bf16.gmra.mxu0 %v1450
    %v6656 = vpop.f32.mrf.mxu0
    %v6657 = vadd.f32 %v6623, %v6656
    %v6658 = vpop.f32.mrf.mxu0
    %v6659 = vadd.f32 %v6625, %v6658
    %6660 = vmatmul.bf16.gmra.mxu0 %v1454
    %v6661 = vpop.f32.mrf.mxu0
    %v6662 = vadd.f32 %v6628, %v6661
    %v6663 = vpop.f32.mrf.mxu0
    %v6664 = vadd.f32 %v6630, %v6663
    %6665 = vmatmul.bf16.gmra.mxu0 %v1458
    %v6666 = vpop.f32.mrf.mxu0
    %v6667 = vadd.f32 %v6633, %v6666
    %v6668 = vpop.f32.mrf.mxu0
    %v6669 = vadd.f32 %v6635, %v6668
    %6670 = vmatmul.bf16.gmra.mxu0 %v5419
    %v6671 = vpop.f32.mrf.mxu0
    %v6672 = vadd.f32 %v6638, %v6671
    %v6673 = vpop.f32.mrf.mxu0
    %v6674 = vadd.f32 %v6640, %v6673
    %6675 = vdwg.mxu0
    %6676 = vmatpush.bf16.msra.mxu0 %v6376
    %6677 = vmatpush.bf16.msra.mxu0 %v6370
    %6678 = vmatpush.bf16.msra.mxu0 %v6364
    %6679 = vmatpush.bf16.msra.mxu0 %v6358
    %6680 = vmatpush.bf16.msra.mxu0 %v6352
    %6681 = vmatpush.bf16.msra.mxu0 %v6346
    %6682 = vmatpush.bf16.msra.mxu0 %v6340
    %6683 = vmatpush.bf16.msra.mxu0 %v6334
    %6684 = vmatmul.bf16.gmra.mxu0 %v1447
    %v6685 = vpop.f32.mrf.mxu0
    %v6686 = vadd.f32 %v6652, %v6685
    %v6687 = vpop.f32.mrf.mxu0
    %v6688 = vadd.f32 %v6654, %v6687
    %6689 = vmatmul.bf16.gmra.mxu0 %v1451
    %v6690 = vpop.f32.mrf.mxu0
    %v6691 = vadd.f32 %v6657, %v6690
    %v6692 = vpop.f32.mrf.mxu0
    %v6693 = vadd.f32 %v6659, %v6692
    %6694 = vmatmul.bf16.gmra.mxu0 %v1455
    %v6695 = vpop.f32.mrf.mxu0
    %v6696 = vadd.f32 %v6662, %v6695
    %v6697 = vpop.f32.mrf.mxu0
    %v6698 = vadd.f32 %v6664, %v6697
    %6699 = vmatmul.bf16.gmra.mxu0 %v1459
    %v6700 = vpop.f32.mrf.mxu0
    %v6701 = vadd.f32 %v6667, %v6700
    %v6702 = vpop.f32.mrf.mxu0
    %v6703 = vadd.f32 %v6669, %v6702
    %6704 = vmatmul.bf16.gmra.mxu0 %v5420
    %v6705 = vpop.f32.mrf.mxu0
    %v6706 = vadd.f32 %v6672, %v6705
    %v6707 = vpop.f32.mrf.mxu0
    %v6708 = vadd.f32 %v6674, %v6707
    %6709 = vdwg.mxu0
    %6710 = vmatpush.bf16.msra.mxu0 %v6233
    %6711 = vmatpush.bf16.msra.mxu0 %v6227
    %6712 = vmatpush.bf16.msra.mxu0 %v6221
    %6713 = vmatpush.bf16.msra.mxu0 %v6215
    %6714 = vmatpush.bf16.msra.mxu0 %v6209
    %6715 = vmatpush.bf16.msra.mxu0 %v6203
    %6716 = vmatpush.bf16.msra.mxu0 %v6197
    %6717 = vmatpush.bf16.msra.mxu0 %v6191
    %6718 = vmatmul.bf16.gmra.mxu0 %v1444
    %v6719 = vpop.f32.mrf.mxu0
    %v6720 = vadd.f32 0.0, %v6719
    %v6721 = vpop.f32.mrf.mxu0
    %v6722 = vadd.f32 0.0, %v6721
    %6723 = vmatmul.bf16.gmra.mxu0 %v1448
    %v6724 = vpop.f32.mrf.mxu0
    %v6725 = vadd.f32 0.0, %v6724
    %v6726 = vpop.f32.mrf.mxu0
    %v6727 = vadd.f32 0.0, %v6726
    %6728 = vmatmul.bf16.gmra.mxu0 %v1452
    %v6729 = vpop.f32.mrf.mxu0
    %v6730 = vadd.f32 0.0, %v6729
    %v6731 = vpop.f32.mrf.mxu0
    %v6732 = vadd.f32 0.0, %v6731
    %6733 = vmatmul.bf16.gmra.mxu0 %v1456
    %v6734 = vpop.f32.mrf.mxu0
    %v6735 = vadd.f32 0.0, %v6734
    %v6736 = vpop.f32.mrf.mxu0
    %v6737 = vadd.f32 0.0, %v6736
    %6738 = vmatmul.bf16.gmra.mxu0 %v5417
    %v6739 = vpop.f32.mrf.mxu0
    %v6740 = vadd.f32 0.0, %v6739
    %v6741 = vpop.f32.mrf.mxu0
    %v6742 = vadd.f32 0.0, %v6741
    %6743 = vdwg.mxu0
    %6744 = vmatpush.bf16.msra.mxu0 %v6281
    %6745 = vmatpush.bf16.msra.mxu0 %v6275
    %6746 = vmatpush.bf16.msra.mxu0 %v6269
    %6747 = vmatpush.bf16.msra.mxu0 %v6263
    %6748 = vmatpush.bf16.msra.mxu0 %v6257
    %6749 = vmatpush.bf16.msra.mxu0 %v6251
    %6750 = vmatpush.bf16.msra.mxu0 %v6245
    %6751 = vmatpush.bf16.msra.mxu0 %v6239
    %6752 = vmatmul.bf16.gmra.mxu0 %v1445
    %v6753 = vpop.f32.mrf.mxu0
    %v6754 = vadd.f32 %v6720, %v6753
    %v6755 = vpop.f32.mrf.mxu0
    %v6756 = vadd.f32 %v6722, %v6755
    %6757 = vmatmul.bf16.gmra.mxu0 %v1449
    %v6758 = vpop.f32.mrf.mxu0
    %v6759 = vadd.f32 %v6725, %v6758
    %v6760 = vpop.f32.mrf.mxu0
    %v6761 = vadd.f32 %v6727, %v6760
    %6762 = vmatmul.bf16.gmra.mxu0 %v1453
    %v6763 = vpop.f32.mrf.mxu0
    %v6764 = vadd.f32 %v6730, %v6763
    %v6765 = vpop.f32.mrf.mxu0
    %v6766 = vadd.f32 %v6732, %v6765
    %6767 = vmatmul.bf16.gmra.mxu0 %v1457
    %v6768 = vpop.f32.mrf.mxu0
    %v6769 = vadd.f32 %v6735, %v6768
    %v6770 = vpop.f32.mrf.mxu0
    %v6771 = vadd.f32 %v6737, %v6770
    %6772 = vmatmul.bf16.gmra.mxu0 %v5418
    %v6773 = vpop.f32.mrf.mxu0
    %v6774 = vadd.f32 %v6740, %v6773
    %v6775 = vpop.f32.mrf.mxu0
    %v6776 = vadd.f32 %v6742, %v6775
    %6777 = vdwg.mxu0
    %6778 = vmatpush.bf16.msra.mxu0 %v6329
    %6779 = vmatpush.bf16.msra.mxu0 %v6323
    %6780 = vmatpush.bf16.msra.mxu0 %v6317
    %6781 = vmatpush.bf16.msra.mxu0 %v6311
    %6782 = vmatpush.bf16.msra.mxu0 %v6305
    %6783 = vmatpush.bf16.msra.mxu0 %v6299
    %6784 = vmatpush.bf16.msra.mxu0 %v6293
    %6785 = vmatpush.bf16.msra.mxu0 %v6287
    %6786 = vmatmul.bf16.gmra.mxu0 %v1446
    %v6787 = vpop.f32.mrf.mxu0
    %v6788 = vadd.f32 %v6754, %v6787
    %v6789 = vpop.f32.mrf.mxu0
    %v6790 = vadd.f32 %v6756, %v6789
    %6791 = vmatmul.bf16.gmra.mxu0 %v1450
    %v6792 = vpop.f32.mrf.mxu0
    %v6793 = vadd.f32 %v6759, %v6792
    %v6794 = vpop.f32.mrf.mxu0
    %v6795 = vadd.f32 %v6761, %v6794
    %6796 = vmatmul.bf16.gmra.mxu0 %v1454
    %v6797 = vpop.f32.mrf.mxu0
    %v6798 = vadd.f32 %v6764, %v6797
    %v6799 = vpop.f32.mrf.mxu0
    %v6800 = vadd.f32 %v6766, %v6799
    %6801 = vmatmul.bf16.gmra.mxu0 %v1458
    %v6802 = vpop.f32.mrf.mxu0
    %v6803 = vadd.f32 %v6769, %v6802
    %v6804 = vpop.f32.mrf.mxu0
    %v6805 = vadd.f32 %v6771, %v6804
    %6806 = vmatmul.bf16.gmra.mxu0 %v5419
    %v6807 = vpop.f32.mrf.mxu0
    %v6808 = vadd.f32 %v6774, %v6807
    %v6809 = vpop.f32.mrf.mxu0
    %v6810 = vadd.f32 %v6776, %v6809
    %6811 = vdwg.mxu0
    %6812 = vmatpush.bf16.msra.mxu0 %v6377
    %6813 = vmatpush.bf16.msra.mxu0 %v6371
    %6814 = vmatpush.bf16.msra.mxu0 %v6365
    %6815 = vmatpush.bf16.msra.mxu0 %v6359
    %6816 = vmatpush.bf16.msra.mxu0 %v6353
    %6817 = vmatpush.bf16.msra.mxu0 %v6347
    %6818 = vmatpush.bf16.msra.mxu0 %v6341
    %6819 = vmatpush.bf16.msra.mxu0 %v6335
    %6820 = vmatmul.bf16.gmra.mxu0 %v1447
    %v6821 = vpop.f32.mrf.mxu0
    %v6822 = vadd.f32 %v6788, %v6821
    %v6823 = vpop.f32.mrf.mxu0
    %v6824 = vadd.f32 %v6790, %v6823
    %6825 = vmatmul.bf16.gmra.mxu0 %v1451
    %v6826 = vpop.f32.mrf.mxu0
    %v6827 = vadd.f32 %v6793, %v6826
    %v6828 = vpop.f32.mrf.mxu0
    %v6829 = vadd.f32 %v6795, %v6828
    %6830 = vmatmul.bf16.gmra.mxu0 %v1455
    %v6831 = vpop.f32.mrf.mxu0
    %v6832 = vadd.f32 %v6798, %v6831
    %v6833 = vpop.f32.mrf.mxu0
    %v6834 = vadd.f32 %v6800, %v6833
    %6835 = vmatmul.bf16.gmra.mxu0 %v1459
    %v6836 = vpop.f32.mrf.mxu0
    %v6837 = vadd.f32 %v6803, %v6836
    %v6838 = vpop.f32.mrf.mxu0
    %v6839 = vadd.f32 %v6805, %v6838
    %6840 = vmatmul.bf16.gmra.mxu0 %v5420
    %v6841 = vpop.f32.mrf.mxu0
    %v6842 = vadd.f32 %v6808, %v6841
    %v6843 = vpop.f32.mrf.mxu0
    %v6844 = vadd.f32 %v6810, %v6843
    %6845 = vdwg.mxu0
    %6846 = vmatpush.bf16.msra.mxu0 %v6234
    %6847 = vmatpush.bf16.msra.mxu0 %v6228
    %6848 = vmatpush.bf16.msra.mxu0 %v6222
    %6849 = vmatpush.bf16.msra.mxu0 %v6216
    %6850 = vmatpush.bf16.msra.mxu0 %v6210
    %6851 = vmatpush.bf16.msra.mxu0 %v6204
    %6852 = vmatpush.bf16.msra.mxu0 %v6198
    %6853 = vmatpush.bf16.msra.mxu0 %v6192
    %6854 = vmatmul.bf16.gmra.mxu0 %v1444
    %v6855 = vpop.f32.mrf.mxu0
    %v6856 = vadd.f32 0.0, %v6855
    %v6857 = vpop.f32.mrf.mxu0
    %v6858 = vadd.f32 0.0, %v6857
    %6859 = vmatmul.bf16.gmra.mxu0 %v1448
    %v6860 = vpop.f32.mrf.mxu0
    %v6861 = vadd.f32 0.0, %v6860
    %v6862 = vpop.f32.mrf.mxu0
    %v6863 = vadd.f32 0.0, %v6862
    %6864 = vmatmul.bf16.gmra.mxu0 %v1452
    %v6865 = vpop.f32.mrf.mxu0
    %v6866 = vadd.f32 0.0, %v6865
    %v6867 = vpop.f32.mrf.mxu0
    %v6868 = vadd.f32 0.0, %v6867
    %6869 = vmatmul.bf16.gmra.mxu0 %v1456
    %v6870 = vpop.f32.mrf.mxu0
    %v6871 = vadd.f32 0.0, %v6870
    %v6872 = vpop.f32.mrf.mxu0
    %v6873 = vadd.f32 0.0, %v6872
    %6874 = vmatmul.bf16.gmra.mxu0 %v5417
    %v6875 = vpop.f32.mrf.mxu0
    %v6876 = vadd.f32 0.0, %v6875
    %v6877 = vpop.f32.mrf.mxu0
    %v6878 = vadd.f32 0.0, %v6877
    %6879 = vdwg.mxu0
    %6880 = vmatpush.bf16.msra.mxu0 %v6282
    %6881 = vmatpush.bf16.msra.mxu0 %v6276
    %6882 = vmatpush.bf16.msra.mxu0 %v6270
    %6883 = vmatpush.bf16.msra.mxu0 %v6264
    %6884 = vmatpush.bf16.msra.mxu0 %v6258
    %6885 = vmatpush.bf16.msra.mxu0 %v6252
    %6886 = vmatpush.bf16.msra.mxu0 %v6246
    %6887 = vmatpush.bf16.msra.mxu0 %v6240
    %6888 = vmatmul.bf16.gmra.mxu0 %v1445
    %v6889 = vpop.f32.mrf.mxu0
    %v6890 = vadd.f32 %v6856, %v6889
    %v6891 = vpop.f32.mrf.mxu0
    %v6892 = vadd.f32 %v6858, %v6891
    %6893 = vmatmul.bf16.gmra.mxu0 %v1449
    %v6894 = vpop.f32.mrf.mxu0
    %v6895 = vadd.f32 %v6861, %v6894
    %v6896 = vpop.f32.mrf.mxu0
    %v6897 = vadd.f32 %v6863, %v6896
    %6898 = vmatmul.bf16.gmra.mxu0 %v1453
    %v6899 = vpop.f32.mrf.mxu0
    %v6900 = vadd.f32 %v6866, %v6899
    %v6901 = vpop.f32.mrf.mxu0
    %v6902 = vadd.f32 %v6868, %v6901
    %6903 = vmatmul.bf16.gmra.mxu0 %v1457
    %v6904 = vpop.f32.mrf.mxu0
    %v6905 = vadd.f32 %v6871, %v6904
    %v6906 = vpop.f32.mrf.mxu0
    %v6907 = vadd.f32 %v6873, %v6906
    %6908 = vmatmul.bf16.gmra.mxu0 %v5418
    %v6909 = vpop.f32.mrf.mxu0
    %v6910 = vadd.f32 %v6876, %v6909
    %v6911 = vpop.f32.mrf.mxu0
    %v6912 = vadd.f32 %v6878, %v6911
    %6913 = vdwg.mxu0
    %6914 = vmatpush.bf16.msra.mxu0 %v6330
    %6915 = vmatpush.bf16.msra.mxu0 %v6324
    %6916 = vmatpush.bf16.msra.mxu0 %v6318
    %6917 = vmatpush.bf16.msra.mxu0 %v6312
    %6918 = vmatpush.bf16.msra.mxu0 %v6306
    %6919 = vmatpush.bf16.msra.mxu0 %v6300
    %6920 = vmatpush.bf16.msra.mxu0 %v6294
    %6921 = vmatpush.bf16.msra.mxu0 %v6288
    %6922 = vmatmul.bf16.gmra.mxu0 %v1446
    %v6923 = vpop.f32.mrf.mxu0
    %v6924 = vadd.f32 %v6890, %v6923
    %v6925 = vpop.f32.mrf.mxu0
    %v6926 = vadd.f32 %v6892, %v6925
    %6927 = vmatmul.bf16.gmra.mxu0 %v1450
    %v6928 = vpop.f32.mrf.mxu0
    %v6929 = vadd.f32 %v6895, %v6928
    %v6930 = vpop.f32.mrf.mxu0
    %v6931 = vadd.f32 %v6897, %v6930
    %6932 = vmatmul.bf16.gmra.mxu0 %v1454
    %v6933 = vpop.f32.mrf.mxu0
    %v6934 = vadd.f32 %v6900, %v6933
    %v6935 = vpop.f32.mrf.mxu0
    %v6936 = vadd.f32 %v6902, %v6935
    %6937 = vmatmul.bf16.gmra.mxu0 %v1458
    %v6938 = vpop.f32.mrf.mxu0
    %v6939 = vadd.f32 %v6905, %v6938
    %v6940 = vpop.f32.mrf.mxu0
    %v6941 = vadd.f32 %v6907, %v6940
    %6942 = vmatmul.bf16.gmra.mxu0 %v5419
    %v6943 = vpop.f32.mrf.mxu0
    %v6944 = vadd.f32 %v6910, %v6943
    %v6945 = vpop.f32.mrf.mxu0
    %v6946 = vadd.f32 %v6912, %v6945
    %6947 = vdwg.mxu0
    %6948 = vmatpush.bf16.msra.mxu0 %v6378
    %6949 = vmatpush.bf16.msra.mxu0 %v6372
    %6950 = vmatpush.bf16.msra.mxu0 %v6366
    %6951 = vmatpush.bf16.msra.mxu0 %v6360
    %6952 = vmatpush.bf16.msra.mxu0 %v6354
    %6953 = vmatpush.bf16.msra.mxu0 %v6348
    %6954 = vmatpush.bf16.msra.mxu0 %v6342
    %6955 = vmatpush.bf16.msra.mxu0 %v6336
    %6956 = vmatmul.bf16.gmra.mxu0 %v1447
    %v6957 = vpop.f32.mrf.mxu0
    %v6958 = vadd.f32 %v6924, %v6957
    %v6959 = vpop.f32.mrf.mxu0
    %v6960 = vadd.f32 %v6926, %v6959
    %6961 = vmatmul.bf16.gmra.mxu0 %v1451
    %v6962 = vpop.f32.mrf.mxu0
    %v6963 = vadd.f32 %v6929, %v6962
    %v6964 = vpop.f32.mrf.mxu0
    %v6965 = vadd.f32 %v6931, %v6964
    %6966 = vmatmul.bf16.gmra.mxu0 %v1455
    %v6967 = vpop.f32.mrf.mxu0
    %v6968 = vadd.f32 %v6934, %v6967
    %v6969 = vpop.f32.mrf.mxu0
    %v6970 = vadd.f32 %v6936, %v6969
    %6971 = vmatmul.bf16.gmra.mxu0 %v1459
    %v6972 = vpop.f32.mrf.mxu0
    %v6973 = vadd.f32 %v6939, %v6972
    %v6974 = vpop.f32.mrf.mxu0
    %v6975 = vadd.f32 %v6941, %v6974
    %6976 = vmatmul.bf16.gmra.mxu0 %v5420
    %v6977 = vpop.f32.mrf.mxu0
    %v6978 = vadd.f32 %v6944, %v6977
    %v6979 = vpop.f32.mrf.mxu0
    %v6980 = vadd.f32 %v6946, %v6979
    %6981 = vdwg.mxu0
    %6982 = vmatpush.bf16.msra.mxu0 %v6235
    %6983 = vmatpush.bf16.msra.mxu0 %v6229
    %6984 = vmatpush.bf16.msra.mxu0 %v6223
    %6985 = vmatpush.bf16.msra.mxu0 %v6217
    %6986 = vmatpush.bf16.msra.mxu0 %v6211
    %6987 = vmatpush.bf16.msra.mxu0 %v6205
    %6988 = vmatpush.bf16.msra.mxu0 %v6199
    %6989 = vmatpush.bf16.msra.mxu0 %v6193
    %6990 = vmatmul.bf16.gmra.mxu0 %v1444
    %v6991 = vpop.f32.mrf.mxu0
    %v6992 = vadd.f32 0.0, %v6991
    %v6993 = vpop.f32.mrf.mxu0
    %v6994 = vadd.f32 0.0, %v6993
    %6995 = vmatmul.bf16.gmra.mxu0 %v1448
    %v6996 = vpop.f32.mrf.mxu0
    %v6997 = vadd.f32 0.0, %v6996
    %v6998 = vpop.f32.mrf.mxu0
    %v6999 = vadd.f32 0.0, %v6998
    %7000 = vmatmul.bf16.gmra.mxu0 %v1452
    %v7001 = vpop.f32.mrf.mxu0
    %v7002 = vadd.f32 0.0, %v7001
    %v7003 = vpop.f32.mrf.mxu0
    %v7004 = vadd.f32 0.0, %v7003
    %7005 = vmatmul.bf16.gmra.mxu0 %v1456
    %v7006 = vpop.f32.mrf.mxu0
    %v7007 = vadd.f32 0.0, %v7006
    %v7008 = vpop.f32.mrf.mxu0
    %v7009 = vadd.f32 0.0, %v7008
    %7010 = vmatmul.bf16.gmra.mxu0 %v5417
    %v7011 = vpop.f32.mrf.mxu0
    %v7012 = vadd.f32 0.0, %v7011
    %v7013 = vpop.f32.mrf.mxu0
    %v7014 = vadd.f32 0.0, %v7013
    %7015 = vdwg.mxu0
    %7016 = vmatpush.bf16.msra.mxu0 %v6283
    %7017 = vmatpush.bf16.msra.mxu0 %v6277
    %7018 = vmatpush.bf16.msra.mxu0 %v6271
    %7019 = vmatpush.bf16.msra.mxu0 %v6265
    %7020 = vmatpush.bf16.msra.mxu0 %v6259
    %7021 = vmatpush.bf16.msra.mxu0 %v6253
    %7022 = vmatpush.bf16.msra.mxu0 %v6247
    %7023 = vmatpush.bf16.msra.mxu0 %v6241
    %7024 = vmatmul.bf16.gmra.mxu0 %v1445
    %v7025 = vpop.f32.mrf.mxu0
    %v7026 = vadd.f32 %v6992, %v7025
    %v7027 = vpop.f32.mrf.mxu0
    %v7028 = vadd.f32 %v6994, %v7027
    %7029 = vmatmul.bf16.gmra.mxu0 %v1449
    %v7030 = vpop.f32.mrf.mxu0
    %v7031 = vadd.f32 %v6997, %v7030
    %v7032 = vpop.f32.mrf.mxu0
    %v7033 = vadd.f32 %v6999, %v7032
    %7034 = vmatmul.bf16.gmra.mxu0 %v1453
    %v7035 = vpop.f32.mrf.mxu0
    %v7036 = vadd.f32 %v7002, %v7035
    %v7037 = vpop.f32.mrf.mxu0
    %v7038 = vadd.f32 %v7004, %v7037
    %7039 = vmatmul.bf16.gmra.mxu0 %v1457
    %v7040 = vpop.f32.mrf.mxu0
    %v7041 = vadd.f32 %v7007, %v7040
    %v7042 = vpop.f32.mrf.mxu0
    %v7043 = vadd.f32 %v7009, %v7042
    %7044 = vmatmul.bf16.gmra.mxu0 %v5418
    %v7045 = vpop.f32.mrf.mxu0
    %v7046 = vadd.f32 %v7012, %v7045
    %v7047 = vpop.f32.mrf.mxu0
    %v7048 = vadd.f32 %v7014, %v7047
    %7049 = vdwg.mxu0
    %7050 = vmatpush.bf16.msra.mxu0 %v6331
    %7051 = vmatpush.bf16.msra.mxu0 %v6325
    %7052 = vmatpush.bf16.msra.mxu0 %v6319
    %7053 = vmatpush.bf16.msra.mxu0 %v6313
    %7054 = vmatpush.bf16.msra.mxu0 %v6307
    %7055 = vmatpush.bf16.msra.mxu0 %v6301
    %7056 = vmatpush.bf16.msra.mxu0 %v6295
    %7057 = vmatpush.bf16.msra.mxu0 %v6289
    %7058 = vmatmul.bf16.gmra.mxu0 %v1446
    %v7059 = vpop.f32.mrf.mxu0
    %v7060 = vadd.f32 %v7026, %v7059
    %v7061 = vpop.f32.mrf.mxu0
    %v7062 = vadd.f32 %v7028, %v7061
    %7063 = vmatmul.bf16.gmra.mxu0 %v1450
    %v7064 = vpop.f32.mrf.mxu0
    %v7065 = vadd.f32 %v7031, %v7064
    %v7066 = vpop.f32.mrf.mxu0
    %v7067 = vadd.f32 %v7033, %v7066
    %7068 = vmatmul.bf16.gmra.mxu0 %v1454
    %v7069 = vpop.f32.mrf.mxu0
    %v7070 = vadd.f32 %v7036, %v7069
    %v7071 = vpop.f32.mrf.mxu0
    %v7072 = vadd.f32 %v7038, %v7071
    %7073 = vmatmul.bf16.gmra.mxu0 %v1458
    %v7074 = vpop.f32.mrf.mxu0
    %v7075 = vadd.f32 %v7041, %v7074
    %v7076 = vpop.f32.mrf.mxu0
    %v7077 = vadd.f32 %v7043, %v7076
    %7078 = vmatmul.bf16.gmra.mxu0 %v5419
    %v7079 = vpop.f32.mrf.mxu0
    %v7080 = vadd.f32 %v7046, %v7079
    %v7081 = vpop.f32.mrf.mxu0
    %v7082 = vadd.f32 %v7048, %v7081
    %7083 = vdwg.mxu0
    %7084 = vmatpush.bf16.msra.mxu0 %v6379
    %7085 = vmatpush.bf16.msra.mxu0 %v6373
    %7086 = vmatpush.bf16.msra.mxu0 %v6367
    %7087 = vmatpush.bf16.msra.mxu0 %v6361
    %7088 = vmatpush.bf16.msra.mxu0 %v6355
    %7089 = vmatpush.bf16.msra.mxu0 %v6349
    %7090 = vmatpush.bf16.msra.mxu0 %v6343
    %7091 = vmatpush.bf16.msra.mxu0 %v6337
    %7092 = vmatmul.bf16.gmra.mxu0 %v1447
    %v7093 = vpop.f32.mrf.mxu0
    %v7094 = vadd.f32 %v7060, %v7093
    %v7095 = vpop.f32.mrf.mxu0
    %v7096 = vadd.f32 %v7062, %v7095
    %7097 = vmatmul.bf16.gmra.mxu0 %v1451
    %v7098 = vpop.f32.mrf.mxu0
    %v7099 = vadd.f32 %v7065, %v7098
    %v7100 = vpop.f32.mrf.mxu0
    %v7101 = vadd.f32 %v7067, %v7100
    %7102 = vmatmul.bf16.gmra.mxu0 %v1455
    %v7103 = vpop.f32.mrf.mxu0
    %v7104 = vadd.f32 %v7070, %v7103
    %v7105 = vpop.f32.mrf.mxu0
    %v7106 = vadd.f32 %v7072, %v7105
    %7107 = vmatmul.bf16.gmra.mxu0 %v1459
    %v7108 = vpop.f32.mrf.mxu0
    %v7109 = vadd.f32 %v7075, %v7108
    %v7110 = vpop.f32.mrf.mxu0
    %v7111 = vadd.f32 %v7077, %v7110
    %7112 = vmatmul.bf16.gmra.mxu0 %v5420
    %v7113 = vpop.f32.mrf.mxu0
    %v7114 = vadd.f32 %v7080, %v7113
    %v7115 = vpop.f32.mrf.mxu0
    %v7116 = vadd.f32 %v7082, %v7115
    %7117 = vdwg.mxu0
    %7118 = vmatpush.bf16.msra.mxu0 %v6236
    %7119 = vmatpush.bf16.msra.mxu0 %v6230
    %7120 = vmatpush.bf16.msra.mxu0 %v6224
    %7121 = vmatpush.bf16.msra.mxu0 %v6218
    %7122 = vmatpush.bf16.msra.mxu0 %v6212
    %7123 = vmatpush.bf16.msra.mxu0 %v6206
    %7124 = vmatpush.bf16.msra.mxu0 %v6200
    %7125 = vmatpush.bf16.msra.mxu0 %v6194
    %7126 = vmatmul.bf16.gmra.mxu0 %v1444
    %v7127 = vpop.f32.mrf.mxu0
    %v7128 = vadd.f32 0.0, %v7127
    %v7129 = vpop.f32.mrf.mxu0
    %v7130 = vadd.f32 0.0, %v7129
    %7131 = vmatmul.bf16.gmra.mxu0 %v1448
    %v7132 = vpop.f32.mrf.mxu0
    %v7133 = vadd.f32 0.0, %v7132
    %v7134 = vpop.f32.mrf.mxu0
    %v7135 = vadd.f32 0.0, %v7134
    %7136 = vmatmul.bf16.gmra.mxu0 %v1452
    %v7137 = vpop.f32.mrf.mxu0
    %v7138 = vadd.f32 0.0, %v7137
    %v7139 = vpop.f32.mrf.mxu0
    %v7140 = vadd.f32 0.0, %v7139
    %7141 = vmatmul.bf16.gmra.mxu0 %v1456
    %v7142 = vpop.f32.mrf.mxu0
    %v7143 = vadd.f32 0.0, %v7142
    %v7144 = vpop.f32.mrf.mxu0
    %v7145 = vadd.f32 0.0, %v7144
    %7146 = vmatmul.bf16.gmra.mxu0 %v5417
    %v7147 = vpop.f32.mrf.mxu0
    %v7148 = vadd.f32 0.0, %v7147
    %v7149 = vpop.f32.mrf.mxu0
    %v7150 = vadd.f32 0.0, %v7149
    %7151 = vdwg.mxu0
    %7152 = vmatpush.bf16.msra.mxu0 %v6284
    %7153 = vmatpush.bf16.msra.mxu0 %v6278
    %7154 = vmatpush.bf16.msra.mxu0 %v6272
    %7155 = vmatpush.bf16.msra.mxu0 %v6266
    %7156 = vmatpush.bf16.msra.mxu0 %v6260
    %7157 = vmatpush.bf16.msra.mxu0 %v6254
    %7158 = vmatpush.bf16.msra.mxu0 %v6248
    %7159 = vmatpush.bf16.msra.mxu0 %v6242
    %7160 = vmatmul.bf16.gmra.mxu0 %v1445
    %v7161 = vpop.f32.mrf.mxu0
    %v7162 = vadd.f32 %v7128, %v7161
    %v7163 = vpop.f32.mrf.mxu0
    %v7164 = vadd.f32 %v7130, %v7163
    %7165 = vmatmul.bf16.gmra.mxu0 %v1449
    %v7166 = vpop.f32.mrf.mxu0
    %v7167 = vadd.f32 %v7133, %v7166
    %v7168 = vpop.f32.mrf.mxu0
    %v7169 = vadd.f32 %v7135, %v7168
    %7170 = vmatmul.bf16.gmra.mxu0 %v1453
    %v7171 = vpop.f32.mrf.mxu0
    %v7172 = vadd.f32 %v7138, %v7171
    %v7173 = vpop.f32.mrf.mxu0
    %v7174 = vadd.f32 %v7140, %v7173
    %7175 = vmatmul.bf16.gmra.mxu0 %v1457
    %v7176 = vpop.f32.mrf.mxu0
    %v7177 = vadd.f32 %v7143, %v7176
    %v7178 = vpop.f32.mrf.mxu0
    %v7179 = vadd.f32 %v7145, %v7178
    %7180 = vmatmul.bf16.gmra.mxu0 %v5418
    %v7181 = vpop.f32.mrf.mxu0
    %v7182 = vadd.f32 %v7148, %v7181
    %v7183 = vpop.f32.mrf.mxu0
    %v7184 = vadd.f32 %v7150, %v7183
    %7185 = vdwg.mxu0
    %7186 = vmatpush.bf16.msra.mxu0 %v6332
    %7187 = vmatpush.bf16.msra.mxu0 %v6326
    %7188 = vmatpush.bf16.msra.mxu0 %v6320
    %7189 = vmatpush.bf16.msra.mxu0 %v6314
    %7190 = vmatpush.bf16.msra.mxu0 %v6308
    %7191 = vmatpush.bf16.msra.mxu0 %v6302
    %7192 = vmatpush.bf16.msra.mxu0 %v6296
    %7193 = vmatpush.bf16.msra.mxu0 %v6290
    %7194 = vmatmul.bf16.gmra.mxu0 %v1446
    %v7195 = vpop.f32.mrf.mxu0
    %v7196 = vadd.f32 %v7162, %v7195
    %v7197 = vpop.f32.mrf.mxu0
    %v7198 = vadd.f32 %v7164, %v7197
    %7199 = vmatmul.bf16.gmra.mxu0 %v1450
    %v7200 = vpop.f32.mrf.mxu0
    %v7201 = vadd.f32 %v7167, %v7200
    %v7202 = vpop.f32.mrf.mxu0
    %v7203 = vadd.f32 %v7169, %v7202
    %7204 = vmatmul.bf16.gmra.mxu0 %v1454
    %v7205 = vpop.f32.mrf.mxu0
    %v7206 = vadd.f32 %v7172, %v7205
    %v7207 = vpop.f32.mrf.mxu0
    %v7208 = vadd.f32 %v7174, %v7207
    %7209 = vmatmul.bf16.gmra.mxu0 %v1458
    %v7210 = vpop.f32.mrf.mxu0
    %v7211 = vadd.f32 %v7177, %v7210
    %v7212 = vpop.f32.mrf.mxu0
    %v7213 = vadd.f32 %v7179, %v7212
    %7214 = vmatmul.bf16.gmra.mxu0 %v5419
    %v7215 = vpop.f32.mrf.mxu0
    %v7216 = vadd.f32 %v7182, %v7215
    %v7217 = vpop.f32.mrf.mxu0
    %v7218 = vadd.f32 %v7184, %v7217
    %7219 = vdwg.mxu0
    %7220 = vmatpush.bf16.msra.mxu0 %v6380
    %7221 = vmatpush.bf16.msra.mxu0 %v6374
    %7222 = vmatpush.bf16.msra.mxu0 %v6368
    %7223 = vmatpush.bf16.msra.mxu0 %v6362
    %7224 = vmatpush.bf16.msra.mxu0 %v6356
    %7225 = vmatpush.bf16.msra.mxu0 %v6350
    %7226 = vmatpush.bf16.msra.mxu0 %v6344
    %7227 = vmatpush.bf16.msra.mxu0 %v6338
    %7228 = vmatmul.bf16.gmra.mxu0 %v1447
    %v7229 = vpop.f32.mrf.mxu0
    %v7230 = vadd.f32 %v7196, %v7229
    %v7231 = vpop.f32.mrf.mxu0
    %v7232 = vadd.f32 %v7198, %v7231
    %7233 = vmatmul.bf16.gmra.mxu0 %v1451
    %v7234 = vpop.f32.mrf.mxu0
    %v7235 = vadd.f32 %v7201, %v7234
    %v7236 = vpop.f32.mrf.mxu0
    %v7237 = vadd.f32 %v7203, %v7236
    %7238 = vmatmul.bf16.gmra.mxu0 %v1455
    %v7239 = vpop.f32.mrf.mxu0
    %v7240 = vadd.f32 %v7206, %v7239
    %v7241 = vpop.f32.mrf.mxu0
    %v7242 = vadd.f32 %v7208, %v7241
    %7243 = vmatmul.bf16.gmra.mxu0 %v1459
    %v7244 = vpop.f32.mrf.mxu0
    %v7245 = vadd.f32 %v7211, %v7244
    %v7246 = vpop.f32.mrf.mxu0
    %v7247 = vadd.f32 %v7213, %v7246
    %7248 = vmatmul.bf16.gmra.mxu0 %v5420
    %v7249 = vpop.f32.mrf.mxu0
    %v7250 = vadd.f32 %v7216, %v7249
    %v7251 = vpop.f32.mrf.mxu0
    %v7252 = vadd.f32 %v7218, %v7251
    %7253 = vdwg.mxu0
    %7254 = vmatpush.bf16.msra.mxu0 %v6237
    %7255 = vmatpush.bf16.msra.mxu0 %v6231
    %7256 = vmatpush.bf16.msra.mxu0 %v6225
    %7257 = vmatpush.bf16.msra.mxu0 %v6219
    %7258 = vmatpush.bf16.msra.mxu0 %v6213
    %7259 = vmatpush.bf16.msra.mxu0 %v6207
    %7260 = vmatpush.bf16.msra.mxu0 %v6201
    %7261 = vmatpush.bf16.msra.mxu0 %v6195
    %7262 = vmatmul.bf16.gmra.mxu0 %v1444
    %v7263 = vpop.f32.mrf.mxu0
    %v7264 = vadd.f32 0.0, %v7263
    %v7265 = vpop.f32.mrf.mxu0
    %v7266 = vadd.f32 0.0, %v7265
    %7267 = vmatmul.bf16.gmra.mxu0 %v1448
    %v7268 = vpop.f32.mrf.mxu0
    %v7269 = vadd.f32 0.0, %v7268
    %v7270 = vpop.f32.mrf.mxu0
    %v7271 = vadd.f32 0.0, %v7270
    %7272 = vmatmul.bf16.gmra.mxu0 %v1452
    %v7273 = vpop.f32.mrf.mxu0
    %v7274 = vadd.f32 0.0, %v7273
    %v7275 = vpop.f32.mrf.mxu0
    %v7276 = vadd.f32 0.0, %v7275
    %7277 = vmatmul.bf16.gmra.mxu0 %v1456
    %v7278 = vpop.f32.mrf.mxu0
    %v7279 = vadd.f32 0.0, %v7278
    %v7280 = vpop.f32.mrf.mxu0
    %v7281 = vadd.f32 0.0, %v7280
    %7282 = vmatmul.bf16.gmra.mxu0 %v5417
    %v7283 = vpop.f32.mrf.mxu0
    %v7284 = vadd.f32 0.0, %v7283
    %v7285 = vpop.f32.mrf.mxu0
    %v7286 = vadd.f32 0.0, %v7285
    %7287 = vdwg.mxu0
    %7288 = vmatpush.bf16.msra.mxu0 %v6285
    %7289 = vmatpush.bf16.msra.mxu0 %v6279
    %7290 = vmatpush.bf16.msra.mxu0 %v6273
    %7291 = vmatpush.bf16.msra.mxu0 %v6267
    %7292 = vmatpush.bf16.msra.mxu0 %v6261
    %7293 = vmatpush.bf16.msra.mxu0 %v6255
    %7294 = vmatpush.bf16.msra.mxu0 %v6249
    %7295 = vmatpush.bf16.msra.mxu0 %v6243
    %7296 = vmatmul.bf16.gmra.mxu0 %v1445
    %v7297 = vpop.f32.mrf.mxu0
    %v7298 = vadd.f32 %v7264, %v7297
    %v7299 = vpop.f32.mrf.mxu0
    %v7300 = vadd.f32 %v7266, %v7299
    %7301 = vmatmul.bf16.gmra.mxu0 %v1449
    %v7302 = vpop.f32.mrf.mxu0
    %v7303 = vadd.f32 %v7269, %v7302
    %v7304 = vpop.f32.mrf.mxu0
    %v7305 = vadd.f32 %v7271, %v7304
    %7306 = vmatmul.bf16.gmra.mxu0 %v1453
    %v7307 = vpop.f32.mrf.mxu0
    %v7308 = vadd.f32 %v7274, %v7307
    %v7309 = vpop.f32.mrf.mxu0
    %v7310 = vadd.f32 %v7276, %v7309
    %7311 = vmatmul.bf16.gmra.mxu0 %v1457
    %v7312 = vpop.f32.mrf.mxu0
    %v7313 = vadd.f32 %v7279, %v7312
    %v7314 = vpop.f32.mrf.mxu0
    %v7315 = vadd.f32 %v7281, %v7314
    %7316 = vmatmul.bf16.gmra.mxu0 %v5418
    %v7317 = vpop.f32.mrf.mxu0
    %v7318 = vadd.f32 %v7284, %v7317
    %v7319 = vpop.f32.mrf.mxu0
    %v7320 = vadd.f32 %v7286, %v7319
    %7321 = vdwg.mxu0
    %7322 = vmatpush.bf16.msra.mxu0 %v6333
    %7323 = vmatpush.bf16.msra.mxu0 %v6327
    %7324 = vmatpush.bf16.msra.mxu0 %v6321
    %7325 = vmatpush.bf16.msra.mxu0 %v6315
    %7326 = vmatpush.bf16.msra.mxu0 %v6309
    %7327 = vmatpush.bf16.msra.mxu0 %v6303
    %7328 = vmatpush.bf16.msra.mxu0 %v6297
    %7329 = vmatpush.bf16.msra.mxu0 %v6291
    %7330 = vmatmul.bf16.gmra.mxu0 %v1446
    %v7331 = vpop.f32.mrf.mxu0
    %v7332 = vadd.f32 %v7298, %v7331
    %v7333 = vpop.f32.mrf.mxu0
    %v7334 = vadd.f32 %v7300, %v7333
    %7335 = vmatmul.bf16.gmra.mxu0 %v1450
    %v7336 = vpop.f32.mrf.mxu0
    %v7337 = vadd.f32 %v7303, %v7336
    %v7338 = vpop.f32.mrf.mxu0
    %v7339 = vadd.f32 %v7305, %v7338
    %7340 = vmatmul.bf16.gmra.mxu0 %v1454
    %v7341 = vpop.f32.mrf.mxu0
    %v7342 = vadd.f32 %v7308, %v7341
    %v7343 = vpop.f32.mrf.mxu0
    %v7344 = vadd.f32 %v7310, %v7343
    %7345 = vmatmul.bf16.gmra.mxu0 %v1458
    %v7346 = vpop.f32.mrf.mxu0
    %v7347 = vadd.f32 %v7313, %v7346
    %v7348 = vpop.f32.mrf.mxu0
    %v7349 = vadd.f32 %v7315, %v7348
    %7350 = vmatmul.bf16.gmra.mxu0 %v5419
    %v7351 = vpop.f32.mrf.mxu0
    %v7352 = vadd.f32 %v7318, %v7351
    %v7353 = vpop.f32.mrf.mxu0
    %v7354 = vadd.f32 %v7320, %v7353
    %7355 = vdwg.mxu0
    %7356 = vmatpush.bf16.msra.mxu0 %v6381
    %7357 = vmatpush.bf16.msra.mxu0 %v6375
    %7358 = vmatpush.bf16.msra.mxu0 %v6369
    %7359 = vmatpush.bf16.msra.mxu0 %v6363
    %7360 = vmatpush.bf16.msra.mxu0 %v6357
    %7361 = vmatpush.bf16.msra.mxu0 %v6351
    %7362 = vmatpush.bf16.msra.mxu0 %v6345
    %7363 = vmatpush.bf16.msra.mxu0 %v6339
    %7364 = vmatmul.bf16.gmra.mxu0 %v1447
    %v7365 = vpop.f32.mrf.mxu0
    %v7366 = vadd.f32 %v7332, %v7365
    %v7367 = vpop.f32.mrf.mxu0
    %v7368 = vadd.f32 %v7334, %v7367
    %7369 = vmatmul.bf16.gmra.mxu0 %v1451
    %v7370 = vpop.f32.mrf.mxu0
    %v7371 = vadd.f32 %v7337, %v7370
    %v7372 = vpop.f32.mrf.mxu0
    %v7373 = vadd.f32 %v7339, %v7372
    %7374 = vmatmul.bf16.gmra.mxu0 %v1455
    %v7375 = vpop.f32.mrf.mxu0
    %v7376 = vadd.f32 %v7342, %v7375
    %v7377 = vpop.f32.mrf.mxu0
    %v7378 = vadd.f32 %v7344, %v7377
    %7379 = vmatmul.bf16.gmra.mxu0 %v1459
    %v7380 = vpop.f32.mrf.mxu0
    %v7381 = vadd.f32 %v7347, %v7380
    %v7382 = vpop.f32.mrf.mxu0
    %v7383 = vadd.f32 %v7349, %v7382
    %7384 = vmatmul.bf16.gmra.mxu0 %v5420
    %v7385 = vpop.f32.mrf.mxu0
    %v7386 = vadd.f32 %v7352, %v7385
    %v7387 = vpop.f32.mrf.mxu0
    %v7388 = vadd.f32 %v7354, %v7387
    %7389 = vdwg.mxu0
    %v7390 = vadd.f32 %v4713, %v6686
    %v7391 = vadd.f32 %v4849, %v6822
    %v7392 = vadd.f32 %v4985, %v6958
    %v7393 = vadd.f32 %v5121, %v7094
    %v7394 = vadd.f32 %v5257, %v7230
    %v7395 = vadd.f32 %v5393, %v7366
    %v7396 = vadd.f32 %v4715, %v6688
    %v7397 = vadd.f32 %v4851, %v6824
    %v7398 = vadd.f32 %v4987, %v6960
    %v7399 = vadd.f32 %v5123, %v7096
    %v7400 = vadd.f32 %v5259, %v7232
    %v7401 = vadd.f32 %v5395, %v7368
    %v7402 = vadd.f32 %v4718, %v6691
    %v7403 = vadd.f32 %v4854, %v6827
    %v7404 = vadd.f32 %v4990, %v6963
    %v7405 = vadd.f32 %v5126, %v7099
    %v7406 = vadd.f32 %v5262, %v7235
    %v7407 = vadd.f32 %v5398, %v7371
    %v7408 = vadd.f32 %v4720, %v6693
    %v7409 = vadd.f32 %v4856, %v6829
    %v7410 = vadd.f32 %v4992, %v6965
    %v7411 = vadd.f32 %v5128, %v7101
    %v7412 = vadd.f32 %v5264, %v7237
    %v7413 = vadd.f32 %v5400, %v7373
    %v7414 = vadd.f32 %v4723, %v6696
    %v7415 = vadd.f32 %v4859, %v6832
    %v7416 = vadd.f32 %v4995, %v6968
    %v7417 = vadd.f32 %v5131, %v7104
    %v7418 = vadd.f32 %v5267, %v7240
    %v7419 = vadd.f32 %v5403, %v7376
    %v7420 = vadd.f32 %v4725, %v6698
    %v7421 = vadd.f32 %v4861, %v6834
    %v7422 = vadd.f32 %v4997, %v6970
    %v7423 = vadd.f32 %v5133, %v7106
    %v7424 = vadd.f32 %v5269, %v7242
    %v7425 = vadd.f32 %v5405, %v7378
    %v7426 = vadd.f32 %v4728, %v6701
    %v7427 = vadd.f32 %v4864, %v6837
    %v7428 = vadd.f32 %v5000, %v6973
    %v7429 = vadd.f32 %v5136, %v7109
    %v7430 = vadd.f32 %v5272, %v7245
    %v7431 = vadd.f32 %v5408, %v7381
    %v7432 = vadd.f32 %v4730, %v6703
    %v7433 = vadd.f32 %v4866, %v6839
    %v7434 = vadd.f32 %v5002, %v6975
    %v7435 = vadd.f32 %v5138, %v7111
    %v7436 = vadd.f32 %v5274, %v7247
    %v7437 = vadd.f32 %v5410, %v7383
    %v7438 = vadd.f32 %v4733, %v6706
    %v7439 = vadd.f32 %v4869, %v6842
    %v7440 = vadd.f32 %v5005, %v6978
    %v7441 = vadd.f32 %v5141, %v7114
    %v7442 = vadd.f32 %v5277, %v7250
    %v7443 = vadd.f32 %v5413, %v7386
    %v7444 = vadd.f32 %v4735, %v6708
    %v7445 = vadd.f32 %v4871, %v6844
    %v7446 = vadd.f32 %v5007, %v6980
    %v7447 = vadd.f32 %v5143, %v7116
    %v7448 = vadd.f32 %v5279, %v7252
    %v7449 = vadd.f32 %v5415, %v7388
    %v7450 = vmax.f32 %v7390, %v7393
    %v7451 = vmax.f32 %v7391, %v7394
    %v7452 = vmax.f32 %v7392, %v7395
    %v7453 = vmax.f32 %v7396, %v7399
    %v7454 = vmax.f32 %v7397, %v7400
    %v7455 = vmax.f32 %v7398, %v7401
    %v7456 = vmax.f32 %v7402, %v7405
    %v7457 = vmax.f32 %v7403, %v7406
    %v7458 = vmax.f32 %v7404, %v7407
    %v7459 = vmax.f32 %v7408, %v7411
    %v7460 = vmax.f32 %v7409, %v7412
    %v7461 = vmax.f32 %v7410, %v7413
    %v7462 = vmax.f32 %v7414, %v7417
    %v7463 = vmax.f32 %v7415, %v7418
    %v7464 = vmax.f32 %v7416, %v7419
    %v7465 = vmax.f32 %v7420, %v7423
    %v7466 = vmax.f32 %v7421, %v7424
    %v7467 = vmax.f32 %v7422, %v7425
    %v7468 = vmax.f32 %v7426, %v7429
    %v7469 = vmax.f32 %v7427, %v7430
    %v7470 = vmax.f32 %v7428, %v7431
    %v7471 = vmax.f32 %v7432, %v7435
    %v7472 = vmax.f32 %v7433, %v7436
    %v7473 = vmax.f32 %v7434, %v7437
    %v7474 = vmax.f32 %v7438, %v7441
    %v7475 = vmax.f32 %v7439, %v7442
    %v7476 = vmax.f32 %v7440, %v7443
    %v7477 = vmax.f32 %v7444, %v7447
    %v7478 = vmax.f32 %v7445, %v7448
    %v7479 = vmax.f32 %v7446, %v7449
    %v7480 = vld [vmem:[#allocation7] sm:$0x7]
    %v7482 = vperm.slane %v7480, 0
    %v7483 = vperm.slane %v7480, 1
    %v7484 = vperm.slane %v7480, 2
    %v7488 = vadd.f32 %v7450, %v7482
    %v7489 = vadd.f32 %v7451, %v7483
    %v7490 = vadd.f32 %v7452, %v7484
    %v7491 = vadd.f32 %v7453, %v7482
    %v7492 = vadd.f32 %v7454, %v7483
    %v7493 = vadd.f32 %v7455, %v7484
    %v7494 = vadd.f32 %v7456, %v7482
    %v7495 = vadd.f32 %v7457, %v7483
    %v7496 = vadd.f32 %v7458, %v7484
    %v7497 = vadd.f32 %v7459, %v7482
    %v7498 = vadd.f32 %v7460, %v7483
    %v7499 = vadd.f32 %v7461, %v7484
    %v7500 = vadd.f32 %v7462, %v7482
    %v7501 = vadd.f32 %v7463, %v7483
    %v7502 = vadd.f32 %v7464, %v7484
    %v7503 = vadd.f32 %v7465, %v7482
    %v7504 = vadd.f32 %v7466, %v7483
    %v7505 = vadd.f32 %v7467, %v7484
    %v7506 = vadd.f32 %v7468, %v7482
    %v7507 = vadd.f32 %v7469, %v7483
    %v7508 = vadd.f32 %v7470, %v7484
    %v7509 = vadd.f32 %v7471, %v7482
    %v7510 = vadd.f32 %v7472, %v7483
    %v7511 = vadd.f32 %v7473, %v7484
    %v7512 = vadd.f32 %v7474, %v7482
    %v7513 = vadd.f32 %v7475, %v7483
    %v7514 = vadd.f32 %v7476, %v7484
    %v7515 = vadd.f32 %v7477, %v7482
    %v7516 = vadd.f32 %v7478, %v7483
    %v7517 = vadd.f32 %v7479, %v7484
    %v7518 = vmax.f32 %v7488, 0.0
    %v7519 = vmax.f32 %v7489, 0.0
    %v7520 = vmax.f32 %v7490, 0.0
    %v7521 = vmax.f32 %v7491, 0.0
    %v7522 = vmax.f32 %v7492, 0.0
    %v7523 = vmax.f32 %v7493, 0.0
    %v7524 = vmax.f32 %v7494, 0.0
    %v7525 = vmax.f32 %v7495, 0.0
    %v7526 = vmax.f32 %v7496, 0.0
    %v7527 = vmax.f32 %v7497, 0.0
    %v7528 = vmax.f32 %v7498, 0.0
    %v7529 = vmax.f32 %v7499, 0.0
    %v7530 = vmax.f32 %v7500, 0.0
    %v7531 = vmax.f32 %v7501, 0.0
    %v7532 = vmax.f32 %v7502, 0.0
    %v7533 = vmax.f32 %v7503, 0.0
    %v7534 = vmax.f32 %v7504, 0.0
    %v7535 = vmax.f32 %v7505, 0.0
    %v7536 = vmax.f32 %v7506, 0.0
    %v7537 = vmax.f32 %v7507, 0.0
    %v7538 = vmax.f32 %v7508, 0.0
    %v7539 = vmax.f32 %v7509, 0.0
    %v7540 = vmax.f32 %v7510, 0.0
    %v7541 = vmax.f32 %v7511, 0.0
    %v7542 = vmax.f32 %v7512, 0.0
    %v7543 = vmax.f32 %v7513, 0.0
    %v7544 = vmax.f32 %v7514, 0.0
    %v7545 = vmax.f32 %v7515, 0.0
    %v7546 = vmax.f32 %v7516, 0.0
    %v7547 = vmax.f32 %v7517, 0.0
    %v7548 = vmax.f32 %v7518, %v7521
    %v7549 = vmax.f32 %v7519, %v7522
    %v7550 = vmax.f32 %v7520, %v7523
    %v7551 = vmax.f32 %v7524, %v7527
    %v7552 = vmax.f32 %v7525, %v7528
    %v7553 = vmax.f32 %v7526, %v7529
    %v7554 = vmax.f32 %v7530, %v7533
    %v7555 = vmax.f32 %v7531, %v7534
    %v7556 = vmax.f32 %v7532, %v7535
    %v7557 = vmax.f32 %v7536, %v7539
    %v7558 = vmax.f32 %v7537, %v7540
    %v7559 = vmax.f32 %v7538, %v7541
    %v7560 = vmax.f32 %v7542, %v7545
    %v7561 = vmax.f32 %v7543, %v7546
    %v7562 = vmax.f32 %v7544, %v7547
    %v7563 = vpack.c.bf16 %v7548, %v7548
    %v7564 = vpack.c.bf16 %v7549, %v7549
    %v7565 = vpack.c.bf16 %v7550, %v7550
    %v7566 = vpack.c.bf16 %v7551, %v7551
    %v7567 = vpack.c.bf16 %v7552, %v7552
    %v7568 = vpack.c.bf16 %v7553, %v7553
    %v7569 = vpack.c.bf16 %v7554, %v7554
    %v7570 = vpack.c.bf16 %v7555, %v7555
    %v7571 = vpack.c.bf16 %v7556, %v7556
    %v7572 = vpack.c.bf16 %v7557, %v7557
    %v7573 = vpack.c.bf16 %v7558, %v7558
    %v7574 = vpack.c.bf16 %v7559, %v7559
    %v7575 = vpack.c.bf16 %v7560, %v7560
    %v7576 = vpack.c.bf16 %v7561, %v7561
    %v7577 = vpack.c.bf16 %v7562, %v7562
    %v7578 = vld [vmem:[#allocation9] sm:$0xf]
    %v7579 = vld [vmem:[#allocation9 + $0x4] sm:$0xf]
    %v7580 = vld [vmem:[#allocation9 + $0x8] sm:$0xf]
    %v7581 = vld [vmem:[#allocation9 + $0xc] sm:$0xf]
    %v7582 = vld [vmem:[#allocation9 + $0x10] sm:$0xf]
    %v7583 = vld [vmem:[#allocation9 + $0x14] sm:$0xf]
    %v7584 = vld [vmem:[#allocation9 + $0x18] sm:$0xf]
    %v7585 = vld [vmem:[#allocation9 + $0x1c] sm:$0xf]
    %v7586 = vld [vmem:[#allocation9 + $0x20] sm:$0xf]
    %v7587 = vld [vmem:[#allocation9 + $0x24] sm:$0xf]
    %v7588 = vld [vmem:[#allocation9 + $0x28] sm:$0xf]
    %v7589 = vld [vmem:[#allocation9 + $0x2c] sm:$0xf]
    %v7590 = vld [vmem:[#allocation9 + $0x30] sm:$0xf]
    %v7591 = vld [vmem:[#allocation9 + $0x34] sm:$0xf]
    %v7592 = vld [vmem:[#allocation9 + $0x38] sm:$0xf]
    %v7593 = vld [vmem:[#allocation9 + $0x3c] sm:$0xf]
    %v7594 = vld [vmem:[#allocation9 + $0x40] sm:$0xf]
    %v7595 = vld [vmem:[#allocation9 + $0x44] sm:$0xf]
    %v7596 = vld [vmem:[#allocation9 + $0x48] sm:$0xf]
    %v7597 = vld [vmem:[#allocation9 + $0x4c] sm:$0xf]
    %v7598 = vld [vmem:[#allocation9 + $0x50] sm:$0xf]
    %v7599 = vld [vmem:[#allocation9 + $0x54] sm:$0xf]
    %v7600 = vld [vmem:[#allocation9 + $0x58] sm:$0xf]
    %v7601 = vld [vmem:[#allocation9 + $0x5c] sm:$0xf]
    %v7602 = vld [vmem:[#allocation9 + $0x60] sm:$0xf]
    %v7603 = vld [vmem:[#allocation9 + $0x64] sm:$0xf]
    %v7604 = vld [vmem:[#allocation9 + $0x68] sm:$0xf]
    %v7605 = vld [vmem:[#allocation9 + $0x6c] sm:$0xf]
    %v7606 = vld [vmem:[#allocation9 + $0x70] sm:$0xf]
    %v7607 = vld [vmem:[#allocation9 + $0x74] sm:$0xf]
    %v7608 = vld [vmem:[#allocation9 + $0x78] sm:$0xf]
    %v7609 = vld [vmem:[#allocation9 + $0x7c] sm:$0xf]
    %v7610 = vld [vmem:[#allocation9 + $0x80] sm:$0xf]
    %v7611 = vld [vmem:[#allocation9 + $0x84] sm:$0xf]
    %v7612 = vld [vmem:[#allocation9 + $0x88] sm:$0xf]
    %v7613 = vld [vmem:[#allocation9 + $0x8c] sm:$0xf]
    %v7614 = vld [vmem:[#allocation9 + $0x90] sm:$0xf]
    %v7615 = vld [vmem:[#allocation9 + $0x94] sm:$0xf]
    %v7616 = vld [vmem:[#allocation9 + $0x98] sm:$0xf]
    %v7617 = vld [vmem:[#allocation9 + $0x9c] sm:$0xf]
    %v7618 = vld [vmem:[#allocation9 + $0xa0] sm:$0xf]
    %v7619 = vld [vmem:[#allocation9 + $0xa4] sm:$0xf]
    %v7620 = vld [vmem:[#allocation9 + $0xa8] sm:$0xf]
    %v7621 = vld [vmem:[#allocation9 + $0xac] sm:$0xf]
    %v7622 = vld [vmem:[#allocation9 + $0xb0] sm:$0xf]
    %v7623 = vld [vmem:[#allocation9 + $0xb4] sm:$0xf]
    %v7624 = vld [vmem:[#allocation9 + $0xb8] sm:$0xf]
    %v7625 = vld [vmem:[#allocation9 + $0xbc] sm:$0xf]
    %v7626 = vld [vmem:[#allocation9 + $0xc0] sm:$0xf]
    %v7627 = vld [vmem:[#allocation9 + $0xc4] sm:$0xf]
    %v7628 = vld [vmem:[#allocation9 + $0xc8] sm:$0xf]
    %v7629 = vld [vmem:[#allocation9 + $0xcc] sm:$0xf]
    %v7630 = vld [vmem:[#allocation9 + $0xd0] sm:$0xf]
    %v7631 = vld [vmem:[#allocation9 + $0xd4] sm:$0xf]
    %v7632 = vld [vmem:[#allocation9 + $0xd8] sm:$0xf]
    %v7633 = vld [vmem:[#allocation9 + $0xdc] sm:$0xf]
    %v7634 = vld [vmem:[#allocation9 + $0xe0] sm:$0xf]
    %v7635 = vld [vmem:[#allocation9 + $0xe4] sm:$0xf]
    %v7636 = vld [vmem:[#allocation9 + $0xe8] sm:$0xf]
    %v7637 = vld [vmem:[#allocation9 + $0xec] sm:$0xf]
    %v7638 = vld [vmem:[#allocation9 + $0xf0] sm:$0xf]
    %v7639 = vld [vmem:[#allocation9 + $0xf4] sm:$0xf]
    %v7640 = vld [vmem:[#allocation9 + $0xf8] sm:$0xf]
    %v7641 = vld [vmem:[#allocation9 + $0xfc] sm:$0xf]
    %v7642 = vld [vmem:[#allocation9 + $0x100] sm:$0xf]
    %v7643 = vld [vmem:[#allocation9 + $0x104] sm:$0xf]
    %v7644 = vld [vmem:[#allocation9 + $0x108] sm:$0xf]
    %v7645 = vld [vmem:[#allocation9 + $0x10c] sm:$0xf]
    %v7646 = vld [vmem:[#allocation9 + $0x110] sm:$0xf]
    %v7647 = vld [vmem:[#allocation9 + $0x114] sm:$0xf]
    %v7648 = vld [vmem:[#allocation9 + $0x118] sm:$0xf]
    %v7649 = vld [vmem:[#allocation9 + $0x11c] sm:$0xf]
    %v7650 = vld [vmem:[#allocation9 + $0x120] sm:$0xf]
    %v7651 = vld [vmem:[#allocation9 + $0x124] sm:$0xf]
    %v7652 = vld [vmem:[#allocation9 + $0x128] sm:$0xf]
    %v7653 = vld [vmem:[#allocation9 + $0x12c] sm:$0xf]
    %v7654 = vld [vmem:[#allocation9 + $0x130] sm:$0xf]
    %v7655 = vld [vmem:[#allocation9 + $0x134] sm:$0xf]
    %v7656 = vld [vmem:[#allocation9 + $0x138] sm:$0xf]
    %v7657 = vld [vmem:[#allocation9 + $0x13c] sm:$0xf]
    %v7658 = vld [vmem:[#allocation9 + $0x140] sm:$0xf]
    %v7659 = vld [vmem:[#allocation9 + $0x144] sm:$0xf]
    %v7660 = vld [vmem:[#allocation9 + $0x148] sm:$0xf]
    %v7661 = vld [vmem:[#allocation9 + $0x14c] sm:$0xf]
    %v7662 = vld [vmem:[#allocation9 + $0x150] sm:$0xf]
    %v7663 = vld [vmem:[#allocation9 + $0x154] sm:$0xf]
    %v7664 = vld [vmem:[#allocation9 + $0x158] sm:$0xf]
    %v7665 = vld [vmem:[#allocation9 + $0x15c] sm:$0xf]
    %v7666 = vld [vmem:[#allocation9 + $0x160] sm:$0xf]
    %v7667 = vld [vmem:[#allocation9 + $0x164] sm:$0xf]
    %v7668 = vld [vmem:[#allocation9 + $0x168] sm:$0xf]
    %v7669 = vld [vmem:[#allocation9 + $0x16c] sm:$0xf]
    %v7670 = vld [vmem:[#allocation9 + $0x170] sm:$0xf]
    %v7671 = vld [vmem:[#allocation9 + $0x174] sm:$0xf]
    %v7672 = vld [vmem:[#allocation9 + $0x178] sm:$0xf]
    %v7673 = vld [vmem:[#allocation9 + $0x17c] sm:$0xf]
    %v7674 = vld [vmem:[#allocation9 + $0x180] sm:$0xf]
    %v7675 = vld [vmem:[#allocation9 + $0x184] sm:$0xf]
    %v7676 = vld [vmem:[#allocation9 + $0x188] sm:$0xf]
    %v7677 = vld [vmem:[#allocation9 + $0x18c] sm:$0xf]
    %v7678 = vld [vmem:[#allocation9 + $0x190] sm:$0xf]
    %v7679 = vld [vmem:[#allocation9 + $0x194] sm:$0xf]
    %v7680 = vld [vmem:[#allocation9 + $0x198] sm:$0xf]
    %v7681 = vld [vmem:[#allocation9 + $0x19c] sm:$0xf]
    %v7682 = vld [vmem:[#allocation9 + $0x1a0] sm:$0xf]
    %v7683 = vld [vmem:[#allocation9 + $0x1a4] sm:$0xf]
    %v7684 = vld [vmem:[#allocation9 + $0x1a8] sm:$0xf]
    %v7685 = vld [vmem:[#allocation9 + $0x1ac] sm:$0xf]
    %v7686 = vld [vmem:[#allocation9 + $0x1b0] sm:$0xf]
    %v7687 = vld [vmem:[#allocation9 + $0x1b4] sm:$0xf]
    %v7688 = vld [vmem:[#allocation9 + $0x1b8] sm:$0xf]
    %v7689 = vld [vmem:[#allocation9 + $0x1bc] sm:$0xf]
    %v7690 = vld [vmem:[#allocation9 + $0x1c0] sm:$0xf]
    %v7691 = vld [vmem:[#allocation9 + $0x1c4] sm:$0xf]
    %v7692 = vld [vmem:[#allocation9 + $0x1c8] sm:$0xf]
    %v7693 = vld [vmem:[#allocation9 + $0x1cc] sm:$0xf]
    %v7694 = vld [vmem:[#allocation9 + $0x1d0] sm:$0xf]
    %v7695 = vld [vmem:[#allocation9 + $0x1d4] sm:$0xf]
    %v7696 = vld [vmem:[#allocation9 + $0x1d8] sm:$0xf]
    %v7697 = vld [vmem:[#allocation9 + $0x1dc] sm:$0xf]
    %v7698 = vld [vmem:[#allocation9 + $0x1e0] sm:$0xf]
    %v7699 = vld [vmem:[#allocation9 + $0x1e4] sm:$0xf]
    %v7700 = vld [vmem:[#allocation9 + $0x1e8] sm:$0xf]
    %v7701 = vld [vmem:[#allocation9 + $0x1ec] sm:$0xf]
    %v7702 = vld [vmem:[#allocation9 + $0x1f0] sm:$0xf]
    %v7703 = vld [vmem:[#allocation9 + $0x1f4] sm:$0xf]
    %v7704 = vld [vmem:[#allocation9 + $0x1f8] sm:$0xf]
    %v7705 = vld [vmem:[#allocation9 + $0x1fc] sm:$0xf]
    %v7706 = vld [vmem:[#allocation9 + $0x200] sm:$0xf]
    %v7707 = vld [vmem:[#allocation9 + $0x204] sm:$0xf]
    %v7708 = vld [vmem:[#allocation9 + $0x208] sm:$0xf]
    %v7709 = vld [vmem:[#allocation9 + $0x20c] sm:$0xf]
    %v7710 = vld [vmem:[#allocation9 + $0x210] sm:$0xf]
    %v7711 = vld [vmem:[#allocation9 + $0x214] sm:$0xf]
    %v7712 = vld [vmem:[#allocation9 + $0x218] sm:$0xf]
    %v7713 = vld [vmem:[#allocation9 + $0x21c] sm:$0xf]
    %v7714 = vld [vmem:[#allocation9 + $0x220] sm:$0xf]
    %v7715 = vld [vmem:[#allocation9 + $0x224] sm:$0xf]
    %v7716 = vld [vmem:[#allocation9 + $0x228] sm:$0xf]
    %v7717 = vld [vmem:[#allocation9 + $0x22c] sm:$0xf]
    %v7718 = vld [vmem:[#allocation9 + $0x230] sm:$0xf]
    %v7719 = vld [vmem:[#allocation9 + $0x234] sm:$0xf]
    %v7720 = vld [vmem:[#allocation9 + $0x238] sm:$0xf]
    %v7721 = vld [vmem:[#allocation9 + $0x23c] sm:$0xf]
    %v7722 = vld [vmem:[#allocation9 + $0x240] sm:$0xf]
    %v7723 = vld [vmem:[#allocation9 + $0x244] sm:$0xf]
    %v7724 = vld [vmem:[#allocation9 + $0x248] sm:$0xf]
    %v7725 = vld [vmem:[#allocation9 + $0x24c] sm:$0xf]
    %v7726 = vld [vmem:[#allocation9 + $0x250] sm:$0xf]
    %v7727 = vld [vmem:[#allocation9 + $0x254] sm:$0xf]
    %v7728 = vld [vmem:[#allocation9 + $0x258] sm:$0xf]
    %v7729 = vld [vmem:[#allocation9 + $0x25c] sm:$0xf]
    %v7730 = vld [vmem:[#allocation9 + $0x260] sm:$0xf]
    %v7731 = vld [vmem:[#allocation9 + $0x264] sm:$0xf]
    %v7732 = vld [vmem:[#allocation9 + $0x268] sm:$0xf]
    %v7733 = vld [vmem:[#allocation9 + $0x26c] sm:$0xf]
    %v7734 = vld [vmem:[#allocation9 + $0x270] sm:$0xf]
    %v7735 = vld [vmem:[#allocation9 + $0x274] sm:$0xf]
    %v7736 = vld [vmem:[#allocation9 + $0x278] sm:$0xf]
    %v7737 = vld [vmem:[#allocation9 + $0x27c] sm:$0xf]
    %v7738 = vld [vmem:[#allocation9 + $0x280] sm:$0xf]
    %v7739 = vld [vmem:[#allocation9 + $0x284] sm:$0xf]
    %v7740 = vld [vmem:[#allocation9 + $0x288] sm:$0xf]
    %v7741 = vld [vmem:[#allocation9 + $0x28c] sm:$0xf]
    %v7742 = vld [vmem:[#allocation9 + $0x290] sm:$0xf]
    %v7743 = vld [vmem:[#allocation9 + $0x294] sm:$0xf]
    %v7744 = vld [vmem:[#allocation9 + $0x298] sm:$0xf]
    %v7745 = vld [vmem:[#allocation9 + $0x29c] sm:$0xf]
    %v7746 = vld [vmem:[#allocation9 + $0x2a0] sm:$0xf]
    %v7747 = vld [vmem:[#allocation9 + $0x2a4] sm:$0xf]
    %v7748 = vld [vmem:[#allocation9 + $0x2a8] sm:$0xf]
    %v7749 = vld [vmem:[#allocation9 + $0x2ac] sm:$0xf]
    %v7750 = vld [vmem:[#allocation9 + $0x2b0] sm:$0xf]
    %v7751 = vld [vmem:[#allocation9 + $0x2b4] sm:$0xf]
    %v7752 = vld [vmem:[#allocation9 + $0x2b8] sm:$0xf]
    %v7753 = vld [vmem:[#allocation9 + $0x2bc] sm:$0xf]
    %v7754 = vld [vmem:[#allocation9 + $0x2c0] sm:$0xf]
    %v7755 = vld [vmem:[#allocation9 + $0x2c4] sm:$0xf]
    %v7756 = vld [vmem:[#allocation9 + $0x2c8] sm:$0xf]
    %v7757 = vld [vmem:[#allocation9 + $0x2cc] sm:$0xf]
    %v7758 = vld [vmem:[#allocation9 + $0x2d0] sm:$0xf]
    %v7759 = vld [vmem:[#allocation9 + $0x2d4] sm:$0xf]
    %v7760 = vld [vmem:[#allocation9 + $0x2d8] sm:$0xf]
    %v7761 = vld [vmem:[#allocation9 + $0x2dc] sm:$0xf]
    %v7762 = vld [vmem:[#allocation9 + $0x2e0] sm:$0xf]
    %v7763 = vld [vmem:[#allocation9 + $0x2e4] sm:$0xf]
    %v7764 = vld [vmem:[#allocation9 + $0x2e8] sm:$0xf]
    %v7765 = vld [vmem:[#allocation9 + $0x2ec] sm:$0xf]
    %v7766 = vld [vmem:[#allocation9 + $0x2f0] sm:$0xf]
    %v7767 = vld [vmem:[#allocation9 + $0x2f4] sm:$0xf]
    %v7768 = vld [vmem:[#allocation9 + $0x2f8] sm:$0xf]
    %v7769 = vld [vmem:[#allocation9 + $0x2fc] sm:$0xf]
    %v7770 = vld [vmem:[#allocation9 + $0x300] sm:$0xf]
    %v7771 = vld [vmem:[#allocation9 + $0x304] sm:$0xf]
    %v7772 = vld [vmem:[#allocation9 + $0x308] sm:$0xf]
    %v7773 = vld [vmem:[#allocation9 + $0x30c] sm:$0xf]
    %v7774 = vld [vmem:[#allocation9 + $0x310] sm:$0xf]
    %v7775 = vld [vmem:[#allocation9 + $0x314] sm:$0xf]
    %v7776 = vld [vmem:[#allocation9 + $0x318] sm:$0xf]
    %v7777 = vld [vmem:[#allocation9 + $0x31c] sm:$0xf]
    %v7778 = vld [vmem:[#allocation9 + $0x320] sm:$0xf]
    %v7779 = vld [vmem:[#allocation9 + $0x324] sm:$0xf]
    %v7780 = vld [vmem:[#allocation9 + $0x328] sm:$0xf]
    %v7781 = vld [vmem:[#allocation9 + $0x32c] sm:$0xf]
    %v7782 = vld [vmem:[#allocation9 + $0x330] sm:$0xf]
    %v7783 = vld [vmem:[#allocation9 + $0x334] sm:$0xf]
    %v7784 = vld [vmem:[#allocation9 + $0x338] sm:$0xf]
    %v7785 = vld [vmem:[#allocation9 + $0x33c] sm:$0xf]
    %v7786 = vld [vmem:[#allocation9 + $0x340] sm:$0xf]
    %v7787 = vld [vmem:[#allocation9 + $0x344] sm:$0xf]
    %v7788 = vld [vmem:[#allocation9 + $0x348] sm:$0xf]
    %v7789 = vld [vmem:[#allocation9 + $0x34c] sm:$0xf]
    %v7790 = vld [vmem:[#allocation9 + $0x350] sm:$0xf]
    %v7791 = vld [vmem:[#allocation9 + $0x354] sm:$0xf]
    %v7792 = vld [vmem:[#allocation9 + $0x358] sm:$0xf]
    %v7793 = vld [vmem:[#allocation9 + $0x35c] sm:$0xf]
    %v7794 = vld [vmem:[#allocation9 + $0x360] sm:$0xf]
    %v7795 = vld [vmem:[#allocation9 + $0x364] sm:$0xf]
    %v7796 = vld [vmem:[#allocation9 + $0x368] sm:$0xf]
    %v7797 = vld [vmem:[#allocation9 + $0x36c] sm:$0xf]
    %v7798 = vld [vmem:[#allocation9 + $0x370] sm:$0xf]
    %v7799 = vld [vmem:[#allocation9 + $0x374] sm:$0xf]
    %v7800 = vld [vmem:[#allocation9 + $0x378] sm:$0xf]
    %v7801 = vld [vmem:[#allocation9 + $0x37c] sm:$0xf]
    %v7802 = vld [vmem:[#allocation9 + $0x380] sm:$0xf]
    %v7803 = vld [vmem:[#allocation9 + $0x384] sm:$0xf]
    %v7804 = vld [vmem:[#allocation9 + $0x388] sm:$0xf]
    %v7805 = vld [vmem:[#allocation9 + $0x38c] sm:$0xf]
    %v7806 = vld [vmem:[#allocation9 + $0x390] sm:$0xf]
    %v7807 = vld [vmem:[#allocation9 + $0x394] sm:$0xf]
    %v7808 = vld [vmem:[#allocation9 + $0x398] sm:$0xf]
    %v7809 = vld [vmem:[#allocation9 + $0x39c] sm:$0xf]
    %v7810 = vld [vmem:[#allocation9 + $0x3a0] sm:$0xf]
    %v7811 = vld [vmem:[#allocation9 + $0x3a4] sm:$0xf]
    %v7812 = vld [vmem:[#allocation9 + $0x3a8] sm:$0xf]
    %v7813 = vld [vmem:[#allocation9 + $0x3ac] sm:$0xf]
    %v7814 = vld [vmem:[#allocation9 + $0x3b0] sm:$0xf]
    %v7815 = vld [vmem:[#allocation9 + $0x3b4] sm:$0xf]
    %v7816 = vld [vmem:[#allocation9 + $0x3b8] sm:$0xf]
    %v7817 = vld [vmem:[#allocation9 + $0x3bc] sm:$0xf]
    %v7818 = vld [vmem:[#allocation10] sm:$0x1]
    %v7820 = vperm.slane %v7818, 0
    %v8062 = vunpack.c.l.b16 %v7578
    %v8063 = vunpack.c.l.b16 %v7579
    %v8064 = vunpack.c.l.b16 %v7580
    %v8065 = vunpack.c.l.b16 %v7581
    %v8066 = vunpack.c.l.b16 %v7582
    %v8067 = vunpack.c.l.b16 %v7583
    %v8068 = vunpack.c.l.b16 %v7584
    %v8069 = vunpack.c.l.b16 %v7585
    %v8070 = vunpack.c.l.b16 %v7586
    %v8071 = vunpack.c.l.b16 %v7587
    %v8072 = vunpack.c.l.b16 %v7588
    %v8073 = vunpack.c.l.b16 %v7589
    %v8074 = vunpack.c.l.b16 %v7590
    %v8075 = vunpack.c.l.b16 %v7591
    %v8076 = vunpack.c.l.b16 %v7592
    %v8077 = vunpack.c.l.b16 %v7593
    %v8078 = vunpack.c.l.b16 %v7594
    %v8079 = vunpack.c.l.b16 %v7595
    %v8080 = vunpack.c.l.b16 %v7596
    %v8081 = vunpack.c.l.b16 %v7597
    %v8082 = vunpack.c.l.b16 %v7598
    %v8083 = vunpack.c.l.b16 %v7599
    %v8084 = vunpack.c.l.b16 %v7600
    %v8085 = vunpack.c.l.b16 %v7601
    %v8086 = vunpack.c.l.b16 %v7602
    %v8087 = vunpack.c.l.b16 %v7603
    %v8088 = vunpack.c.l.b16 %v7604
    %v8089 = vunpack.c.l.b16 %v7605
    %v8090 = vunpack.c.l.b16 %v7606
    %v8091 = vunpack.c.l.b16 %v7607
    %v8092 = vunpack.c.l.b16 %v7608
    %v8093 = vunpack.c.l.b16 %v7609
    %v8094 = vunpack.c.l.b16 %v7610
    %v8095 = vunpack.c.l.b16 %v7611
    %v8096 = vunpack.c.l.b16 %v7612
    %v8097 = vunpack.c.l.b16 %v7613
    %v8098 = vunpack.c.l.b16 %v7614
    %v8099 = vunpack.c.l.b16 %v7615
    %v8100 = vunpack.c.l.b16 %v7616
    %v8101 = vunpack.c.l.b16 %v7617
    %v8102 = vunpack.c.l.b16 %v7618
    %v8103 = vunpack.c.l.b16 %v7619
    %v8104 = vunpack.c.l.b16 %v7620
    %v8105 = vunpack.c.l.b16 %v7621
    %v8106 = vunpack.c.l.b16 %v7622
    %v8107 = vunpack.c.l.b16 %v7623
    %v8108 = vunpack.c.l.b16 %v7624
    %v8109 = vunpack.c.l.b16 %v7625
    %v8110 = vunpack.c.l.b16 %v7626
    %v8111 = vunpack.c.l.b16 %v7627
    %v8112 = vunpack.c.l.b16 %v7628
    %v8113 = vunpack.c.l.b16 %v7629
    %v8114 = vunpack.c.l.b16 %v7630
    %v8115 = vunpack.c.l.b16 %v7631
    %v8116 = vunpack.c.l.b16 %v7632
    %v8117 = vunpack.c.l.b16 %v7633
    %v8118 = vunpack.c.l.b16 %v7634
    %v8119 = vunpack.c.l.b16 %v7635
    %v8120 = vunpack.c.l.b16 %v7636
    %v8121 = vunpack.c.l.b16 %v7637
    %v8122 = vunpack.c.l.b16 %v7638
    %v8123 = vunpack.c.l.b16 %v7639
    %v8124 = vunpack.c.l.b16 %v7640
    %v8125 = vunpack.c.l.b16 %v7641
    %v8126 = vunpack.c.l.b16 %v7642
    %v8127 = vunpack.c.l.b16 %v7643
    %v8128 = vunpack.c.l.b16 %v7644
    %v8129 = vunpack.c.l.b16 %v7645
    %v8130 = vunpack.c.l.b16 %v7646
    %v8131 = vunpack.c.l.b16 %v7647
    %v8132 = vunpack.c.l.b16 %v7648
    %v8133 = vunpack.c.l.b16 %v7649
    %v8134 = vunpack.c.l.b16 %v7650
    %v8135 = vunpack.c.l.b16 %v7651
    %v8136 = vunpack.c.l.b16 %v7652
    %v8137 = vunpack.c.l.b16 %v7653
    %v8138 = vunpack.c.l.b16 %v7654
    %v8139 = vunpack.c.l.b16 %v7655
    %v8140 = vunpack.c.l.b16 %v7656
    %v8141 = vunpack.c.l.b16 %v7657
    %v8142 = vunpack.c.l.b16 %v7658
    %v8143 = vunpack.c.l.b16 %v7659
    %v8144 = vunpack.c.l.b16 %v7660
    %v8145 = vunpack.c.l.b16 %v7661
    %v8146 = vunpack.c.l.b16 %v7662
    %v8147 = vunpack.c.l.b16 %v7663
    %v8148 = vunpack.c.l.b16 %v7664
    %v8149 = vunpack.c.l.b16 %v7665
    %v8150 = vunpack.c.l.b16 %v7666
    %v8151 = vunpack.c.l.b16 %v7667
    %v8152 = vunpack.c.l.b16 %v7668
    %v8153 = vunpack.c.l.b16 %v7669
    %v8154 = vunpack.c.l.b16 %v7670
    %v8155 = vunpack.c.l.b16 %v7671
    %v8156 = vunpack.c.l.b16 %v7672
    %v8157 = vunpack.c.l.b16 %v7673
    %v8158 = vunpack.c.l.b16 %v7674
    %v8159 = vunpack.c.l.b16 %v7675
    %v8160 = vunpack.c.l.b16 %v7676
    %v8161 = vunpack.c.l.b16 %v7677
    %v8162 = vunpack.c.l.b16 %v7678
    %v8163 = vunpack.c.l.b16 %v7679
    %v8164 = vunpack.c.l.b16 %v7680
    %v8165 = vunpack.c.l.b16 %v7681
    %v8166 = vunpack.c.l.b16 %v7682
    %v8167 = vunpack.c.l.b16 %v7683
    %v8168 = vunpack.c.l.b16 %v7684
    %v8169 = vunpack.c.l.b16 %v7685
    %v8170 = vunpack.c.l.b16 %v7686
    %v8171 = vunpack.c.l.b16 %v7687
    %v8172 = vunpack.c.l.b16 %v7688
    %v8173 = vunpack.c.l.b16 %v7689
    %v8174 = vunpack.c.l.b16 %v7690
    %v8175 = vunpack.c.l.b16 %v7691
    %v8176 = vunpack.c.l.b16 %v7692
    %v8177 = vunpack.c.l.b16 %v7693
    %v8178 = vunpack.c.l.b16 %v7694
    %v8179 = vunpack.c.l.b16 %v7695
    %v8180 = vunpack.c.l.b16 %v7696
    %v8181 = vunpack.c.l.b16 %v7697
    %v8182 = vunpack.c.l.b16 %v7698
    %v8183 = vunpack.c.l.b16 %v7699
    %v8184 = vunpack.c.l.b16 %v7700
    %v8185 = vunpack.c.l.b16 %v7701
    %v8186 = vunpack.c.l.b16 %v7702
    %v8187 = vunpack.c.l.b16 %v7703
    %v8188 = vunpack.c.l.b16 %v7704
    %v8189 = vunpack.c.l.b16 %v7705
    %v8190 = vunpack.c.l.b16 %v7706
    %v8191 = vunpack.c.l.b16 %v7707
    %v8192 = vunpack.c.l.b16 %v7708
    %v8193 = vunpack.c.l.b16 %v7709
    %v8194 = vunpack.c.l.b16 %v7710
    %v8195 = vunpack.c.l.b16 %v7711
    %v8196 = vunpack.c.l.b16 %v7712
    %v8197 = vunpack.c.l.b16 %v7713
    %v8198 = vunpack.c.l.b16 %v7714
    %v8199 = vunpack.c.l.b16 %v7715
    %v8200 = vunpack.c.l.b16 %v7716
    %v8201 = vunpack.c.l.b16 %v7717
    %v8202 = vunpack.c.l.b16 %v7718
    %v8203 = vunpack.c.l.b16 %v7719
    %v8204 = vunpack.c.l.b16 %v7720
    %v8205 = vunpack.c.l.b16 %v7721
    %v8206 = vunpack.c.l.b16 %v7722
    %v8207 = vunpack.c.l.b16 %v7723
    %v8208 = vunpack.c.l.b16 %v7724
    %v8209 = vunpack.c.l.b16 %v7725
    %v8210 = vunpack.c.l.b16 %v7726
    %v8211 = vunpack.c.l.b16 %v7727
    %v8212 = vunpack.c.l.b16 %v7728
    %v8213 = vunpack.c.l.b16 %v7729
    %v8214 = vunpack.c.l.b16 %v7730
    %v8215 = vunpack.c.l.b16 %v7731
    %v8216 = vunpack.c.l.b16 %v7732
    %v8217 = vunpack.c.l.b16 %v7733
    %v8218 = vunpack.c.l.b16 %v7734
    %v8219 = vunpack.c.l.b16 %v7735
    %v8220 = vunpack.c.l.b16 %v7736
    %v8221 = vunpack.c.l.b16 %v7737
    %v8222 = vunpack.c.l.b16 %v7738
    %v8223 = vunpack.c.l.b16 %v7739
    %v8224 = vunpack.c.l.b16 %v7740
    %v8225 = vunpack.c.l.b16 %v7741
    %v8226 = vunpack.c.l.b16 %v7742
    %v8227 = vunpack.c.l.b16 %v7743
    %v8228 = vunpack.c.l.b16 %v7744
    %v8229 = vunpack.c.l.b16 %v7745
    %v8230 = vunpack.c.l.b16 %v7746
    %v8231 = vunpack.c.l.b16 %v7747
    %v8232 = vunpack.c.l.b16 %v7748
    %v8233 = vunpack.c.l.b16 %v7749
    %v8234 = vunpack.c.l.b16 %v7750
    %v8235 = vunpack.c.l.b16 %v7751
    %v8236 = vunpack.c.l.b16 %v7752
    %v8237 = vunpack.c.l.b16 %v7753
    %v8238 = vunpack.c.l.b16 %v7754
    %v8239 = vunpack.c.l.b16 %v7755
    %v8240 = vunpack.c.l.b16 %v7756
    %v8241 = vunpack.c.l.b16 %v7757
    %v8242 = vunpack.c.l.b16 %v7758
    %v8243 = vunpack.c.l.b16 %v7759
    %v8244 = vunpack.c.l.b16 %v7760
    %v8245 = vunpack.c.l.b16 %v7761
    %v8246 = vunpack.c.l.b16 %v7762
    %v8247 = vunpack.c.l.b16 %v7763
    %v8248 = vunpack.c.l.b16 %v7764
    %v8249 = vunpack.c.l.b16 %v7765
    %v8250 = vunpack.c.l.b16 %v7766
    %v8251 = vunpack.c.l.b16 %v7767
    %v8252 = vunpack.c.l.b16 %v7768
    %v8253 = vunpack.c.l.b16 %v7769
    %v8254 = vunpack.c.l.b16 %v7770
    %v8255 = vunpack.c.l.b16 %v7771
    %v8256 = vunpack.c.l.b16 %v7772
    %v8257 = vunpack.c.l.b16 %v7773
    %v8258 = vunpack.c.l.b16 %v7774
    %v8259 = vunpack.c.l.b16 %v7775
    %v8260 = vunpack.c.l.b16 %v7776
    %v8261 = vunpack.c.l.b16 %v7777
    %v8262 = vunpack.c.l.b16 %v7778
    %v8263 = vunpack.c.l.b16 %v7779
    %v8264 = vunpack.c.l.b16 %v7780
    %v8265 = vunpack.c.l.b16 %v7781
    %v8266 = vunpack.c.l.b16 %v7782
    %v8267 = vunpack.c.l.b16 %v7783
    %v8268 = vunpack.c.l.b16 %v7784
    %v8269 = vunpack.c.l.b16 %v7785
    %v8270 = vunpack.c.l.b16 %v7786
    %v8271 = vunpack.c.l.b16 %v7787
    %v8272 = vunpack.c.l.b16 %v7788
    %v8273 = vunpack.c.l.b16 %v7789
    %v8274 = vunpack.c.l.b16 %v7790
    %v8275 = vunpack.c.l.b16 %v7791
    %v8276 = vunpack.c.l.b16 %v7792
    %v8277 = vunpack.c.l.b16 %v7793
    %v8278 = vunpack.c.l.b16 %v7794
    %v8279 = vunpack.c.l.b16 %v7795
    %v8280 = vunpack.c.l.b16 %v7796
    %v8281 = vunpack.c.l.b16 %v7797
    %v8282 = vunpack.c.l.b16 %v7798
    %v8283 = vunpack.c.l.b16 %v7799
    %v8284 = vunpack.c.l.b16 %v7800
    %v8285 = vunpack.c.l.b16 %v7801
    %v8286 = vunpack.c.l.b16 %v7802
    %v8287 = vunpack.c.l.b16 %v7803
    %v8288 = vunpack.c.l.b16 %v7804
    %v8289 = vunpack.c.l.b16 %v7805
    %v8290 = vunpack.c.l.b16 %v7806
    %v8291 = vunpack.c.l.b16 %v7807
    %v8292 = vunpack.c.l.b16 %v7808
    %v8293 = vunpack.c.l.b16 %v7809
    %v8294 = vunpack.c.l.b16 %v7810
    %v8295 = vunpack.c.l.b16 %v7811
    %v8296 = vunpack.c.l.b16 %v7812
    %v8297 = vunpack.c.l.b16 %v7813
    %v8298 = vunpack.c.l.b16 %v7814
    %v8299 = vunpack.c.l.b16 %v7815
    %v8300 = vunpack.c.l.b16 %v7816
    %v8301 = vunpack.c.l.b16 %v7817
    %v8302 = vpack.c.b16 %v8063, %v8062
    %v8303 = vpack.c.b16 %v8065, %v8064
    %v8304 = vpack.c.b16 %v8067, %v8066
    %v8305 = vpack.c.b16 %v8069, %v8068
    %v8306 = vpack.c.b16 %v8071, %v8070
    %v8307 = vpack.c.b16 %v8073, %v8072
    %v8308 = vpack.c.b16 %v8075, %v8074
    %v8309 = vpack.c.b16 %v8077, %v8076
    %v8310 = vpack.c.b16 %v8079, %v8078
    %v8311 = vpack.c.b16 %v8081, %v8080
    %v8312 = vpack.c.b16 %v8083, %v8082
    %v8313 = vpack.c.b16 %v8085, %v8084
    %v8314 = vpack.c.b16 %v8087, %v8086
    %v8315 = vpack.c.b16 %v8089, %v8088
    %v8316 = vpack.c.b16 %v8091, %v8090
    %v8317 = vpack.c.b16 %v8093, %v8092
    %v8318 = vpack.c.b16 %v8095, %v8094
    %v8319 = vpack.c.b16 %v8097, %v8096
    %v8320 = vpack.c.b16 %v8099, %v8098
    %v8321 = vpack.c.b16 %v8101, %v8100
    %v8322 = vpack.c.b16 %v8103, %v8102
    %v8323 = vpack.c.b16 %v8105, %v8104
    %v8324 = vpack.c.b16 %v8107, %v8106
    %v8325 = vpack.c.b16 %v8109, %v8108
    %v8326 = vpack.c.b16 %v8111, %v8110
    %v8327 = vpack.c.b16 %v8113, %v8112
    %v8328 = vpack.c.b16 %v8115, %v8114
    %v8329 = vpack.c.b16 %v8117, %v8116
    %v8330 = vpack.c.b16 %v8119, %v8118
    %v8331 = vpack.c.b16 %v8121, %v8120
    %v8332 = vpack.c.b16 %v8123, %v8122
    %v8333 = vpack.c.b16 %v8125, %v8124
    %v8334 = vpack.c.b16 %v8127, %v8126
    %v8335 = vpack.c.b16 %v8129, %v8128
    %v8336 = vpack.c.b16 %v8131, %v8130
    %v8337 = vpack.c.b16 %v8133, %v8132
    %v8338 = vpack.c.b16 %v8135, %v8134
    %v8339 = vpack.c.b16 %v8137, %v8136
    %v8340 = vpack.c.b16 %v8139, %v8138
    %v8341 = vpack.c.b16 %v8141, %v8140
    %v8342 = vpack.c.b16 %v8143, %v8142
    %v8343 = vpack.c.b16 %v8145, %v8144
    %v8344 = vpack.c.b16 %v8147, %v8146
    %v8345 = vpack.c.b16 %v8149, %v8148
    %v8346 = vpack.c.b16 %v8151, %v8150
    %v8347 = vpack.c.b16 %v8153, %v8152
    %v8348 = vpack.c.b16 %v8155, %v8154
    %v8349 = vpack.c.b16 %v8157, %v8156
    %v8350 = vpack.c.b16 %v8159, %v8158
    %v8351 = vpack.c.b16 %v8161, %v8160
    %v8352 = vpack.c.b16 %v8163, %v8162
    %v8353 = vpack.c.b16 %v8165, %v8164
    %v8354 = vpack.c.b16 %v8167, %v8166
    %v8355 = vpack.c.b16 %v8169, %v8168
    %v8356 = vpack.c.b16 %v8171, %v8170
    %v8357 = vpack.c.b16 %v8173, %v8172
    %v8358 = vpack.c.b16 %v8175, %v8174
    %v8359 = vpack.c.b16 %v8177, %v8176
    %v8360 = vpack.c.b16 %v8179, %v8178
    %v8361 = vpack.c.b16 %v8181, %v8180
    %v8362 = vpack.c.b16 %v8183, %v8182
    %v8363 = vpack.c.b16 %v8185, %v8184
    %v8364 = vpack.c.b16 %v8187, %v8186
    %v8365 = vpack.c.b16 %v8189, %v8188
    %v8366 = vpack.c.b16 %v8191, %v8190
    %v8367 = vpack.c.b16 %v8193, %v8192
    %v8368 = vpack.c.b16 %v8195, %v8194
    %v8369 = vpack.c.b16 %v8197, %v8196
    %v8370 = vpack.c.b16 %v8199, %v8198
    %v8371 = vpack.c.b16 %v8201, %v8200
    %v8372 = vpack.c.b16 %v8203, %v8202
    %v8373 = vpack.c.b16 %v8205, %v8204
    %v8374 = vpack.c.b16 %v8207, %v8206
    %v8375 = vpack.c.b16 %v8209, %v8208
    %v8376 = vpack.c.b16 %v8211, %v8210
    %v8377 = vpack.c.b16 %v8213, %v8212
    %v8378 = vpack.c.b16 %v8215, %v8214
    %v8379 = vpack.c.b16 %v8217, %v8216
    %v8380 = vpack.c.b16 %v8219, %v8218
    %v8381 = vpack.c.b16 %v8221, %v8220
    %v8382 = vpack.c.b16 %v8223, %v8222
    %v8383 = vpack.c.b16 %v8225, %v8224
    %v8384 = vpack.c.b16 %v8227, %v8226
    %v8385 = vpack.c.b16 %v8229, %v8228
    %v8386 = vpack.c.b16 %v8231, %v8230
    %v8387 = vpack.c.b16 %v8233, %v8232
    %v8388 = vpack.c.b16 %v8235, %v8234
    %v8389 = vpack.c.b16 %v8237, %v8236
    %v8390 = vpack.c.b16 %v8239, %v8238
    %v8391 = vpack.c.b16 %v8241, %v8240
    %v8392 = vpack.c.b16 %v8243, %v8242
    %v8393 = vpack.c.b16 %v8245, %v8244
    %v8394 = vpack.c.b16 %v8247, %v8246
    %v8395 = vpack.c.b16 %v8249, %v8248
    %v8396 = vpack.c.b16 %v8251, %v8250
    %v8397 = vpack.c.b16 %v8253, %v8252
    %v8398 = vpack.c.b16 %v8255, %v8254
    %v8399 = vpack.c.b16 %v8257, %v8256
    %v8400 = vpack.c.b16 %v8259, %v8258
    %v8401 = vpack.c.b16 %v8261, %v8260
    %v8402 = vpack.c.b16 %v8263, %v8262
    %v8403 = vpack.c.b16 %v8265, %v8264
    %v8404 = vpack.c.b16 %v8267, %v8266
    %v8405 = vpack.c.b16 %v8269, %v8268
    %v8406 = vpack.c.b16 %v8271, %v8270
    %v8407 = vpack.c.b16 %v8273, %v8272
    %v8408 = vpack.c.b16 %v8275, %v8274
    %v8409 = vpack.c.b16 %v8277, %v8276
    %v8410 = vpack.c.b16 %v8279, %v8278
    %v8411 = vpack.c.b16 %v8281, %v8280
    %v8412 = vpack.c.b16 %v8283, %v8282
    %v8413 = vpack.c.b16 %v8285, %v8284
    %v8414 = vpack.c.b16 %v8287, %v8286
    %v8415 = vpack.c.b16 %v8289, %v8288
    %v8416 = vpack.c.b16 %v8291, %v8290
    %v8417 = vpack.c.b16 %v8293, %v8292
    %v8418 = vpack.c.b16 %v8295, %v8294
    %v8419 = vpack.c.b16 %v8297, %v8296
    %v8420 = vpack.c.b16 %v8299, %v8298
    %v8421 = vpack.c.b16 %v8301, %v8300
    %8542 = vmatpush.bf16.msra.mxu0 %v8309
    %8543 = vmatpush.bf16.msra.mxu0 %v8308
    %8544 = vmatpush.bf16.msra.mxu0 %v8307
    %8545 = vmatpush.bf16.msra.mxu0 %v8306
    %8546 = vmatpush.bf16.msra.mxu0 %v8305
    %8547 = vmatpush.bf16.msra.mxu0 %v8304
    %8548 = vmatpush.bf16.msra.mxu0 %v8303
    %8549 = vmatpush.bf16.msra.mxu0 %v8302
    %8550 = vmatmul.bf16.gmra.mxu0 %v7563
    %v8551 = vpop.f32.mrf.mxu0
    %v8552 = vadd.f32 %v7820, %v8551
    %v8553 = vpop.f32.mrf.mxu0
    %8554 = vdwg.mxu0
    %8555 = vmatpush.bf16.msra.mxu0 %v8317
    %8556 = vmatpush.bf16.msra.mxu0 %v8316
    %8557 = vmatpush.bf16.msra.mxu0 %v8315
    %8558 = vmatpush.bf16.msra.mxu0 %v8314
    %8559 = vmatpush.bf16.msra.mxu0 %v8313
    %8560 = vmatpush.bf16.msra.mxu0 %v8312
    %8561 = vmatpush.bf16.msra.mxu0 %v8311
    %8562 = vmatpush.bf16.msra.mxu0 %v8310
    %8563 = vmatmul.bf16.gmra.mxu0 %v7564
    %v8564 = vpop.f32.mrf.mxu0
    %v8565 = vadd.f32 %v8552, %v8564
    %v8566 = vpop.f32.mrf.mxu0
    %8567 = vdwg.mxu0
    %8568 = vmatpush.bf16.msra.mxu0 %v8325
    %8569 = vmatpush.bf16.msra.mxu0 %v8324
    %8570 = vmatpush.bf16.msra.mxu0 %v8323
    %8571 = vmatpush.bf16.msra.mxu0 %v8322
    %8572 = vmatpush.bf16.msra.mxu0 %v8321
    %8573 = vmatpush.bf16.msra.mxu0 %v8320
    %8574 = vmatpush.bf16.msra.mxu0 %v8319
    %8575 = vmatpush.bf16.msra.mxu0 %v8318
    %8576 = vmatmul.bf16.gmra.mxu0 %v7565
    %v8577 = vpop.f32.mrf.mxu0
    %v8578 = vadd.f32 %v8565, %v8577
    %v8579 = vpop.f32.mrf.mxu0
    %8580 = vdwg.mxu0
    %8581 = vmatpush.bf16.msra.mxu0 %v8333
    %8582 = vmatpush.bf16.msra.mxu0 %v8332
    %8583 = vmatpush.bf16.msra.mxu0 %v8331
    %8584 = vmatpush.bf16.msra.mxu0 %v8330
    %8585 = vmatpush.bf16.msra.mxu0 %v8329
    %8586 = vmatpush.bf16.msra.mxu0 %v8328
    %8587 = vmatpush.bf16.msra.mxu0 %v8327
    %8588 = vmatpush.bf16.msra.mxu0 %v8326
    %8589 = vmatmul.bf16.gmra.mxu0 %v7566
    %v8590 = vpop.f32.mrf.mxu0
    %v8591 = vadd.f32 %v8578, %v8590
    %v8592 = vpop.f32.mrf.mxu0
    %8593 = vdwg.mxu0
    %8594 = vmatpush.bf16.msra.mxu0 %v8341
    %8595 = vmatpush.bf16.msra.mxu0 %v8340
    %8596 = vmatpush.bf16.msra.mxu0 %v8339
    %8597 = vmatpush.bf16.msra.mxu0 %v8338
    %8598 = vmatpush.bf16.msra.mxu0 %v8337
    %8599 = vmatpush.bf16.msra.mxu0 %v8336
    %8600 = vmatpush.bf16.msra.mxu0 %v8335
    %8601 = vmatpush.bf16.msra.mxu0 %v8334
    %8602 = vmatmul.bf16.gmra.mxu0 %v7567
    %v8603 = vpop.f32.mrf.mxu0
    %v8604 = vadd.f32 %v8591, %v8603
    %v8605 = vpop.f32.mrf.mxu0
    %8606 = vdwg.mxu0
    %8607 = vmatpush.bf16.msra.mxu0 %v8349
    %8608 = vmatpush.bf16.msra.mxu0 %v8348
    %8609 = vmatpush.bf16.msra.mxu0 %v8347
    %8610 = vmatpush.bf16.msra.mxu0 %v8346
    %8611 = vmatpush.bf16.msra.mxu0 %v8345
    %8612 = vmatpush.bf16.msra.mxu0 %v8344
    %8613 = vmatpush.bf16.msra.mxu0 %v8343
    %8614 = vmatpush.bf16.msra.mxu0 %v8342
    %8615 = vmatmul.bf16.gmra.mxu0 %v7568
    %v8616 = vpop.f32.mrf.mxu0
    %v8617 = vadd.f32 %v8604, %v8616
    %v8618 = vpop.f32.mrf.mxu0
    %8619 = vdwg.mxu0
    %8620 = vmatpush.bf16.msra.mxu0 %v8357
    %8621 = vmatpush.bf16.msra.mxu0 %v8356
    %8622 = vmatpush.bf16.msra.mxu0 %v8355
    %8623 = vmatpush.bf16.msra.mxu0 %v8354
    %8624 = vmatpush.bf16.msra.mxu0 %v8353
    %8625 = vmatpush.bf16.msra.mxu0 %v8352
    %8626 = vmatpush.bf16.msra.mxu0 %v8351
    %8627 = vmatpush.bf16.msra.mxu0 %v8350
    %8628 = vmatmul.bf16.gmra.mxu0 %v7569
    %v8629 = vpop.f32.mrf.mxu0
    %v8630 = vadd.f32 %v8617, %v8629
    %v8631 = vpop.f32.mrf.mxu0
    %8632 = vdwg.mxu0
    %8633 = vmatpush.bf16.msra.mxu0 %v8365
    %8634 = vmatpush.bf16.msra.mxu0 %v8364
    %8635 = vmatpush.bf16.msra.mxu0 %v8363
    %8636 = vmatpush.bf16.msra.mxu0 %v8362
    %8637 = vmatpush.bf16.msra.mxu0 %v8361
    %8638 = vmatpush.bf16.msra.mxu0 %v8360
    %8639 = vmatpush.bf16.msra.mxu0 %v8359
    %8640 = vmatpush.bf16.msra.mxu0 %v8358
    %8641 = vmatmul.bf16.gmra.mxu0 %v7570
    %v8642 = vpop.f32.mrf.mxu0
    %v8643 = vadd.f32 %v8630, %v8642
    %v8644 = vpop.f32.mrf.mxu0
    %8645 = vdwg.mxu0
    %8646 = vmatpush.bf16.msra.mxu0 %v8373
    %8647 = vmatpush.bf16.msra.mxu0 %v8372
    %8648 = vmatpush.bf16.msra.mxu0 %v8371
    %8649 = vmatpush.bf16.msra.mxu0 %v8370
    %8650 = vmatpush.bf16.msra.mxu0 %v8369
    %8651 = vmatpush.bf16.msra.mxu0 %v8368
    %8652 = vmatpush.bf16.msra.mxu0 %v8367
    %8653 = vmatpush.bf16.msra.mxu0 %v8366
    %8654 = vmatmul.bf16.gmra.mxu0 %v7571
    %v8655 = vpop.f32.mrf.mxu0
    %v8656 = vadd.f32 %v8643, %v8655
    %v8657 = vpop.f32.mrf.mxu0
    %8658 = vdwg.mxu0
    %8659 = vmatpush.bf16.msra.mxu0 %v8381
    %8660 = vmatpush.bf16.msra.mxu0 %v8380
    %8661 = vmatpush.bf16.msra.mxu0 %v8379
    %8662 = vmatpush.bf16.msra.mxu0 %v8378
    %8663 = vmatpush.bf16.msra.mxu0 %v8377
    %8664 = vmatpush.bf16.msra.mxu0 %v8376
    %8665 = vmatpush.bf16.msra.mxu0 %v8375
    %8666 = vmatpush.bf16.msra.mxu0 %v8374
    %8667 = vmatmul.bf16.gmra.mxu0 %v7572
    %v8668 = vpop.f32.mrf.mxu0
    %v8669 = vadd.f32 %v8656, %v8668
    %v8670 = vpop.f32.mrf.mxu0
    %8671 = vdwg.mxu0
    %8672 = vmatpush.bf16.msra.mxu0 %v8389
    %8673 = vmatpush.bf16.msra.mxu0 %v8388
    %8674 = vmatpush.bf16.msra.mxu0 %v8387
    %8675 = vmatpush.bf16.msra.mxu0 %v8386
    %8676 = vmatpush.bf16.msra.mxu0 %v8385
    %8677 = vmatpush.bf16.msra.mxu0 %v8384
    %8678 = vmatpush.bf16.msra.mxu0 %v8383
    %8679 = vmatpush.bf16.msra.mxu0 %v8382
    %8680 = vmatmul.bf16.gmra.mxu0 %v7573
    %v8681 = vpop.f32.mrf.mxu0
    %v8682 = vadd.f32 %v8669, %v8681
    %v8683 = vpop.f32.mrf.mxu0
    %8684 = vdwg.mxu0
    %8685 = vmatpush.bf16.msra.mxu0 %v8397
    %8686 = vmatpush.bf16.msra.mxu0 %v8396
    %8687 = vmatpush.bf16.msra.mxu0 %v8395
    %8688 = vmatpush.bf16.msra.mxu0 %v8394
    %8689 = vmatpush.bf16.msra.mxu0 %v8393
    %8690 = vmatpush.bf16.msra.mxu0 %v8392
    %8691 = vmatpush.bf16.msra.mxu0 %v8391
    %8692 = vmatpush.bf16.msra.mxu0 %v8390
    %8693 = vmatmul.bf16.gmra.mxu0 %v7574
    %v8694 = vpop.f32.mrf.mxu0
    %v8695 = vadd.f32 %v8682, %v8694
    %v8696 = vpop.f32.mrf.mxu0
    %8697 = vdwg.mxu0
    %8698 = vmatpush.bf16.msra.mxu0 %v8405
    %8699 = vmatpush.bf16.msra.mxu0 %v8404
    %8700 = vmatpush.bf16.msra.mxu0 %v8403
    %8701 = vmatpush.bf16.msra.mxu0 %v8402
    %8702 = vmatpush.bf16.msra.mxu0 %v8401
    %8703 = vmatpush.bf16.msra.mxu0 %v8400
    %8704 = vmatpush.bf16.msra.mxu0 %v8399
    %8705 = vmatpush.bf16.msra.mxu0 %v8398
    %8706 = vmatmul.bf16.gmra.mxu0 %v7575
    %v8707 = vpop.f32.mrf.mxu0
    %v8708 = vadd.f32 %v8695, %v8707
    %v8709 = vpop.f32.mrf.mxu0
    %8710 = vdwg.mxu0
    %8711 = vmatpush.bf16.msra.mxu0 %v8413
    %8712 = vmatpush.bf16.msra.mxu0 %v8412
    %8713 = vmatpush.bf16.msra.mxu0 %v8411
    %8714 = vmatpush.bf16.msra.mxu0 %v8410
    %8715 = vmatpush.bf16.msra.mxu0 %v8409
    %8716 = vmatpush.bf16.msra.mxu0 %v8408
    %8717 = vmatpush.bf16.msra.mxu0 %v8407
    %8718 = vmatpush.bf16.msra.mxu0 %v8406
    %8719 = vmatmul.bf16.gmra.mxu0 %v7576
    %v8720 = vpop.f32.mrf.mxu0
    %v8721 = vadd.f32 %v8708, %v8720
    %v8722 = vpop.f32.mrf.mxu0
    %8723 = vdwg.mxu0
    %8724 = vmatpush.bf16.msra.mxu0 %v8421
    %8725 = vmatpush.bf16.msra.mxu0 %v8420
    %8726 = vmatpush.bf16.msra.mxu0 %v8419
    %8727 = vmatpush.bf16.msra.mxu0 %v8418
    %8728 = vmatpush.bf16.msra.mxu0 %v8417
    %8729 = vmatpush.bf16.msra.mxu0 %v8416
    %8730 = vmatpush.bf16.msra.mxu0 %v8415
    %8731 = vmatpush.bf16.msra.mxu0 %v8414
    %8732 = vmatmul.bf16.gmra.mxu0 %v7577
    %v8733 = vpop.f32.mrf.mxu0
    %v8734 = vadd.f32 %v8721, %v8733
    %v8735 = vpop.f32.mrf.mxu0
    %8736 = vdwg.mxu0
    %v8737 = vmax.f32 %v8734, 0.0
    %v8738 = vpack.c.bf16 %v8737, %v8737
    %v8739 = vld [vmem:[#allocation12] sm:$0xf]
    %v8740 = vld [vmem:[#allocation12 + $0x4] sm:$0xf]
    %v8741 = vld [vmem:[#allocation12 + $0x8] sm:$0xf]
    %v8742 = vld [vmem:[#allocation12 + $0xc] sm:$0xf]
    %v8743 = vld [vmem:[#allocation12 + $0x10] sm:$0xf]
    %v8744 = vld [vmem:[#allocation12 + $0x14] sm:$0xf]
    %v8745 = vld [vmem:[#allocation12 + $0x18] sm:$0xf]
    %v8746 = vld [vmem:[#allocation12 + $0x1c] sm:$0xf]
    %v8747 = vld [vmem:[#allocation12 + $0x20] sm:$0xf]
    %v8748 = vld [vmem:[#allocation12 + $0x24] sm:$0xf]
    %v8749 = vld [vmem:[#allocation12 + $0x28] sm:$0xf]
    %v8750 = vld [vmem:[#allocation12 + $0x2c] sm:$0xf]
    %v8751 = vld [vmem:[#allocation12 + $0x30] sm:$0xf]
    %v8752 = vld [vmem:[#allocation12 + $0x34] sm:$0xf]
    %v8753 = vld [vmem:[#allocation12 + $0x38] sm:$0xf]
    %v8754 = vld [vmem:[#allocation12 + $0x3c] sm:$0xf]
    %v8755 = vld [vmem:[#allocation13] sm:$0x1]
    %v8757 = vperm.slane %v8755, 0
    %v8775 = vunpack.c.l.b16 %v8739
    %v8776 = vunpack.c.l.b16 %v8740
    %v8777 = vunpack.c.l.b16 %v8741
    %v8778 = vunpack.c.l.b16 %v8742
    %v8779 = vunpack.c.l.b16 %v8743
    %v8780 = vunpack.c.l.b16 %v8744
    %v8781 = vunpack.c.l.b16 %v8745
    %v8782 = vunpack.c.l.b16 %v8746
    %v8783 = vunpack.c.l.b16 %v8747
    %v8784 = vunpack.c.l.b16 %v8748
    %v8785 = vunpack.c.l.b16 %v8749
    %v8786 = vunpack.c.l.b16 %v8750
    %v8787 = vunpack.c.l.b16 %v8751
    %v8788 = vunpack.c.l.b16 %v8752
    %v8789 = vunpack.c.l.b16 %v8753
    %v8790 = vunpack.c.l.b16 %v8754
    %v8791 = vpack.c.b16 %v8776, %v8775
    %v8792 = vpack.c.b16 %v8778, %v8777
    %v8793 = vpack.c.b16 %v8780, %v8779
    %v8794 = vpack.c.b16 %v8782, %v8781
    %v8795 = vpack.c.b16 %v8784, %v8783
    %v8796 = vpack.c.b16 %v8786, %v8785
    %v8797 = vpack.c.b16 %v8788, %v8787
    %v8798 = vpack.c.b16 %v8790, %v8789
    %8807 = vmatpush.bf16.msra.mxu0 %v8798
    %8808 = vmatpush.bf16.msra.mxu0 %v8797
    %8809 = vmatpush.bf16.msra.mxu0 %v8796
    %8810 = vmatpush.bf16.msra.mxu0 %v8795
    %8811 = vmatpush.bf16.msra.mxu0 %v8794
    %8812 = vmatpush.bf16.msra.mxu0 %v8793
    %8813 = vmatpush.bf16.msra.mxu0 %v8792
    %8814 = vmatpush.bf16.msra.mxu0 %v8791
    %8815 = vmatmul.bf16.gmra.mxu0 %v8738
    %v8816 = vpop.f32.mrf.mxu0
    %v8817 = vadd.f32 %v8757, %v8816
    %v8818 = vpop.f32.mrf.mxu0
    %8819 = vdwg.mxu0
    %8820 = vst [vmem:[%s9] sm:$0xff] %v8817
    // Predicated region
    $region70: #{net_forward.1} parent=1 // pred_check
      _
    $region71: #{net_forward.1} parent=1 // pred_check_branch
      %8822 = sbr.rel (0) target = $region73
    $region72: #{net_forward.1} parent=1 // pred_region
      _
    $region73: #{net_forward.1} parent=1 // pred_fallthru
      _
    // Predicated region
    $region74: #{net_forward.1} parent=1 // pred_check
      _
    $region75: #{net_forward.1} parent=1 // pred_check_branch
      %8824 = sbr.rel (0) target = $region77
    $region76: #{net_forward.1} parent=1 // pred_region
      _
    $region77: #{net_forward.1} parent=1 // pred_fallthru
      _
    %8825 = vsyncpa [#allocation3], 1
    %8826 = vsyncpa [#allocation5], 1
    %8827 = vsyncpa [#allocation8], 1
    %8828 = vsyncpa [#allocation11], 1
    %8829 = vsyncpa [#allocation14], 1

</llo_original>
